<compile_context>
chip_gen: v7x
topology: tpu7x:2x2x1
jax: 0.10.0
libtpu: 0.0.40
codegen_flags: <defaults>
</compile_context>

<pallas_src>
import functools

import jax
import jax.numpy as jnp
import numpy as np
from jax import lax
from jax.experimental import pallas as pl
from jax.experimental.pallas import tpu as pltpu

jax.config.update("jax_default_matmul_precision", "highest")

# ----- hyper-parameters implied by the module (small, deterministic) -----
VOCAB_SIZE = 20
EMBED_DIM = 16
N_HIDDEN = 32
NUM_CLASSES = 3
BATCH = 2
SEQ_LEN = 8
KSIZE = 3
CONV_LEN = SEQ_LEN - KSIZE + 1  # valid conv, stride 1


# ---------------------------------------------------------------------------
# Fused kernel: Conv1d(k=3, valid) + ReLU + BiLSTM + attention + output Linear
# ---------------------------------------------------------------------------
def fused_kernel(im2col_ref, convw_ref, convb_ref, wih_ref, bcat_ref,
                 whhf_ref, whhr_ref, outw_ref, outb_ref,
                 logits_ref, attn_ref, *, B, T, H):
    f32 = jnp.float32
    H4 = 4 * H

    # --- Conv1d as one im2col matmul + bias + ReLU (rows are time-major t*B+b)
    x = jnp.maximum(
        jnp.dot(im2col_ref[...], convw_ref[...], preferred_element_type=f32)
        + convb_ref[...], 0.0)                                       # [T*B, H]

    # --- input projection for both directions, hoisted out of the recurrence
    gx = jnp.dot(x, wih_ref[...], preferred_element_type=f32) + bcat_ref[...]  # [T*B, 8H]
    gx_f = gx[:, 0:H4]          # forward-direction input gates (vreg-aligned)
    gx_b = gx[:, H4:2 * H4]     # backward-direction input gates

    whh_f = whhf_ref[...]       # [H, 4H]
    whh_r = whhr_ref[...]       # [H, 4H]

    def cell(gates, c):
        # one full-width sigmoid covers i/f/o; tanh only on the g slice and c
        sig = jax.nn.sigmoid(gates)                  # [B, 4H]
        i = sig[:, 0:H]
        f = sig[:, H:2 * H]
        o = sig[:, 3 * H:4 * H]
        g = jnp.tanh(gates[:, 2 * H:3 * H])
        c_new = f * c + i * g
        h_new = o * jnp.tanh(c_new)
        return h_new, c_new

    h_f = jnp.zeros((B, H), f32); c_f = jnp.zeros((B, H), f32)
    h_b = jnp.zeros((B, H), f32); c_b = jnp.zeros((B, H), f32)
    hf_time = [None] * T        # forward hidden state at absolute time t
    hb_time = [None] * T        # backward hidden state at absolute time t
    for s in range(T):          # T dependent steps; whole batch + both dirs per step
        gates_f = gx_f[s * B:(s + 1) * B, :] + jnp.dot(
            h_f, whh_f, preferred_element_type=f32)
        gates_b = gx_b[(T - 1 - s) * B:(T - s) * B, :] + jnp.dot(
            h_b, whh_r, preferred_element_type=f32)
        h_f, c_f = cell(gates_f, c_f)
        h_b, c_b = cell(gates_b, c_b)
        hf_time[s] = h_f
        hb_time[T - 1 - s] = h_b
    hf_fin, hb_fin = h_f, h_b   # final hidden state per direction

    # --- attention query: reproduce torch's final_hidden_state.view(-1, 2H, 1)
    # quirk (batch/direction mixing for B>1) exactly as the module does.
    # query row r = flat blocks (2r, 2r+1) of the [2, B, H] final-hidden tensor;
    # qA / qB are its first / second H lanes and are kept separate (no concat).
    row_iota = lax.broadcasted_iota(jnp.int32, (B, 1), 0)
    qA = jnp.zeros((B, H), f32)
    qB = jnp.zeros((B, H), f32)
    for r in range(B):
        dA, bA = divmod(2 * r, B)
        dB, bB = divmod(2 * r + 1, B)
        srcA = (hf_fin if dA == 0 else hb_fin)[bA:bA + 1, :]
        srcB = (hf_fin if dB == 0 else hb_fin)[bB:bB + 1, :]
        qA = qA + jnp.where(row_iota == r, srcA, 0.0)
        qB = qB + jnp.where(row_iota == r, srcB, 0.0)

    # --- attention scores (bmm #1) + softmax over the T timesteps
    scores = [jnp.sum(hf_time[t] * qA, axis=1, keepdims=True)
              + jnp.sum(hb_time[t] * qB, axis=1, keepdims=True)
              for t in range(T)]                                  # T x [B, 1]
    m = scores[0]
    for t in range(1, T):
        m = jnp.maximum(m, scores[t])
    exps = [jnp.exp(s - m) for s in scores]
    denom = exps[0]
    for t in range(1, T):
        denom = denom + exps[t]
    inv = 1.0 / denom
    sm = [e * inv for e in exps]                                  # T x [B, 1]

    # --- context (bmm #2) + output Linear
    ctx_f = sm[0] * hf_time[0]
    ctx_b = sm[0] * hb_time[0]
    for t in range(1, T):
        ctx_f = ctx_f + sm[t] * hf_time[t]
        ctx_b = ctx_b + sm[t] * hb_time[t]
    outw = outw_ref[...]                                          # [2H, C]
    logits_ref[...] = (
        jnp.dot(ctx_f, outw[0:H, :], preferred_element_type=f32)
        + jnp.dot(ctx_b, outw[H:2 * H, :], preferred_element_type=f32)
        + outb_ref[...])

    # attention weights written once as a dense [B, T] slab
    lane_iota = lax.broadcasted_iota(jnp.int32, (1, T), 1)
    attn = jnp.where(lane_iota == 0, sm[0], 0.0)
    for t in range(1, T):
        attn = attn + jnp.where(lane_iota == t, sm[t], 0.0)
    attn_ref[...] = attn


# ---------------------------------------------------------------------------
# Wrapper: embedding gather + im2col windows + weight re-layout (plain-JAX glue)
# ---------------------------------------------------------------------------
def cnn_bilstm_attention_forward(X, params):
    B, L = X.shape
    V, E = params["embedding"].shape
    H = params["conv_b"].shape[0]
    C = params["out_b"].shape[0]
    K = params["conv_w"].shape[2]
    T = L - K + 1

    # embedding gather + im2col window extraction, time-major rows (t*B + b)
    Xw = jnp.stack([X[:, k:k + T] for k in range(K)], axis=-1)       # [B, T, K]
    emb_win = jnp.take(params["embedding"], Xw, axis=0)              # [B, T, K, E]
    im2col = jnp.transpose(emb_win, (1, 0, 2, 3)).reshape(T * B, K * E)

    convw2 = jnp.transpose(params["conv_w"], (2, 1, 0)).reshape(K * E, H)
    convb = params["conv_b"].reshape(1, H)
    wih_cat = jnp.concatenate([params["w_ih_f"].T, params["w_ih_r"].T], axis=1)  # [H, 8H]
    b_cat = jnp.concatenate([params["b_ih_f"] + params["b_hh_f"],
                             params["b_ih_r"] + params["b_hh_r"]]).reshape(1, 8 * H)
    whh_f = params["w_hh_f"].T                                       # [H, 4H]
    whh_r = params["w_hh_r"].T
    outw = params["out_w"].T                                         # [2H, C]
    outb = params["out_b"].reshape(1, C)

    vmem = pl.BlockSpec(memory_space=pltpu.MemorySpace.VMEM)
    logits, attn = pl.pallas_call(
        functools.partial(fused_kernel, B=B, T=T, H=H),
        out_shape=(
            jax.ShapeDtypeStruct((B, C), jnp.float32),
            jax.ShapeDtypeStruct((B, T), jnp.float32),
        ),
        in_specs=[vmem] * 9,
        out_specs=(vmem, vmem),
    )(im2col, convw2, convb, wih_cat, b_cat, whh_f, whh_r, outw, outb)

    # TODO(synk): torch returns attention as a host numpy array via .to('cpu');
    # we return a device array with the same values/shape instead.
    return logits, attn


# ---------------------------------------------------------------------------
# Pure-JAX reference of the PyTorch forward (for a correctness check)
# ---------------------------------------------------------------------------
def reference_forward(X, params):
    B, L = X.shape
    V, E = params["embedding"].shape
    H = params["conv_b"].shape[0]
    T = L - KSIZE + 1

    emb = params["embedding"][X]                       # [B, L, E]
    inp = jnp.transpose(emb, (0, 2, 1))                # [B, E, L]  (NCW)
    conv = lax.conv_general_dilated(
        inp, params["conv_w"], window_strides=(1,), padding="VALID",
        dimension_numbers=("NCW", "OIW", "NCW")) + params["conv_b"][None, :, None]
    conv = jax.nn.relu(conv)                           # [B, H, T]
    seq = jnp.transpose(conv, (2, 0, 1))               # [T, B, H]

    def cell(x, h, c, w_ih, w_hh, b_ih, b_hh):
        g = x @ w_ih.T + b_ih + h @ w_hh.T + b_hh
        i, f, gg, o = jnp.split(g, 4, axis=1)
        i, f, o = jax.nn.sigmoid(i), jax.nn.sigmoid(f), jax.nn.sigmoid(o)
        gg = jnp.tanh(gg)
        c = f * c + i * gg
        return o * jnp.tanh(c), c

    h = jnp.zeros((B, H)); c = jnp.zeros((B, H)); fwd = []
    for t in range(T):
        h, c = cell(seq[t], h, c, params["w_ih_f"], params["w_hh_f"],
                    params["b_ih_f"], params["b_hh_f"])
        fwd.append(h)
    h_f_fin = h
    h = jnp.zeros((B, H)); c = jnp.zeros((B, H)); bwd = [None] * T
    for t in range(T - 1, -1, -1):
        h, c = cell(seq[t], h, c, params["w_ih_r"], params["w_hh_r"],
                    params["b_ih_r"], params["b_hh_r"])
        bwd[t] = h
    h_b_fin = h

    lstm_out = jnp.concatenate([jnp.stack(fwd, 0), jnp.stack(bwd, 0)], axis=2)
    lstm_out = jnp.transpose(lstm_out, (1, 0, 2))      # [B, T, 2H]
    final_hidden = jnp.stack([h_f_fin, h_b_fin], 0)    # [2, B, H]
    q = final_hidden.reshape(B, 2 * H, 1)
    attn_w = jnp.squeeze(lstm_out @ q, 2)              # [B, T]
    sm = jax.nn.softmax(attn_w, axis=1)
    context = jnp.squeeze(jnp.transpose(lstm_out, (0, 2, 1)) @ sm[:, :, None], 2)
    logits = context @ params["out_w"].T + params["out_b"]
    return logits, sm


# ---------------------------------------------------------------------------
if __name__ == "__main__":
    key = jax.random.PRNGKey(0)
    ks = jax.random.split(key, 16)

    def u(k, shape, s=0.2):
        return jax.random.uniform(k, shape, jnp.float32, -s, s)

    V, E, H, C = VOCAB_SIZE, EMBED_DIM, N_HIDDEN, NUM_CLASSES
    params = {
        "embedding": jax.random.normal(ks[0], (V, E), jnp.float32) * 0.5,
        "conv_w": u(ks[1], (H, E, KSIZE)),
        "conv_b": u(ks[2], (H,)),
        "w_ih_f": u(ks[3], (4 * H, H)),
        "w_hh_f": u(ks[4], (4 * H, H)),
        "b_ih_f": u(ks[5], (4 * H,)),
        "b_hh_f": u(ks[6], (4 * H,)),
        "w_ih_r": u(ks[7], (4 * H, H)),
        "w_hh_r": u(ks[8], (4 * H, H)),
        "b_ih_r": u(ks[9], (4 * H,)),
        "b_hh_r": u(ks[10], (4 * H,)),
        "out_w": u(ks[11], (C, 2 * H)),
        "out_b": u(ks[12], (C,)),
    }
    X = jax.random.randint(ks[13], (BATCH, SEQ_LEN), 0, V, dtype=jnp.int32)

    fwd = jax.jit(cnn_bilstm_attention_forward)
    ref = jax.jit(reference_forward)
    logits, attn = jax.block_until_ready(fwd(X, params))
    ref_logits, ref_attn = jax.block_until_ready(ref(X, params))

    assert logits.shape == (BATCH, NUM_CLASSES)
    assert attn.shape == (BATCH, CONV_LEN)
    np.testing.assert_allclose(np.asarray(logits), np.asarray(ref_logits),
                               rtol=5e-3, atol=5e-3)
    np.testing.assert_allclose(np.asarray(attn), np.asarray(ref_attn),
                               rtol=5e-3, atol=5e-3)
    print("KERNEL_OK")
</pallas_src>

<mosaic_0001>
module attributes {stable_mosaic.version = 11 : i64} {
  func.func @fused_kernel(%arg0: memref<12x48xf32, #tpu.memory_space<vmem>>, %arg1: memref<48x32xf32, #tpu.memory_space<vmem>>, %arg2: memref<1x32xf32, #tpu.memory_space<vmem>>, %arg3: memref<32x256xf32, #tpu.memory_space<vmem>>, %arg4: memref<1x256xf32, #tpu.memory_space<vmem>>, %arg5: memref<32x128xf32, #tpu.memory_space<vmem>>, %arg6: memref<32x128xf32, #tpu.memory_space<vmem>>, %arg7: memref<64x3xf32, #tpu.memory_space<vmem>>, %arg8: memref<1x3xf32, #tpu.memory_space<vmem>>, %arg9: memref<2x3xf32, #tpu.memory_space<vmem>>, %arg10: memref<2x6xf32, #tpu.memory_space<vmem>>) attributes {dimension_semantics = [], scalar_prefetch = 0 : i64, scratch_operands = 0 : i64, tpu.core_type = #tpu.core_type<tc>} {
    %c0 = arith.constant 0 : index
    %c0_0 = arith.constant 0 : index
    %0 = vector.load %arg0[%c0, %c0_0] : memref<12x48xf32, #tpu.memory_space<vmem>>, vector<12x48xf32>
    %c0_1 = arith.constant 0 : index
    %c0_2 = arith.constant 0 : index
    %1 = vector.load %arg1[%c0_1, %c0_2] : memref<48x32xf32, #tpu.memory_space<vmem>>, vector<48x32xf32>
    %cst = arith.constant dense<0.000000e+00> : vector<12x32xf32>
    %2 = tpu.matmul %0, %1, %cst {dimension_numbers = #tpu.dot_dimension_numbers<[1], [0], [0], [1], [0, 0, 1, 1], [], []>, precision = #tpu.contract_precision<fp32>} : vector<12x48xf32>, vector<48x32xf32>, vector<12x32xf32> -> vector<12x32xf32>
    %c0_3 = arith.constant 0 : index
    %c0_4 = arith.constant 0 : index
    %3 = vector.load %arg2[%c0_3, %c0_4] : memref<1x32xf32, #tpu.memory_space<vmem>>, vector<1x32xf32>
    %4 = vector.broadcast %3 : vector<1x32xf32> to vector<12x32xf32>
    %5 = arith.addf %2, %4 : vector<12x32xf32>
    %cst_5 = arith.constant 0.000000e+00 : f32
    %6 = vector.broadcast %cst_5 : f32 to vector<12x32xf32>
    %7 = arith.maximumf %5, %6 : vector<12x32xf32>
    %c0_6 = arith.constant 0 : index
    %c0_7 = arith.constant 0 : index
    %8 = vector.load %arg3[%c0_6, %c0_7] : memref<32x256xf32, #tpu.memory_space<vmem>>, vector<32x256xf32>
    %cst_8 = arith.constant dense<0.000000e+00> : vector<12x256xf32>
    %9 = tpu.matmul %7, %8, %cst_8 {dimension_numbers = #tpu.dot_dimension_numbers<[1], [0], [0], [1], [0, 0, 1, 1], [], []>, precision = #tpu.contract_precision<fp32>} : vector<12x32xf32>, vector<32x256xf32>, vector<12x256xf32> -> vector<12x256xf32>
    %c0_9 = arith.constant 0 : index
    %c0_10 = arith.constant 0 : index
    %10 = vector.load %arg4[%c0_9, %c0_10] : memref<1x256xf32, #tpu.memory_space<vmem>>, vector<1x256xf32>
    %11 = vector.broadcast %10 : vector<1x256xf32> to vector<12x256xf32>
    %12 = arith.addf %9, %11 : vector<12x256xf32>
    %13 = vector.extract_strided_slice %12 {offsets = [0, 0], sizes = [12, 128], strides = [1, 1]} : vector<12x256xf32> to vector<12x128xf32>
    %14 = vector.extract_strided_slice %12 {offsets = [0, 128], sizes = [12, 128], strides = [1, 1]} : vector<12x256xf32> to vector<12x128xf32>
    %c0_11 = arith.constant 0 : index
    %c0_12 = arith.constant 0 : index
    %15 = vector.load %arg5[%c0_11, %c0_12] : memref<32x128xf32, #tpu.memory_space<vmem>>, vector<32x128xf32>
    %c0_13 = arith.constant 0 : index
    %c0_14 = arith.constant 0 : index
    %16 = vector.load %arg6[%c0_13, %c0_14] : memref<32x128xf32, #tpu.memory_space<vmem>>, vector<32x128xf32>
    %cst_15 = arith.constant 0.000000e+00 : f32
    %17 = vector.broadcast %cst_15 : f32 to vector<2x32xf32>
    %cst_16 = arith.constant 0.000000e+00 : f32
    %18 = vector.broadcast %cst_16 : f32 to vector<2x32xf32>
    %cst_17 = arith.constant 0.000000e+00 : f32
    %19 = vector.broadcast %cst_17 : f32 to vector<2x32xf32>
    %cst_18 = arith.constant 0.000000e+00 : f32
    %20 = vector.broadcast %cst_18 : f32 to vector<2x32xf32>
    %21 = vector.extract_strided_slice %13 {offsets = [0, 0], sizes = [2, 128], strides = [1, 1]} : vector<12x128xf32> to vector<2x128xf32>
    %cst_19 = arith.constant dense<0.000000e+00> : vector<2x128xf32>
    %22 = tpu.matmul %17, %15, %cst_19 {dimension_numbers = #tpu.dot_dimension_numbers<[1], [0], [0], [1], [0, 0, 1, 1], [], []>, precision = #tpu.contract_precision<fp32>} : vector<2x32xf32>, vector<32x128xf32>, vector<2x128xf32> -> vector<2x128xf32>
    %23 = arith.addf %21, %22 : vector<2x128xf32>
    %24 = vector.extract_strided_slice %14 {offsets = [10, 0], sizes = [2, 128], strides = [1, 1]} : vector<12x128xf32> to vector<2x128xf32>
    %cst_20 = arith.constant dense<0.000000e+00> : vector<2x128xf32>
    %25 = tpu.matmul %19, %16, %cst_20 {dimension_numbers = #tpu.dot_dimension_numbers<[1], [0], [0], [1], [0, 0, 1, 1], [], []>, precision = #tpu.contract_precision<fp32>} : vector<2x32xf32>, vector<32x128xf32>, vector<2x128xf32> -> vector<2x128xf32>
    %26 = arith.addf %24, %25 : vector<2x128xf32>
    %27 = arith.negf %23 : vector<2x128xf32>
    %28 = math.exp %27 : vector<2x128xf32>
    %cst_21 = arith.constant 1.000000e+00 : f32
    %29 = vector.broadcast %cst_21 : f32 to vector<2x128xf32>
    %30 = arith.addf %29, %28 : vector<2x128xf32>
    %31 = arith.divf %29, %30 : vector<2x128xf32>
    %32 = vector.extract_strided_slice %31 {offsets = [0, 0], sizes = [2, 32], strides = [1, 1]} : vector<2x128xf32> to vector<2x32xf32>
    %33 = vector.extract_strided_slice %31 {offsets = [0, 32], sizes = [2, 32], strides = [1, 1]} : vector<2x128xf32> to vector<2x32xf32>
    %34 = vector.extract_strided_slice %31 {offsets = [0, 96], sizes = [2, 32], strides = [1, 1]} : vector<2x128xf32> to vector<2x32xf32>
    %35 = vector.extract_strided_slice %23 {offsets = [0, 64], sizes = [2, 32], strides = [1, 1]} : vector<2x128xf32> to vector<2x32xf32>
    %36 = math.tanh %35 : vector<2x32xf32>
    %37 = arith.mulf %33, %18 : vector<2x32xf32>
    %38 = arith.mulf %32, %36 : vector<2x32xf32>
    %39 = arith.addf %37, %38 : vector<2x32xf32>
    %40 = math.tanh %39 : vector<2x32xf32>
    %41 = arith.mulf %34, %40 : vector<2x32xf32>
    %42 = arith.negf %26 : vector<2x128xf32>
    %43 = math.exp %42 : vector<2x128xf32>
    %cst_22 = arith.constant 1.000000e+00 : f32
    %44 = vector.broadcast %cst_22 : f32 to vector<2x128xf32>
    %45 = arith.addf %44, %43 : vector<2x128xf32>
    %46 = arith.divf %44, %45 : vector<2x128xf32>
    %47 = vector.extract_strided_slice %46 {offsets = [0, 0], sizes = [2, 32], strides = [1, 1]} : vector<2x128xf32> to vector<2x32xf32>
    %48 = vector.extract_strided_slice %46 {offsets = [0, 32], sizes = [2, 32], strides = [1, 1]} : vector<2x128xf32> to vector<2x32xf32>
    %49 = vector.extract_strided_slice %46 {offsets = [0, 96], sizes = [2, 32], strides = [1, 1]} : vector<2x128xf32> to vector<2x32xf32>
    %50 = vector.extract_strided_slice %26 {offsets = [0, 64], sizes = [2, 32], strides = [1, 1]} : vector<2x128xf32> to vector<2x32xf32>
    %51 = math.tanh %50 : vector<2x32xf32>
    %52 = arith.mulf %48, %20 : vector<2x32xf32>
    %53 = arith.mulf %47, %51 : vector<2x32xf32>
    %54 = arith.addf %52, %53 : vector<2x32xf32>
    %55 = math.tanh %54 : vector<2x32xf32>
    %56 = arith.mulf %49, %55 : vector<2x32xf32>
    %57 = vector.extract_strided_slice %13 {offsets = [2, 0], sizes = [2, 128], strides = [1, 1]} : vector<12x128xf32> to vector<2x128xf32>
    %cst_23 = arith.constant dense<0.000000e+00> : vector<2x128xf32>
    %58 = tpu.matmul %41, %15, %cst_23 {dimension_numbers = #tpu.dot_dimension_numbers<[1], [0], [0], [1], [0, 0, 1, 1], [], []>, precision = #tpu.contract_precision<fp32>} : vector<2x32xf32>, vector<32x128xf32>, vector<2x128xf32> -> vector<2x128xf32>
    %59 = arith.addf %57, %58 : vector<2x128xf32>
    %60 = vector.extract_strided_slice %14 {offsets = [8, 0], sizes = [2, 128], strides = [1, 1]} : vector<12x128xf32> to vector<2x128xf32>
    %cst_24 = arith.constant dense<0.000000e+00> : vector<2x128xf32>
    %61 = tpu.matmul %56, %16, %cst_24 {dimension_numbers = #tpu.dot_dimension_numbers<[1], [0], [0], [1], [0, 0, 1, 1], [], []>, precision = #tpu.contract_precision<fp32>} : vector<2x32xf32>, vector<32x128xf32>, vector<2x128xf32> -> vector<2x128xf32>
    %62 = arith.addf %60, %61 : vector<2x128xf32>
    %63 = arith.negf %59 : vector<2x128xf32>
    %64 = math.exp %63 : vector<2x128xf32>
    %cst_25 = arith.constant 1.000000e+00 : f32
    %65 = vector.broadcast %cst_25 : f32 to vector<2x128xf32>
    %66 = arith.addf %65, %64 : vector<2x128xf32>
    %67 = arith.divf %65, %66 : vector<2x128xf32>
    %68 = vector.extract_strided_slice %67 {offsets = [0, 0], sizes = [2, 32], strides = [1, 1]} : vector<2x128xf32> to vector<2x32xf32>
    %69 = vector.extract_strided_slice %67 {offsets = [0, 32], sizes = [2, 32], strides = [1, 1]} : vector<2x128xf32> to vector<2x32xf32>
    %70 = vector.extract_strided_slice %67 {offsets = [0, 96], sizes = [2, 32], strides = [1, 1]} : vector<2x128xf32> to vector<2x32xf32>
    %71 = vector.extract_strided_slice %59 {offsets = [0, 64], sizes = [2, 32], strides = [1, 1]} : vector<2x128xf32> to vector<2x32xf32>
    %72 = math.tanh %71 : vector<2x32xf32>
    %73 = arith.mulf %69, %39 : vector<2x32xf32>
    %74 = arith.mulf %68, %72 : vector<2x32xf32>
    %75 = arith.addf %73, %74 : vector<2x32xf32>
    %76 = math.tanh %75 : vector<2x32xf32>
    %77 = arith.mulf %70, %76 : vector<2x32xf32>
    %78 = arith.negf %62 : vector<2x128xf32>
    %79 = math.exp %78 : vector<2x128xf32>
    %cst_26 = arith.constant 1.000000e+00 : f32
    %80 = vector.broadcast %cst_26 : f32 to vector<2x128xf32>
    %81 = arith.addf %80, %79 : vector<2x128xf32>
    %82 = arith.divf %80, %81 : vector<2x128xf32>
    %83 = vector.extract_strided_slice %82 {offsets = [0, 0], sizes = [2, 32], strides = [1, 1]} : vector<2x128xf32> to vector<2x32xf32>
    %84 = vector.extract_strided_slice %82 {offsets = [0, 32], sizes = [2, 32], strides = [1, 1]} : vector<2x128xf32> to vector<2x32xf32>
    %85 = vector.extract_strided_slice %82 {offsets = [0, 96], sizes = [2, 32], strides = [1, 1]} : vector<2x128xf32> to vector<2x32xf32>
    %86 = vector.extract_strided_slice %62 {offsets = [0, 64], sizes = [2, 32], strides = [1, 1]} : vector<2x128xf32> to vector<2x32xf32>
    %87 = math.tanh %86 : vector<2x32xf32>
    %88 = arith.mulf %84, %54 : vector<2x32xf32>
    %89 = arith.mulf %83, %87 : vector<2x32xf32>
    %90 = arith.addf %88, %89 : vector<2x32xf32>
    %91 = math.tanh %90 : vector<2x32xf32>
    %92 = arith.mulf %85, %91 : vector<2x32xf32>
    %93 = vector.extract_strided_slice %13 {offsets = [4, 0], sizes = [2, 128], strides = [1, 1]} : vector<12x128xf32> to vector<2x128xf32>
    %cst_27 = arith.constant dense<0.000000e+00> : vector<2x128xf32>
    %94 = tpu.matmul %77, %15, %cst_27 {dimension_numbers = #tpu.dot_dimension_numbers<[1], [0], [0], [1], [0, 0, 1, 1], [], []>, precision = #tpu.contract_precision<fp32>} : vector<2x32xf32>, vector<32x128xf32>, vector<2x128xf32> -> vector<2x128xf32>
    %95 = arith.addf %93, %94 : vector<2x128xf32>
    %96 = vector.extract_strided_slice %14 {offsets = [6, 0], sizes = [2, 128], strides = [1, 1]} : vector<12x128xf32> to vector<2x128xf32>
    %cst_28 = arith.constant dense<0.000000e+00> : vector<2x128xf32>
    %97 = tpu.matmul %92, %16, %cst_28 {dimension_numbers = #tpu.dot_dimension_numbers<[1], [0], [0], [1], [0, 0, 1, 1], [], []>, precision = #tpu.contract_precision<fp32>} : vector<2x32xf32>, vector<32x128xf32>, vector<2x128xf32> -> vector<2x128xf32>
    %98 = arith.addf %96, %97 : vector<2x128xf32>
    %99 = arith.negf %95 : vector<2x128xf32>
    %100 = math.exp %99 : vector<2x128xf32>
    %cst_29 = arith.constant 1.000000e+00 : f32
    %101 = vector.broadcast %cst_29 : f32 to vector<2x128xf32>
    %102 = arith.addf %101, %100 : vector<2x128xf32>
    %103 = arith.divf %101, %102 : vector<2x128xf32>
    %104 = vector.extract_strided_slice %103 {offsets = [0, 0], sizes = [2, 32], strides = [1, 1]} : vector<2x128xf32> to vector<2x32xf32>
    %105 = vector.extract_strided_slice %103 {offsets = [0, 32], sizes = [2, 32], strides = [1, 1]} : vector<2x128xf32> to vector<2x32xf32>
    %106 = vector.extract_strided_slice %103 {offsets = [0, 96], sizes = [2, 32], strides = [1, 1]} : vector<2x128xf32> to vector<2x32xf32>
    %107 = vector.extract_strided_slice %95 {offsets = [0, 64], sizes = [2, 32], strides = [1, 1]} : vector<2x128xf32> to vector<2x32xf32>
    %108 = math.tanh %107 : vector<2x32xf32>
    %109 = arith.mulf %105, %75 : vector<2x32xf32>
    %110 = arith.mulf %104, %108 : vector<2x32xf32>
    %111 = arith.addf %109, %110 : vector<2x32xf32>
    %112 = math.tanh %111 : vector<2x32xf32>
    %113 = arith.mulf %106, %112 : vector<2x32xf32>
    %114 = arith.negf %98 : vector<2x128xf32>
    %115 = math.exp %114 : vector<2x128xf32>
    %cst_30 = arith.constant 1.000000e+00 : f32
    %116 = vector.broadcast %cst_30 : f32 to vector<2x128xf32>
    %117 = arith.addf %116, %115 : vector<2x128xf32>
    %118 = arith.divf %116, %117 : vector<2x128xf32>
    %119 = vector.extract_strided_slice %118 {offsets = [0, 0], sizes = [2, 32], strides = [1, 1]} : vector<2x128xf32> to vector<2x32xf32>
    %120 = vector.extract_strided_slice %118 {offsets = [0, 32], sizes = [2, 32], strides = [1, 1]} : vector<2x128xf32> to vector<2x32xf32>
    %121 = vector.extract_strided_slice %118 {offsets = [0, 96], sizes = [2, 32], strides = [1, 1]} : vector<2x128xf32> to vector<2x32xf32>
    %122 = vector.extract_strided_slice %98 {offsets = [0, 64], sizes = [2, 32], strides = [1, 1]} : vector<2x128xf32> to vector<2x32xf32>
    %123 = math.tanh %122 : vector<2x32xf32>
    %124 = arith.mulf %120, %90 : vector<2x32xf32>
    %125 = arith.mulf %119, %123 : vector<2x32xf32>
    %126 = arith.addf %124, %125 : vector<2x32xf32>
    %127 = math.tanh %126 : vector<2x32xf32>
    %128 = arith.mulf %121, %127 : vector<2x32xf32>
    %129 = vector.extract_strided_slice %13 {offsets = [6, 0], sizes = [2, 128], strides = [1, 1]} : vector<12x128xf32> to vector<2x128xf32>
    %cst_31 = arith.constant dense<0.000000e+00> : vector<2x128xf32>
    %130 = tpu.matmul %113, %15, %cst_31 {dimension_numbers = #tpu.dot_dimension_numbers<[1], [0], [0], [1], [0, 0, 1, 1], [], []>, precision = #tpu.contract_precision<fp32>} : vector<2x32xf32>, vector<32x128xf32>, vector<2x128xf32> -> vector<2x128xf32>
    %131 = arith.addf %129, %130 : vector<2x128xf32>
    %132 = vector.extract_strided_slice %14 {offsets = [4, 0], sizes = [2, 128], strides = [1, 1]} : vector<12x128xf32> to vector<2x128xf32>
    %cst_32 = arith.constant dense<0.000000e+00> : vector<2x128xf32>
    %133 = tpu.matmul %128, %16, %cst_32 {dimension_numbers = #tpu.dot_dimension_numbers<[1], [0], [0], [1], [0, 0, 1, 1], [], []>, precision = #tpu.contract_precision<fp32>} : vector<2x32xf32>, vector<32x128xf32>, vector<2x128xf32> -> vector<2x128xf32>
    %134 = arith.addf %132, %133 : vector<2x128xf32>
    %135 = arith.negf %131 : vector<2x128xf32>
    %136 = math.exp %135 : vector<2x128xf32>
    %cst_33 = arith.constant 1.000000e+00 : f32
    %137 = vector.broadcast %cst_33 : f32 to vector<2x128xf32>
    %138 = arith.addf %137, %136 : vector<2x128xf32>
    %139 = arith.divf %137, %138 : vector<2x128xf32>
    %140 = vector.extract_strided_slice %139 {offsets = [0, 0], sizes = [2, 32], strides = [1, 1]} : vector<2x128xf32> to vector<2x32xf32>
    %141 = vector.extract_strided_slice %139 {offsets = [0, 32], sizes = [2, 32], strides = [1, 1]} : vector<2x128xf32> to vector<2x32xf32>
    %142 = vector.extract_strided_slice %139 {offsets = [0, 96], sizes = [2, 32], strides = [1, 1]} : vector<2x128xf32> to vector<2x32xf32>
    %143 = vector.extract_strided_slice %131 {offsets = [0, 64], sizes = [2, 32], strides = [1, 1]} : vector<2x128xf32> to vector<2x32xf32>
    %144 = math.tanh %143 : vector<2x32xf32>
    %145 = arith.mulf %141, %111 : vector<2x32xf32>
    %146 = arith.mulf %140, %144 : vector<2x32xf32>
    %147 = arith.addf %145, %146 : vector<2x32xf32>
    %148 = math.tanh %147 : vector<2x32xf32>
    %149 = arith.mulf %142, %148 : vector<2x32xf32>
    %150 = arith.negf %134 : vector<2x128xf32>
    %151 = math.exp %150 : vector<2x128xf32>
    %cst_34 = arith.constant 1.000000e+00 : f32
    %152 = vector.broadcast %cst_34 : f32 to vector<2x128xf32>
    %153 = arith.addf %152, %151 : vector<2x128xf32>
    %154 = arith.divf %152, %153 : vector<2x128xf32>
    %155 = vector.extract_strided_slice %154 {offsets = [0, 0], sizes = [2, 32], strides = [1, 1]} : vector<2x128xf32> to vector<2x32xf32>
    %156 = vector.extract_strided_slice %154 {offsets = [0, 32], sizes = [2, 32], strides = [1, 1]} : vector<2x128xf32> to vector<2x32xf32>
    %157 = vector.extract_strided_slice %154 {offsets = [0, 96], sizes = [2, 32], strides = [1, 1]} : vector<2x128xf32> to vector<2x32xf32>
    %158 = vector.extract_strided_slice %134 {offsets = [0, 64], sizes = [2, 32], strides = [1, 1]} : vector<2x128xf32> to vector<2x32xf32>
    %159 = math.tanh %158 : vector<2x32xf32>
    %160 = arith.mulf %156, %126 : vector<2x32xf32>
    %161 = arith.mulf %155, %159 : vector<2x32xf32>
    %162 = arith.addf %160, %161 : vector<2x32xf32>
    %163 = math.tanh %162 : vector<2x32xf32>
    %164 = arith.mulf %157, %163 : vector<2x32xf32>
    %165 = vector.extract_strided_slice %13 {offsets = [8, 0], sizes = [2, 128], strides = [1, 1]} : vector<12x128xf32> to vector<2x128xf32>
    %cst_35 = arith.constant dense<0.000000e+00> : vector<2x128xf32>
    %166 = tpu.matmul %149, %15, %cst_35 {dimension_numbers = #tpu.dot_dimension_numbers<[1], [0], [0], [1], [0, 0, 1, 1], [], []>, precision = #tpu.contract_precision<fp32>} : vector<2x32xf32>, vector<32x128xf32>, vector<2x128xf32> -> vector<2x128xf32>
    %167 = arith.addf %165, %166 : vector<2x128xf32>
    %168 = vector.extract_strided_slice %14 {offsets = [2, 0], sizes = [2, 128], strides = [1, 1]} : vector<12x128xf32> to vector<2x128xf32>
    %cst_36 = arith.constant dense<0.000000e+00> : vector<2x128xf32>
    %169 = tpu.matmul %164, %16, %cst_36 {dimension_numbers = #tpu.dot_dimension_numbers<[1], [0], [0], [1], [0, 0, 1, 1], [], []>, precision = #tpu.contract_precision<fp32>} : vector<2x32xf32>, vector<32x128xf32>, vector<2x128xf32> -> vector<2x128xf32>
    %170 = arith.addf %168, %169 : vector<2x128xf32>
    %171 = arith.negf %167 : vector<2x128xf32>
    %172 = math.exp %171 : vector<2x128xf32>
    %cst_37 = arith.constant 1.000000e+00 : f32
    %173 = vector.broadcast %cst_37 : f32 to vector<2x128xf32>
    %174 = arith.addf %173, %172 : vector<2x128xf32>
    %175 = arith.divf %173, %174 : vector<2x128xf32>
    %176 = vector.extract_strided_slice %175 {offsets = [0, 0], sizes = [2, 32], strides = [1, 1]} : vector<2x128xf32> to vector<2x32xf32>
    %177 = vector.extract_strided_slice %175 {offsets = [0, 32], sizes = [2, 32], strides = [1, 1]} : vector<2x128xf32> to vector<2x32xf32>
    %178 = vector.extract_strided_slice %175 {offsets = [0, 96], sizes = [2, 32], strides = [1, 1]} : vector<2x128xf32> to vector<2x32xf32>
    %179 = vector.extract_strided_slice %167 {offsets = [0, 64], sizes = [2, 32], strides = [1, 1]} : vector<2x128xf32> to vector<2x32xf32>
    %180 = math.tanh %179 : vector<2x32xf32>
    %181 = arith.mulf %177, %147 : vector<2x32xf32>
    %182 = arith.mulf %176, %180 : vector<2x32xf32>
    %183 = arith.addf %181, %182 : vector<2x32xf32>
    %184 = math.tanh %183 : vector<2x32xf32>
    %185 = arith.mulf %178, %184 : vector<2x32xf32>
    %186 = arith.negf %170 : vector<2x128xf32>
    %187 = math.exp %186 : vector<2x128xf32>
    %cst_38 = arith.constant 1.000000e+00 : f32
    %188 = vector.broadcast %cst_38 : f32 to vector<2x128xf32>
    %189 = arith.addf %188, %187 : vector<2x128xf32>
    %190 = arith.divf %188, %189 : vector<2x128xf32>
    %191 = vector.extract_strided_slice %190 {offsets = [0, 0], sizes = [2, 32], strides = [1, 1]} : vector<2x128xf32> to vector<2x32xf32>
    %192 = vector.extract_strided_slice %190 {offsets = [0, 32], sizes = [2, 32], strides = [1, 1]} : vector<2x128xf32> to vector<2x32xf32>
    %193 = vector.extract_strided_slice %190 {offsets = [0, 96], sizes = [2, 32], strides = [1, 1]} : vector<2x128xf32> to vector<2x32xf32>
    %194 = vector.extract_strided_slice %170 {offsets = [0, 64], sizes = [2, 32], strides = [1, 1]} : vector<2x128xf32> to vector<2x32xf32>
    %195 = math.tanh %194 : vector<2x32xf32>
    %196 = arith.mulf %192, %162 : vector<2x32xf32>
    %197 = arith.mulf %191, %195 : vector<2x32xf32>
    %198 = arith.addf %196, %197 : vector<2x32xf32>
    %199 = math.tanh %198 : vector<2x32xf32>
    %200 = arith.mulf %193, %199 : vector<2x32xf32>
    %201 = vector.extract_strided_slice %13 {offsets = [10, 0], sizes = [2, 128], strides = [1, 1]} : vector<12x128xf32> to vector<2x128xf32>
    %cst_39 = arith.constant dense<0.000000e+00> : vector<2x128xf32>
    %202 = tpu.matmul %185, %15, %cst_39 {dimension_numbers = #tpu.dot_dimension_numbers<[1], [0], [0], [1], [0, 0, 1, 1], [], []>, precision = #tpu.contract_precision<fp32>} : vector<2x32xf32>, vector<32x128xf32>, vector<2x128xf32> -> vector<2x128xf32>
    %203 = arith.addf %201, %202 : vector<2x128xf32>
    %204 = vector.extract_strided_slice %14 {offsets = [0, 0], sizes = [2, 128], strides = [1, 1]} : vector<12x128xf32> to vector<2x128xf32>
    %cst_40 = arith.constant dense<0.000000e+00> : vector<2x128xf32>
    %205 = tpu.matmul %200, %16, %cst_40 {dimension_numbers = #tpu.dot_dimension_numbers<[1], [0], [0], [1], [0, 0, 1, 1], [], []>, precision = #tpu.contract_precision<fp32>} : vector<2x32xf32>, vector<32x128xf32>, vector<2x128xf32> -> vector<2x128xf32>
    %206 = arith.addf %204, %205 : vector<2x128xf32>
    %207 = arith.negf %203 : vector<2x128xf32>
    %208 = math.exp %207 : vector<2x128xf32>
    %cst_41 = arith.constant 1.000000e+00 : f32
    %209 = vector.broadcast %cst_41 : f32 to vector<2x128xf32>
    %210 = arith.addf %209, %208 : vector<2x128xf32>
    %211 = arith.divf %209, %210 : vector<2x128xf32>
    %212 = vector.extract_strided_slice %211 {offsets = [0, 0], sizes = [2, 32], strides = [1, 1]} : vector<2x128xf32> to vector<2x32xf32>
    %213 = vector.extract_strided_slice %211 {offsets = [0, 32], sizes = [2, 32], strides = [1, 1]} : vector<2x128xf32> to vector<2x32xf32>
    %214 = vector.extract_strided_slice %211 {offsets = [0, 96], sizes = [2, 32], strides = [1, 1]} : vector<2x128xf32> to vector<2x32xf32>
    %215 = vector.extract_strided_slice %203 {offsets = [0, 64], sizes = [2, 32], strides = [1, 1]} : vector<2x128xf32> to vector<2x32xf32>
    %216 = math.tanh %215 : vector<2x32xf32>
    %217 = arith.mulf %213, %183 : vector<2x32xf32>
    %218 = arith.mulf %212, %216 : vector<2x32xf32>
    %219 = arith.addf %217, %218 : vector<2x32xf32>
    %220 = math.tanh %219 : vector<2x32xf32>
    %221 = arith.mulf %214, %220 : vector<2x32xf32>
    %222 = arith.negf %206 : vector<2x128xf32>
    %223 = math.exp %222 : vector<2x128xf32>
    %cst_42 = arith.constant 1.000000e+00 : f32
    %224 = vector.broadcast %cst_42 : f32 to vector<2x128xf32>
    %225 = arith.addf %224, %223 : vector<2x128xf32>
    %226 = arith.divf %224, %225 : vector<2x128xf32>
    %227 = vector.extract_strided_slice %226 {offsets = [0, 0], sizes = [2, 32], strides = [1, 1]} : vector<2x128xf32> to vector<2x32xf32>
    %228 = vector.extract_strided_slice %226 {offsets = [0, 32], sizes = [2, 32], strides = [1, 1]} : vector<2x128xf32> to vector<2x32xf32>
    %229 = vector.extract_strided_slice %226 {offsets = [0, 96], sizes = [2, 32], strides = [1, 1]} : vector<2x128xf32> to vector<2x32xf32>
    %230 = vector.extract_strided_slice %206 {offsets = [0, 64], sizes = [2, 32], strides = [1, 1]} : vector<2x128xf32> to vector<2x32xf32>
    %231 = math.tanh %230 : vector<2x32xf32>
    %232 = arith.mulf %228, %198 : vector<2x32xf32>
    %233 = arith.mulf %227, %231 : vector<2x32xf32>
    %234 = arith.addf %232, %233 : vector<2x32xf32>
    %235 = math.tanh %234 : vector<2x32xf32>
    %236 = arith.mulf %229, %235 : vector<2x32xf32>
    %237 = tpu.iota {dimensions = array<i32: 0>} : vector<2x1xi32>
    %cst_43 = arith.constant 0.000000e+00 : f32
    %238 = vector.broadcast %cst_43 : f32 to vector<2x32xf32>
    %cst_44 = arith.constant 0.000000e+00 : f32
    %239 = vector.broadcast %cst_44 : f32 to vector<2x32xf32>
    %240 = vector.extract_strided_slice %221 {offsets = [0, 0], sizes = [1, 32], strides = [1, 1]} : vector<2x32xf32> to vector<1x32xf32>
    %241 = vector.extract_strided_slice %221 {offsets = [1, 0], sizes = [1, 32], strides = [1, 1]} : vector<2x32xf32> to vector<1x32xf32>
    %c0_i32 = arith.constant 0 : i32
    %242 = vector.broadcast %c0_i32 : i32 to vector<2x1xi32>
    %243 = arith.cmpi eq, %237, %242 : vector<2x1xi32>
    %cst_45 = arith.constant 0.000000e+00 : f32
    %244 = vector.shape_cast %243 : vector<2x1xi1> to vector<2x1xi1>
    %245 = vector.broadcast %244 : vector<2x1xi1> to vector<2x32xi1>
    %246 = vector.shape_cast %240 : vector<1x32xf32> to vector<1x32xf32>
    %247 = vector.broadcast %246 : vector<1x32xf32> to vector<2x32xf32>
    %248 = vector.broadcast %cst_45 : f32 to vector<2x32xf32>
    %249 = arith.select %245, %247, %248 : vector<2x32xi1>, vector<2x32xf32>
    %250 = arith.addf %238, %249 : vector<2x32xf32>
    %c0_i32_46 = arith.constant 0 : i32
    %251 = vector.broadcast %c0_i32_46 : i32 to vector<2x1xi32>
    %252 = arith.cmpi eq, %237, %251 : vector<2x1xi32>
    %cst_47 = arith.constant 0.000000e+00 : f32
    %253 = vector.shape_cast %252 : vector<2x1xi1> to vector<2x1xi1>
    %254 = vector.broadcast %253 : vector<2x1xi1> to vector<2x32xi1>
    %255 = vector.shape_cast %241 : vector<1x32xf32> to vector<1x32xf32>
    %256 = vector.broadcast %255 : vector<1x32xf32> to vector<2x32xf32>
    %257 = vector.broadcast %cst_47 : f32 to vector<2x32xf32>
    %258 = arith.select %254, %256, %257 : vector<2x32xi1>, vector<2x32xf32>
    %259 = arith.addf %239, %258 : vector<2x32xf32>
    %260 = vector.extract_strided_slice %236 {offsets = [0, 0], sizes = [1, 32], strides = [1, 1]} : vector<2x32xf32> to vector<1x32xf32>
    %261 = vector.extract_strided_slice %236 {offsets = [1, 0], sizes = [1, 32], strides = [1, 1]} : vector<2x32xf32> to vector<1x32xf32>
    %c1_i32 = arith.constant 1 : i32
    %262 = vector.broadcast %c1_i32 : i32 to vector<2x1xi32>
    %263 = arith.cmpi eq, %237, %262 : vector<2x1xi32>
    %cst_48 = arith.constant 0.000000e+00 : f32
    %264 = vector.shape_cast %263 : vector<2x1xi1> to vector<2x1xi1>
    %265 = vector.broadcast %264 : vector<2x1xi1> to vector<2x32xi1>
    %266 = vector.shape_cast %260 : vector<1x32xf32> to vector<1x32xf32>
    %267 = vector.broadcast %266 : vector<1x32xf32> to vector<2x32xf32>
    %268 = vector.broadcast %cst_48 : f32 to vector<2x32xf32>
    %269 = arith.select %265, %267, %268 : vector<2x32xi1>, vector<2x32xf32>
    %270 = arith.addf %250, %269 : vector<2x32xf32>
    %c1_i32_49 = arith.constant 1 : i32
    %271 = vector.broadcast %c1_i32_49 : i32 to vector<2x1xi32>
    %272 = arith.cmpi eq, %237, %271 : vector<2x1xi32>
    %cst_50 = arith.constant 0.000000e+00 : f32
    %273 = vector.shape_cast %272 : vector<2x1xi1> to vector<2x1xi1>
    %274 = vector.broadcast %273 : vector<2x1xi1> to vector<2x32xi1>
    %275 = vector.shape_cast %261 : vector<1x32xf32> to vector<1x32xf32>
    %276 = vector.broadcast %275 : vector<1x32xf32> to vector<2x32xf32>
    %277 = vector.broadcast %cst_50 : f32 to vector<2x32xf32>
    %278 = arith.select %274, %276, %277 : vector<2x32xi1>, vector<2x32xf32>
    %279 = arith.addf %259, %278 : vector<2x32xf32>
    %280 = arith.mulf %41, %270 : vector<2x32xf32>
    %cst_51 = arith.constant dense<0.000000e+00> : vector<2xf32>
    %281 = vector.multi_reduction <add>, %280, %cst_51 [1] : vector<2x32xf32> to vector<2xf32>
    %282 = vector.shape_cast %281 : vector<2xf32> to vector<2x1xf32>
    %283 = arith.mulf %236, %279 : vector<2x32xf32>
    %cst_52 = arith.constant dense<0.000000e+00> : vector<2xf32>
    %284 = vector.multi_reduction <add>, %283, %cst_52 [1] : vector<2x32xf32> to vector<2xf32>
    %285 = vector.shape_cast %284 : vector<2xf32> to vector<2x1xf32>
    %286 = arith.addf %282, %285 : vector<2x1xf32>
    %287 = arith.mulf %77, %270 : vector<2x32xf32>
    %cst_53 = arith.constant dense<0.000000e+00> : vector<2xf32>
    %288 = vector.multi_reduction <add>, %287, %cst_53 [1] : vector<2x32xf32> to vector<2xf32>
    %289 = vector.shape_cast %288 : vector<2xf32> to vector<2x1xf32>
    %290 = arith.mulf %200, %279 : vector<2x32xf32>
    %cst_54 = arith.constant dense<0.000000e+00> : vector<2xf32>
    %291 = vector.multi_reduction <add>, %290, %cst_54 [1] : vector<2x32xf32> to vector<2xf32>
    %292 = vector.shape_cast %291 : vector<2xf32> to vector<2x1xf32>
    %293 = arith.addf %289, %292 : vector<2x1xf32>
    %294 = arith.mulf %113, %270 : vector<2x32xf32>
    %cst_55 = arith.constant dense<0.000000e+00> : vector<2xf32>
    %295 = vector.multi_reduction <add>, %294, %cst_55 [1] : vector<2x32xf32> to vector<2xf32>
    %296 = vector.shape_cast %295 : vector<2xf32> to vector<2x1xf32>
    %297 = arith.mulf %164, %279 : vector<2x32xf32>
    %cst_56 = arith.constant dense<0.000000e+00> : vector<2xf32>
    %298 = vector.multi_reduction <add>, %297, %cst_56 [1] : vector<2x32xf32> to vector<2xf32>
    %299 = vector.shape_cast %298 : vector<2xf32> to vector<2x1xf32>
    %300 = arith.addf %296, %299 : vector<2x1xf32>
    %301 = arith.mulf %149, %270 : vector<2x32xf32>
    %cst_57 = arith.constant dense<0.000000e+00> : vector<2xf32>
    %302 = vector.multi_reduction <add>, %301, %cst_57 [1] : vector<2x32xf32> to vector<2xf32>
    %303 = vector.shape_cast %302 : vector<2xf32> to vector<2x1xf32>
    %304 = arith.mulf %128, %279 : vector<2x32xf32>
    %cst_58 = arith.constant dense<0.000000e+00> : vector<2xf32>
    %305 = vector.multi_reduction <add>, %304, %cst_58 [1] : vector<2x32xf32> to vector<2xf32>
    %306 = vector.shape_cast %305 : vector<2xf32> to vector<2x1xf32>
    %307 = arith.addf %303, %306 : vector<2x1xf32>
    %308 = arith.mulf %185, %270 : vector<2x32xf32>
    %cst_59 = arith.constant dense<0.000000e+00> : vector<2xf32>
    %309 = vector.multi_reduction <add>, %308, %cst_59 [1] : vector<2x32xf32> to vector<2xf32>
    %310 = vector.shape_cast %309 : vector<2xf32> to vector<2x1xf32>
    %311 = arith.mulf %92, %279 : vector<2x32xf32>
    %cst_60 = arith.constant dense<0.000000e+00> : vector<2xf32>
    %312 = vector.multi_reduction <add>, %311, %cst_60 [1] : vector<2x32xf32> to vector<2xf32>
    %313 = vector.shape_cast %312 : vector<2xf32> to vector<2x1xf32>
    %314 = arith.addf %310, %313 : vector<2x1xf32>
    %315 = arith.mulf %221, %270 : vector<2x32xf32>
    %cst_61 = arith.constant dense<0.000000e+00> : vector<2xf32>
    %316 = vector.multi_reduction <add>, %315, %cst_61 [1] : vector<2x32xf32> to vector<2xf32>
    %317 = vector.shape_cast %316 : vector<2xf32> to vector<2x1xf32>
    %318 = arith.mulf %56, %279 : vector<2x32xf32>
    %cst_62 = arith.constant dense<0.000000e+00> : vector<2xf32>
    %319 = vector.multi_reduction <add>, %318, %cst_62 [1] : vector<2x32xf32> to vector<2xf32>
    %320 = vector.shape_cast %319 : vector<2xf32> to vector<2x1xf32>
    %321 = arith.addf %317, %320 : vector<2x1xf32>
    %322 = arith.maximumf %286, %293 : vector<2x1xf32>
    %323 = arith.maximumf %322, %300 : vector<2x1xf32>
    %324 = arith.maximumf %323, %307 : vector<2x1xf32>
    %325 = arith.maximumf %324, %314 : vector<2x1xf32>
    %326 = arith.maximumf %325, %321 : vector<2x1xf32>
    %327 = arith.subf %286, %326 : vector<2x1xf32>
    %328 = math.exp %327 : vector<2x1xf32>
    %329 = arith.subf %293, %326 : vector<2x1xf32>
    %330 = math.exp %329 : vector<2x1xf32>
    %331 = arith.subf %300, %326 : vector<2x1xf32>
    %332 = math.exp %331 : vector<2x1xf32>
    %333 = arith.subf %307, %326 : vector<2x1xf32>
    %334 = math.exp %333 : vector<2x1xf32>
    %335 = arith.subf %314, %326 : vector<2x1xf32>
    %336 = math.exp %335 : vector<2x1xf32>
    %337 = arith.subf %321, %326 : vector<2x1xf32>
    %338 = math.exp %337 : vector<2x1xf32>
    %339 = arith.addf %328, %330 : vector<2x1xf32>
    %340 = arith.addf %339, %332 : vector<2x1xf32>
    %341 = arith.addf %340, %334 : vector<2x1xf32>
    %342 = arith.addf %341, %336 : vector<2x1xf32>
    %343 = arith.addf %342, %338 : vector<2x1xf32>
    %cst_63 = arith.constant 1.000000e+00 : f32
    %344 = vector.broadcast %cst_63 : f32 to vector<2x1xf32>
    %345 = arith.divf %344, %343 : vector<2x1xf32>
    %346 = arith.mulf %328, %345 : vector<2x1xf32>
    %347 = arith.mulf %330, %345 : vector<2x1xf32>
    %348 = arith.mulf %332, %345 : vector<2x1xf32>
    %349 = arith.mulf %334, %345 : vector<2x1xf32>
    %350 = arith.mulf %336, %345 : vector<2x1xf32>
    %351 = arith.mulf %338, %345 : vector<2x1xf32>
    %352 = vector.broadcast %346 : vector<2x1xf32> to vector<2x32xf32>
    %353 = arith.mulf %352, %41 : vector<2x32xf32>
    %354 = vector.broadcast %346 : vector<2x1xf32> to vector<2x32xf32>
    %355 = arith.mulf %354, %236 : vector<2x32xf32>
    %356 = vector.broadcast %347 : vector<2x1xf32> to vector<2x32xf32>
    %357 = arith.mulf %356, %77 : vector<2x32xf32>
    %358 = arith.addf %353, %357 : vector<2x32xf32>
    %359 = vector.broadcast %347 : vector<2x1xf32> to vector<2x32xf32>
    %360 = arith.mulf %359, %200 : vector<2x32xf32>
    %361 = arith.addf %355, %360 : vector<2x32xf32>
    %362 = vector.broadcast %348 : vector<2x1xf32> to vector<2x32xf32>
    %363 = arith.mulf %362, %113 : vector<2x32xf32>
    %364 = arith.addf %358, %363 : vector<2x32xf32>
    %365 = vector.broadcast %348 : vector<2x1xf32> to vector<2x32xf32>
    %366 = arith.mulf %365, %164 : vector<2x32xf32>
    %367 = arith.addf %361, %366 : vector<2x32xf32>
    %368 = vector.broadcast %349 : vector<2x1xf32> to vector<2x32xf32>
    %369 = arith.mulf %368, %149 : vector<2x32xf32>
    %370 = arith.addf %364, %369 : vector<2x32xf32>
    %371 = vector.broadcast %349 : vector<2x1xf32> to vector<2x32xf32>
    %372 = arith.mulf %371, %128 : vector<2x32xf32>
    %373 = arith.addf %367, %372 : vector<2x32xf32>
    %374 = vector.broadcast %350 : vector<2x1xf32> to vector<2x32xf32>
    %375 = arith.mulf %374, %185 : vector<2x32xf32>
    %376 = arith.addf %370, %375 : vector<2x32xf32>
    %377 = vector.broadcast %350 : vector<2x1xf32> to vector<2x32xf32>
    %378 = arith.mulf %377, %92 : vector<2x32xf32>
    %379 = arith.addf %373, %378 : vector<2x32xf32>
    %380 = vector.broadcast %351 : vector<2x1xf32> to vector<2x32xf32>
    %381 = arith.mulf %380, %221 : vector<2x32xf32>
    %382 = arith.addf %376, %381 : vector<2x32xf32>
    %383 = vector.broadcast %351 : vector<2x1xf32> to vector<2x32xf32>
    %384 = arith.mulf %383, %56 : vector<2x32xf32>
    %385 = arith.addf %379, %384 : vector<2x32xf32>
    %c0_64 = arith.constant 0 : index
    %c0_65 = arith.constant 0 : index
    %386 = vector.load %arg7[%c0_64, %c0_65] : memref<64x3xf32, #tpu.memory_space<vmem>>, vector<64x3xf32>
    %387 = vector.extract_strided_slice %386 {offsets = [0, 0], sizes = [32, 3], strides = [1, 1]} : vector<64x3xf32> to vector<32x3xf32>
    %cst_66 = arith.constant dense<0.000000e+00> : vector<2x3xf32>
    %388 = tpu.matmul %382, %387, %cst_66 {dimension_numbers = #tpu.dot_dimension_numbers<[1], [0], [0], [1], [0, 0, 1, 1], [], []>, precision = #tpu.contract_precision<fp32>} : vector<2x32xf32>, vector<32x3xf32>, vector<2x3xf32> -> vector<2x3xf32>
    %389 = vector.extract_strided_slice %386 {offsets = [32, 0], sizes = [32, 3], strides = [1, 1]} : vector<64x3xf32> to vector<32x3xf32>
    %cst_67 = arith.constant dense<0.000000e+00> : vector<2x3xf32>
    %390 = tpu.matmul %385, %389, %cst_67 {dimension_numbers = #tpu.dot_dimension_numbers<[1], [0], [0], [1], [0, 0, 1, 1], [], []>, precision = #tpu.contract_precision<fp32>} : vector<2x32xf32>, vector<32x3xf32>, vector<2x3xf32> -> vector<2x3xf32>
    %391 = arith.addf %388, %390 : vector<2x3xf32>
    %c0_68 = arith.constant 0 : index
    %c0_69 = arith.constant 0 : index
    %392 = vector.load %arg8[%c0_68, %c0_69] : memref<1x3xf32, #tpu.memory_space<vmem>>, vector<1x3xf32>
    %393 = vector.broadcast %392 : vector<1x3xf32> to vector<2x3xf32>
    %394 = arith.addf %391, %393 : vector<2x3xf32>
    %c0_70 = arith.constant 0 : index
    %c0_71 = arith.constant 0 : index
    %395 = vector.load %arg9[%c0_70, %c0_71] : memref<2x3xf32, #tpu.memory_space<vmem>>, vector<2x3xf32>
    tpu.vector_store %arg9[%c0_70, %c0_71], %394 {strides = array<i32>} : memref<2x3xf32, #tpu.memory_space<vmem>>, vector<2x3xf32>,
    %396 = tpu.iota {dimensions = array<i32: 1>} : vector<1x6xi32>
    %c0_i32_72 = arith.constant 0 : i32
    %397 = vector.broadcast %c0_i32_72 : i32 to vector<1x6xi32>
    %398 = arith.cmpi eq, %396, %397 : vector<1x6xi32>
    %cst_73 = arith.constant 0.000000e+00 : f32
    %399 = vector.shape_cast %398 : vector<1x6xi1> to vector<1x6xi1>
    %400 = vector.broadcast %399 : vector<1x6xi1> to vector<2x6xi1>
    %401 = vector.shape_cast %346 : vector<2x1xf32> to vector<2x1xf32>
    %402 = vector.broadcast %401 : vector<2x1xf32> to vector<2x6xf32>
    %403 = vector.broadcast %cst_73 : f32 to vector<2x6xf32>
    %404 = arith.select %400, %402, %403 : vector<2x6xi1>, vector<2x6xf32>
    %c1_i32_74 = arith.constant 1 : i32
    %405 = vector.broadcast %c1_i32_74 : i32 to vector<1x6xi32>
    %406 = arith.cmpi eq, %396, %405 : vector<1x6xi32>
    %cst_75 = arith.constant 0.000000e+00 : f32
    %407 = vector.shape_cast %406 : vector<1x6xi1> to vector<1x6xi1>
    %408 = vector.broadcast %407 : vector<1x6xi1> to vector<2x6xi1>
    %409 = vector.shape_cast %347 : vector<2x1xf32> to vector<2x1xf32>
    %410 = vector.broadcast %409 : vector<2x1xf32> to vector<2x6xf32>
    %411 = vector.broadcast %cst_75 : f32 to vector<2x6xf32>
    %412 = arith.select %408, %410, %411 : vector<2x6xi1>, vector<2x6xf32>
    %413 = arith.addf %404, %412 : vector<2x6xf32>
    %c2_i32 = arith.constant 2 : i32
    %414 = vector.broadcast %c2_i32 : i32 to vector<1x6xi32>
    %415 = arith.cmpi eq, %396, %414 : vector<1x6xi32>
    %cst_76 = arith.constant 0.000000e+00 : f32
    %416 = vector.shape_cast %415 : vector<1x6xi1> to vector<1x6xi1>
    %417 = vector.broadcast %416 : vector<1x6xi1> to vector<2x6xi1>
    %418 = vector.shape_cast %348 : vector<2x1xf32> to vector<2x1xf32>
    %419 = vector.broadcast %418 : vector<2x1xf32> to vector<2x6xf32>
    %420 = vector.broadcast %cst_76 : f32 to vector<2x6xf32>
    %421 = arith.select %417, %419, %420 : vector<2x6xi1>, vector<2x6xf32>
    %422 = arith.addf %413, %421 : vector<2x6xf32>
    %c3_i32 = arith.constant 3 : i32
    %423 = vector.broadcast %c3_i32 : i32 to vector<1x6xi32>
    %424 = arith.cmpi eq, %396, %423 : vector<1x6xi32>
    %cst_77 = arith.constant 0.000000e+00 : f32
    %425 = vector.shape_cast %424 : vector<1x6xi1> to vector<1x6xi1>
    %426 = vector.broadcast %425 : vector<1x6xi1> to vector<2x6xi1>
    %427 = vector.shape_cast %349 : vector<2x1xf32> to vector<2x1xf32>
    %428 = vector.broadcast %427 : vector<2x1xf32> to vector<2x6xf32>
    %429 = vector.broadcast %cst_77 : f32 to vector<2x6xf32>
    %430 = arith.select %426, %428, %429 : vector<2x6xi1>, vector<2x6xf32>
    %431 = arith.addf %422, %430 : vector<2x6xf32>
    %c4_i32 = arith.constant 4 : i32
    %432 = vector.broadcast %c4_i32 : i32 to vector<1x6xi32>
    %433 = arith.cmpi eq, %396, %432 : vector<1x6xi32>
    %cst_78 = arith.constant 0.000000e+00 : f32
    %434 = vector.shape_cast %433 : vector<1x6xi1> to vector<1x6xi1>
    %435 = vector.broadcast %434 : vector<1x6xi1> to vector<2x6xi1>
    %436 = vector.shape_cast %350 : vector<2x1xf32> to vector<2x1xf32>
    %437 = vector.broadcast %436 : vector<2x1xf32> to vector<2x6xf32>
    %438 = vector.broadcast %cst_78 : f32 to vector<2x6xf32>
    %439 = arith.select %435, %437, %438 : vector<2x6xi1>, vector<2x6xf32>
    %440 = arith.addf %431, %439 : vector<2x6xf32>
    %c5_i32 = arith.constant 5 : i32
    %441 = vector.broadcast %c5_i32 : i32 to vector<1x6xi32>
    %442 = arith.cmpi eq, %396, %441 : vector<1x6xi32>
    %cst_79 = arith.constant 0.000000e+00 : f32
    %443 = vector.shape_cast %442 : vector<1x6xi1> to vector<1x6xi1>
    %444 = vector.broadcast %443 : vector<1x6xi1> to vector<2x6xi1>
    %445 = vector.shape_cast %351 : vector<2x1xf32> to vector<2x1xf32>
    %446 = vector.broadcast %445 : vector<2x1xf32> to vector<2x6xf32>
    %447 = vector.broadcast %cst_79 : f32 to vector<2x6xf32>
    %448 = arith.select %444, %446, %447 : vector<2x6xi1>, vector<2x6xf32>
    %449 = arith.addf %440, %448 : vector<2x6xf32>
    %c0_80 = arith.constant 0 : index
    %c0_81 = arith.constant 0 : index
    %450 = vector.load %arg10[%c0_80, %c0_81] : memref<2x6xf32, #tpu.memory_space<vmem>>, vector<2x6xf32>
    tpu.vector_store %arg10[%c0_80, %c0_81], %449 {strides = array<i32>} : memref<2x6xf32, #tpu.memory_space<vmem>>, vector<2x6xf32>,
    return
  }
}

</mosaic_0001>

<llo_original>
// kernel: cnn_bilstm_attention_forward.1
$region0: #{cnn_bilstm_attention_forward.1}
  #allocation0 [shape = 'u32[]', space=smem, size = 0x4, offset = 0x4, fixed_abs, tag = 'smem constant byte address 0x4 - core index']
  #allocation1 [shape = 'u32[144,128]{1,0:T(1,128)}', space=vmem, size = 0x12000, scoped, tag = 'internal scratch']
  %s0 = inlined_call_operand.vmem [shape: f32[12,48], index: 0, kind: input, shape index: {}]
  %s1 = inlined_call_operand.vmem [shape: f32[48,32], index: 1, kind: input, shape index: {}]
  %s2 = inlined_call_operand.vmem [shape: f32[1,32], index: 2, kind: input, shape index: {}]
  %s3 = inlined_call_operand.vmem [shape: f32[32,256], index: 3, kind: input, shape index: {}]
  %s4 = inlined_call_operand.vmem [shape: f32[1,256], index: 4, kind: input, shape index: {}]
  %s5 = inlined_call_operand.vmem [shape: f32[32,128], index: 5, kind: input, shape index: {}]
  %s6 = inlined_call_operand.vmem [shape: f32[32,128], index: 6, kind: input, shape index: {}]
  %s7 = inlined_call_operand.vmem [shape: f32[64,3], index: 7, kind: input, shape index: {}]
  %s8 = inlined_call_operand.vmem [shape: f32[1,3], index: 8, kind: input, shape index: {}]
  %s9 = inlined_call_operand.hbm [shape: f32[2,3], index: 9, kind: output, shape index: {0}]
  %s10 = inlined_call_operand.hbm [shape: f32[2,6], index: 10, kind: output, shape index: {1}]
  %11 = xla_tuple %s9, %s10
  %s12 = sld [smem:[#allocation0]]
  $region54: #{cnn_bilstm_attention_forward.1} parent=0
    _
  %s14 = ssub.s32 1, %s12
  %s15 = scalar_select 0, %s14, %s12
  $region1: #{cnn_bilstm_attention_forward.1} parent=0
    #allocation2 [shape = 'u8[1024]{0}', space=vmem, size = 0x400, scoped, tag = 'output window, operand 0, single buffered']
    #allocation3 [shape = 's32[1]{0}', space=sflag, size = 0x4, scoped, tag = 'scoped memory for cnn_bilstm_attention_forward.1']
    #allocation4 [shape = 'u8[1024]{0}', space=vmem, size = 0x400, scoped, tag = 'output window, operand 1, single buffered']
    #allocation5 [shape = 's32[1]{0}', space=sflag, size = 0x4, scoped, tag = 'scoped memory for cnn_bilstm_attention_forward.1']
    %16 = vsyncpa [#allocation3], 0
    %17 = vsyncpa [#allocation5], 0
    // Predicated region
    $region2: #{cnn_bilstm_attention_forward.1} parent=1 // pred_check
      _
    $region3: #{cnn_bilstm_attention_forward.1} parent=1 // pred_check_branch
      %19 = sbr.rel (0) target = $region5
    $region4: #{cnn_bilstm_attention_forward.1} parent=1 // pred_region
      _
    $region5: #{cnn_bilstm_attention_forward.1} parent=1 // pred_fallthru
      _
    // Predicated region
    $region6: #{cnn_bilstm_attention_forward.1} parent=1 // pred_check
      _
    $region7: #{cnn_bilstm_attention_forward.1} parent=1 // pred_check_branch
      %21 = sbr.rel (0) target = $region9
    $region8: #{cnn_bilstm_attention_forward.1} parent=1 // pred_region
      _
    $region9: #{cnn_bilstm_attention_forward.1} parent=1 // pred_fallthru
      _
    // Predicated region
    $region10: #{cnn_bilstm_attention_forward.1} parent=1 // pred_check
      _
    $region11: #{cnn_bilstm_attention_forward.1} parent=1 // pred_check_branch
      %23 = sbr.rel (0) target = $region13
    $region12: #{cnn_bilstm_attention_forward.1} parent=1 // pred_region
      _
    $region13: #{cnn_bilstm_attention_forward.1} parent=1 // pred_fallthru
      _
    // Predicated region
    $region14: #{cnn_bilstm_attention_forward.1} parent=1 // pred_check
      _
    $region15: #{cnn_bilstm_attention_forward.1} parent=1 // pred_check_branch
      %25 = sbr.rel (0) target = $region17
    $region16: #{cnn_bilstm_attention_forward.1} parent=1 // pred_region
      _
    $region17: #{cnn_bilstm_attention_forward.1} parent=1 // pred_fallthru
      _
    // Predicated region
    $region18: #{cnn_bilstm_attention_forward.1} parent=1 // pred_check
      _
    $region19: #{cnn_bilstm_attention_forward.1} parent=1 // pred_check_branch
      %27 = sbr.rel (0) target = $region21
    $region20: #{cnn_bilstm_attention_forward.1} parent=1 // pred_region
      _
    $region21: #{cnn_bilstm_attention_forward.1} parent=1 // pred_fallthru
      _
    // Predicated region
    $region22: #{cnn_bilstm_attention_forward.1} parent=1 // pred_check
      _
    $region23: #{cnn_bilstm_attention_forward.1} parent=1 // pred_check_branch
      %29 = sbr.rel (0) target = $region25
    $region24: #{cnn_bilstm_attention_forward.1} parent=1 // pred_region
      _
    $region25: #{cnn_bilstm_attention_forward.1} parent=1 // pred_fallthru
      _
    // Predicated region
    $region26: #{cnn_bilstm_attention_forward.1} parent=1 // pred_check
      _
    $region27: #{cnn_bilstm_attention_forward.1} parent=1 // pred_check_branch
      %31 = sbr.rel (0) target = $region29
    $region28: #{cnn_bilstm_attention_forward.1} parent=1 // pred_region
      _
    $region29: #{cnn_bilstm_attention_forward.1} parent=1 // pred_fallthru
      _
    // Predicated region
    $region30: #{cnn_bilstm_attention_forward.1} parent=1 // pred_check
      _
    $region31: #{cnn_bilstm_attention_forward.1} parent=1 // pred_check_branch
      %33 = sbr.rel (0) target = $region33
    $region32: #{cnn_bilstm_attention_forward.1} parent=1 // pred_region
      _
    $region33: #{cnn_bilstm_attention_forward.1} parent=1 // pred_fallthru
      _
    // Predicated region
    $region34: #{cnn_bilstm_attention_forward.1} parent=1 // pred_check
      _
    $region35: #{cnn_bilstm_attention_forward.1} parent=1 // pred_check_branch
      %35 = sbr.rel (0) target = $region37
    $region36: #{cnn_bilstm_attention_forward.1} parent=1 // pred_region
      _
    $region37: #{cnn_bilstm_attention_forward.1} parent=1 // pred_fallthru
      _
    %v36 = vld [vmem:[%s0] sm:$0xff]
    %v37 = vld [vmem:[%s0 + $0x8] sm:$0xf]
    %v38 = vld [vmem:[%s1] sm:$0xff]
    %v39 = vld [vmem:[%s1 + $0x8] sm:$0xff]
    %v40 = vld [vmem:[%s1 + $0x10] sm:$0xff]
    %v41 = vld [vmem:[%s1 + $0x18] sm:$0xff]
    %v42 = vld [vmem:[%s1 + $0x20] sm:$0xff]
    %v43 = vld [vmem:[%s1 + $0x28] sm:$0xff]
    %v44 = vld [vmem:[%s2] sm:$0x1]
    %v46 = vlaneseq
    %v47 = vshrl.u32 %v46, 7
    %v48 = vsub.s32 0, %v47
    %v49 = vrot.slane %v44, %v48
    %vm51 = vcmask 392192
    %v53 = vsel %vm51, %v36, 0
    %v56 = vsel %vm51, %v37, 0
    %58 = vmatprep.subr.mxu0 0.0
    %v59 = vand.u32 %v38, 4294901760
    %60 = vmatpush1.msra.mxu0 %v59
    %61 = vmatprep.subr.mxu0 0.0
    %v62 = vand.u32 %v39, 4294901760
    %63 = vmatpush1.msra.mxu0 %v62
    %64 = vmatprep.subr.mxu0 0.0
    %v65 = vand.u32 %v40, 4294901760
    %66 = vmatpush1.msra.mxu0 %v65
    %67 = vmatprep.subr.mxu0 0.0
    %v68 = vand.u32 %v41, 4294901760
    %69 = vmatpush1.msra.mxu0 %v68
    %70 = vmatprep.subr.mxu0 0.0
    %v71 = vand.u32 %v42, 4294901760
    %72 = vmatpush1.msra.mxu0 %v71
    %73 = vmatprep.subr.mxu0 0.0
    %v74 = vand.u32 %v43, 4294901760
    %75 = vmatpush1.msra.mxu0 %v74
    %76 = vmatprep.subr.mxu0 0.0
    %77 = vmatpush1.msra.mxu0 0.0
    %78 = vmatprep.subr.mxu0 0.0
    %79 = vmatpush1.msra.mxu0 0.0
    %80 = vmatprep.subr.mxu0 0.0
    %81 = vmatpush1.msra.mxu0 0.0
    %82 = vmatprep.subr.mxu0 0.0
    %83 = vmatpush1.msra.mxu0 0.0
    %84 = vmatprep.subr.mxu0 0.0
    %85 = vmatpush1.msra.mxu0 0.0
    %86 = vmatprep.subr.mxu0 0.0
    %87 = vmatpush1.msra.mxu0 0.0
    %88 = vmatprep.subr.mxu0 0.0
    %89 = vmatpush1.msra.mxu0 0.0
    %90 = vmatprep.subr.mxu0 0.0
    %91 = vmatpush1.msra.mxu0 0.0
    %92 = vmatprep.subr.mxu0 0.0
    %93 = vmatpush1.msra.mxu0 0.0
    %94 = vmatprep.subr.mxu0 0.0
    %95 = vmatpush1.msra.mxu0 0.0
    %96 = vmatprep.subr.mxu0 0.0
    %97 = vmatpush1.msra.mxu0 0.0
    %98 = vmatprep.subr.mxu0 0.0
    %99 = vmatpush1.msra.mxu0 0.0
    %100 = vmatprep.subr.mxu0 0.0
    %101 = vmatpush1.msra.mxu0 0.0
    %102 = vmatprep.subr.mxu0 0.0
    %103 = vmatpush1.msra.mxu0 0.0
    %104 = vmatprep.subr.mxu0 0.0
    %105 = vmatpush1.msra.mxu0 0.0
    %106 = vmatprep.subr.mxu0 0.0
    %107 = vmatpush1.msra.mxu0 0.0
    %108 = vmatprep.subr.mxu0 0.0
    %109 = vmatpush1.msra.mxu0 0.0
    %110 = vmatprep.subr.mxu0 0.0
    %111 = vmatpush1.msra.mxu0 0.0
    %112 = vmatprep.subr.mxu0 0.0
    %113 = vmatpush1.msra.mxu0 0.0
    %114 = vmatprep.subr.mxu0 0.0
    %115 = vmatpush1.msra.mxu0 0.0
    %116 = vmatprep.subr.mxu0 0.0
    %117 = vmatpush1.msra.mxu0 0.0
    %118 = vmatprep.subr.mxu0 0.0
    %119 = vmatpush1.msra.mxu0 0.0
    %120 = vmatprep.subr.mxu0 0.0
    %121 = vmatpush1.msra.mxu0 0.0
    %122 = vmatprep.subr.mxu0 0.0
    %123 = vmatpush1.msra.mxu0 0.0
    %124 = vmatprep.subr.mxu0 0.0
    %125 = vmatpush1.msra.mxu0 0.0
    %126 = vmatprep.subr.mxu0 0.0
    %127 = vmatpush1.msra.mxu0 0.0
    %128 = vmatprep.mubr.f32.mxu0 0.0
    %v129 = vand.u32 %v53, 4294901760
    %v130 = vsub.f32 %v53, %v129
    %v131 = vand.u32 %v130, 4294901760
    %v132 = vsub.f32 %v130, %v131
    %v133 = vand.u32 %v132, 4294901760
    %134 = vmatmul.mubr.f32.gmra.mrb[0].mxu0 %v133
    %v135 = vpop.f32.mrb[0].mxu0
    %v136 = vadd.f32 %v49, %v135
    %v137 = vpop.f32.mrb[0].mxu0
    %138 = vmatprep.mubr.f32.mxu0 0.0
    %v139 = vand.u32 %v56, 4294901760
    %v140 = vsub.f32 %v56, %v139
    %v141 = vand.u32 %v140, 4294901760
    %v142 = vsub.f32 %v140, %v141
    %v143 = vand.u32 %v142, 4294901760
    %144 = vmatmul.mubr.f32.gmra.mrb[0].mxu0 %v143
    %v145 = vpop.f32.mrb[0].mxu0
    %v146 = vadd.f32 %v49, %v145
    %v147 = vpop.f32.mrb[0].mxu0
    %148 = vdwg.mxu0
    %149 = vmatprep.subr.mxu0 0.0
    %v150 = vand.u32 %v38, 4294901760
    %v151 = vsub.f32 %v38, %v150
    %v152 = vand.u32 %v151, 4294901760
    %v153 = vsub.f32 %v151, %v152
    %v154 = vand.u32 %v153, 4294901760
    %155 = vmatpush1.msra.mxu0 %v154
    %156 = vmatprep.subr.mxu0 0.0
    %v157 = vand.u32 %v39, 4294901760
    %v158 = vsub.f32 %v39, %v157
    %v159 = vand.u32 %v158, 4294901760
    %v160 = vsub.f32 %v158, %v159
    %v161 = vand.u32 %v160, 4294901760
    %162 = vmatpush1.msra.mxu0 %v161
    %163 = vmatprep.subr.mxu0 0.0
    %v164 = vand.u32 %v40, 4294901760
    %v165 = vsub.f32 %v40, %v164
    %v166 = vand.u32 %v165, 4294901760
    %v167 = vsub.f32 %v165, %v166
    %v168 = vand.u32 %v167, 4294901760
    %169 = vmatpush1.msra.mxu0 %v168
    %170 = vmatprep.subr.mxu0 0.0
    %v171 = vand.u32 %v41, 4294901760
    %v172 = vsub.f32 %v41, %v171
    %v173 = vand.u32 %v172, 4294901760
    %v174 = vsub.f32 %v172, %v173
    %v175 = vand.u32 %v174, 4294901760
    %176 = vmatpush1.msra.mxu0 %v175
    %177 = vmatprep.subr.mxu0 0.0
    %v178 = vand.u32 %v42, 4294901760
    %v179 = vsub.f32 %v42, %v178
    %v180 = vand.u32 %v179, 4294901760
    %v181 = vsub.f32 %v179, %v180
    %v182 = vand.u32 %v181, 4294901760
    %183 = vmatpush1.msra.mxu0 %v182
    %184 = vmatprep.subr.mxu0 0.0
    %v185 = vand.u32 %v43, 4294901760
    %v186 = vsub.f32 %v43, %v185
    %v187 = vand.u32 %v186, 4294901760
    %v188 = vsub.f32 %v186, %v187
    %v189 = vand.u32 %v188, 4294901760
    %190 = vmatpush1.msra.mxu0 %v189
    %191 = vmatprep.subr.mxu0 0.0
    %192 = vmatpush1.msra.mxu0 0.0
    %193 = vmatprep.subr.mxu0 0.0
    %194 = vmatpush1.msra.mxu0 0.0
    %195 = vmatprep.subr.mxu0 0.0
    %196 = vmatpush1.msra.mxu0 0.0
    %197 = vmatprep.subr.mxu0 0.0
    %198 = vmatpush1.msra.mxu0 0.0
    %199 = vmatprep.subr.mxu0 0.0
    %200 = vmatpush1.msra.mxu0 0.0
    %201 = vmatprep.subr.mxu0 0.0
    %202 = vmatpush1.msra.mxu0 0.0
    %203 = vmatprep.subr.mxu0 0.0
    %204 = vmatpush1.msra.mxu0 0.0
    %205 = vmatprep.subr.mxu0 0.0
    %206 = vmatpush1.msra.mxu0 0.0
    %207 = vmatprep.subr.mxu0 0.0
    %208 = vmatpush1.msra.mxu0 0.0
    %209 = vmatprep.subr.mxu0 0.0
    %210 = vmatpush1.msra.mxu0 0.0
    %211 = vmatprep.subr.mxu0 0.0
    %212 = vmatpush1.msra.mxu0 0.0
    %213 = vmatprep.subr.mxu0 0.0
    %214 = vmatpush1.msra.mxu0 0.0
    %215 = vmatprep.subr.mxu0 0.0
    %216 = vmatpush1.msra.mxu0 0.0
    %217 = vmatprep.subr.mxu0 0.0
    %218 = vmatpush1.msra.mxu0 0.0
    %219 = vmatprep.subr.mxu0 0.0
    %220 = vmatpush1.msra.mxu0 0.0
    %221 = vmatprep.subr.mxu0 0.0
    %222 = vmatpush1.msra.mxu0 0.0
    %223 = vmatprep.subr.mxu0 0.0
    %224 = vmatpush1.msra.mxu0 0.0
    %225 = vmatprep.subr.mxu0 0.0
    %226 = vmatpush1.msra.mxu0 0.0
    %227 = vmatprep.subr.mxu0 0.0
    %228 = vmatpush1.msra.mxu0 0.0
    %229 = vmatprep.subr.mxu0 0.0
    %230 = vmatpush1.msra.mxu0 0.0
    %231 = vmatprep.subr.mxu0 0.0
    %232 = vmatpush1.msra.mxu0 0.0
    %233 = vmatprep.subr.mxu0 0.0
    %234 = vmatpush1.msra.mxu0 0.0
    %235 = vmatprep.subr.mxu0 0.0
    %236 = vmatpush1.msra.mxu0 0.0
    %237 = vmatprep.subr.mxu0 0.0
    %238 = vmatpush1.msra.mxu0 0.0
    %239 = vmatprep.subr.mxu0 0.0
    %240 = vmatpush1.msra.mxu0 0.0
    %241 = vmatprep.subr.mxu0 0.0
    %242 = vmatpush1.msra.mxu0 0.0
    %243 = vmatprep.mubr.f32.mxu0 0.0
    %v244 = vand.u32 %v53, 4294901760
    %245 = vmatmul.mubr.f32.gmra.mrb[0].mxu0 %v244
    %v246 = vpop.f32.mrb[0].mxu0
    %v247 = vadd.f32 %v136, %v246
    %v248 = vpop.f32.mrb[0].mxu0
    %249 = vmatprep.mubr.f32.mxu0 0.0
    %v250 = vand.u32 %v56, 4294901760
    %251 = vmatmul.mubr.f32.gmra.mrb[0].mxu0 %v250
    %v252 = vpop.f32.mrb[0].mxu0
    %v253 = vadd.f32 %v146, %v252
    %v254 = vpop.f32.mrb[0].mxu0
    %255 = vdwg.mxu0
    %256 = vmatprep.subr.mxu0 0.0
    %v257 = vand.u32 %v38, 4294901760
    %v258 = vsub.f32 %v38, %v257
    %259 = vmatpush1.msra.mxu0 %v258
    %260 = vmatprep.subr.mxu0 0.0
    %v261 = vand.u32 %v39, 4294901760
    %v262 = vsub.f32 %v39, %v261
    %263 = vmatpush1.msra.mxu0 %v262
    %264 = vmatprep.subr.mxu0 0.0
    %v265 = vand.u32 %v40, 4294901760
    %v266 = vsub.f32 %v40, %v265
    %267 = vmatpush1.msra.mxu0 %v266
    %268 = vmatprep.subr.mxu0 0.0
    %v269 = vand.u32 %v41, 4294901760
    %v270 = vsub.f32 %v41, %v269
    %271 = vmatpush1.msra.mxu0 %v270
    %272 = vmatprep.subr.mxu0 0.0
    %v273 = vand.u32 %v42, 4294901760
    %v274 = vsub.f32 %v42, %v273
    %275 = vmatpush1.msra.mxu0 %v274
    %276 = vmatprep.subr.mxu0 0.0
    %v277 = vand.u32 %v43, 4294901760
    %v278 = vsub.f32 %v43, %v277
    %279 = vmatpush1.msra.mxu0 %v278
    %280 = vmatprep.subr.mxu0 0.0
    %281 = vmatpush1.msra.mxu0 0.0
    %282 = vmatprep.subr.mxu0 0.0
    %283 = vmatpush1.msra.mxu0 0.0
    %284 = vmatprep.subr.mxu0 0.0
    %285 = vmatpush1.msra.mxu0 0.0
    %286 = vmatprep.subr.mxu0 0.0
    %287 = vmatpush1.msra.mxu0 0.0
    %288 = vmatprep.subr.mxu0 0.0
    %289 = vmatpush1.msra.mxu0 0.0
    %290 = vmatprep.subr.mxu0 0.0
    %291 = vmatpush1.msra.mxu0 0.0
    %292 = vmatprep.subr.mxu0 0.0
    %293 = vmatpush1.msra.mxu0 0.0
    %294 = vmatprep.subr.mxu0 0.0
    %295 = vmatpush1.msra.mxu0 0.0
    %296 = vmatprep.subr.mxu0 0.0
    %297 = vmatpush1.msra.mxu0 0.0
    %298 = vmatprep.subr.mxu0 0.0
    %299 = vmatpush1.msra.mxu0 0.0
    %300 = vmatprep.subr.mxu0 0.0
    %301 = vmatpush1.msra.mxu0 0.0
    %302 = vmatprep.subr.mxu0 0.0
    %303 = vmatpush1.msra.mxu0 0.0
    %304 = vmatprep.subr.mxu0 0.0
    %305 = vmatpush1.msra.mxu0 0.0
    %306 = vmatprep.subr.mxu0 0.0
    %307 = vmatpush1.msra.mxu0 0.0
    %308 = vmatprep.subr.mxu0 0.0
    %309 = vmatpush1.msra.mxu0 0.0
    %310 = vmatprep.subr.mxu0 0.0
    %311 = vmatpush1.msra.mxu0 0.0
    %312 = vmatprep.subr.mxu0 0.0
    %313 = vmatpush1.msra.mxu0 0.0
    %314 = vmatprep.subr.mxu0 0.0
    %315 = vmatpush1.msra.mxu0 0.0
    %316 = vmatprep.subr.mxu0 0.0
    %317 = vmatpush1.msra.mxu0 0.0
    %318 = vmatprep.subr.mxu0 0.0
    %319 = vmatpush1.msra.mxu0 0.0
    %320 = vmatprep.subr.mxu0 0.0
    %321 = vmatpush1.msra.mxu0 0.0
    %322 = vmatprep.subr.mxu0 0.0
    %323 = vmatpush1.msra.mxu0 0.0
    %324 = vmatprep.subr.mxu0 0.0
    %325 = vmatpush1.msra.mxu0 0.0
    %326 = vmatprep.subr.mxu0 0.0
    %327 = vmatpush1.msra.mxu0 0.0
    %328 = vmatprep.subr.mxu0 0.0
    %329 = vmatpush1.msra.mxu0 0.0
    %330 = vmatprep.subr.mxu0 0.0
    %331 = vmatpush1.msra.mxu0 0.0
    %332 = vmatprep.mubr.f32.mxu0 0.0
    %v333 = vand.u32 %v53, 4294901760
    %v334 = vsub.f32 %v53, %v333
    %335 = vmatmul.mubr.f32.gmra.mrb[0].mxu0 %v334
    %v336 = vpop.f32.mrb[0].mxu0
    %v337 = vadd.f32 %v247, %v336
    %v338 = vpop.f32.mrb[0].mxu0
    %339 = vmatprep.mubr.f32.mxu0 0.0
    %v340 = vand.u32 %v56, 4294901760
    %v341 = vsub.f32 %v56, %v340
    %342 = vmatmul.mubr.f32.gmra.mrb[0].mxu0 %v341
    %v343 = vpop.f32.mrb[0].mxu0
    %v344 = vadd.f32 %v253, %v343
    %v345 = vpop.f32.mrb[0].mxu0
    %346 = vdwg.mxu0
    %347 = vmatprep.subr.mxu0 0.0
    %v348 = vand.u32 %v38, 4294901760
    %349 = vmatpush1.msra.mxu0 %v348
    %350 = vmatprep.subr.mxu0 0.0
    %v351 = vand.u32 %v39, 4294901760
    %352 = vmatpush1.msra.mxu0 %v351
    %353 = vmatprep.subr.mxu0 0.0
    %v354 = vand.u32 %v40, 4294901760
    %355 = vmatpush1.msra.mxu0 %v354
    %356 = vmatprep.subr.mxu0 0.0
    %v357 = vand.u32 %v41, 4294901760
    %358 = vmatpush1.msra.mxu0 %v357
    %359 = vmatprep.subr.mxu0 0.0
    %v360 = vand.u32 %v42, 4294901760
    %361 = vmatpush1.msra.mxu0 %v360
    %362 = vmatprep.subr.mxu0 0.0
    %v363 = vand.u32 %v43, 4294901760
    %364 = vmatpush1.msra.mxu0 %v363
    %365 = vmatprep.subr.mxu0 0.0
    %366 = vmatpush1.msra.mxu0 0.0
    %367 = vmatprep.subr.mxu0 0.0
    %368 = vmatpush1.msra.mxu0 0.0
    %369 = vmatprep.subr.mxu0 0.0
    %370 = vmatpush1.msra.mxu0 0.0
    %371 = vmatprep.subr.mxu0 0.0
    %372 = vmatpush1.msra.mxu0 0.0
    %373 = vmatprep.subr.mxu0 0.0
    %374 = vmatpush1.msra.mxu0 0.0
    %375 = vmatprep.subr.mxu0 0.0
    %376 = vmatpush1.msra.mxu0 0.0
    %377 = vmatprep.subr.mxu0 0.0
    %378 = vmatpush1.msra.mxu0 0.0
    %379 = vmatprep.subr.mxu0 0.0
    %380 = vmatpush1.msra.mxu0 0.0
    %381 = vmatprep.subr.mxu0 0.0
    %382 = vmatpush1.msra.mxu0 0.0
    %383 = vmatprep.subr.mxu0 0.0
    %384 = vmatpush1.msra.mxu0 0.0
    %385 = vmatprep.subr.mxu0 0.0
    %386 = vmatpush1.msra.mxu0 0.0
    %387 = vmatprep.subr.mxu0 0.0
    %388 = vmatpush1.msra.mxu0 0.0
    %389 = vmatprep.subr.mxu0 0.0
    %390 = vmatpush1.msra.mxu0 0.0
    %391 = vmatprep.subr.mxu0 0.0
    %392 = vmatpush1.msra.mxu0 0.0
    %393 = vmatprep.subr.mxu0 0.0
    %394 = vmatpush1.msra.mxu0 0.0
    %395 = vmatprep.subr.mxu0 0.0
    %396 = vmatpush1.msra.mxu0 0.0
    %397 = vmatprep.subr.mxu0 0.0
    %398 = vmatpush1.msra.mxu0 0.0
    %399 = vmatprep.subr.mxu0 0.0
    %400 = vmatpush1.msra.mxu0 0.0
    %401 = vmatprep.subr.mxu0 0.0
    %402 = vmatpush1.msra.mxu0 0.0
    %403 = vmatprep.subr.mxu0 0.0
    %404 = vmatpush1.msra.mxu0 0.0
    %405 = vmatprep.subr.mxu0 0.0
    %406 = vmatpush1.msra.mxu0 0.0
    %407 = vmatprep.subr.mxu0 0.0
    %408 = vmatpush1.msra.mxu0 0.0
    %409 = vmatprep.subr.mxu0 0.0
    %410 = vmatpush1.msra.mxu0 0.0
    %411 = vmatprep.subr.mxu0 0.0
    %412 = vmatpush1.msra.mxu0 0.0
    %413 = vmatprep.subr.mxu0 0.0
    %414 = vmatpush1.msra.mxu0 0.0
    %415 = vmatprep.subr.mxu0 0.0
    %416 = vmatpush1.msra.mxu0 0.0
    %417 = vmatprep.mubr.f32.mxu0 0.0
    %v418 = vand.u32 %v53, 4294901760
    %v419 = vsub.f32 %v53, %v418
    %v420 = vand.u32 %v419, 4294901760
    %421 = vmatmul.mubr.f32.gmra.mrb[0].mxu0 %v420
    %v422 = vpop.f32.mrb[0].mxu0
    %v423 = vadd.f32 %v337, %v422
    %v424 = vpop.f32.mrb[0].mxu0
    %425 = vmatprep.mubr.f32.mxu0 0.0
    %v426 = vand.u32 %v56, 4294901760
    %v427 = vsub.f32 %v56, %v426
    %v428 = vand.u32 %v427, 4294901760
    %429 = vmatmul.mubr.f32.gmra.mrb[0].mxu0 %v428
    %v430 = vpop.f32.mrb[0].mxu0
    %v431 = vadd.f32 %v344, %v430
    %v432 = vpop.f32.mrb[0].mxu0
    %433 = vdwg.mxu0
    %434 = vmatprep.subr.mxu0 0.0
    %v435 = vand.u32 %v38, 4294901760
    %v436 = vsub.f32 %v38, %v435
    %v437 = vand.u32 %v436, 4294901760
    %438 = vmatpush1.msra.mxu0 %v437
    %439 = vmatprep.subr.mxu0 0.0
    %v440 = vand.u32 %v39, 4294901760
    %v441 = vsub.f32 %v39, %v440
    %v442 = vand.u32 %v441, 4294901760
    %443 = vmatpush1.msra.mxu0 %v442
    %444 = vmatprep.subr.mxu0 0.0
    %v445 = vand.u32 %v40, 4294901760
    %v446 = vsub.f32 %v40, %v445
    %v447 = vand.u32 %v446, 4294901760
    %448 = vmatpush1.msra.mxu0 %v447
    %449 = vmatprep.subr.mxu0 0.0
    %v450 = vand.u32 %v41, 4294901760
    %v451 = vsub.f32 %v41, %v450
    %v452 = vand.u32 %v451, 4294901760
    %453 = vmatpush1.msra.mxu0 %v452
    %454 = vmatprep.subr.mxu0 0.0
    %v455 = vand.u32 %v42, 4294901760
    %v456 = vsub.f32 %v42, %v455
    %v457 = vand.u32 %v456, 4294901760
    %458 = vmatpush1.msra.mxu0 %v457
    %459 = vmatprep.subr.mxu0 0.0
    %v460 = vand.u32 %v43, 4294901760
    %v461 = vsub.f32 %v43, %v460
    %v462 = vand.u32 %v461, 4294901760
    %463 = vmatpush1.msra.mxu0 %v462
    %464 = vmatprep.subr.mxu0 0.0
    %465 = vmatpush1.msra.mxu0 0.0
    %466 = vmatprep.subr.mxu0 0.0
    %467 = vmatpush1.msra.mxu0 0.0
    %468 = vmatprep.subr.mxu0 0.0
    %469 = vmatpush1.msra.mxu0 0.0
    %470 = vmatprep.subr.mxu0 0.0
    %471 = vmatpush1.msra.mxu0 0.0
    %472 = vmatprep.subr.mxu0 0.0
    %473 = vmatpush1.msra.mxu0 0.0
    %474 = vmatprep.subr.mxu0 0.0
    %475 = vmatpush1.msra.mxu0 0.0
    %476 = vmatprep.subr.mxu0 0.0
    %477 = vmatpush1.msra.mxu0 0.0
    %478 = vmatprep.subr.mxu0 0.0
    %479 = vmatpush1.msra.mxu0 0.0
    %480 = vmatprep.subr.mxu0 0.0
    %481 = vmatpush1.msra.mxu0 0.0
    %482 = vmatprep.subr.mxu0 0.0
    %483 = vmatpush1.msra.mxu0 0.0
    %484 = vmatprep.subr.mxu0 0.0
    %485 = vmatpush1.msra.mxu0 0.0
    %486 = vmatprep.subr.mxu0 0.0
    %487 = vmatpush1.msra.mxu0 0.0
    %488 = vmatprep.subr.mxu0 0.0
    %489 = vmatpush1.msra.mxu0 0.0
    %490 = vmatprep.subr.mxu0 0.0
    %491 = vmatpush1.msra.mxu0 0.0
    %492 = vmatprep.subr.mxu0 0.0
    %493 = vmatpush1.msra.mxu0 0.0
    %494 = vmatprep.subr.mxu0 0.0
    %495 = vmatpush1.msra.mxu0 0.0
    %496 = vmatprep.subr.mxu0 0.0
    %497 = vmatpush1.msra.mxu0 0.0
    %498 = vmatprep.subr.mxu0 0.0
    %499 = vmatpush1.msra.mxu0 0.0
    %500 = vmatprep.subr.mxu0 0.0
    %501 = vmatpush1.msra.mxu0 0.0
    %502 = vmatprep.subr.mxu0 0.0
    %503 = vmatpush1.msra.mxu0 0.0
    %504 = vmatprep.subr.mxu0 0.0
    %505 = vmatpush1.msra.mxu0 0.0
    %506 = vmatprep.subr.mxu0 0.0
    %507 = vmatpush1.msra.mxu0 0.0
    %508 = vmatprep.subr.mxu0 0.0
    %509 = vmatpush1.msra.mxu0 0.0
    %510 = vmatprep.subr.mxu0 0.0
    %511 = vmatpush1.msra.mxu0 0.0
    %512 = vmatprep.subr.mxu0 0.0
    %513 = vmatpush1.msra.mxu0 0.0
    %514 = vmatprep.subr.mxu0 0.0
    %515 = vmatpush1.msra.mxu0 0.0
    %516 = vmatprep.mubr.f32.mxu0 0.0
    %v517 = vand.u32 %v53, 4294901760
    %518 = vmatmul.mubr.f32.gmra.mrb[0].mxu0 %v517
    %v519 = vpop.f32.mrb[0].mxu0
    %v520 = vadd.f32 %v423, %v519
    %v521 = vpop.f32.mrb[0].mxu0
    %522 = vmatprep.mubr.f32.mxu0 0.0
    %v523 = vand.u32 %v56, 4294901760
    %524 = vmatmul.mubr.f32.gmra.mrb[0].mxu0 %v523
    %v525 = vpop.f32.mrb[0].mxu0
    %v526 = vadd.f32 %v431, %v525
    %v527 = vpop.f32.mrb[0].mxu0
    %528 = vdwg.mxu0
    %529 = vmatprep.subr.mxu0 0.0
    %v530 = vand.u32 %v38, 4294901760
    %531 = vmatpush1.msra.mxu0 %v530
    %532 = vmatprep.subr.mxu0 0.0
    %v533 = vand.u32 %v39, 4294901760
    %534 = vmatpush1.msra.mxu0 %v533
    %535 = vmatprep.subr.mxu0 0.0
    %v536 = vand.u32 %v40, 4294901760
    %537 = vmatpush1.msra.mxu0 %v536
    %538 = vmatprep.subr.mxu0 0.0
    %v539 = vand.u32 %v41, 4294901760
    %540 = vmatpush1.msra.mxu0 %v539
    %541 = vmatprep.subr.mxu0 0.0
    %v542 = vand.u32 %v42, 4294901760
    %543 = vmatpush1.msra.mxu0 %v542
    %544 = vmatprep.subr.mxu0 0.0
    %v545 = vand.u32 %v43, 4294901760
    %546 = vmatpush1.msra.mxu0 %v545
    %547 = vmatprep.subr.mxu0 0.0
    %548 = vmatpush1.msra.mxu0 0.0
    %549 = vmatprep.subr.mxu0 0.0
    %550 = vmatpush1.msra.mxu0 0.0
    %551 = vmatprep.subr.mxu0 0.0
    %552 = vmatpush1.msra.mxu0 0.0
    %553 = vmatprep.subr.mxu0 0.0
    %554 = vmatpush1.msra.mxu0 0.0
    %555 = vmatprep.subr.mxu0 0.0
    %556 = vmatpush1.msra.mxu0 0.0
    %557 = vmatprep.subr.mxu0 0.0
    %558 = vmatpush1.msra.mxu0 0.0
    %559 = vmatprep.subr.mxu0 0.0
    %560 = vmatpush1.msra.mxu0 0.0
    %561 = vmatprep.subr.mxu0 0.0
    %562 = vmatpush1.msra.mxu0 0.0
    %563 = vmatprep.subr.mxu0 0.0
    %564 = vmatpush1.msra.mxu0 0.0
    %565 = vmatprep.subr.mxu0 0.0
    %566 = vmatpush1.msra.mxu0 0.0
    %567 = vmatprep.subr.mxu0 0.0
    %568 = vmatpush1.msra.mxu0 0.0
    %569 = vmatprep.subr.mxu0 0.0
    %570 = vmatpush1.msra.mxu0 0.0
    %571 = vmatprep.subr.mxu0 0.0
    %572 = vmatpush1.msra.mxu0 0.0
    %573 = vmatprep.subr.mxu0 0.0
    %574 = vmatpush1.msra.mxu0 0.0
    %575 = vmatprep.subr.mxu0 0.0
    %576 = vmatpush1.msra.mxu0 0.0
    %577 = vmatprep.subr.mxu0 0.0
    %578 = vmatpush1.msra.mxu0 0.0
    %579 = vmatprep.subr.mxu0 0.0
    %580 = vmatpush1.msra.mxu0 0.0
    %581 = vmatprep.subr.mxu0 0.0
    %582 = vmatpush1.msra.mxu0 0.0
    %583 = vmatprep.subr.mxu0 0.0
    %584 = vmatpush1.msra.mxu0 0.0
    %585 = vmatprep.subr.mxu0 0.0
    %586 = vmatpush1.msra.mxu0 0.0
    %587 = vmatprep.subr.mxu0 0.0
    %588 = vmatpush1.msra.mxu0 0.0
    %589 = vmatprep.subr.mxu0 0.0
    %590 = vmatpush1.msra.mxu0 0.0
    %591 = vmatprep.subr.mxu0 0.0
    %592 = vmatpush1.msra.mxu0 0.0
    %593 = vmatprep.subr.mxu0 0.0
    %594 = vmatpush1.msra.mxu0 0.0
    %595 = vmatprep.subr.mxu0 0.0
    %596 = vmatpush1.msra.mxu0 0.0
    %597 = vmatprep.subr.mxu0 0.0
    %598 = vmatpush1.msra.mxu0 0.0
    %599 = vmatprep.mubr.f32.mxu0 0.0
    %v600 = vand.u32 %v53, 4294901760
    %601 = vmatmul.mubr.f32.gmra.mrb[0].mxu0 %v600
    %v602 = vpop.f32.mrb[0].mxu0
    %v603 = vadd.f32 %v520, %v602
    %v604 = vpop.f32.mrb[0].mxu0
    %605 = vmatprep.mubr.f32.mxu0 0.0
    %v606 = vand.u32 %v56, 4294901760
    %607 = vmatmul.mubr.f32.gmra.mrb[0].mxu0 %v606
    %v608 = vpop.f32.mrb[0].mxu0
    %v609 = vadd.f32 %v526, %v608
    %v610 = vpop.f32.mrb[0].mxu0
    %611 = vdwg.mxu0
    %v612 = vmax.f32 %v603, 0.0
    %v613 = vmax.f32 %v609, 0.0
    %v614 = vld [vmem:[%s3] sm:$0xff]
    %v615 = vld [vmem:[%s3 + $0x8] sm:$0xff]
    %v616 = vld [vmem:[%s3 + $0x10] sm:$0xff]
    %v617 = vld [vmem:[%s3 + $0x18] sm:$0xff]
    %v618 = vld [vmem:[%s3 + $0x20] sm:$0xff]
    %v619 = vld [vmem:[%s3 + $0x28] sm:$0xff]
    %v620 = vld [vmem:[%s3 + $0x30] sm:$0xff]
    %v621 = vld [vmem:[%s3 + $0x38] sm:$0xff]
    %v622 = vld [vmem:[%s4] sm:$0x3]
    %v624 = vlaneseq
    %v625 = vshrl.u32 %v624, 7
    %v626 = vsub.s32 0, %v625
    %v627 = vrot.slane %v622, %v626
    %v628 = vlaneseq
    %v629 = vshrl.u32 %v628, 7
    %v630 = vsub.s32 1, %v629
    %v631 = vrot.slane %v622, %v630
    %vm634 = vcmask 261120
    %v636 = vsel %vm634, %v612, 0
    %v639 = vsel %vm634, %v613, 0
    %v641 = vand.u32 %v615, 4294901760
    %642 = vmatprep.subr.mxu0 %v641
    %v643 = vand.u32 %v614, 4294901760
    %644 = vmatpush1.msra.mxu0 %v643
    %v645 = vand.u32 %v617, 4294901760
    %646 = vmatprep.subr.mxu0 %v645
    %v647 = vand.u32 %v616, 4294901760
    %648 = vmatpush1.msra.mxu0 %v647
    %v649 = vand.u32 %v619, 4294901760
    %650 = vmatprep.subr.mxu0 %v649
    %v651 = vand.u32 %v618, 4294901760
    %652 = vmatpush1.msra.mxu0 %v651
    %v653 = vand.u32 %v621, 4294901760
    %654 = vmatprep.subr.mxu0 %v653
    %v655 = vand.u32 %v620, 4294901760
    %656 = vmatpush1.msra.mxu0 %v655
    %657 = vmatprep.subr.mxu0 0.0
    %658 = vmatpush1.msra.mxu0 0.0
    %659 = vmatprep.subr.mxu0 0.0
    %660 = vmatpush1.msra.mxu0 0.0
    %661 = vmatprep.subr.mxu0 0.0
    %662 = vmatpush1.msra.mxu0 0.0
    %663 = vmatprep.subr.mxu0 0.0
    %664 = vmatpush1.msra.mxu0 0.0
    %665 = vmatprep.subr.mxu0 0.0
    %666 = vmatpush1.msra.mxu0 0.0
    %667 = vmatprep.subr.mxu0 0.0
    %668 = vmatpush1.msra.mxu0 0.0
    %669 = vmatprep.subr.mxu0 0.0
    %670 = vmatpush1.msra.mxu0 0.0
    %671 = vmatprep.subr.mxu0 0.0
    %672 = vmatpush1.msra.mxu0 0.0
    %673 = vmatprep.subr.mxu0 0.0
    %674 = vmatpush1.msra.mxu0 0.0
    %675 = vmatprep.subr.mxu0 0.0
    %676 = vmatpush1.msra.mxu0 0.0
    %677 = vmatprep.subr.mxu0 0.0
    %678 = vmatpush1.msra.mxu0 0.0
    %679 = vmatprep.subr.mxu0 0.0
    %680 = vmatpush1.msra.mxu0 0.0
    %681 = vmatprep.subr.mxu0 0.0
    %682 = vmatpush1.msra.mxu0 0.0
    %683 = vmatprep.subr.mxu0 0.0
    %684 = vmatpush1.msra.mxu0 0.0
    %685 = vmatprep.subr.mxu0 0.0
    %686 = vmatpush1.msra.mxu0 0.0
    %687 = vmatprep.subr.mxu0 0.0
    %688 = vmatpush1.msra.mxu0 0.0
    %689 = vmatprep.subr.mxu0 0.0
    %690 = vmatpush1.msra.mxu0 0.0
    %691 = vmatprep.subr.mxu0 0.0
    %692 = vmatpush1.msra.mxu0 0.0
    %693 = vmatprep.subr.mxu0 0.0
    %694 = vmatpush1.msra.mxu0 0.0
    %695 = vmatprep.subr.mxu0 0.0
    %696 = vmatpush1.msra.mxu0 0.0
    %697 = vmatprep.subr.mxu0 0.0
    %698 = vmatpush1.msra.mxu0 0.0
    %699 = vmatprep.subr.mxu0 0.0
    %700 = vmatpush1.msra.mxu0 0.0
    %701 = vmatprep.subr.mxu0 0.0
    %702 = vmatpush1.msra.mxu0 0.0
    %703 = vmatprep.subr.mxu0 0.0
    %704 = vmatpush1.msra.mxu0 0.0
    %705 = vmatprep.subr.mxu0 0.0
    %706 = vmatpush1.msra.mxu0 0.0
    %707 = vmatprep.subr.mxu0 0.0
    %708 = vmatpush1.msra.mxu0 0.0
    %709 = vmatprep.subr.mxu0 0.0
    %710 = vmatpush1.msra.mxu0 0.0
    %711 = vmatprep.subr.mxu0 0.0
    %712 = vmatpush1.msra.mxu0 0.0
    %713 = vmatprep.mubr.f32.mxu0 0.0
    %v714 = vand.u32 %v636, 4294901760
    %v715 = vsub.f32 %v636, %v714
    %v716 = vand.u32 %v715, 4294901760
    %v717 = vsub.f32 %v715, %v716
    %v718 = vand.u32 %v717, 4294901760
    %719 = vmatmul.mubr.f32.gmra.mrb[0].mxu0 %v718
    %v720 = vpop.f32.mrb[0].mxu0
    %v721 = vadd.f32 %v627, %v720
    %v722 = vpop.f32.mrb[0].mxu0
    %v723 = vadd.f32 %v631, %v722
    %724 = vmatprep.mubr.f32.mxu0 0.0
    %v725 = vand.u32 %v639, 4294901760
    %v726 = vsub.f32 %v639, %v725
    %v727 = vand.u32 %v726, 4294901760
    %v728 = vsub.f32 %v726, %v727
    %v729 = vand.u32 %v728, 4294901760
    %730 = vmatmul.mubr.f32.gmra.mrb[0].mxu0 %v729
    %v731 = vpop.f32.mrb[0].mxu0
    %v732 = vadd.f32 %v627, %v731
    %v733 = vpop.f32.mrb[0].mxu0
    %v734 = vadd.f32 %v631, %v733
    %735 = vdwg.mxu0
    %v736 = vand.u32 %v615, 4294901760
    %v737 = vsub.f32 %v615, %v736
    %v738 = vand.u32 %v737, 4294901760
    %v739 = vsub.f32 %v737, %v738
    %v740 = vand.u32 %v739, 4294901760
    %741 = vmatprep.subr.mxu0 %v740
    %v742 = vand.u32 %v614, 4294901760
    %v743 = vsub.f32 %v614, %v742
    %v744 = vand.u32 %v743, 4294901760
    %v745 = vsub.f32 %v743, %v744
    %v746 = vand.u32 %v745, 4294901760
    %747 = vmatpush1.msra.mxu0 %v746
    %v748 = vand.u32 %v617, 4294901760
    %v749 = vsub.f32 %v617, %v748
    %v750 = vand.u32 %v749, 4294901760
    %v751 = vsub.f32 %v749, %v750
    %v752 = vand.u32 %v751, 4294901760
    %753 = vmatprep.subr.mxu0 %v752
    %v754 = vand.u32 %v616, 4294901760
    %v755 = vsub.f32 %v616, %v754
    %v756 = vand.u32 %v755, 4294901760
    %v757 = vsub.f32 %v755, %v756
    %v758 = vand.u32 %v757, 4294901760
    %759 = vmatpush1.msra.mxu0 %v758
    %v760 = vand.u32 %v619, 4294901760
    %v761 = vsub.f32 %v619, %v760
    %v762 = vand.u32 %v761, 4294901760
    %v763 = vsub.f32 %v761, %v762
    %v764 = vand.u32 %v763, 4294901760
    %765 = vmatprep.subr.mxu0 %v764
    %v766 = vand.u32 %v618, 4294901760
    %v767 = vsub.f32 %v618, %v766
    %v768 = vand.u32 %v767, 4294901760
    %v769 = vsub.f32 %v767, %v768
    %v770 = vand.u32 %v769, 4294901760
    %771 = vmatpush1.msra.mxu0 %v770
    %v772 = vand.u32 %v621, 4294901760
    %v773 = vsub.f32 %v621, %v772
    %v774 = vand.u32 %v773, 4294901760
    %v775 = vsub.f32 %v773, %v774
    %v776 = vand.u32 %v775, 4294901760
    %777 = vmatprep.subr.mxu0 %v776
    %v778 = vand.u32 %v620, 4294901760
    %v779 = vsub.f32 %v620, %v778
    %v780 = vand.u32 %v779, 4294901760
    %v781 = vsub.f32 %v779, %v780
    %v782 = vand.u32 %v781, 4294901760
    %783 = vmatpush1.msra.mxu0 %v782
    %784 = vmatprep.subr.mxu0 0.0
    %785 = vmatpush1.msra.mxu0 0.0
    %786 = vmatprep.subr.mxu0 0.0
    %787 = vmatpush1.msra.mxu0 0.0
    %788 = vmatprep.subr.mxu0 0.0
    %789 = vmatpush1.msra.mxu0 0.0
    %790 = vmatprep.subr.mxu0 0.0
    %791 = vmatpush1.msra.mxu0 0.0
    %792 = vmatprep.subr.mxu0 0.0
    %793 = vmatpush1.msra.mxu0 0.0
    %794 = vmatprep.subr.mxu0 0.0
    %795 = vmatpush1.msra.mxu0 0.0
    %796 = vmatprep.subr.mxu0 0.0
    %797 = vmatpush1.msra.mxu0 0.0
    %798 = vmatprep.subr.mxu0 0.0
    %799 = vmatpush1.msra.mxu0 0.0
    %800 = vmatprep.subr.mxu0 0.0
    %801 = vmatpush1.msra.mxu0 0.0
    %802 = vmatprep.subr.mxu0 0.0
    %803 = vmatpush1.msra.mxu0 0.0
    %804 = vmatprep.subr.mxu0 0.0
    %805 = vmatpush1.msra.mxu0 0.0
    %806 = vmatprep.subr.mxu0 0.0
    %807 = vmatpush1.msra.mxu0 0.0
    %808 = vmatprep.subr.mxu0 0.0
    %809 = vmatpush1.msra.mxu0 0.0
    %810 = vmatprep.subr.mxu0 0.0
    %811 = vmatpush1.msra.mxu0 0.0
    %812 = vmatprep.subr.mxu0 0.0
    %813 = vmatpush1.msra.mxu0 0.0
    %814 = vmatprep.subr.mxu0 0.0
    %815 = vmatpush1.msra.mxu0 0.0
    %816 = vmatprep.subr.mxu0 0.0
    %817 = vmatpush1.msra.mxu0 0.0
    %818 = vmatprep.subr.mxu0 0.0
    %819 = vmatpush1.msra.mxu0 0.0
    %820 = vmatprep.subr.mxu0 0.0
    %821 = vmatpush1.msra.mxu0 0.0
    %822 = vmatprep.subr.mxu0 0.0
    %823 = vmatpush1.msra.mxu0 0.0
    %824 = vmatprep.subr.mxu0 0.0
    %825 = vmatpush1.msra.mxu0 0.0
    %826 = vmatprep.subr.mxu0 0.0
    %827 = vmatpush1.msra.mxu0 0.0
    %828 = vmatprep.subr.mxu0 0.0
    %829 = vmatpush1.msra.mxu0 0.0
    %830 = vmatprep.subr.mxu0 0.0
    %831 = vmatpush1.msra.mxu0 0.0
    %832 = vmatprep.subr.mxu0 0.0
    %833 = vmatpush1.msra.mxu0 0.0
    %834 = vmatprep.subr.mxu0 0.0
    %835 = vmatpush1.msra.mxu0 0.0
    %836 = vmatprep.subr.mxu0 0.0
    %837 = vmatpush1.msra.mxu0 0.0
    %838 = vmatprep.subr.mxu0 0.0
    %839 = vmatpush1.msra.mxu0 0.0
    %840 = vmatprep.mubr.f32.mxu0 0.0
    %v841 = vand.u32 %v636, 4294901760
    %842 = vmatmul.mubr.f32.gmra.mrb[0].mxu0 %v841
    %v843 = vpop.f32.mrb[0].mxu0
    %v844 = vadd.f32 %v721, %v843
    %v845 = vpop.f32.mrb[0].mxu0
    %v846 = vadd.f32 %v723, %v845
    %847 = vmatprep.mubr.f32.mxu0 0.0
    %v848 = vand.u32 %v639, 4294901760
    %849 = vmatmul.mubr.f32.gmra.mrb[0].mxu0 %v848
    %v850 = vpop.f32.mrb[0].mxu0
    %v851 = vadd.f32 %v732, %v850
    %v852 = vpop.f32.mrb[0].mxu0
    %v853 = vadd.f32 %v734, %v852
    %854 = vdwg.mxu0
    %v855 = vand.u32 %v615, 4294901760
    %v856 = vsub.f32 %v615, %v855
    %857 = vmatprep.subr.mxu0 %v856
    %v858 = vand.u32 %v614, 4294901760
    %v859 = vsub.f32 %v614, %v858
    %860 = vmatpush1.msra.mxu0 %v859
    %v861 = vand.u32 %v617, 4294901760
    %v862 = vsub.f32 %v617, %v861
    %863 = vmatprep.subr.mxu0 %v862
    %v864 = vand.u32 %v616, 4294901760
    %v865 = vsub.f32 %v616, %v864
    %866 = vmatpush1.msra.mxu0 %v865
    %v867 = vand.u32 %v619, 4294901760
    %v868 = vsub.f32 %v619, %v867
    %869 = vmatprep.subr.mxu0 %v868
    %v870 = vand.u32 %v618, 4294901760
    %v871 = vsub.f32 %v618, %v870
    %872 = vmatpush1.msra.mxu0 %v871
    %v873 = vand.u32 %v621, 4294901760
    %v874 = vsub.f32 %v621, %v873
    %875 = vmatprep.subr.mxu0 %v874
    %v876 = vand.u32 %v620, 4294901760
    %v877 = vsub.f32 %v620, %v876
    %878 = vmatpush1.msra.mxu0 %v877
    %879 = vmatprep.subr.mxu0 0.0
    %880 = vmatpush1.msra.mxu0 0.0
    %881 = vmatprep.subr.mxu0 0.0
    %882 = vmatpush1.msra.mxu0 0.0
    %883 = vmatprep.subr.mxu0 0.0
    %884 = vmatpush1.msra.mxu0 0.0
    %885 = vmatprep.subr.mxu0 0.0
    %886 = vmatpush1.msra.mxu0 0.0
    %887 = vmatprep.subr.mxu0 0.0
    %888 = vmatpush1.msra.mxu0 0.0
    %889 = vmatprep.subr.mxu0 0.0
    %890 = vmatpush1.msra.mxu0 0.0
    %891 = vmatprep.subr.mxu0 0.0
    %892 = vmatpush1.msra.mxu0 0.0
    %893 = vmatprep.subr.mxu0 0.0
    %894 = vmatpush1.msra.mxu0 0.0
    %895 = vmatprep.subr.mxu0 0.0
    %896 = vmatpush1.msra.mxu0 0.0
    %897 = vmatprep.subr.mxu0 0.0
    %898 = vmatpush1.msra.mxu0 0.0
    %899 = vmatprep.subr.mxu0 0.0
    %900 = vmatpush1.msra.mxu0 0.0
    %901 = vmatprep.subr.mxu0 0.0
    %902 = vmatpush1.msra.mxu0 0.0
    %903 = vmatprep.subr.mxu0 0.0
    %904 = vmatpush1.msra.mxu0 0.0
    %905 = vmatprep.subr.mxu0 0.0
    %906 = vmatpush1.msra.mxu0 0.0
    %907 = vmatprep.subr.mxu0 0.0
    %908 = vmatpush1.msra.mxu0 0.0
    %909 = vmatprep.subr.mxu0 0.0
    %910 = vmatpush1.msra.mxu0 0.0
    %911 = vmatprep.subr.mxu0 0.0
    %912 = vmatpush1.msra.mxu0 0.0
    %913 = vmatprep.subr.mxu0 0.0
    %914 = vmatpush1.msra.mxu0 0.0
    %915 = vmatprep.subr.mxu0 0.0
    %916 = vmatpush1.msra.mxu0 0.0
    %917 = vmatprep.subr.mxu0 0.0
    %918 = vmatpush1.msra.mxu0 0.0
    %919 = vmatprep.subr.mxu0 0.0
    %920 = vmatpush1.msra.mxu0 0.0
    %921 = vmatprep.subr.mxu0 0.0
    %922 = vmatpush1.msra.mxu0 0.0
    %923 = vmatprep.subr.mxu0 0.0
    %924 = vmatpush1.msra.mxu0 0.0
    %925 = vmatprep.subr.mxu0 0.0
    %926 = vmatpush1.msra.mxu0 0.0
    %927 = vmatprep.subr.mxu0 0.0
    %928 = vmatpush1.msra.mxu0 0.0
    %929 = vmatprep.subr.mxu0 0.0
    %930 = vmatpush1.msra.mxu0 0.0
    %931 = vmatprep.subr.mxu0 0.0
    %932 = vmatpush1.msra.mxu0 0.0
    %933 = vmatprep.subr.mxu0 0.0
    %934 = vmatpush1.msra.mxu0 0.0
    %935 = vmatprep.mubr.f32.mxu0 0.0
    %v936 = vand.u32 %v636, 4294901760
    %v937 = vsub.f32 %v636, %v936
    %938 = vmatmul.mubr.f32.gmra.mrb[0].mxu0 %v937
    %v939 = vpop.f32.mrb[0].mxu0
    %v940 = vadd.f32 %v844, %v939
    %v941 = vpop.f32.mrb[0].mxu0
    %v942 = vadd.f32 %v846, %v941
    %943 = vmatprep.mubr.f32.mxu0 0.0
    %v944 = vand.u32 %v639, 4294901760
    %v945 = vsub.f32 %v639, %v944
    %946 = vmatmul.mubr.f32.gmra.mrb[0].mxu0 %v945
    %v947 = vpop.f32.mrb[0].mxu0
    %v948 = vadd.f32 %v851, %v947
    %v949 = vpop.f32.mrb[0].mxu0
    %v950 = vadd.f32 %v853, %v949
    %951 = vdwg.mxu0
    %v952 = vand.u32 %v615, 4294901760
    %953 = vmatprep.subr.mxu0 %v952
    %v954 = vand.u32 %v614, 4294901760
    %955 = vmatpush1.msra.mxu0 %v954
    %v956 = vand.u32 %v617, 4294901760
    %957 = vmatprep.subr.mxu0 %v956
    %v958 = vand.u32 %v616, 4294901760
    %959 = vmatpush1.msra.mxu0 %v958
    %v960 = vand.u32 %v619, 4294901760
    %961 = vmatprep.subr.mxu0 %v960
    %v962 = vand.u32 %v618, 4294901760
    %963 = vmatpush1.msra.mxu0 %v962
    %v964 = vand.u32 %v621, 4294901760
    %965 = vmatprep.subr.mxu0 %v964
    %v966 = vand.u32 %v620, 4294901760
    %967 = vmatpush1.msra.mxu0 %v966
    %968 = vmatprep.subr.mxu0 0.0
    %969 = vmatpush1.msra.mxu0 0.0
    %970 = vmatprep.subr.mxu0 0.0
    %971 = vmatpush1.msra.mxu0 0.0
    %972 = vmatprep.subr.mxu0 0.0
    %973 = vmatpush1.msra.mxu0 0.0
    %974 = vmatprep.subr.mxu0 0.0
    %975 = vmatpush1.msra.mxu0 0.0
    %976 = vmatprep.subr.mxu0 0.0
    %977 = vmatpush1.msra.mxu0 0.0
    %978 = vmatprep.subr.mxu0 0.0
    %979 = vmatpush1.msra.mxu0 0.0
    %980 = vmatprep.subr.mxu0 0.0
    %981 = vmatpush1.msra.mxu0 0.0
    %982 = vmatprep.subr.mxu0 0.0
    %983 = vmatpush1.msra.mxu0 0.0
    %984 = vmatprep.subr.mxu0 0.0
    %985 = vmatpush1.msra.mxu0 0.0
    %986 = vmatprep.subr.mxu0 0.0
    %987 = vmatpush1.msra.mxu0 0.0
    %988 = vmatprep.subr.mxu0 0.0
    %989 = vmatpush1.msra.mxu0 0.0
    %990 = vmatprep.subr.mxu0 0.0
    %991 = vmatpush1.msra.mxu0 0.0
    %992 = vmatprep.subr.mxu0 0.0
    %993 = vmatpush1.msra.mxu0 0.0
    %994 = vmatprep.subr.mxu0 0.0
    %995 = vmatpush1.msra.mxu0 0.0
    %996 = vmatprep.subr.mxu0 0.0
    %997 = vmatpush1.msra.mxu0 0.0
    %998 = vmatprep.subr.mxu0 0.0
    %999 = vmatpush1.msra.mxu0 0.0
    %1000 = vmatprep.subr.mxu0 0.0
    %1001 = vmatpush1.msra.mxu0 0.0
    %1002 = vmatprep.subr.mxu0 0.0
    %1003 = vmatpush1.msra.mxu0 0.0
    %1004 = vmatprep.subr.mxu0 0.0
    %1005 = vmatpush1.msra.mxu0 0.0
    %1006 = vmatprep.subr.mxu0 0.0
    %1007 = vmatpush1.msra.mxu0 0.0
    %1008 = vmatprep.subr.mxu0 0.0
    %1009 = vmatpush1.msra.mxu0 0.0
    %1010 = vmatprep.subr.mxu0 0.0
    %1011 = vmatpush1.msra.mxu0 0.0
    %1012 = vmatprep.subr.mxu0 0.0
    %1013 = vmatpush1.msra.mxu0 0.0
    %1014 = vmatprep.subr.mxu0 0.0
    %1015 = vmatpush1.msra.mxu0 0.0
    %1016 = vmatprep.subr.mxu0 0.0
    %1017 = vmatpush1.msra.mxu0 0.0
    %1018 = vmatprep.subr.mxu0 0.0
    %1019 = vmatpush1.msra.mxu0 0.0
    %1020 = vmatprep.subr.mxu0 0.0
    %1021 = vmatpush1.msra.mxu0 0.0
    %1022 = vmatprep.subr.mxu0 0.0
    %1023 = vmatpush1.msra.mxu0 0.0
    %1024 = vmatprep.mubr.f32.mxu0 0.0
    %v1025 = vand.u32 %v636, 4294901760
    %v1026 = vsub.f32 %v636, %v1025
    %v1027 = vand.u32 %v1026, 4294901760
    %1028 = vmatmul.mubr.f32.gmra.mrb[0].mxu0 %v1027
    %v1029 = vpop.f32.mrb[0].mxu0
    %v1030 = vadd.f32 %v940, %v1029
    %v1031 = vpop.f32.mrb[0].mxu0
    %v1032 = vadd.f32 %v942, %v1031
    %1033 = vmatprep.mubr.f32.mxu0 0.0
    %v1034 = vand.u32 %v639, 4294901760
    %v1035 = vsub.f32 %v639, %v1034
    %v1036 = vand.u32 %v1035, 4294901760
    %1037 = vmatmul.mubr.f32.gmra.mrb[0].mxu0 %v1036
    %v1038 = vpop.f32.mrb[0].mxu0
    %v1039 = vadd.f32 %v948, %v1038
    %v1040 = vpop.f32.mrb[0].mxu0
    %v1041 = vadd.f32 %v950, %v1040
    %1042 = vdwg.mxu0
    %v1043 = vand.u32 %v615, 4294901760
    %v1044 = vsub.f32 %v615, %v1043
    %v1045 = vand.u32 %v1044, 4294901760
    %1046 = vmatprep.subr.mxu0 %v1045
    %v1047 = vand.u32 %v614, 4294901760
    %v1048 = vsub.f32 %v614, %v1047
    %v1049 = vand.u32 %v1048, 4294901760
    %1050 = vmatpush1.msra.mxu0 %v1049
    %v1051 = vand.u32 %v617, 4294901760
    %v1052 = vsub.f32 %v617, %v1051
    %v1053 = vand.u32 %v1052, 4294901760
    %1054 = vmatprep.subr.mxu0 %v1053
    %v1055 = vand.u32 %v616, 4294901760
    %v1056 = vsub.f32 %v616, %v1055
    %v1057 = vand.u32 %v1056, 4294901760
    %1058 = vmatpush1.msra.mxu0 %v1057
    %v1059 = vand.u32 %v619, 4294901760
    %v1060 = vsub.f32 %v619, %v1059
    %v1061 = vand.u32 %v1060, 4294901760
    %1062 = vmatprep.subr.mxu0 %v1061
    %v1063 = vand.u32 %v618, 4294901760
    %v1064 = vsub.f32 %v618, %v1063
    %v1065 = vand.u32 %v1064, 4294901760
    %1066 = vmatpush1.msra.mxu0 %v1065
    %v1067 = vand.u32 %v621, 4294901760
    %v1068 = vsub.f32 %v621, %v1067
    %v1069 = vand.u32 %v1068, 4294901760
    %1070 = vmatprep.subr.mxu0 %v1069
    %v1071 = vand.u32 %v620, 4294901760
    %v1072 = vsub.f32 %v620, %v1071
    %v1073 = vand.u32 %v1072, 4294901760
    %1074 = vmatpush1.msra.mxu0 %v1073
    %1075 = vmatprep.subr.mxu0 0.0
    %1076 = vmatpush1.msra.mxu0 0.0
    %1077 = vmatprep.subr.mxu0 0.0
    %1078 = vmatpush1.msra.mxu0 0.0
    %1079 = vmatprep.subr.mxu0 0.0
    %1080 = vmatpush1.msra.mxu0 0.0
    %1081 = vmatprep.subr.mxu0 0.0
    %1082 = vmatpush1.msra.mxu0 0.0
    %1083 = vmatprep.subr.mxu0 0.0
    %1084 = vmatpush1.msra.mxu0 0.0
    %1085 = vmatprep.subr.mxu0 0.0
    %1086 = vmatpush1.msra.mxu0 0.0
    %1087 = vmatprep.subr.mxu0 0.0
    %1088 = vmatpush1.msra.mxu0 0.0
    %1089 = vmatprep.subr.mxu0 0.0
    %1090 = vmatpush1.msra.mxu0 0.0
    %1091 = vmatprep.subr.mxu0 0.0
    %1092 = vmatpush1.msra.mxu0 0.0
    %1093 = vmatprep.subr.mxu0 0.0
    %1094 = vmatpush1.msra.mxu0 0.0
    %1095 = vmatprep.subr.mxu0 0.0
    %1096 = vmatpush1.msra.mxu0 0.0
    %1097 = vmatprep.subr.mxu0 0.0
    %1098 = vmatpush1.msra.mxu0 0.0
    %1099 = vmatprep.subr.mxu0 0.0
    %1100 = vmatpush1.msra.mxu0 0.0
    %1101 = vmatprep.subr.mxu0 0.0
    %1102 = vmatpush1.msra.mxu0 0.0
    %1103 = vmatprep.subr.mxu0 0.0
    %1104 = vmatpush1.msra.mxu0 0.0
    %1105 = vmatprep.subr.mxu0 0.0
    %1106 = vmatpush1.msra.mxu0 0.0
    %1107 = vmatprep.subr.mxu0 0.0
    %1108 = vmatpush1.msra.mxu0 0.0
    %1109 = vmatprep.subr.mxu0 0.0
    %1110 = vmatpush1.msra.mxu0 0.0
    %1111 = vmatprep.subr.mxu0 0.0
    %1112 = vmatpush1.msra.mxu0 0.0
    %1113 = vmatprep.subr.mxu0 0.0
    %1114 = vmatpush1.msra.mxu0 0.0
    %1115 = vmatprep.subr.mxu0 0.0
    %1116 = vmatpush1.msra.mxu0 0.0
    %1117 = vmatprep.subr.mxu0 0.0
    %1118 = vmatpush1.msra.mxu0 0.0
    %1119 = vmatprep.subr.mxu0 0.0
    %1120 = vmatpush1.msra.mxu0 0.0
    %1121 = vmatprep.subr.mxu0 0.0
    %1122 = vmatpush1.msra.mxu0 0.0
    %1123 = vmatprep.subr.mxu0 0.0
    %1124 = vmatpush1.msra.mxu0 0.0
    %1125 = vmatprep.subr.mxu0 0.0
    %1126 = vmatpush1.msra.mxu0 0.0
    %1127 = vmatprep.subr.mxu0 0.0
    %1128 = vmatpush1.msra.mxu0 0.0
    %1129 = vmatprep.subr.mxu0 0.0
    %1130 = vmatpush1.msra.mxu0 0.0
    %1131 = vmatprep.mubr.f32.mxu0 0.0
    %v1132 = vand.u32 %v636, 4294901760
    %1133 = vmatmul.mubr.f32.gmra.mrb[0].mxu0 %v1132
    %v1134 = vpop.f32.mrb[0].mxu0
    %v1135 = vadd.f32 %v1030, %v1134
    %v1136 = vpop.f32.mrb[0].mxu0
    %v1137 = vadd.f32 %v1032, %v1136
    %1138 = vmatprep.mubr.f32.mxu0 0.0
    %v1139 = vand.u32 %v639, 4294901760
    %1140 = vmatmul.mubr.f32.gmra.mrb[0].mxu0 %v1139
    %v1141 = vpop.f32.mrb[0].mxu0
    %v1142 = vadd.f32 %v1039, %v1141
    %v1143 = vpop.f32.mrb[0].mxu0
    %v1144 = vadd.f32 %v1041, %v1143
    %1145 = vdwg.mxu0
    %v1146 = vand.u32 %v615, 4294901760
    %1147 = vmatprep.subr.mxu0 %v1146
    %v1148 = vand.u32 %v614, 4294901760
    %1149 = vmatpush1.msra.mxu0 %v1148
    %v1150 = vand.u32 %v617, 4294901760
    %1151 = vmatprep.subr.mxu0 %v1150
    %v1152 = vand.u32 %v616, 4294901760
    %1153 = vmatpush1.msra.mxu0 %v1152
    %v1154 = vand.u32 %v619, 4294901760
    %1155 = vmatprep.subr.mxu0 %v1154
    %v1156 = vand.u32 %v618, 4294901760
    %1157 = vmatpush1.msra.mxu0 %v1156
    %v1158 = vand.u32 %v621, 4294901760
    %1159 = vmatprep.subr.mxu0 %v1158
    %v1160 = vand.u32 %v620, 4294901760
    %1161 = vmatpush1.msra.mxu0 %v1160
    %1162 = vmatprep.subr.mxu0 0.0
    %1163 = vmatpush1.msra.mxu0 0.0
    %1164 = vmatprep.subr.mxu0 0.0
    %1165 = vmatpush1.msra.mxu0 0.0
    %1166 = vmatprep.subr.mxu0 0.0
    %1167 = vmatpush1.msra.mxu0 0.0
    %1168 = vmatprep.subr.mxu0 0.0
    %1169 = vmatpush1.msra.mxu0 0.0
    %1170 = vmatprep.subr.mxu0 0.0
    %1171 = vmatpush1.msra.mxu0 0.0
    %1172 = vmatprep.subr.mxu0 0.0
    %1173 = vmatpush1.msra.mxu0 0.0
    %1174 = vmatprep.subr.mxu0 0.0
    %1175 = vmatpush1.msra.mxu0 0.0
    %1176 = vmatprep.subr.mxu0 0.0
    %1177 = vmatpush1.msra.mxu0 0.0
    %1178 = vmatprep.subr.mxu0 0.0
    %1179 = vmatpush1.msra.mxu0 0.0
    %1180 = vmatprep.subr.mxu0 0.0
    %1181 = vmatpush1.msra.mxu0 0.0
    %1182 = vmatprep.subr.mxu0 0.0
    %1183 = vmatpush1.msra.mxu0 0.0
    %1184 = vmatprep.subr.mxu0 0.0
    %1185 = vmatpush1.msra.mxu0 0.0
    %1186 = vmatprep.subr.mxu0 0.0
    %1187 = vmatpush1.msra.mxu0 0.0
    %1188 = vmatprep.subr.mxu0 0.0
    %1189 = vmatpush1.msra.mxu0 0.0
    %1190 = vmatprep.subr.mxu0 0.0
    %1191 = vmatpush1.msra.mxu0 0.0
    %1192 = vmatprep.subr.mxu0 0.0
    %1193 = vmatpush1.msra.mxu0 0.0
    %1194 = vmatprep.subr.mxu0 0.0
    %1195 = vmatpush1.msra.mxu0 0.0
    %1196 = vmatprep.subr.mxu0 0.0
    %1197 = vmatpush1.msra.mxu0 0.0
    %1198 = vmatprep.subr.mxu0 0.0
    %1199 = vmatpush1.msra.mxu0 0.0
    %1200 = vmatprep.subr.mxu0 0.0
    %1201 = vmatpush1.msra.mxu0 0.0
    %1202 = vmatprep.subr.mxu0 0.0
    %1203 = vmatpush1.msra.mxu0 0.0
    %1204 = vmatprep.subr.mxu0 0.0
    %1205 = vmatpush1.msra.mxu0 0.0
    %1206 = vmatprep.subr.mxu0 0.0
    %1207 = vmatpush1.msra.mxu0 0.0
    %1208 = vmatprep.subr.mxu0 0.0
    %1209 = vmatpush1.msra.mxu0 0.0
    %1210 = vmatprep.subr.mxu0 0.0
    %1211 = vmatpush1.msra.mxu0 0.0
    %1212 = vmatprep.subr.mxu0 0.0
    %1213 = vmatpush1.msra.mxu0 0.0
    %1214 = vmatprep.subr.mxu0 0.0
    %1215 = vmatpush1.msra.mxu0 0.0
    %1216 = vmatprep.subr.mxu0 0.0
    %1217 = vmatpush1.msra.mxu0 0.0
    %1218 = vmatprep.mubr.f32.mxu0 0.0
    %v1219 = vand.u32 %v636, 4294901760
    %1220 = vmatmul.mubr.f32.gmra.mrb[0].mxu0 %v1219
    %v1221 = vpop.f32.mrb[0].mxu0
    %v1222 = vadd.f32 %v1135, %v1221
    %v1223 = vpop.f32.mrb[0].mxu0
    %v1224 = vadd.f32 %v1137, %v1223
    %1225 = vmatprep.mubr.f32.mxu0 0.0
    %v1226 = vand.u32 %v639, 4294901760
    %1227 = vmatmul.mubr.f32.gmra.mrb[0].mxu0 %v1226
    %v1228 = vpop.f32.mrb[0].mxu0
    %v1229 = vadd.f32 %v1142, %v1228
    %v1230 = vpop.f32.mrb[0].mxu0
    %v1231 = vadd.f32 %v1144, %v1230
    %1232 = vdwg.mxu0
    %v1233 = vld [vmem:[%s5] sm:$0xff]
    %v1234 = vld [vmem:[%s5 + $0x8] sm:$0xff]
    %v1235 = vld [vmem:[%s5 + $0x10] sm:$0xff]
    %v1236 = vld [vmem:[%s5 + $0x18] sm:$0xff]
    %v1237 = vld [vmem:[%s6] sm:$0xff]
    %v1238 = vld [vmem:[%s6 + $0x8] sm:$0xff]
    %v1239 = vld [vmem:[%s6 + $0x10] sm:$0xff]
    %v1240 = vld [vmem:[%s6 + $0x18] sm:$0xff]
    %v1242 = vsel %vm634, 0.0, 0
    %1244 = vmatprep.subr.mxu0 0.0
    %v1245 = vand.u32 %v1233, 4294901760
    %1246 = vmatpush1.msra.mxu0 %v1245
    %1247 = vmatprep.subr.mxu0 0.0
    %v1248 = vand.u32 %v1234, 4294901760
    %1249 = vmatpush1.msra.mxu0 %v1248
    %1250 = vmatprep.subr.mxu0 0.0
    %v1251 = vand.u32 %v1235, 4294901760
    %1252 = vmatpush1.msra.mxu0 %v1251
    %1253 = vmatprep.subr.mxu0 0.0
    %v1254 = vand.u32 %v1236, 4294901760
    %1255 = vmatpush1.msra.mxu0 %v1254
    %1256 = vmatprep.subr.mxu0 0.0
    %1257 = vmatpush1.msra.mxu0 0.0
    %1258 = vmatprep.subr.mxu0 0.0
    %1259 = vmatpush1.msra.mxu0 0.0
    %1260 = vmatprep.subr.mxu0 0.0
    %1261 = vmatpush1.msra.mxu0 0.0
    %1262 = vmatprep.subr.mxu0 0.0
    %1263 = vmatpush1.msra.mxu0 0.0
    %1264 = vmatprep.subr.mxu0 0.0
    %1265 = vmatpush1.msra.mxu0 0.0
    %1266 = vmatprep.subr.mxu0 0.0
    %1267 = vmatpush1.msra.mxu0 0.0
    %1268 = vmatprep.subr.mxu0 0.0
    %1269 = vmatpush1.msra.mxu0 0.0
    %1270 = vmatprep.subr.mxu0 0.0
    %1271 = vmatpush1.msra.mxu0 0.0
    %1272 = vmatprep.subr.mxu0 0.0
    %1273 = vmatpush1.msra.mxu0 0.0
    %1274 = vmatprep.subr.mxu0 0.0
    %1275 = vmatpush1.msra.mxu0 0.0
    %1276 = vmatprep.subr.mxu0 0.0
    %1277 = vmatpush1.msra.mxu0 0.0
    %1278 = vmatprep.subr.mxu0 0.0
    %1279 = vmatpush1.msra.mxu0 0.0
    %1280 = vmatprep.subr.mxu0 0.0
    %1281 = vmatpush1.msra.mxu0 0.0
    %1282 = vmatprep.subr.mxu0 0.0
    %1283 = vmatpush1.msra.mxu0 0.0
    %1284 = vmatprep.subr.mxu0 0.0
    %1285 = vmatpush1.msra.mxu0 0.0
    %1286 = vmatprep.subr.mxu0 0.0
    %1287 = vmatpush1.msra.mxu0 0.0
    %1288 = vmatprep.subr.mxu0 0.0
    %1289 = vmatpush1.msra.mxu0 0.0
    %1290 = vmatprep.subr.mxu0 0.0
    %1291 = vmatpush1.msra.mxu0 0.0
    %1292 = vmatprep.subr.mxu0 0.0
    %1293 = vmatpush1.msra.mxu0 0.0
    %1294 = vmatprep.subr.mxu0 0.0
    %1295 = vmatpush1.msra.mxu0 0.0
    %1296 = vmatprep.subr.mxu0 0.0
    %1297 = vmatpush1.msra.mxu0 0.0
    %1298 = vmatprep.subr.mxu0 0.0
    %1299 = vmatpush1.msra.mxu0 0.0
    %1300 = vmatprep.subr.mxu0 0.0
    %1301 = vmatpush1.msra.mxu0 0.0
    %1302 = vmatprep.subr.mxu0 0.0
    %1303 = vmatpush1.msra.mxu0 0.0
    %1304 = vmatprep.subr.mxu0 0.0
    %1305 = vmatpush1.msra.mxu0 0.0
    %1306 = vmatprep.subr.mxu0 0.0
    %1307 = vmatpush1.msra.mxu0 0.0
    %1308 = vmatprep.subr.mxu0 0.0
    %1309 = vmatpush1.msra.mxu0 0.0
    %1310 = vmatprep.subr.mxu0 0.0
    %1311 = vmatpush1.msra.mxu0 0.0
    %1312 = vmatprep.mubr.f32.mxu0 0.0
    %v1313 = vand.u32 %v1242, 4294901760
    %v1314 = vsub.f32 %v1242, %v1313
    %v1315 = vand.u32 %v1314, 4294901760
    %v1316 = vsub.f32 %v1314, %v1315
    %v1317 = vand.u32 %v1316, 4294901760
    %1318 = vmatmul.mubr.f32.gmra.mrb[0].mxu0 %v1317
    %v1319 = vpop.f32.mrb[0].mxu0
    %v1320 = vadd.f32 0.0, %v1319
    %v1321 = vpop.f32.mrb[0].mxu0
    %1322 = vdwg.mxu0
    %1323 = vmatprep.subr.mxu0 0.0
    %v1324 = vand.u32 %v1233, 4294901760
    %v1325 = vsub.f32 %v1233, %v1324
    %v1326 = vand.u32 %v1325, 4294901760
    %v1327 = vsub.f32 %v1325, %v1326
    %v1328 = vand.u32 %v1327, 4294901760
    %1329 = vmatpush1.msra.mxu0 %v1328
    %1330 = vmatprep.subr.mxu0 0.0
    %v1331 = vand.u32 %v1234, 4294901760
    %v1332 = vsub.f32 %v1234, %v1331
    %v1333 = vand.u32 %v1332, 4294901760
    %v1334 = vsub.f32 %v1332, %v1333
    %v1335 = vand.u32 %v1334, 4294901760
    %1336 = vmatpush1.msra.mxu0 %v1335
    %1337 = vmatprep.subr.mxu0 0.0
    %v1338 = vand.u32 %v1235, 4294901760
    %v1339 = vsub.f32 %v1235, %v1338
    %v1340 = vand.u32 %v1339, 4294901760
    %v1341 = vsub.f32 %v1339, %v1340
    %v1342 = vand.u32 %v1341, 4294901760
    %1343 = vmatpush1.msra.mxu0 %v1342
    %1344 = vmatprep.subr.mxu0 0.0
    %v1345 = vand.u32 %v1236, 4294901760
    %v1346 = vsub.f32 %v1236, %v1345
    %v1347 = vand.u32 %v1346, 4294901760
    %v1348 = vsub.f32 %v1346, %v1347
    %v1349 = vand.u32 %v1348, 4294901760
    %1350 = vmatpush1.msra.mxu0 %v1349
    %1351 = vmatprep.subr.mxu0 0.0
    %1352 = vmatpush1.msra.mxu0 0.0
    %1353 = vmatprep.subr.mxu0 0.0
    %1354 = vmatpush1.msra.mxu0 0.0
    %1355 = vmatprep.subr.mxu0 0.0
    %1356 = vmatpush1.msra.mxu0 0.0
    %1357 = vmatprep.subr.mxu0 0.0
    %1358 = vmatpush1.msra.mxu0 0.0
    %1359 = vmatprep.subr.mxu0 0.0
    %1360 = vmatpush1.msra.mxu0 0.0
    %1361 = vmatprep.subr.mxu0 0.0
    %1362 = vmatpush1.msra.mxu0 0.0
    %1363 = vmatprep.subr.mxu0 0.0
    %1364 = vmatpush1.msra.mxu0 0.0
    %1365 = vmatprep.subr.mxu0 0.0
    %1366 = vmatpush1.msra.mxu0 0.0
    %1367 = vmatprep.subr.mxu0 0.0
    %1368 = vmatpush1.msra.mxu0 0.0
    %1369 = vmatprep.subr.mxu0 0.0
    %1370 = vmatpush1.msra.mxu0 0.0
    %1371 = vmatprep.subr.mxu0 0.0
    %1372 = vmatpush1.msra.mxu0 0.0
    %1373 = vmatprep.subr.mxu0 0.0
    %1374 = vmatpush1.msra.mxu0 0.0
    %1375 = vmatprep.subr.mxu0 0.0
    %1376 = vmatpush1.msra.mxu0 0.0
    %1377 = vmatprep.subr.mxu0 0.0
    %1378 = vmatpush1.msra.mxu0 0.0
    %1379 = vmatprep.subr.mxu0 0.0
    %1380 = vmatpush1.msra.mxu0 0.0
    %1381 = vmatprep.subr.mxu0 0.0
    %1382 = vmatpush1.msra.mxu0 0.0
    %1383 = vmatprep.subr.mxu0 0.0
    %1384 = vmatpush1.msra.mxu0 0.0
    %1385 = vmatprep.subr.mxu0 0.0
    %1386 = vmatpush1.msra.mxu0 0.0
    %1387 = vmatprep.subr.mxu0 0.0
    %1388 = vmatpush1.msra.mxu0 0.0
    %1389 = vmatprep.subr.mxu0 0.0
    %1390 = vmatpush1.msra.mxu0 0.0
    %1391 = vmatprep.subr.mxu0 0.0
    %1392 = vmatpush1.msra.mxu0 0.0
    %1393 = vmatprep.subr.mxu0 0.0
    %1394 = vmatpush1.msra.mxu0 0.0
    %1395 = vmatprep.subr.mxu0 0.0
    %1396 = vmatpush1.msra.mxu0 0.0
    %1397 = vmatprep.subr.mxu0 0.0
    %1398 = vmatpush1.msra.mxu0 0.0
    %1399 = vmatprep.subr.mxu0 0.0
    %1400 = vmatpush1.msra.mxu0 0.0
    %1401 = vmatprep.subr.mxu0 0.0
    %1402 = vmatpush1.msra.mxu0 0.0
    %1403 = vmatprep.subr.mxu0 0.0
    %1404 = vmatpush1.msra.mxu0 0.0
    %1405 = vmatprep.subr.mxu0 0.0
    %1406 = vmatpush1.msra.mxu0 0.0
    %1407 = vmatprep.mubr.f32.mxu0 0.0
    %v1408 = vand.u32 %v1242, 4294901760
    %1409 = vmatmul.mubr.f32.gmra.mrb[0].mxu0 %v1408
    %v1410 = vpop.f32.mrb[0].mxu0
    %v1411 = vadd.f32 %v1320, %v1410
    %v1412 = vpop.f32.mrb[0].mxu0
    %1413 = vdwg.mxu0
    %1414 = vmatprep.subr.mxu0 0.0
    %v1415 = vand.u32 %v1233, 4294901760
    %v1416 = vsub.f32 %v1233, %v1415
    %1417 = vmatpush1.msra.mxu0 %v1416
    %1418 = vmatprep.subr.mxu0 0.0
    %v1419 = vand.u32 %v1234, 4294901760
    %v1420 = vsub.f32 %v1234, %v1419
    %1421 = vmatpush1.msra.mxu0 %v1420
    %1422 = vmatprep.subr.mxu0 0.0
    %v1423 = vand.u32 %v1235, 4294901760
    %v1424 = vsub.f32 %v1235, %v1423
    %1425 = vmatpush1.msra.mxu0 %v1424
    %1426 = vmatprep.subr.mxu0 0.0
    %v1427 = vand.u32 %v1236, 4294901760
    %v1428 = vsub.f32 %v1236, %v1427
    %1429 = vmatpush1.msra.mxu0 %v1428
    %1430 = vmatprep.subr.mxu0 0.0
    %1431 = vmatpush1.msra.mxu0 0.0
    %1432 = vmatprep.subr.mxu0 0.0
    %1433 = vmatpush1.msra.mxu0 0.0
    %1434 = vmatprep.subr.mxu0 0.0
    %1435 = vmatpush1.msra.mxu0 0.0
    %1436 = vmatprep.subr.mxu0 0.0
    %1437 = vmatpush1.msra.mxu0 0.0
    %1438 = vmatprep.subr.mxu0 0.0
    %1439 = vmatpush1.msra.mxu0 0.0
    %1440 = vmatprep.subr.mxu0 0.0
    %1441 = vmatpush1.msra.mxu0 0.0
    %1442 = vmatprep.subr.mxu0 0.0
    %1443 = vmatpush1.msra.mxu0 0.0
    %1444 = vmatprep.subr.mxu0 0.0
    %1445 = vmatpush1.msra.mxu0 0.0
    %1446 = vmatprep.subr.mxu0 0.0
    %1447 = vmatpush1.msra.mxu0 0.0
    %1448 = vmatprep.subr.mxu0 0.0
    %1449 = vmatpush1.msra.mxu0 0.0
    %1450 = vmatprep.subr.mxu0 0.0
    %1451 = vmatpush1.msra.mxu0 0.0
    %1452 = vmatprep.subr.mxu0 0.0
    %1453 = vmatpush1.msra.mxu0 0.0
    %1454 = vmatprep.subr.mxu0 0.0
    %1455 = vmatpush1.msra.mxu0 0.0
    %1456 = vmatprep.subr.mxu0 0.0
    %1457 = vmatpush1.msra.mxu0 0.0
    %1458 = vmatprep.subr.mxu0 0.0
    %1459 = vmatpush1.msra.mxu0 0.0
    %1460 = vmatprep.subr.mxu0 0.0
    %1461 = vmatpush1.msra.mxu0 0.0
    %1462 = vmatprep.subr.mxu0 0.0
    %1463 = vmatpush1.msra.mxu0 0.0
    %1464 = vmatprep.subr.mxu0 0.0
    %1465 = vmatpush1.msra.mxu0 0.0
    %1466 = vmatprep.subr.mxu0 0.0
    %1467 = vmatpush1.msra.mxu0 0.0
    %1468 = vmatprep.subr.mxu0 0.0
    %1469 = vmatpush1.msra.mxu0 0.0
    %1470 = vmatprep.subr.mxu0 0.0
    %1471 = vmatpush1.msra.mxu0 0.0
    %1472 = vmatprep.subr.mxu0 0.0
    %1473 = vmatpush1.msra.mxu0 0.0
    %1474 = vmatprep.subr.mxu0 0.0
    %1475 = vmatpush1.msra.mxu0 0.0
    %1476 = vmatprep.subr.mxu0 0.0
    %1477 = vmatpush1.msra.mxu0 0.0
    %1478 = vmatprep.subr.mxu0 0.0
    %1479 = vmatpush1.msra.mxu0 0.0
    %1480 = vmatprep.subr.mxu0 0.0
    %1481 = vmatpush1.msra.mxu0 0.0
    %1482 = vmatprep.subr.mxu0 0.0
    %1483 = vmatpush1.msra.mxu0 0.0
    %1484 = vmatprep.subr.mxu0 0.0
    %1485 = vmatpush1.msra.mxu0 0.0
    %1486 = vmatprep.mubr.f32.mxu0 0.0
    %v1487 = vand.u32 %v1242, 4294901760
    %v1488 = vsub.f32 %v1242, %v1487
    %1489 = vmatmul.mubr.f32.gmra.mrb[0].mxu0 %v1488
    %v1490 = vpop.f32.mrb[0].mxu0
    %v1491 = vadd.f32 %v1411, %v1490
    %v1492 = vpop.f32.mrb[0].mxu0
    %1493 = vdwg.mxu0
    %1494 = vmatprep.subr.mxu0 0.0
    %v1495 = vand.u32 %v1233, 4294901760
    %1496 = vmatpush1.msra.mxu0 %v1495
    %1497 = vmatprep.subr.mxu0 0.0
    %v1498 = vand.u32 %v1234, 4294901760
    %1499 = vmatpush1.msra.mxu0 %v1498
    %1500 = vmatprep.subr.mxu0 0.0
    %v1501 = vand.u32 %v1235, 4294901760
    %1502 = vmatpush1.msra.mxu0 %v1501
    %1503 = vmatprep.subr.mxu0 0.0
    %v1504 = vand.u32 %v1236, 4294901760
    %1505 = vmatpush1.msra.mxu0 %v1504
    %1506 = vmatprep.subr.mxu0 0.0
    %1507 = vmatpush1.msra.mxu0 0.0
    %1508 = vmatprep.subr.mxu0 0.0
    %1509 = vmatpush1.msra.mxu0 0.0
    %1510 = vmatprep.subr.mxu0 0.0
    %1511 = vmatpush1.msra.mxu0 0.0
    %1512 = vmatprep.subr.mxu0 0.0
    %1513 = vmatpush1.msra.mxu0 0.0
    %1514 = vmatprep.subr.mxu0 0.0
    %1515 = vmatpush1.msra.mxu0 0.0
    %1516 = vmatprep.subr.mxu0 0.0
    %1517 = vmatpush1.msra.mxu0 0.0
    %1518 = vmatprep.subr.mxu0 0.0
    %1519 = vmatpush1.msra.mxu0 0.0
    %1520 = vmatprep.subr.mxu0 0.0
    %1521 = vmatpush1.msra.mxu0 0.0
    %1522 = vmatprep.subr.mxu0 0.0
    %1523 = vmatpush1.msra.mxu0 0.0
    %1524 = vmatprep.subr.mxu0 0.0
    %1525 = vmatpush1.msra.mxu0 0.0
    %1526 = vmatprep.subr.mxu0 0.0
    %1527 = vmatpush1.msra.mxu0 0.0
    %1528 = vmatprep.subr.mxu0 0.0
    %1529 = vmatpush1.msra.mxu0 0.0
    %1530 = vmatprep.subr.mxu0 0.0
    %1531 = vmatpush1.msra.mxu0 0.0
    %1532 = vmatprep.subr.mxu0 0.0
    %1533 = vmatpush1.msra.mxu0 0.0
    %1534 = vmatprep.subr.mxu0 0.0
    %1535 = vmatpush1.msra.mxu0 0.0
    %1536 = vmatprep.subr.mxu0 0.0
    %1537 = vmatpush1.msra.mxu0 0.0
    %1538 = vmatprep.subr.mxu0 0.0
    %1539 = vmatpush1.msra.mxu0 0.0
    %1540 = vmatprep.subr.mxu0 0.0
    %1541 = vmatpush1.msra.mxu0 0.0
    %1542 = vmatprep.subr.mxu0 0.0
    %1543 = vmatpush1.msra.mxu0 0.0
    %1544 = vmatprep.subr.mxu0 0.0
    %1545 = vmatpush1.msra.mxu0 0.0
    %1546 = vmatprep.subr.mxu0 0.0
    %1547 = vmatpush1.msra.mxu0 0.0
    %1548 = vmatprep.subr.mxu0 0.0
    %1549 = vmatpush1.msra.mxu0 0.0
    %1550 = vmatprep.subr.mxu0 0.0
    %1551 = vmatpush1.msra.mxu0 0.0
    %1552 = vmatprep.subr.mxu0 0.0
    %1553 = vmatpush1.msra.mxu0 0.0
    %1554 = vmatprep.subr.mxu0 0.0
    %1555 = vmatpush1.msra.mxu0 0.0
    %1556 = vmatprep.subr.mxu0 0.0
    %1557 = vmatpush1.msra.mxu0 0.0
    %1558 = vmatprep.subr.mxu0 0.0
    %1559 = vmatpush1.msra.mxu0 0.0
    %1560 = vmatprep.subr.mxu0 0.0
    %1561 = vmatpush1.msra.mxu0 0.0
    %1562 = vmatprep.mubr.f32.mxu0 0.0
    %v1563 = vand.u32 %v1242, 4294901760
    %v1564 = vsub.f32 %v1242, %v1563
    %v1565 = vand.u32 %v1564, 4294901760
    %1566 = vmatmul.mubr.f32.gmra.mrb[0].mxu0 %v1565
    %v1567 = vpop.f32.mrb[0].mxu0
    %v1568 = vadd.f32 %v1491, %v1567
    %v1569 = vpop.f32.mrb[0].mxu0
    %1570 = vdwg.mxu0
    %1571 = vmatprep.subr.mxu0 0.0
    %v1572 = vand.u32 %v1233, 4294901760
    %v1573 = vsub.f32 %v1233, %v1572
    %v1574 = vand.u32 %v1573, 4294901760
    %1575 = vmatpush1.msra.mxu0 %v1574
    %1576 = vmatprep.subr.mxu0 0.0
    %v1577 = vand.u32 %v1234, 4294901760
    %v1578 = vsub.f32 %v1234, %v1577
    %v1579 = vand.u32 %v1578, 4294901760
    %1580 = vmatpush1.msra.mxu0 %v1579
    %1581 = vmatprep.subr.mxu0 0.0
    %v1582 = vand.u32 %v1235, 4294901760
    %v1583 = vsub.f32 %v1235, %v1582
    %v1584 = vand.u32 %v1583, 4294901760
    %1585 = vmatpush1.msra.mxu0 %v1584
    %1586 = vmatprep.subr.mxu0 0.0
    %v1587 = vand.u32 %v1236, 4294901760
    %v1588 = vsub.f32 %v1236, %v1587
    %v1589 = vand.u32 %v1588, 4294901760
    %1590 = vmatpush1.msra.mxu0 %v1589
    %1591 = vmatprep.subr.mxu0 0.0
    %1592 = vmatpush1.msra.mxu0 0.0
    %1593 = vmatprep.subr.mxu0 0.0
    %1594 = vmatpush1.msra.mxu0 0.0
    %1595 = vmatprep.subr.mxu0 0.0
    %1596 = vmatpush1.msra.mxu0 0.0
    %1597 = vmatprep.subr.mxu0 0.0
    %1598 = vmatpush1.msra.mxu0 0.0
    %1599 = vmatprep.subr.mxu0 0.0
    %1600 = vmatpush1.msra.mxu0 0.0
    %1601 = vmatprep.subr.mxu0 0.0
    %1602 = vmatpush1.msra.mxu0 0.0
    %1603 = vmatprep.subr.mxu0 0.0
    %1604 = vmatpush1.msra.mxu0 0.0
    %1605 = vmatprep.subr.mxu0 0.0
    %1606 = vmatpush1.msra.mxu0 0.0
    %1607 = vmatprep.subr.mxu0 0.0
    %1608 = vmatpush1.msra.mxu0 0.0
    %1609 = vmatprep.subr.mxu0 0.0
    %1610 = vmatpush1.msra.mxu0 0.0
    %1611 = vmatprep.subr.mxu0 0.0
    %1612 = vmatpush1.msra.mxu0 0.0
    %1613 = vmatprep.subr.mxu0 0.0
    %1614 = vmatpush1.msra.mxu0 0.0
    %1615 = vmatprep.subr.mxu0 0.0
    %1616 = vmatpush1.msra.mxu0 0.0
    %1617 = vmatprep.subr.mxu0 0.0
    %1618 = vmatpush1.msra.mxu0 0.0
    %1619 = vmatprep.subr.mxu0 0.0
    %1620 = vmatpush1.msra.mxu0 0.0
    %1621 = vmatprep.subr.mxu0 0.0
    %1622 = vmatpush1.msra.mxu0 0.0
    %1623 = vmatprep.subr.mxu0 0.0
    %1624 = vmatpush1.msra.mxu0 0.0
    %1625 = vmatprep.subr.mxu0 0.0
    %1626 = vmatpush1.msra.mxu0 0.0
    %1627 = vmatprep.subr.mxu0 0.0
    %1628 = vmatpush1.msra.mxu0 0.0
    %1629 = vmatprep.subr.mxu0 0.0
    %1630 = vmatpush1.msra.mxu0 0.0
    %1631 = vmatprep.subr.mxu0 0.0
    %1632 = vmatpush1.msra.mxu0 0.0
    %1633 = vmatprep.subr.mxu0 0.0
    %1634 = vmatpush1.msra.mxu0 0.0
    %1635 = vmatprep.subr.mxu0 0.0
    %1636 = vmatpush1.msra.mxu0 0.0
    %1637 = vmatprep.subr.mxu0 0.0
    %1638 = vmatpush1.msra.mxu0 0.0
    %1639 = vmatprep.subr.mxu0 0.0
    %1640 = vmatpush1.msra.mxu0 0.0
    %1641 = vmatprep.subr.mxu0 0.0
    %1642 = vmatpush1.msra.mxu0 0.0
    %1643 = vmatprep.subr.mxu0 0.0
    %1644 = vmatpush1.msra.mxu0 0.0
    %1645 = vmatprep.subr.mxu0 0.0
    %1646 = vmatpush1.msra.mxu0 0.0
    %1647 = vmatprep.mubr.f32.mxu0 0.0
    %v1648 = vand.u32 %v1242, 4294901760
    %1649 = vmatmul.mubr.f32.gmra.mrb[0].mxu0 %v1648
    %v1650 = vpop.f32.mrb[0].mxu0
    %v1651 = vadd.f32 %v1568, %v1650
    %v1652 = vpop.f32.mrb[0].mxu0
    %1653 = vdwg.mxu0
    %1654 = vmatprep.subr.mxu0 0.0
    %v1655 = vand.u32 %v1233, 4294901760
    %1656 = vmatpush1.msra.mxu0 %v1655
    %1657 = vmatprep.subr.mxu0 0.0
    %v1658 = vand.u32 %v1234, 4294901760
    %1659 = vmatpush1.msra.mxu0 %v1658
    %1660 = vmatprep.subr.mxu0 0.0
    %v1661 = vand.u32 %v1235, 4294901760
    %1662 = vmatpush1.msra.mxu0 %v1661
    %1663 = vmatprep.subr.mxu0 0.0
    %v1664 = vand.u32 %v1236, 4294901760
    %1665 = vmatpush1.msra.mxu0 %v1664
    %1666 = vmatprep.subr.mxu0 0.0
    %1667 = vmatpush1.msra.mxu0 0.0
    %1668 = vmatprep.subr.mxu0 0.0
    %1669 = vmatpush1.msra.mxu0 0.0
    %1670 = vmatprep.subr.mxu0 0.0
    %1671 = vmatpush1.msra.mxu0 0.0
    %1672 = vmatprep.subr.mxu0 0.0
    %1673 = vmatpush1.msra.mxu0 0.0
    %1674 = vmatprep.subr.mxu0 0.0
    %1675 = vmatpush1.msra.mxu0 0.0
    %1676 = vmatprep.subr.mxu0 0.0
    %1677 = vmatpush1.msra.mxu0 0.0
    %1678 = vmatprep.subr.mxu0 0.0
    %1679 = vmatpush1.msra.mxu0 0.0
    %1680 = vmatprep.subr.mxu0 0.0
    %1681 = vmatpush1.msra.mxu0 0.0
    %1682 = vmatprep.subr.mxu0 0.0
    %1683 = vmatpush1.msra.mxu0 0.0
    %1684 = vmatprep.subr.mxu0 0.0
    %1685 = vmatpush1.msra.mxu0 0.0
    %1686 = vmatprep.subr.mxu0 0.0
    %1687 = vmatpush1.msra.mxu0 0.0
    %1688 = vmatprep.subr.mxu0 0.0
    %1689 = vmatpush1.msra.mxu0 0.0
    %1690 = vmatprep.subr.mxu0 0.0
    %1691 = vmatpush1.msra.mxu0 0.0
    %1692 = vmatprep.subr.mxu0 0.0
    %1693 = vmatpush1.msra.mxu0 0.0
    %1694 = vmatprep.subr.mxu0 0.0
    %1695 = vmatpush1.msra.mxu0 0.0
    %1696 = vmatprep.subr.mxu0 0.0
    %1697 = vmatpush1.msra.mxu0 0.0
    %1698 = vmatprep.subr.mxu0 0.0
    %1699 = vmatpush1.msra.mxu0 0.0
    %1700 = vmatprep.subr.mxu0 0.0
    %1701 = vmatpush1.msra.mxu0 0.0
    %1702 = vmatprep.subr.mxu0 0.0
    %1703 = vmatpush1.msra.mxu0 0.0
    %1704 = vmatprep.subr.mxu0 0.0
    %1705 = vmatpush1.msra.mxu0 0.0
    %1706 = vmatprep.subr.mxu0 0.0
    %1707 = vmatpush1.msra.mxu0 0.0
    %1708 = vmatprep.subr.mxu0 0.0
    %1709 = vmatpush1.msra.mxu0 0.0
    %1710 = vmatprep.subr.mxu0 0.0
    %1711 = vmatpush1.msra.mxu0 0.0
    %1712 = vmatprep.subr.mxu0 0.0
    %1713 = vmatpush1.msra.mxu0 0.0
    %1714 = vmatprep.subr.mxu0 0.0
    %1715 = vmatpush1.msra.mxu0 0.0
    %1716 = vmatprep.subr.mxu0 0.0
    %1717 = vmatpush1.msra.mxu0 0.0
    %1718 = vmatprep.subr.mxu0 0.0
    %1719 = vmatpush1.msra.mxu0 0.0
    %1720 = vmatprep.subr.mxu0 0.0
    %1721 = vmatpush1.msra.mxu0 0.0
    %1722 = vmatprep.mubr.f32.mxu0 0.0
    %v1723 = vand.u32 %v1242, 4294901760
    %1724 = vmatmul.mubr.f32.gmra.mrb[0].mxu0 %v1723
    %v1725 = vpop.f32.mrb[0].mxu0
    %v1726 = vadd.f32 %v1651, %v1725
    %v1727 = vpop.f32.mrb[0].mxu0
    %1728 = vdwg.mxu0
    %v1729 = vadd.f32 %v1222, %v1726
    %1730 = vmatprep.subr.mxu0 0.0
    %v1731 = vand.u32 %v1237, 4294901760
    %1732 = vmatpush1.msra.mxu0 %v1731
    %1733 = vmatprep.subr.mxu0 0.0
    %v1734 = vand.u32 %v1238, 4294901760
    %1735 = vmatpush1.msra.mxu0 %v1734
    %1736 = vmatprep.subr.mxu0 0.0
    %v1737 = vand.u32 %v1239, 4294901760
    %1738 = vmatpush1.msra.mxu0 %v1737
    %1739 = vmatprep.subr.mxu0 0.0
    %v1740 = vand.u32 %v1240, 4294901760
    %1741 = vmatpush1.msra.mxu0 %v1740
    %1742 = vmatprep.subr.mxu0 0.0
    %1743 = vmatpush1.msra.mxu0 0.0
    %1744 = vmatprep.subr.mxu0 0.0
    %1745 = vmatpush1.msra.mxu0 0.0
    %1746 = vmatprep.subr.mxu0 0.0
    %1747 = vmatpush1.msra.mxu0 0.0
    %1748 = vmatprep.subr.mxu0 0.0
    %1749 = vmatpush1.msra.mxu0 0.0
    %1750 = vmatprep.subr.mxu0 0.0
    %1751 = vmatpush1.msra.mxu0 0.0
    %1752 = vmatprep.subr.mxu0 0.0
    %1753 = vmatpush1.msra.mxu0 0.0
    %1754 = vmatprep.subr.mxu0 0.0
    %1755 = vmatpush1.msra.mxu0 0.0
    %1756 = vmatprep.subr.mxu0 0.0
    %1757 = vmatpush1.msra.mxu0 0.0
    %1758 = vmatprep.subr.mxu0 0.0
    %1759 = vmatpush1.msra.mxu0 0.0
    %1760 = vmatprep.subr.mxu0 0.0
    %1761 = vmatpush1.msra.mxu0 0.0
    %1762 = vmatprep.subr.mxu0 0.0
    %1763 = vmatpush1.msra.mxu0 0.0
    %1764 = vmatprep.subr.mxu0 0.0
    %1765 = vmatpush1.msra.mxu0 0.0
    %1766 = vmatprep.subr.mxu0 0.0
    %1767 = vmatpush1.msra.mxu0 0.0
    %1768 = vmatprep.subr.mxu0 0.0
    %1769 = vmatpush1.msra.mxu0 0.0
    %1770 = vmatprep.subr.mxu0 0.0
    %1771 = vmatpush1.msra.mxu0 0.0
    %1772 = vmatprep.subr.mxu0 0.0
    %1773 = vmatpush1.msra.mxu0 0.0
    %1774 = vmatprep.subr.mxu0 0.0
    %1775 = vmatpush1.msra.mxu0 0.0
    %1776 = vmatprep.subr.mxu0 0.0
    %1777 = vmatpush1.msra.mxu0 0.0
    %1778 = vmatprep.subr.mxu0 0.0
    %1779 = vmatpush1.msra.mxu0 0.0
    %1780 = vmatprep.subr.mxu0 0.0
    %1781 = vmatpush1.msra.mxu0 0.0
    %1782 = vmatprep.subr.mxu0 0.0
    %1783 = vmatpush1.msra.mxu0 0.0
    %1784 = vmatprep.subr.mxu0 0.0
    %1785 = vmatpush1.msra.mxu0 0.0
    %1786 = vmatprep.subr.mxu0 0.0
    %1787 = vmatpush1.msra.mxu0 0.0
    %1788 = vmatprep.subr.mxu0 0.0
    %1789 = vmatpush1.msra.mxu0 0.0
    %1790 = vmatprep.subr.mxu0 0.0
    %1791 = vmatpush1.msra.mxu0 0.0
    %1792 = vmatprep.subr.mxu0 0.0
    %1793 = vmatpush1.msra.mxu0 0.0
    %1794 = vmatprep.subr.mxu0 0.0
    %1795 = vmatpush1.msra.mxu0 0.0
    %1796 = vmatprep.subr.mxu0 0.0
    %1797 = vmatpush1.msra.mxu0 0.0
    %1798 = vmatprep.mubr.f32.mxu0 0.0
    %v1799 = vand.u32 %v1242, 4294901760
    %v1800 = vsub.f32 %v1242, %v1799
    %v1801 = vand.u32 %v1800, 4294901760
    %v1802 = vsub.f32 %v1800, %v1801
    %v1803 = vand.u32 %v1802, 4294901760
    %1804 = vmatmul.mubr.f32.gmra.mrb[0].mxu0 %v1803
    %v1805 = vpop.f32.mrb[0].mxu0
    %v1806 = vadd.f32 0.0, %v1805
    %v1807 = vpop.f32.mrb[0].mxu0
    %1808 = vdwg.mxu0
    %1809 = vmatprep.subr.mxu0 0.0
    %v1810 = vand.u32 %v1237, 4294901760
    %v1811 = vsub.f32 %v1237, %v1810
    %v1812 = vand.u32 %v1811, 4294901760
    %v1813 = vsub.f32 %v1811, %v1812
    %v1814 = vand.u32 %v1813, 4294901760
    %1815 = vmatpush1.msra.mxu0 %v1814
    %1816 = vmatprep.subr.mxu0 0.0
    %v1817 = vand.u32 %v1238, 4294901760
    %v1818 = vsub.f32 %v1238, %v1817
    %v1819 = vand.u32 %v1818, 4294901760
    %v1820 = vsub.f32 %v1818, %v1819
    %v1821 = vand.u32 %v1820, 4294901760
    %1822 = vmatpush1.msra.mxu0 %v1821
    %1823 = vmatprep.subr.mxu0 0.0
    %v1824 = vand.u32 %v1239, 4294901760
    %v1825 = vsub.f32 %v1239, %v1824
    %v1826 = vand.u32 %v1825, 4294901760
    %v1827 = vsub.f32 %v1825, %v1826
    %v1828 = vand.u32 %v1827, 4294901760
    %1829 = vmatpush1.msra.mxu0 %v1828
    %1830 = vmatprep.subr.mxu0 0.0
    %v1831 = vand.u32 %v1240, 4294901760
    %v1832 = vsub.f32 %v1240, %v1831
    %v1833 = vand.u32 %v1832, 4294901760
    %v1834 = vsub.f32 %v1832, %v1833
    %v1835 = vand.u32 %v1834, 4294901760
    %1836 = vmatpush1.msra.mxu0 %v1835
    %1837 = vmatprep.subr.mxu0 0.0
    %1838 = vmatpush1.msra.mxu0 0.0
    %1839 = vmatprep.subr.mxu0 0.0
    %1840 = vmatpush1.msra.mxu0 0.0
    %1841 = vmatprep.subr.mxu0 0.0
    %1842 = vmatpush1.msra.mxu0 0.0
    %1843 = vmatprep.subr.mxu0 0.0
    %1844 = vmatpush1.msra.mxu0 0.0
    %1845 = vmatprep.subr.mxu0 0.0
    %1846 = vmatpush1.msra.mxu0 0.0
    %1847 = vmatprep.subr.mxu0 0.0
    %1848 = vmatpush1.msra.mxu0 0.0
    %1849 = vmatprep.subr.mxu0 0.0
    %1850 = vmatpush1.msra.mxu0 0.0
    %1851 = vmatprep.subr.mxu0 0.0
    %1852 = vmatpush1.msra.mxu0 0.0
    %1853 = vmatprep.subr.mxu0 0.0
    %1854 = vmatpush1.msra.mxu0 0.0
    %1855 = vmatprep.subr.mxu0 0.0
    %1856 = vmatpush1.msra.mxu0 0.0
    %1857 = vmatprep.subr.mxu0 0.0
    %1858 = vmatpush1.msra.mxu0 0.0
    %1859 = vmatprep.subr.mxu0 0.0
    %1860 = vmatpush1.msra.mxu0 0.0
    %1861 = vmatprep.subr.mxu0 0.0
    %1862 = vmatpush1.msra.mxu0 0.0
    %1863 = vmatprep.subr.mxu0 0.0
    %1864 = vmatpush1.msra.mxu0 0.0
    %1865 = vmatprep.subr.mxu0 0.0
    %1866 = vmatpush1.msra.mxu0 0.0
    %1867 = vmatprep.subr.mxu0 0.0
    %1868 = vmatpush1.msra.mxu0 0.0
    %1869 = vmatprep.subr.mxu0 0.0
    %1870 = vmatpush1.msra.mxu0 0.0
    %1871 = vmatprep.subr.mxu0 0.0
    %1872 = vmatpush1.msra.mxu0 0.0
    %1873 = vmatprep.subr.mxu0 0.0
    %1874 = vmatpush1.msra.mxu0 0.0
    %1875 = vmatprep.subr.mxu0 0.0
    %1876 = vmatpush1.msra.mxu0 0.0
    %1877 = vmatprep.subr.mxu0 0.0
    %1878 = vmatpush1.msra.mxu0 0.0
    %1879 = vmatprep.subr.mxu0 0.0
    %1880 = vmatpush1.msra.mxu0 0.0
    %1881 = vmatprep.subr.mxu0 0.0
    %1882 = vmatpush1.msra.mxu0 0.0
    %1883 = vmatprep.subr.mxu0 0.0
    %1884 = vmatpush1.msra.mxu0 0.0
    %1885 = vmatprep.subr.mxu0 0.0
    %1886 = vmatpush1.msra.mxu0 0.0
    %1887 = vmatprep.subr.mxu0 0.0
    %1888 = vmatpush1.msra.mxu0 0.0
    %1889 = vmatprep.subr.mxu0 0.0
    %1890 = vmatpush1.msra.mxu0 0.0
    %1891 = vmatprep.subr.mxu0 0.0
    %1892 = vmatpush1.msra.mxu0 0.0
    %1893 = vmatprep.mubr.f32.mxu0 0.0
    %v1894 = vand.u32 %v1242, 4294901760
    %1895 = vmatmul.mubr.f32.gmra.mrb[0].mxu0 %v1894
    %v1896 = vpop.f32.mrb[0].mxu0
    %v1897 = vadd.f32 %v1806, %v1896
    %v1898 = vpop.f32.mrb[0].mxu0
    %1899 = vdwg.mxu0
    %1900 = vmatprep.subr.mxu0 0.0
    %v1901 = vand.u32 %v1237, 4294901760
    %v1902 = vsub.f32 %v1237, %v1901
    %1903 = vmatpush1.msra.mxu0 %v1902
    %1904 = vmatprep.subr.mxu0 0.0
    %v1905 = vand.u32 %v1238, 4294901760
    %v1906 = vsub.f32 %v1238, %v1905
    %1907 = vmatpush1.msra.mxu0 %v1906
    %1908 = vmatprep.subr.mxu0 0.0
    %v1909 = vand.u32 %v1239, 4294901760
    %v1910 = vsub.f32 %v1239, %v1909
    %1911 = vmatpush1.msra.mxu0 %v1910
    %1912 = vmatprep.subr.mxu0 0.0
    %v1913 = vand.u32 %v1240, 4294901760
    %v1914 = vsub.f32 %v1240, %v1913
    %1915 = vmatpush1.msra.mxu0 %v1914
    %1916 = vmatprep.subr.mxu0 0.0
    %1917 = vmatpush1.msra.mxu0 0.0
    %1918 = vmatprep.subr.mxu0 0.0
    %1919 = vmatpush1.msra.mxu0 0.0
    %1920 = vmatprep.subr.mxu0 0.0
    %1921 = vmatpush1.msra.mxu0 0.0
    %1922 = vmatprep.subr.mxu0 0.0
    %1923 = vmatpush1.msra.mxu0 0.0
    %1924 = vmatprep.subr.mxu0 0.0
    %1925 = vmatpush1.msra.mxu0 0.0
    %1926 = vmatprep.subr.mxu0 0.0
    %1927 = vmatpush1.msra.mxu0 0.0
    %1928 = vmatprep.subr.mxu0 0.0
    %1929 = vmatpush1.msra.mxu0 0.0
    %1930 = vmatprep.subr.mxu0 0.0
    %1931 = vmatpush1.msra.mxu0 0.0
    %1932 = vmatprep.subr.mxu0 0.0
    %1933 = vmatpush1.msra.mxu0 0.0
    %1934 = vmatprep.subr.mxu0 0.0
    %1935 = vmatpush1.msra.mxu0 0.0
    %1936 = vmatprep.subr.mxu0 0.0
    %1937 = vmatpush1.msra.mxu0 0.0
    %1938 = vmatprep.subr.mxu0 0.0
    %1939 = vmatpush1.msra.mxu0 0.0
    %1940 = vmatprep.subr.mxu0 0.0
    %1941 = vmatpush1.msra.mxu0 0.0
    %1942 = vmatprep.subr.mxu0 0.0
    %1943 = vmatpush1.msra.mxu0 0.0
    %1944 = vmatprep.subr.mxu0 0.0
    %1945 = vmatpush1.msra.mxu0 0.0
    %1946 = vmatprep.subr.mxu0 0.0
    %1947 = vmatpush1.msra.mxu0 0.0
    %1948 = vmatprep.subr.mxu0 0.0
    %1949 = vmatpush1.msra.mxu0 0.0
    %1950 = vmatprep.subr.mxu0 0.0
    %1951 = vmatpush1.msra.mxu0 0.0
    %1952 = vmatprep.subr.mxu0 0.0
    %1953 = vmatpush1.msra.mxu0 0.0
    %1954 = vmatprep.subr.mxu0 0.0
    %1955 = vmatpush1.msra.mxu0 0.0
    %1956 = vmatprep.subr.mxu0 0.0
    %1957 = vmatpush1.msra.mxu0 0.0
    %1958 = vmatprep.subr.mxu0 0.0
    %1959 = vmatpush1.msra.mxu0 0.0
    %1960 = vmatprep.subr.mxu0 0.0
    %1961 = vmatpush1.msra.mxu0 0.0
    %1962 = vmatprep.subr.mxu0 0.0
    %1963 = vmatpush1.msra.mxu0 0.0
    %1964 = vmatprep.subr.mxu0 0.0
    %1965 = vmatpush1.msra.mxu0 0.0
    %1966 = vmatprep.subr.mxu0 0.0
    %1967 = vmatpush1.msra.mxu0 0.0
    %1968 = vmatprep.subr.mxu0 0.0
    %1969 = vmatpush1.msra.mxu0 0.0
    %1970 = vmatprep.subr.mxu0 0.0
    %1971 = vmatpush1.msra.mxu0 0.0
    %1972 = vmatprep.mubr.f32.mxu0 0.0
    %v1973 = vand.u32 %v1242, 4294901760
    %v1974 = vsub.f32 %v1242, %v1973
    %1975 = vmatmul.mubr.f32.gmra.mrb[0].mxu0 %v1974
    %v1976 = vpop.f32.mrb[0].mxu0
    %v1977 = vadd.f32 %v1897, %v1976
    %v1978 = vpop.f32.mrb[0].mxu0
    %1979 = vdwg.mxu0
    %1980 = vmatprep.subr.mxu0 0.0
    %v1981 = vand.u32 %v1237, 4294901760
    %1982 = vmatpush1.msra.mxu0 %v1981
    %1983 = vmatprep.subr.mxu0 0.0
    %v1984 = vand.u32 %v1238, 4294901760
    %1985 = vmatpush1.msra.mxu0 %v1984
    %1986 = vmatprep.subr.mxu0 0.0
    %v1987 = vand.u32 %v1239, 4294901760
    %1988 = vmatpush1.msra.mxu0 %v1987
    %1989 = vmatprep.subr.mxu0 0.0
    %v1990 = vand.u32 %v1240, 4294901760
    %1991 = vmatpush1.msra.mxu0 %v1990
    %1992 = vmatprep.subr.mxu0 0.0
    %1993 = vmatpush1.msra.mxu0 0.0
    %1994 = vmatprep.subr.mxu0 0.0
    %1995 = vmatpush1.msra.mxu0 0.0
    %1996 = vmatprep.subr.mxu0 0.0
    %1997 = vmatpush1.msra.mxu0 0.0
    %1998 = vmatprep.subr.mxu0 0.0
    %1999 = vmatpush1.msra.mxu0 0.0
    %2000 = vmatprep.subr.mxu0 0.0
    %2001 = vmatpush1.msra.mxu0 0.0
    %2002 = vmatprep.subr.mxu0 0.0
    %2003 = vmatpush1.msra.mxu0 0.0
    %2004 = vmatprep.subr.mxu0 0.0
    %2005 = vmatpush1.msra.mxu0 0.0
    %2006 = vmatprep.subr.mxu0 0.0
    %2007 = vmatpush1.msra.mxu0 0.0
    %2008 = vmatprep.subr.mxu0 0.0
    %2009 = vmatpush1.msra.mxu0 0.0
    %2010 = vmatprep.subr.mxu0 0.0
    %2011 = vmatpush1.msra.mxu0 0.0
    %2012 = vmatprep.subr.mxu0 0.0
    %2013 = vmatpush1.msra.mxu0 0.0
    %2014 = vmatprep.subr.mxu0 0.0
    %2015 = vmatpush1.msra.mxu0 0.0
    %2016 = vmatprep.subr.mxu0 0.0
    %2017 = vmatpush1.msra.mxu0 0.0
    %2018 = vmatprep.subr.mxu0 0.0
    %2019 = vmatpush1.msra.mxu0 0.0
    %2020 = vmatprep.subr.mxu0 0.0
    %2021 = vmatpush1.msra.mxu0 0.0
    %2022 = vmatprep.subr.mxu0 0.0
    %2023 = vmatpush1.msra.mxu0 0.0
    %2024 = vmatprep.subr.mxu0 0.0
    %2025 = vmatpush1.msra.mxu0 0.0
    %2026 = vmatprep.subr.mxu0 0.0
    %2027 = vmatpush1.msra.mxu0 0.0
    %2028 = vmatprep.subr.mxu0 0.0
    %2029 = vmatpush1.msra.mxu0 0.0
    %2030 = vmatprep.subr.mxu0 0.0
    %2031 = vmatpush1.msra.mxu0 0.0
    %2032 = vmatprep.subr.mxu0 0.0
    %2033 = vmatpush1.msra.mxu0 0.0
    %2034 = vmatprep.subr.mxu0 0.0
    %2035 = vmatpush1.msra.mxu0 0.0
    %2036 = vmatprep.subr.mxu0 0.0
    %2037 = vmatpush1.msra.mxu0 0.0
    %2038 = vmatprep.subr.mxu0 0.0
    %2039 = vmatpush1.msra.mxu0 0.0
    %2040 = vmatprep.subr.mxu0 0.0
    %2041 = vmatpush1.msra.mxu0 0.0
    %2042 = vmatprep.subr.mxu0 0.0
    %2043 = vmatpush1.msra.mxu0 0.0
    %2044 = vmatprep.subr.mxu0 0.0
    %2045 = vmatpush1.msra.mxu0 0.0
    %2046 = vmatprep.subr.mxu0 0.0
    %2047 = vmatpush1.msra.mxu0 0.0
    %2048 = vmatprep.mubr.f32.mxu0 0.0
    %v2049 = vand.u32 %v1242, 4294901760
    %v2050 = vsub.f32 %v1242, %v2049
    %v2051 = vand.u32 %v2050, 4294901760
    %2052 = vmatmul.mubr.f32.gmra.mrb[0].mxu0 %v2051
    %v2053 = vpop.f32.mrb[0].mxu0
    %v2054 = vadd.f32 %v1977, %v2053
    %v2055 = vpop.f32.mrb[0].mxu0
    %2056 = vdwg.mxu0
    %2057 = vmatprep.subr.mxu0 0.0
    %v2058 = vand.u32 %v1237, 4294901760
    %v2059 = vsub.f32 %v1237, %v2058
    %v2060 = vand.u32 %v2059, 4294901760
    %2061 = vmatpush1.msra.mxu0 %v2060
    %2062 = vmatprep.subr.mxu0 0.0
    %v2063 = vand.u32 %v1238, 4294901760
    %v2064 = vsub.f32 %v1238, %v2063
    %v2065 = vand.u32 %v2064, 4294901760
    %2066 = vmatpush1.msra.mxu0 %v2065
    %2067 = vmatprep.subr.mxu0 0.0
    %v2068 = vand.u32 %v1239, 4294901760
    %v2069 = vsub.f32 %v1239, %v2068
    %v2070 = vand.u32 %v2069, 4294901760
    %2071 = vmatpush1.msra.mxu0 %v2070
    %2072 = vmatprep.subr.mxu0 0.0
    %v2073 = vand.u32 %v1240, 4294901760
    %v2074 = vsub.f32 %v1240, %v2073
    %v2075 = vand.u32 %v2074, 4294901760
    %2076 = vmatpush1.msra.mxu0 %v2075
    %2077 = vmatprep.subr.mxu0 0.0
    %2078 = vmatpush1.msra.mxu0 0.0
    %2079 = vmatprep.subr.mxu0 0.0
    %2080 = vmatpush1.msra.mxu0 0.0
    %2081 = vmatprep.subr.mxu0 0.0
    %2082 = vmatpush1.msra.mxu0 0.0
    %2083 = vmatprep.subr.mxu0 0.0
    %2084 = vmatpush1.msra.mxu0 0.0
    %2085 = vmatprep.subr.mxu0 0.0
    %2086 = vmatpush1.msra.mxu0 0.0
    %2087 = vmatprep.subr.mxu0 0.0
    %2088 = vmatpush1.msra.mxu0 0.0
    %2089 = vmatprep.subr.mxu0 0.0
    %2090 = vmatpush1.msra.mxu0 0.0
    %2091 = vmatprep.subr.mxu0 0.0
    %2092 = vmatpush1.msra.mxu0 0.0
    %2093 = vmatprep.subr.mxu0 0.0
    %2094 = vmatpush1.msra.mxu0 0.0
    %2095 = vmatprep.subr.mxu0 0.0
    %2096 = vmatpush1.msra.mxu0 0.0
    %2097 = vmatprep.subr.mxu0 0.0
    %2098 = vmatpush1.msra.mxu0 0.0
    %2099 = vmatprep.subr.mxu0 0.0
    %2100 = vmatpush1.msra.mxu0 0.0
    %2101 = vmatprep.subr.mxu0 0.0
    %2102 = vmatpush1.msra.mxu0 0.0
    %2103 = vmatprep.subr.mxu0 0.0
    %2104 = vmatpush1.msra.mxu0 0.0
    %2105 = vmatprep.subr.mxu0 0.0
    %2106 = vmatpush1.msra.mxu0 0.0
    %2107 = vmatprep.subr.mxu0 0.0
    %2108 = vmatpush1.msra.mxu0 0.0
    %2109 = vmatprep.subr.mxu0 0.0
    %2110 = vmatpush1.msra.mxu0 0.0
    %2111 = vmatprep.subr.mxu0 0.0
    %2112 = vmatpush1.msra.mxu0 0.0
    %2113 = vmatprep.subr.mxu0 0.0
    %2114 = vmatpush1.msra.mxu0 0.0
    %2115 = vmatprep.subr.mxu0 0.0
    %2116 = vmatpush1.msra.mxu0 0.0
    %2117 = vmatprep.subr.mxu0 0.0
    %2118 = vmatpush1.msra.mxu0 0.0
    %2119 = vmatprep.subr.mxu0 0.0
    %2120 = vmatpush1.msra.mxu0 0.0
    %2121 = vmatprep.subr.mxu0 0.0
    %2122 = vmatpush1.msra.mxu0 0.0
    %2123 = vmatprep.subr.mxu0 0.0
    %2124 = vmatpush1.msra.mxu0 0.0
    %2125 = vmatprep.subr.mxu0 0.0
    %2126 = vmatpush1.msra.mxu0 0.0
    %2127 = vmatprep.subr.mxu0 0.0
    %2128 = vmatpush1.msra.mxu0 0.0
    %2129 = vmatprep.subr.mxu0 0.0
    %2130 = vmatpush1.msra.mxu0 0.0
    %2131 = vmatprep.subr.mxu0 0.0
    %2132 = vmatpush1.msra.mxu0 0.0
    %2133 = vmatprep.mubr.f32.mxu0 0.0
    %v2134 = vand.u32 %v1242, 4294901760
    %2135 = vmatmul.mubr.f32.gmra.mrb[0].mxu0 %v2134
    %v2136 = vpop.f32.mrb[0].mxu0
    %v2137 = vadd.f32 %v2054, %v2136
    %v2138 = vpop.f32.mrb[0].mxu0
    %2139 = vdwg.mxu0
    %2140 = vmatprep.subr.mxu0 0.0
    %v2141 = vand.u32 %v1237, 4294901760
    %2142 = vmatpush1.msra.mxu0 %v2141
    %2143 = vmatprep.subr.mxu0 0.0
    %v2144 = vand.u32 %v1238, 4294901760
    %2145 = vmatpush1.msra.mxu0 %v2144
    %2146 = vmatprep.subr.mxu0 0.0
    %v2147 = vand.u32 %v1239, 4294901760
    %2148 = vmatpush1.msra.mxu0 %v2147
    %2149 = vmatprep.subr.mxu0 0.0
    %v2150 = vand.u32 %v1240, 4294901760
    %2151 = vmatpush1.msra.mxu0 %v2150
    %2152 = vmatprep.subr.mxu0 0.0
    %2153 = vmatpush1.msra.mxu0 0.0
    %2154 = vmatprep.subr.mxu0 0.0
    %2155 = vmatpush1.msra.mxu0 0.0
    %2156 = vmatprep.subr.mxu0 0.0
    %2157 = vmatpush1.msra.mxu0 0.0
    %2158 = vmatprep.subr.mxu0 0.0
    %2159 = vmatpush1.msra.mxu0 0.0
    %2160 = vmatprep.subr.mxu0 0.0
    %2161 = vmatpush1.msra.mxu0 0.0
    %2162 = vmatprep.subr.mxu0 0.0
    %2163 = vmatpush1.msra.mxu0 0.0
    %2164 = vmatprep.subr.mxu0 0.0
    %2165 = vmatpush1.msra.mxu0 0.0
    %2166 = vmatprep.subr.mxu0 0.0
    %2167 = vmatpush1.msra.mxu0 0.0
    %2168 = vmatprep.subr.mxu0 0.0
    %2169 = vmatpush1.msra.mxu0 0.0
    %2170 = vmatprep.subr.mxu0 0.0
    %2171 = vmatpush1.msra.mxu0 0.0
    %2172 = vmatprep.subr.mxu0 0.0
    %2173 = vmatpush1.msra.mxu0 0.0
    %2174 = vmatprep.subr.mxu0 0.0
    %2175 = vmatpush1.msra.mxu0 0.0
    %2176 = vmatprep.subr.mxu0 0.0
    %2177 = vmatpush1.msra.mxu0 0.0
    %2178 = vmatprep.subr.mxu0 0.0
    %2179 = vmatpush1.msra.mxu0 0.0
    %2180 = vmatprep.subr.mxu0 0.0
    %2181 = vmatpush1.msra.mxu0 0.0
    %2182 = vmatprep.subr.mxu0 0.0
    %2183 = vmatpush1.msra.mxu0 0.0
    %2184 = vmatprep.subr.mxu0 0.0
    %2185 = vmatpush1.msra.mxu0 0.0
    %2186 = vmatprep.subr.mxu0 0.0
    %2187 = vmatpush1.msra.mxu0 0.0
    %2188 = vmatprep.subr.mxu0 0.0
    %2189 = vmatpush1.msra.mxu0 0.0
    %2190 = vmatprep.subr.mxu0 0.0
    %2191 = vmatpush1.msra.mxu0 0.0
    %2192 = vmatprep.subr.mxu0 0.0
    %2193 = vmatpush1.msra.mxu0 0.0
    %2194 = vmatprep.subr.mxu0 0.0
    %2195 = vmatpush1.msra.mxu0 0.0
    %2196 = vmatprep.subr.mxu0 0.0
    %2197 = vmatpush1.msra.mxu0 0.0
    %2198 = vmatprep.subr.mxu0 0.0
    %2199 = vmatpush1.msra.mxu0 0.0
    %2200 = vmatprep.subr.mxu0 0.0
    %2201 = vmatpush1.msra.mxu0 0.0
    %2202 = vmatprep.subr.mxu0 0.0
    %2203 = vmatpush1.msra.mxu0 0.0
    %2204 = vmatprep.subr.mxu0 0.0
    %2205 = vmatpush1.msra.mxu0 0.0
    %2206 = vmatprep.subr.mxu0 0.0
    %2207 = vmatpush1.msra.mxu0 0.0
    %2208 = vmatprep.mubr.f32.mxu0 0.0
    %v2209 = vand.u32 %v1242, 4294901760
    %2210 = vmatmul.mubr.f32.gmra.mrb[0].mxu0 %v2209
    %v2211 = vpop.f32.mrb[0].mxu0
    %v2212 = vadd.f32 %v2137, %v2211
    %v2213 = vpop.f32.mrb[0].mxu0
    %2214 = vdwg.mxu0
    %v2216 = vrot.slane %v2212, 6
    %v2218 = vadd.f32 %v1231, %v2216
    %v2219 = vxor.u32 %v1729, 2147483648
    %v2220 = vmul.f32 %v2219, 1.442695
    %v2221 = vpow.pop %v2220
    %v2222 = vadd.f32 %v2221, 1.0
    %v2223 = vrcp.pop %v2222
    %v2224 = vmul.f32 1.0, %v2223
    %v2225 = vtanh.pop %v1729
    %v2226 = vmul.f32 %v2224, 0.0
    %2228 = vrot.lane.b32.xlu0 %v2225, 64
    %v2229 = vpop.permute.xlu0 %2228
    %v2231 = vmul.f32 %v2224, %v2229
    %2233 = vrot.lane.b32.xlu0 %v2231, 32
    %v2234 = vpop.permute.xlu0 %2233
    %v2236 = vadd.f32 %v2226, %v2234
    %v2237 = vtanh.pop %v2236
    %2239 = vrot.lane.b32.xlu0 %v2237, 64
    %v2240 = vpop.permute.xlu0 %2239
    %v2242 = vmul.f32 %v2224, %v2240
    %v2243 = vxor.u32 %v2218, 2147483648
    %v2244 = vmul.f32 %v2243, 1.442695
    %v2245 = vpow.pop %v2244
    %v2246 = vadd.f32 %v2245, 1.0
    %v2247 = vrcp.pop %v2246
    %v2248 = vmul.f32 1.0, %v2247
    %v2249 = vtanh.pop %v2218
    %v2250 = vmul.f32 %v2248, 0.0
    %2252 = vrot.lane.b32.xlu0 %v2249, 64
    %v2253 = vpop.permute.xlu0 %2252
    %v2255 = vmul.f32 %v2248, %v2253
    %2257 = vrot.lane.b32.xlu0 %v2255, 32
    %v2258 = vpop.permute.xlu0 %2257
    %v2260 = vadd.f32 %v2250, %v2258
    %v2261 = vtanh.pop %v2260
    %2263 = vrot.lane.b32.xlu0 %v2261, 64
    %v2264 = vpop.permute.xlu0 %2263
    %v2266 = vmul.f32 %v2248, %v2264
    %2268 = vrot.lane.b32.xlu0 %v2242, 32
    %v2269 = vpop.permute.xlu0 %2268
    %v2270 = vsel %vm634, %v2269, 0
    %2272 = vmatprep.subr.mxu0 0.0
    %v2273 = vand.u32 %v1233, 4294901760
    %2274 = vmatpush1.msra.mxu0 %v2273
    %2275 = vmatprep.subr.mxu0 0.0
    %v2276 = vand.u32 %v1234, 4294901760
    %2277 = vmatpush1.msra.mxu0 %v2276
    %2278 = vmatprep.subr.mxu0 0.0
    %v2279 = vand.u32 %v1235, 4294901760
    %2280 = vmatpush1.msra.mxu0 %v2279
    %2281 = vmatprep.subr.mxu0 0.0
    %v2282 = vand.u32 %v1236, 4294901760
    %2283 = vmatpush1.msra.mxu0 %v2282
    %2284 = vmatprep.subr.mxu0 0.0
    %2285 = vmatpush1.msra.mxu0 0.0
    %2286 = vmatprep.subr.mxu0 0.0
    %2287 = vmatpush1.msra.mxu0 0.0
    %2288 = vmatprep.subr.mxu0 0.0
    %2289 = vmatpush1.msra.mxu0 0.0
    %2290 = vmatprep.subr.mxu0 0.0
    %2291 = vmatpush1.msra.mxu0 0.0
    %2292 = vmatprep.subr.mxu0 0.0
    %2293 = vmatpush1.msra.mxu0 0.0
    %2294 = vmatprep.subr.mxu0 0.0
    %2295 = vmatpush1.msra.mxu0 0.0
    %2296 = vmatprep.subr.mxu0 0.0
    %2297 = vmatpush1.msra.mxu0 0.0
    %2298 = vmatprep.subr.mxu0 0.0
    %2299 = vmatpush1.msra.mxu0 0.0
    %2300 = vmatprep.subr.mxu0 0.0
    %2301 = vmatpush1.msra.mxu0 0.0
    %2302 = vmatprep.subr.mxu0 0.0
    %2303 = vmatpush1.msra.mxu0 0.0
    %2304 = vmatprep.subr.mxu0 0.0
    %2305 = vmatpush1.msra.mxu0 0.0
    %2306 = vmatprep.subr.mxu0 0.0
    %2307 = vmatpush1.msra.mxu0 0.0
    %2308 = vmatprep.subr.mxu0 0.0
    %2309 = vmatpush1.msra.mxu0 0.0
    %2310 = vmatprep.subr.mxu0 0.0
    %2311 = vmatpush1.msra.mxu0 0.0
    %2312 = vmatprep.subr.mxu0 0.0
    %2313 = vmatpush1.msra.mxu0 0.0
    %2314 = vmatprep.subr.mxu0 0.0
    %2315 = vmatpush1.msra.mxu0 0.0
    %2316 = vmatprep.subr.mxu0 0.0
    %2317 = vmatpush1.msra.mxu0 0.0
    %2318 = vmatprep.subr.mxu0 0.0
    %2319 = vmatpush1.msra.mxu0 0.0
    %2320 = vmatprep.subr.mxu0 0.0
    %2321 = vmatpush1.msra.mxu0 0.0
    %2322 = vmatprep.subr.mxu0 0.0
    %2323 = vmatpush1.msra.mxu0 0.0
    %2324 = vmatprep.subr.mxu0 0.0
    %2325 = vmatpush1.msra.mxu0 0.0
    %2326 = vmatprep.subr.mxu0 0.0
    %2327 = vmatpush1.msra.mxu0 0.0
    %2328 = vmatprep.subr.mxu0 0.0
    %2329 = vmatpush1.msra.mxu0 0.0
    %2330 = vmatprep.subr.mxu0 0.0
    %2331 = vmatpush1.msra.mxu0 0.0
    %2332 = vmatprep.subr.mxu0 0.0
    %2333 = vmatpush1.msra.mxu0 0.0
    %2334 = vmatprep.subr.mxu0 0.0
    %2335 = vmatpush1.msra.mxu0 0.0
    %2336 = vmatprep.subr.mxu0 0.0
    %2337 = vmatpush1.msra.mxu0 0.0
    %2338 = vmatprep.subr.mxu0 0.0
    %2339 = vmatpush1.msra.mxu0 0.0
    %2340 = vmatprep.mubr.f32.mxu0 0.0
    %v2341 = vand.u32 %v2270, 4294901760
    %v2342 = vsub.f32 %v2270, %v2341
    %v2343 = vand.u32 %v2342, 4294901760
    %v2344 = vsub.f32 %v2342, %v2343
    %v2345 = vand.u32 %v2344, 4294901760
    %2346 = vmatmul.mubr.f32.gmra.mrb[0].mxu0 %v2345
    %v2347 = vpop.f32.mrb[0].mxu0
    %v2348 = vadd.f32 0.0, %v2347
    %v2349 = vpop.f32.mrb[0].mxu0
    %2350 = vdwg.mxu0
    %2351 = vmatprep.subr.mxu0 0.0
    %v2352 = vand.u32 %v1233, 4294901760
    %v2353 = vsub.f32 %v1233, %v2352
    %v2354 = vand.u32 %v2353, 4294901760
    %v2355 = vsub.f32 %v2353, %v2354
    %v2356 = vand.u32 %v2355, 4294901760
    %2357 = vmatpush1.msra.mxu0 %v2356
    %2358 = vmatprep.subr.mxu0 0.0
    %v2359 = vand.u32 %v1234, 4294901760
    %v2360 = vsub.f32 %v1234, %v2359
    %v2361 = vand.u32 %v2360, 4294901760
    %v2362 = vsub.f32 %v2360, %v2361
    %v2363 = vand.u32 %v2362, 4294901760
    %2364 = vmatpush1.msra.mxu0 %v2363
    %2365 = vmatprep.subr.mxu0 0.0
    %v2366 = vand.u32 %v1235, 4294901760
    %v2367 = vsub.f32 %v1235, %v2366
    %v2368 = vand.u32 %v2367, 4294901760
    %v2369 = vsub.f32 %v2367, %v2368
    %v2370 = vand.u32 %v2369, 4294901760
    %2371 = vmatpush1.msra.mxu0 %v2370
    %2372 = vmatprep.subr.mxu0 0.0
    %v2373 = vand.u32 %v1236, 4294901760
    %v2374 = vsub.f32 %v1236, %v2373
    %v2375 = vand.u32 %v2374, 4294901760
    %v2376 = vsub.f32 %v2374, %v2375
    %v2377 = vand.u32 %v2376, 4294901760
    %2378 = vmatpush1.msra.mxu0 %v2377
    %2379 = vmatprep.subr.mxu0 0.0
    %2380 = vmatpush1.msra.mxu0 0.0
    %2381 = vmatprep.subr.mxu0 0.0
    %2382 = vmatpush1.msra.mxu0 0.0
    %2383 = vmatprep.subr.mxu0 0.0
    %2384 = vmatpush1.msra.mxu0 0.0
    %2385 = vmatprep.subr.mxu0 0.0
    %2386 = vmatpush1.msra.mxu0 0.0
    %2387 = vmatprep.subr.mxu0 0.0
    %2388 = vmatpush1.msra.mxu0 0.0
    %2389 = vmatprep.subr.mxu0 0.0
    %2390 = vmatpush1.msra.mxu0 0.0
    %2391 = vmatprep.subr.mxu0 0.0
    %2392 = vmatpush1.msra.mxu0 0.0
    %2393 = vmatprep.subr.mxu0 0.0
    %2394 = vmatpush1.msra.mxu0 0.0
    %2395 = vmatprep.subr.mxu0 0.0
    %2396 = vmatpush1.msra.mxu0 0.0
    %2397 = vmatprep.subr.mxu0 0.0
    %2398 = vmatpush1.msra.mxu0 0.0
    %2399 = vmatprep.subr.mxu0 0.0
    %2400 = vmatpush1.msra.mxu0 0.0
    %2401 = vmatprep.subr.mxu0 0.0
    %2402 = vmatpush1.msra.mxu0 0.0
    %2403 = vmatprep.subr.mxu0 0.0
    %2404 = vmatpush1.msra.mxu0 0.0
    %2405 = vmatprep.subr.mxu0 0.0
    %2406 = vmatpush1.msra.mxu0 0.0
    %2407 = vmatprep.subr.mxu0 0.0
    %2408 = vmatpush1.msra.mxu0 0.0
    %2409 = vmatprep.subr.mxu0 0.0
    %2410 = vmatpush1.msra.mxu0 0.0
    %2411 = vmatprep.subr.mxu0 0.0
    %2412 = vmatpush1.msra.mxu0 0.0
    %2413 = vmatprep.subr.mxu0 0.0
    %2414 = vmatpush1.msra.mxu0 0.0
    %2415 = vmatprep.subr.mxu0 0.0
    %2416 = vmatpush1.msra.mxu0 0.0
    %2417 = vmatprep.subr.mxu0 0.0
    %2418 = vmatpush1.msra.mxu0 0.0
    %2419 = vmatprep.subr.mxu0 0.0
    %2420 = vmatpush1.msra.mxu0 0.0
    %2421 = vmatprep.subr.mxu0 0.0
    %2422 = vmatpush1.msra.mxu0 0.0
    %2423 = vmatprep.subr.mxu0 0.0
    %2424 = vmatpush1.msra.mxu0 0.0
    %2425 = vmatprep.subr.mxu0 0.0
    %2426 = vmatpush1.msra.mxu0 0.0
    %2427 = vmatprep.subr.mxu0 0.0
    %2428 = vmatpush1.msra.mxu0 0.0
    %2429 = vmatprep.subr.mxu0 0.0
    %2430 = vmatpush1.msra.mxu0 0.0
    %2431 = vmatprep.subr.mxu0 0.0
    %2432 = vmatpush1.msra.mxu0 0.0
    %2433 = vmatprep.subr.mxu0 0.0
    %2434 = vmatpush1.msra.mxu0 0.0
    %2435 = vmatprep.mubr.f32.mxu0 0.0
    %v2436 = vand.u32 %v2270, 4294901760
    %2437 = vmatmul.mubr.f32.gmra.mrb[0].mxu0 %v2436
    %v2438 = vpop.f32.mrb[0].mxu0
    %v2439 = vadd.f32 %v2348, %v2438
    %v2440 = vpop.f32.mrb[0].mxu0
    %2441 = vdwg.mxu0
    %2442 = vmatprep.subr.mxu0 0.0
    %v2443 = vand.u32 %v1233, 4294901760
    %v2444 = vsub.f32 %v1233, %v2443
    %2445 = vmatpush1.msra.mxu0 %v2444
    %2446 = vmatprep.subr.mxu0 0.0
    %v2447 = vand.u32 %v1234, 4294901760
    %v2448 = vsub.f32 %v1234, %v2447
    %2449 = vmatpush1.msra.mxu0 %v2448
    %2450 = vmatprep.subr.mxu0 0.0
    %v2451 = vand.u32 %v1235, 4294901760
    %v2452 = vsub.f32 %v1235, %v2451
    %2453 = vmatpush1.msra.mxu0 %v2452
    %2454 = vmatprep.subr.mxu0 0.0
    %v2455 = vand.u32 %v1236, 4294901760
    %v2456 = vsub.f32 %v1236, %v2455
    %2457 = vmatpush1.msra.mxu0 %v2456
    %2458 = vmatprep.subr.mxu0 0.0
    %2459 = vmatpush1.msra.mxu0 0.0
    %2460 = vmatprep.subr.mxu0 0.0
    %2461 = vmatpush1.msra.mxu0 0.0
    %2462 = vmatprep.subr.mxu0 0.0
    %2463 = vmatpush1.msra.mxu0 0.0
    %2464 = vmatprep.subr.mxu0 0.0
    %2465 = vmatpush1.msra.mxu0 0.0
    %2466 = vmatprep.subr.mxu0 0.0
    %2467 = vmatpush1.msra.mxu0 0.0
    %2468 = vmatprep.subr.mxu0 0.0
    %2469 = vmatpush1.msra.mxu0 0.0
    %2470 = vmatprep.subr.mxu0 0.0
    %2471 = vmatpush1.msra.mxu0 0.0
    %2472 = vmatprep.subr.mxu0 0.0
    %2473 = vmatpush1.msra.mxu0 0.0
    %2474 = vmatprep.subr.mxu0 0.0
    %2475 = vmatpush1.msra.mxu0 0.0
    %2476 = vmatprep.subr.mxu0 0.0
    %2477 = vmatpush1.msra.mxu0 0.0
    %2478 = vmatprep.subr.mxu0 0.0
    %2479 = vmatpush1.msra.mxu0 0.0
    %2480 = vmatprep.subr.mxu0 0.0
    %2481 = vmatpush1.msra.mxu0 0.0
    %2482 = vmatprep.subr.mxu0 0.0
    %2483 = vmatpush1.msra.mxu0 0.0
    %2484 = vmatprep.subr.mxu0 0.0
    %2485 = vmatpush1.msra.mxu0 0.0
    %2486 = vmatprep.subr.mxu0 0.0
    %2487 = vmatpush1.msra.mxu0 0.0
    %2488 = vmatprep.subr.mxu0 0.0
    %2489 = vmatpush1.msra.mxu0 0.0
    %2490 = vmatprep.subr.mxu0 0.0
    %2491 = vmatpush1.msra.mxu0 0.0
    %2492 = vmatprep.subr.mxu0 0.0
    %2493 = vmatpush1.msra.mxu0 0.0
    %2494 = vmatprep.subr.mxu0 0.0
    %2495 = vmatpush1.msra.mxu0 0.0
    %2496 = vmatprep.subr.mxu0 0.0
    %2497 = vmatpush1.msra.mxu0 0.0
    %2498 = vmatprep.subr.mxu0 0.0
    %2499 = vmatpush1.msra.mxu0 0.0
    %2500 = vmatprep.subr.mxu0 0.0
    %2501 = vmatpush1.msra.mxu0 0.0
    %2502 = vmatprep.subr.mxu0 0.0
    %2503 = vmatpush1.msra.mxu0 0.0
    %2504 = vmatprep.subr.mxu0 0.0
    %2505 = vmatpush1.msra.mxu0 0.0
    %2506 = vmatprep.subr.mxu0 0.0
    %2507 = vmatpush1.msra.mxu0 0.0
    %2508 = vmatprep.subr.mxu0 0.0
    %2509 = vmatpush1.msra.mxu0 0.0
    %2510 = vmatprep.subr.mxu0 0.0
    %2511 = vmatpush1.msra.mxu0 0.0
    %2512 = vmatprep.subr.mxu0 0.0
    %2513 = vmatpush1.msra.mxu0 0.0
    %2514 = vmatprep.mubr.f32.mxu0 0.0
    %v2515 = vand.u32 %v2270, 4294901760
    %v2516 = vsub.f32 %v2270, %v2515
    %2517 = vmatmul.mubr.f32.gmra.mrb[0].mxu0 %v2516
    %v2518 = vpop.f32.mrb[0].mxu0
    %v2519 = vadd.f32 %v2439, %v2518
    %v2520 = vpop.f32.mrb[0].mxu0
    %2521 = vdwg.mxu0
    %2522 = vmatprep.subr.mxu0 0.0
    %v2523 = vand.u32 %v1233, 4294901760
    %2524 = vmatpush1.msra.mxu0 %v2523
    %2525 = vmatprep.subr.mxu0 0.0
    %v2526 = vand.u32 %v1234, 4294901760
    %2527 = vmatpush1.msra.mxu0 %v2526
    %2528 = vmatprep.subr.mxu0 0.0
    %v2529 = vand.u32 %v1235, 4294901760
    %2530 = vmatpush1.msra.mxu0 %v2529
    %2531 = vmatprep.subr.mxu0 0.0
    %v2532 = vand.u32 %v1236, 4294901760
    %2533 = vmatpush1.msra.mxu0 %v2532
    %2534 = vmatprep.subr.mxu0 0.0
    %2535 = vmatpush1.msra.mxu0 0.0
    %2536 = vmatprep.subr.mxu0 0.0
    %2537 = vmatpush1.msra.mxu0 0.0
    %2538 = vmatprep.subr.mxu0 0.0
    %2539 = vmatpush1.msra.mxu0 0.0
    %2540 = vmatprep.subr.mxu0 0.0
    %2541 = vmatpush1.msra.mxu0 0.0
    %2542 = vmatprep.subr.mxu0 0.0
    %2543 = vmatpush1.msra.mxu0 0.0
    %2544 = vmatprep.subr.mxu0 0.0
    %2545 = vmatpush1.msra.mxu0 0.0
    %2546 = vmatprep.subr.mxu0 0.0
    %2547 = vmatpush1.msra.mxu0 0.0
    %2548 = vmatprep.subr.mxu0 0.0
    %2549 = vmatpush1.msra.mxu0 0.0
    %2550 = vmatprep.subr.mxu0 0.0
    %2551 = vmatpush1.msra.mxu0 0.0
    %2552 = vmatprep.subr.mxu0 0.0
    %2553 = vmatpush1.msra.mxu0 0.0
    %2554 = vmatprep.subr.mxu0 0.0
    %2555 = vmatpush1.msra.mxu0 0.0
    %2556 = vmatprep.subr.mxu0 0.0
    %2557 = vmatpush1.msra.mxu0 0.0
    %2558 = vmatprep.subr.mxu0 0.0
    %2559 = vmatpush1.msra.mxu0 0.0
    %2560 = vmatprep.subr.mxu0 0.0
    %2561 = vmatpush1.msra.mxu0 0.0
    %2562 = vmatprep.subr.mxu0 0.0
    %2563 = vmatpush1.msra.mxu0 0.0
    %2564 = vmatprep.subr.mxu0 0.0
    %2565 = vmatpush1.msra.mxu0 0.0
    %2566 = vmatprep.subr.mxu0 0.0
    %2567 = vmatpush1.msra.mxu0 0.0
    %2568 = vmatprep.subr.mxu0 0.0
    %2569 = vmatpush1.msra.mxu0 0.0
    %2570 = vmatprep.subr.mxu0 0.0
    %2571 = vmatpush1.msra.mxu0 0.0
    %2572 = vmatprep.subr.mxu0 0.0
    %2573 = vmatpush1.msra.mxu0 0.0
    %2574 = vmatprep.subr.mxu0 0.0
    %2575 = vmatpush1.msra.mxu0 0.0
    %2576 = vmatprep.subr.mxu0 0.0
    %2577 = vmatpush1.msra.mxu0 0.0
    %2578 = vmatprep.subr.mxu0 0.0
    %2579 = vmatpush1.msra.mxu0 0.0
    %2580 = vmatprep.subr.mxu0 0.0
    %2581 = vmatpush1.msra.mxu0 0.0
    %2582 = vmatprep.subr.mxu0 0.0
    %2583 = vmatpush1.msra.mxu0 0.0
    %2584 = vmatprep.subr.mxu0 0.0
    %2585 = vmatpush1.msra.mxu0 0.0
    %2586 = vmatprep.subr.mxu0 0.0
    %2587 = vmatpush1.msra.mxu0 0.0
    %2588 = vmatprep.subr.mxu0 0.0
    %2589 = vmatpush1.msra.mxu0 0.0
    %2590 = vmatprep.mubr.f32.mxu0 0.0
    %v2591 = vand.u32 %v2270, 4294901760
    %v2592 = vsub.f32 %v2270, %v2591
    %v2593 = vand.u32 %v2592, 4294901760
    %2594 = vmatmul.mubr.f32.gmra.mrb[0].mxu0 %v2593
    %v2595 = vpop.f32.mrb[0].mxu0
    %v2596 = vadd.f32 %v2519, %v2595
    %v2597 = vpop.f32.mrb[0].mxu0
    %2598 = vdwg.mxu0
    %2599 = vmatprep.subr.mxu0 0.0
    %v2600 = vand.u32 %v1233, 4294901760
    %v2601 = vsub.f32 %v1233, %v2600
    %v2602 = vand.u32 %v2601, 4294901760
    %2603 = vmatpush1.msra.mxu0 %v2602
    %2604 = vmatprep.subr.mxu0 0.0
    %v2605 = vand.u32 %v1234, 4294901760
    %v2606 = vsub.f32 %v1234, %v2605
    %v2607 = vand.u32 %v2606, 4294901760
    %2608 = vmatpush1.msra.mxu0 %v2607
    %2609 = vmatprep.subr.mxu0 0.0
    %v2610 = vand.u32 %v1235, 4294901760
    %v2611 = vsub.f32 %v1235, %v2610
    %v2612 = vand.u32 %v2611, 4294901760
    %2613 = vmatpush1.msra.mxu0 %v2612
    %2614 = vmatprep.subr.mxu0 0.0
    %v2615 = vand.u32 %v1236, 4294901760
    %v2616 = vsub.f32 %v1236, %v2615
    %v2617 = vand.u32 %v2616, 4294901760
    %2618 = vmatpush1.msra.mxu0 %v2617
    %2619 = vmatprep.subr.mxu0 0.0
    %2620 = vmatpush1.msra.mxu0 0.0
    %2621 = vmatprep.subr.mxu0 0.0
    %2622 = vmatpush1.msra.mxu0 0.0
    %2623 = vmatprep.subr.mxu0 0.0
    %2624 = vmatpush1.msra.mxu0 0.0
    %2625 = vmatprep.subr.mxu0 0.0
    %2626 = vmatpush1.msra.mxu0 0.0
    %2627 = vmatprep.subr.mxu0 0.0
    %2628 = vmatpush1.msra.mxu0 0.0
    %2629 = vmatprep.subr.mxu0 0.0
    %2630 = vmatpush1.msra.mxu0 0.0
    %2631 = vmatprep.subr.mxu0 0.0
    %2632 = vmatpush1.msra.mxu0 0.0
    %2633 = vmatprep.subr.mxu0 0.0
    %2634 = vmatpush1.msra.mxu0 0.0
    %2635 = vmatprep.subr.mxu0 0.0
    %2636 = vmatpush1.msra.mxu0 0.0
    %2637 = vmatprep.subr.mxu0 0.0
    %2638 = vmatpush1.msra.mxu0 0.0
    %2639 = vmatprep.subr.mxu0 0.0
    %2640 = vmatpush1.msra.mxu0 0.0
    %2641 = vmatprep.subr.mxu0 0.0
    %2642 = vmatpush1.msra.mxu0 0.0
    %2643 = vmatprep.subr.mxu0 0.0
    %2644 = vmatpush1.msra.mxu0 0.0
    %2645 = vmatprep.subr.mxu0 0.0
    %2646 = vmatpush1.msra.mxu0 0.0
    %2647 = vmatprep.subr.mxu0 0.0
    %2648 = vmatpush1.msra.mxu0 0.0
    %2649 = vmatprep.subr.mxu0 0.0
    %2650 = vmatpush1.msra.mxu0 0.0
    %2651 = vmatprep.subr.mxu0 0.0
    %2652 = vmatpush1.msra.mxu0 0.0
    %2653 = vmatprep.subr.mxu0 0.0
    %2654 = vmatpush1.msra.mxu0 0.0
    %2655 = vmatprep.subr.mxu0 0.0
    %2656 = vmatpush1.msra.mxu0 0.0
    %2657 = vmatprep.subr.mxu0 0.0
    %2658 = vmatpush1.msra.mxu0 0.0
    %2659 = vmatprep.subr.mxu0 0.0
    %2660 = vmatpush1.msra.mxu0 0.0
    %2661 = vmatprep.subr.mxu0 0.0
    %2662 = vmatpush1.msra.mxu0 0.0
    %2663 = vmatprep.subr.mxu0 0.0
    %2664 = vmatpush1.msra.mxu0 0.0
    %2665 = vmatprep.subr.mxu0 0.0
    %2666 = vmatpush1.msra.mxu0 0.0
    %2667 = vmatprep.subr.mxu0 0.0
    %2668 = vmatpush1.msra.mxu0 0.0
    %2669 = vmatprep.subr.mxu0 0.0
    %2670 = vmatpush1.msra.mxu0 0.0
    %2671 = vmatprep.subr.mxu0 0.0
    %2672 = vmatpush1.msra.mxu0 0.0
    %2673 = vmatprep.subr.mxu0 0.0
    %2674 = vmatpush1.msra.mxu0 0.0
    %2675 = vmatprep.mubr.f32.mxu0 0.0
    %v2676 = vand.u32 %v2270, 4294901760
    %2677 = vmatmul.mubr.f32.gmra.mrb[0].mxu0 %v2676
    %v2678 = vpop.f32.mrb[0].mxu0
    %v2679 = vadd.f32 %v2596, %v2678
    %v2680 = vpop.f32.mrb[0].mxu0
    %2681 = vdwg.mxu0
    %2682 = vmatprep.subr.mxu0 0.0
    %v2683 = vand.u32 %v1233, 4294901760
    %2684 = vmatpush1.msra.mxu0 %v2683
    %2685 = vmatprep.subr.mxu0 0.0
    %v2686 = vand.u32 %v1234, 4294901760
    %2687 = vmatpush1.msra.mxu0 %v2686
    %2688 = vmatprep.subr.mxu0 0.0
    %v2689 = vand.u32 %v1235, 4294901760
    %2690 = vmatpush1.msra.mxu0 %v2689
    %2691 = vmatprep.subr.mxu0 0.0
    %v2692 = vand.u32 %v1236, 4294901760
    %2693 = vmatpush1.msra.mxu0 %v2692
    %2694 = vmatprep.subr.mxu0 0.0
    %2695 = vmatpush1.msra.mxu0 0.0
    %2696 = vmatprep.subr.mxu0 0.0
    %2697 = vmatpush1.msra.mxu0 0.0
    %2698 = vmatprep.subr.mxu0 0.0
    %2699 = vmatpush1.msra.mxu0 0.0
    %2700 = vmatprep.subr.mxu0 0.0
    %2701 = vmatpush1.msra.mxu0 0.0
    %2702 = vmatprep.subr.mxu0 0.0
    %2703 = vmatpush1.msra.mxu0 0.0
    %2704 = vmatprep.subr.mxu0 0.0
    %2705 = vmatpush1.msra.mxu0 0.0
    %2706 = vmatprep.subr.mxu0 0.0
    %2707 = vmatpush1.msra.mxu0 0.0
    %2708 = vmatprep.subr.mxu0 0.0
    %2709 = vmatpush1.msra.mxu0 0.0
    %2710 = vmatprep.subr.mxu0 0.0
    %2711 = vmatpush1.msra.mxu0 0.0
    %2712 = vmatprep.subr.mxu0 0.0
    %2713 = vmatpush1.msra.mxu0 0.0
    %2714 = vmatprep.subr.mxu0 0.0
    %2715 = vmatpush1.msra.mxu0 0.0
    %2716 = vmatprep.subr.mxu0 0.0
    %2717 = vmatpush1.msra.mxu0 0.0
    %2718 = vmatprep.subr.mxu0 0.0
    %2719 = vmatpush1.msra.mxu0 0.0
    %2720 = vmatprep.subr.mxu0 0.0
    %2721 = vmatpush1.msra.mxu0 0.0
    %2722 = vmatprep.subr.mxu0 0.0
    %2723 = vmatpush1.msra.mxu0 0.0
    %2724 = vmatprep.subr.mxu0 0.0
    %2725 = vmatpush1.msra.mxu0 0.0
    %2726 = vmatprep.subr.mxu0 0.0
    %2727 = vmatpush1.msra.mxu0 0.0
    %2728 = vmatprep.subr.mxu0 0.0
    %2729 = vmatpush1.msra.mxu0 0.0
    %2730 = vmatprep.subr.mxu0 0.0
    %2731 = vmatpush1.msra.mxu0 0.0
    %2732 = vmatprep.subr.mxu0 0.0
    %2733 = vmatpush1.msra.mxu0 0.0
    %2734 = vmatprep.subr.mxu0 0.0
    %2735 = vmatpush1.msra.mxu0 0.0
    %2736 = vmatprep.subr.mxu0 0.0
    %2737 = vmatpush1.msra.mxu0 0.0
    %2738 = vmatprep.subr.mxu0 0.0
    %2739 = vmatpush1.msra.mxu0 0.0
    %2740 = vmatprep.subr.mxu0 0.0
    %2741 = vmatpush1.msra.mxu0 0.0
    %2742 = vmatprep.subr.mxu0 0.0
    %2743 = vmatpush1.msra.mxu0 0.0
    %2744 = vmatprep.subr.mxu0 0.0
    %2745 = vmatpush1.msra.mxu0 0.0
    %2746 = vmatprep.subr.mxu0 0.0
    %2747 = vmatpush1.msra.mxu0 0.0
    %2748 = vmatprep.subr.mxu0 0.0
    %2749 = vmatpush1.msra.mxu0 0.0
    %2750 = vmatprep.mubr.f32.mxu0 0.0
    %v2751 = vand.u32 %v2270, 4294901760
    %2752 = vmatmul.mubr.f32.gmra.mrb[0].mxu0 %v2751
    %v2753 = vpop.f32.mrb[0].mxu0
    %v2754 = vadd.f32 %v2679, %v2753
    %v2755 = vpop.f32.mrb[0].mxu0
    %2756 = vdwg.mxu0
    %v2758 = vrot.slane %v2754, 6
    %v2760 = vadd.f32 %v1222, %v2758
    %v2762 = vrot.slane %v2266, 2
    %2763 = vrot.lane.b32.xlu0 %v2762, 32
    %v2764 = vpop.permute.xlu0 %2763
    %v2765 = vsel %vm634, %v2764, 0
    %2767 = vmatprep.subr.mxu0 0.0
    %v2768 = vand.u32 %v1237, 4294901760
    %2769 = vmatpush1.msra.mxu0 %v2768
    %2770 = vmatprep.subr.mxu0 0.0
    %v2771 = vand.u32 %v1238, 4294901760
    %2772 = vmatpush1.msra.mxu0 %v2771
    %2773 = vmatprep.subr.mxu0 0.0
    %v2774 = vand.u32 %v1239, 4294901760
    %2775 = vmatpush1.msra.mxu0 %v2774
    %2776 = vmatprep.subr.mxu0 0.0
    %v2777 = vand.u32 %v1240, 4294901760
    %2778 = vmatpush1.msra.mxu0 %v2777
    %2779 = vmatprep.subr.mxu0 0.0
    %2780 = vmatpush1.msra.mxu0 0.0
    %2781 = vmatprep.subr.mxu0 0.0
    %2782 = vmatpush1.msra.mxu0 0.0
    %2783 = vmatprep.subr.mxu0 0.0
    %2784 = vmatpush1.msra.mxu0 0.0
    %2785 = vmatprep.subr.mxu0 0.0
    %2786 = vmatpush1.msra.mxu0 0.0
    %2787 = vmatprep.subr.mxu0 0.0
    %2788 = vmatpush1.msra.mxu0 0.0
    %2789 = vmatprep.subr.mxu0 0.0
    %2790 = vmatpush1.msra.mxu0 0.0
    %2791 = vmatprep.subr.mxu0 0.0
    %2792 = vmatpush1.msra.mxu0 0.0
    %2793 = vmatprep.subr.mxu0 0.0
    %2794 = vmatpush1.msra.mxu0 0.0
    %2795 = vmatprep.subr.mxu0 0.0
    %2796 = vmatpush1.msra.mxu0 0.0
    %2797 = vmatprep.subr.mxu0 0.0
    %2798 = vmatpush1.msra.mxu0 0.0
    %2799 = vmatprep.subr.mxu0 0.0
    %2800 = vmatpush1.msra.mxu0 0.0
    %2801 = vmatprep.subr.mxu0 0.0
    %2802 = vmatpush1.msra.mxu0 0.0
    %2803 = vmatprep.subr.mxu0 0.0
    %2804 = vmatpush1.msra.mxu0 0.0
    %2805 = vmatprep.subr.mxu0 0.0
    %2806 = vmatpush1.msra.mxu0 0.0
    %2807 = vmatprep.subr.mxu0 0.0
    %2808 = vmatpush1.msra.mxu0 0.0
    %2809 = vmatprep.subr.mxu0 0.0
    %2810 = vmatpush1.msra.mxu0 0.0
    %2811 = vmatprep.subr.mxu0 0.0
    %2812 = vmatpush1.msra.mxu0 0.0
    %2813 = vmatprep.subr.mxu0 0.0
    %2814 = vmatpush1.msra.mxu0 0.0
    %2815 = vmatprep.subr.mxu0 0.0
    %2816 = vmatpush1.msra.mxu0 0.0
    %2817 = vmatprep.subr.mxu0 0.0
    %2818 = vmatpush1.msra.mxu0 0.0
    %2819 = vmatprep.subr.mxu0 0.0
    %2820 = vmatpush1.msra.mxu0 0.0
    %2821 = vmatprep.subr.mxu0 0.0
    %2822 = vmatpush1.msra.mxu0 0.0
    %2823 = vmatprep.subr.mxu0 0.0
    %2824 = vmatpush1.msra.mxu0 0.0
    %2825 = vmatprep.subr.mxu0 0.0
    %2826 = vmatpush1.msra.mxu0 0.0
    %2827 = vmatprep.subr.mxu0 0.0
    %2828 = vmatpush1.msra.mxu0 0.0
    %2829 = vmatprep.subr.mxu0 0.0
    %2830 = vmatpush1.msra.mxu0 0.0
    %2831 = vmatprep.subr.mxu0 0.0
    %2832 = vmatpush1.msra.mxu0 0.0
    %2833 = vmatprep.subr.mxu0 0.0
    %2834 = vmatpush1.msra.mxu0 0.0
    %2835 = vmatprep.mubr.f32.mxu0 0.0
    %v2836 = vand.u32 %v2765, 4294901760
    %v2837 = vsub.f32 %v2765, %v2836
    %v2838 = vand.u32 %v2837, 4294901760
    %v2839 = vsub.f32 %v2837, %v2838
    %v2840 = vand.u32 %v2839, 4294901760
    %2841 = vmatmul.mubr.f32.gmra.mrb[0].mxu0 %v2840
    %v2842 = vpop.f32.mrb[0].mxu0
    %v2843 = vadd.f32 0.0, %v2842
    %v2844 = vpop.f32.mrb[0].mxu0
    %2845 = vdwg.mxu0
    %2846 = vmatprep.subr.mxu0 0.0
    %v2847 = vand.u32 %v1237, 4294901760
    %v2848 = vsub.f32 %v1237, %v2847
    %v2849 = vand.u32 %v2848, 4294901760
    %v2850 = vsub.f32 %v2848, %v2849
    %v2851 = vand.u32 %v2850, 4294901760
    %2852 = vmatpush1.msra.mxu0 %v2851
    %2853 = vmatprep.subr.mxu0 0.0
    %v2854 = vand.u32 %v1238, 4294901760
    %v2855 = vsub.f32 %v1238, %v2854
    %v2856 = vand.u32 %v2855, 4294901760
    %v2857 = vsub.f32 %v2855, %v2856
    %v2858 = vand.u32 %v2857, 4294901760
    %2859 = vmatpush1.msra.mxu0 %v2858
    %2860 = vmatprep.subr.mxu0 0.0
    %v2861 = vand.u32 %v1239, 4294901760
    %v2862 = vsub.f32 %v1239, %v2861
    %v2863 = vand.u32 %v2862, 4294901760
    %v2864 = vsub.f32 %v2862, %v2863
    %v2865 = vand.u32 %v2864, 4294901760
    %2866 = vmatpush1.msra.mxu0 %v2865
    %2867 = vmatprep.subr.mxu0 0.0
    %v2868 = vand.u32 %v1240, 4294901760
    %v2869 = vsub.f32 %v1240, %v2868
    %v2870 = vand.u32 %v2869, 4294901760
    %v2871 = vsub.f32 %v2869, %v2870
    %v2872 = vand.u32 %v2871, 4294901760
    %2873 = vmatpush1.msra.mxu0 %v2872
    %2874 = vmatprep.subr.mxu0 0.0
    %2875 = vmatpush1.msra.mxu0 0.0
    %2876 = vmatprep.subr.mxu0 0.0
    %2877 = vmatpush1.msra.mxu0 0.0
    %2878 = vmatprep.subr.mxu0 0.0
    %2879 = vmatpush1.msra.mxu0 0.0
    %2880 = vmatprep.subr.mxu0 0.0
    %2881 = vmatpush1.msra.mxu0 0.0
    %2882 = vmatprep.subr.mxu0 0.0
    %2883 = vmatpush1.msra.mxu0 0.0
    %2884 = vmatprep.subr.mxu0 0.0
    %2885 = vmatpush1.msra.mxu0 0.0
    %2886 = vmatprep.subr.mxu0 0.0
    %2887 = vmatpush1.msra.mxu0 0.0
    %2888 = vmatprep.subr.mxu0 0.0
    %2889 = vmatpush1.msra.mxu0 0.0
    %2890 = vmatprep.subr.mxu0 0.0
    %2891 = vmatpush1.msra.mxu0 0.0
    %2892 = vmatprep.subr.mxu0 0.0
    %2893 = vmatpush1.msra.mxu0 0.0
    %2894 = vmatprep.subr.mxu0 0.0
    %2895 = vmatpush1.msra.mxu0 0.0
    %2896 = vmatprep.subr.mxu0 0.0
    %2897 = vmatpush1.msra.mxu0 0.0
    %2898 = vmatprep.subr.mxu0 0.0
    %2899 = vmatpush1.msra.mxu0 0.0
    %2900 = vmatprep.subr.mxu0 0.0
    %2901 = vmatpush1.msra.mxu0 0.0
    %2902 = vmatprep.subr.mxu0 0.0
    %2903 = vmatpush1.msra.mxu0 0.0
    %2904 = vmatprep.subr.mxu0 0.0
    %2905 = vmatpush1.msra.mxu0 0.0
    %2906 = vmatprep.subr.mxu0 0.0
    %2907 = vmatpush1.msra.mxu0 0.0
    %2908 = vmatprep.subr.mxu0 0.0
    %2909 = vmatpush1.msra.mxu0 0.0
    %2910 = vmatprep.subr.mxu0 0.0
    %2911 = vmatpush1.msra.mxu0 0.0
    %2912 = vmatprep.subr.mxu0 0.0
    %2913 = vmatpush1.msra.mxu0 0.0
    %2914 = vmatprep.subr.mxu0 0.0
    %2915 = vmatpush1.msra.mxu0 0.0
    %2916 = vmatprep.subr.mxu0 0.0
    %2917 = vmatpush1.msra.mxu0 0.0
    %2918 = vmatprep.subr.mxu0 0.0
    %2919 = vmatpush1.msra.mxu0 0.0
    %2920 = vmatprep.subr.mxu0 0.0
    %2921 = vmatpush1.msra.mxu0 0.0
    %2922 = vmatprep.subr.mxu0 0.0
    %2923 = vmatpush1.msra.mxu0 0.0
    %2924 = vmatprep.subr.mxu0 0.0
    %2925 = vmatpush1.msra.mxu0 0.0
    %2926 = vmatprep.subr.mxu0 0.0
    %2927 = vmatpush1.msra.mxu0 0.0
    %2928 = vmatprep.subr.mxu0 0.0
    %2929 = vmatpush1.msra.mxu0 0.0
    %2930 = vmatprep.mubr.f32.mxu0 0.0
    %v2931 = vand.u32 %v2765, 4294901760
    %2932 = vmatmul.mubr.f32.gmra.mrb[0].mxu0 %v2931
    %v2933 = vpop.f32.mrb[0].mxu0
    %v2934 = vadd.f32 %v2843, %v2933
    %v2935 = vpop.f32.mrb[0].mxu0
    %2936 = vdwg.mxu0
    %2937 = vmatprep.subr.mxu0 0.0
    %v2938 = vand.u32 %v1237, 4294901760
    %v2939 = vsub.f32 %v1237, %v2938
    %2940 = vmatpush1.msra.mxu0 %v2939
    %2941 = vmatprep.subr.mxu0 0.0
    %v2942 = vand.u32 %v1238, 4294901760
    %v2943 = vsub.f32 %v1238, %v2942
    %2944 = vmatpush1.msra.mxu0 %v2943
    %2945 = vmatprep.subr.mxu0 0.0
    %v2946 = vand.u32 %v1239, 4294901760
    %v2947 = vsub.f32 %v1239, %v2946
    %2948 = vmatpush1.msra.mxu0 %v2947
    %2949 = vmatprep.subr.mxu0 0.0
    %v2950 = vand.u32 %v1240, 4294901760
    %v2951 = vsub.f32 %v1240, %v2950
    %2952 = vmatpush1.msra.mxu0 %v2951
    %2953 = vmatprep.subr.mxu0 0.0
    %2954 = vmatpush1.msra.mxu0 0.0
    %2955 = vmatprep.subr.mxu0 0.0
    %2956 = vmatpush1.msra.mxu0 0.0
    %2957 = vmatprep.subr.mxu0 0.0
    %2958 = vmatpush1.msra.mxu0 0.0
    %2959 = vmatprep.subr.mxu0 0.0
    %2960 = vmatpush1.msra.mxu0 0.0
    %2961 = vmatprep.subr.mxu0 0.0
    %2962 = vmatpush1.msra.mxu0 0.0
    %2963 = vmatprep.subr.mxu0 0.0
    %2964 = vmatpush1.msra.mxu0 0.0
    %2965 = vmatprep.subr.mxu0 0.0
    %2966 = vmatpush1.msra.mxu0 0.0
    %2967 = vmatprep.subr.mxu0 0.0
    %2968 = vmatpush1.msra.mxu0 0.0
    %2969 = vmatprep.subr.mxu0 0.0
    %2970 = vmatpush1.msra.mxu0 0.0
    %2971 = vmatprep.subr.mxu0 0.0
    %2972 = vmatpush1.msra.mxu0 0.0
    %2973 = vmatprep.subr.mxu0 0.0
    %2974 = vmatpush1.msra.mxu0 0.0
    %2975 = vmatprep.subr.mxu0 0.0
    %2976 = vmatpush1.msra.mxu0 0.0
    %2977 = vmatprep.subr.mxu0 0.0
    %2978 = vmatpush1.msra.mxu0 0.0
    %2979 = vmatprep.subr.mxu0 0.0
    %2980 = vmatpush1.msra.mxu0 0.0
    %2981 = vmatprep.subr.mxu0 0.0
    %2982 = vmatpush1.msra.mxu0 0.0
    %2983 = vmatprep.subr.mxu0 0.0
    %2984 = vmatpush1.msra.mxu0 0.0
    %2985 = vmatprep.subr.mxu0 0.0
    %2986 = vmatpush1.msra.mxu0 0.0
    %2987 = vmatprep.subr.mxu0 0.0
    %2988 = vmatpush1.msra.mxu0 0.0
    %2989 = vmatprep.subr.mxu0 0.0
    %2990 = vmatpush1.msra.mxu0 0.0
    %2991 = vmatprep.subr.mxu0 0.0
    %2992 = vmatpush1.msra.mxu0 0.0
    %2993 = vmatprep.subr.mxu0 0.0
    %2994 = vmatpush1.msra.mxu0 0.0
    %2995 = vmatprep.subr.mxu0 0.0
    %2996 = vmatpush1.msra.mxu0 0.0
    %2997 = vmatprep.subr.mxu0 0.0
    %2998 = vmatpush1.msra.mxu0 0.0
    %2999 = vmatprep.subr.mxu0 0.0
    %3000 = vmatpush1.msra.mxu0 0.0
    %3001 = vmatprep.subr.mxu0 0.0
    %3002 = vmatpush1.msra.mxu0 0.0
    %3003 = vmatprep.subr.mxu0 0.0
    %3004 = vmatpush1.msra.mxu0 0.0
    %3005 = vmatprep.subr.mxu0 0.0
    %3006 = vmatpush1.msra.mxu0 0.0
    %3007 = vmatprep.subr.mxu0 0.0
    %3008 = vmatpush1.msra.mxu0 0.0
    %3009 = vmatprep.mubr.f32.mxu0 0.0
    %v3010 = vand.u32 %v2765, 4294901760
    %v3011 = vsub.f32 %v2765, %v3010
    %3012 = vmatmul.mubr.f32.gmra.mrb[0].mxu0 %v3011
    %v3013 = vpop.f32.mrb[0].mxu0
    %v3014 = vadd.f32 %v2934, %v3013
    %v3015 = vpop.f32.mrb[0].mxu0
    %3016 = vdwg.mxu0
    %3017 = vmatprep.subr.mxu0 0.0
    %v3018 = vand.u32 %v1237, 4294901760
    %3019 = vmatpush1.msra.mxu0 %v3018
    %3020 = vmatprep.subr.mxu0 0.0
    %v3021 = vand.u32 %v1238, 4294901760
    %3022 = vmatpush1.msra.mxu0 %v3021
    %3023 = vmatprep.subr.mxu0 0.0
    %v3024 = vand.u32 %v1239, 4294901760
    %3025 = vmatpush1.msra.mxu0 %v3024
    %3026 = vmatprep.subr.mxu0 0.0
    %v3027 = vand.u32 %v1240, 4294901760
    %3028 = vmatpush1.msra.mxu0 %v3027
    %3029 = vmatprep.subr.mxu0 0.0
    %3030 = vmatpush1.msra.mxu0 0.0
    %3031 = vmatprep.subr.mxu0 0.0
    %3032 = vmatpush1.msra.mxu0 0.0
    %3033 = vmatprep.subr.mxu0 0.0
    %3034 = vmatpush1.msra.mxu0 0.0
    %3035 = vmatprep.subr.mxu0 0.0
    %3036 = vmatpush1.msra.mxu0 0.0
    %3037 = vmatprep.subr.mxu0 0.0
    %3038 = vmatpush1.msra.mxu0 0.0
    %3039 = vmatprep.subr.mxu0 0.0
    %3040 = vmatpush1.msra.mxu0 0.0
    %3041 = vmatprep.subr.mxu0 0.0
    %3042 = vmatpush1.msra.mxu0 0.0
    %3043 = vmatprep.subr.mxu0 0.0
    %3044 = vmatpush1.msra.mxu0 0.0
    %3045 = vmatprep.subr.mxu0 0.0
    %3046 = vmatpush1.msra.mxu0 0.0
    %3047 = vmatprep.subr.mxu0 0.0
    %3048 = vmatpush1.msra.mxu0 0.0
    %3049 = vmatprep.subr.mxu0 0.0
    %3050 = vmatpush1.msra.mxu0 0.0
    %3051 = vmatprep.subr.mxu0 0.0
    %3052 = vmatpush1.msra.mxu0 0.0
    %3053 = vmatprep.subr.mxu0 0.0
    %3054 = vmatpush1.msra.mxu0 0.0
    %3055 = vmatprep.subr.mxu0 0.0
    %3056 = vmatpush1.msra.mxu0 0.0
    %3057 = vmatprep.subr.mxu0 0.0
    %3058 = vmatpush1.msra.mxu0 0.0
    %3059 = vmatprep.subr.mxu0 0.0
    %3060 = vmatpush1.msra.mxu0 0.0
    %3061 = vmatprep.subr.mxu0 0.0
    %3062 = vmatpush1.msra.mxu0 0.0
    %3063 = vmatprep.subr.mxu0 0.0
    %3064 = vmatpush1.msra.mxu0 0.0
    %3065 = vmatprep.subr.mxu0 0.0
    %3066 = vmatpush1.msra.mxu0 0.0
    %3067 = vmatprep.subr.mxu0 0.0
    %3068 = vmatpush1.msra.mxu0 0.0
    %3069 = vmatprep.subr.mxu0 0.0
    %3070 = vmatpush1.msra.mxu0 0.0
    %3071 = vmatprep.subr.mxu0 0.0
    %3072 = vmatpush1.msra.mxu0 0.0
    %3073 = vmatprep.subr.mxu0 0.0
    %3074 = vmatpush1.msra.mxu0 0.0
    %3075 = vmatprep.subr.mxu0 0.0
    %3076 = vmatpush1.msra.mxu0 0.0
    %3077 = vmatprep.subr.mxu0 0.0
    %3078 = vmatpush1.msra.mxu0 0.0
    %3079 = vmatprep.subr.mxu0 0.0
    %3080 = vmatpush1.msra.mxu0 0.0
    %3081 = vmatprep.subr.mxu0 0.0
    %3082 = vmatpush1.msra.mxu0 0.0
    %3083 = vmatprep.subr.mxu0 0.0
    %3084 = vmatpush1.msra.mxu0 0.0
    %3085 = vmatprep.mubr.f32.mxu0 0.0
    %v3086 = vand.u32 %v2765, 4294901760
    %v3087 = vsub.f32 %v2765, %v3086
    %v3088 = vand.u32 %v3087, 4294901760
    %3089 = vmatmul.mubr.f32.gmra.mrb[0].mxu0 %v3088
    %v3090 = vpop.f32.mrb[0].mxu0
    %v3091 = vadd.f32 %v3014, %v3090
    %v3092 = vpop.f32.mrb[0].mxu0
    %3093 = vdwg.mxu0
    %3094 = vmatprep.subr.mxu0 0.0
    %v3095 = vand.u32 %v1237, 4294901760
    %v3096 = vsub.f32 %v1237, %v3095
    %v3097 = vand.u32 %v3096, 4294901760
    %3098 = vmatpush1.msra.mxu0 %v3097
    %3099 = vmatprep.subr.mxu0 0.0
    %v3100 = vand.u32 %v1238, 4294901760
    %v3101 = vsub.f32 %v1238, %v3100
    %v3102 = vand.u32 %v3101, 4294901760
    %3103 = vmatpush1.msra.mxu0 %v3102
    %3104 = vmatprep.subr.mxu0 0.0
    %v3105 = vand.u32 %v1239, 4294901760
    %v3106 = vsub.f32 %v1239, %v3105
    %v3107 = vand.u32 %v3106, 4294901760
    %3108 = vmatpush1.msra.mxu0 %v3107
    %3109 = vmatprep.subr.mxu0 0.0
    %v3110 = vand.u32 %v1240, 4294901760
    %v3111 = vsub.f32 %v1240, %v3110
    %v3112 = vand.u32 %v3111, 4294901760
    %3113 = vmatpush1.msra.mxu0 %v3112
    %3114 = vmatprep.subr.mxu0 0.0
    %3115 = vmatpush1.msra.mxu0 0.0
    %3116 = vmatprep.subr.mxu0 0.0
    %3117 = vmatpush1.msra.mxu0 0.0
    %3118 = vmatprep.subr.mxu0 0.0
    %3119 = vmatpush1.msra.mxu0 0.0
    %3120 = vmatprep.subr.mxu0 0.0
    %3121 = vmatpush1.msra.mxu0 0.0
    %3122 = vmatprep.subr.mxu0 0.0
    %3123 = vmatpush1.msra.mxu0 0.0
    %3124 = vmatprep.subr.mxu0 0.0
    %3125 = vmatpush1.msra.mxu0 0.0
    %3126 = vmatprep.subr.mxu0 0.0
    %3127 = vmatpush1.msra.mxu0 0.0
    %3128 = vmatprep.subr.mxu0 0.0
    %3129 = vmatpush1.msra.mxu0 0.0
    %3130 = vmatprep.subr.mxu0 0.0
    %3131 = vmatpush1.msra.mxu0 0.0
    %3132 = vmatprep.subr.mxu0 0.0
    %3133 = vmatpush1.msra.mxu0 0.0
    %3134 = vmatprep.subr.mxu0 0.0
    %3135 = vmatpush1.msra.mxu0 0.0
    %3136 = vmatprep.subr.mxu0 0.0
    %3137 = vmatpush1.msra.mxu0 0.0
    %3138 = vmatprep.subr.mxu0 0.0
    %3139 = vmatpush1.msra.mxu0 0.0
    %3140 = vmatprep.subr.mxu0 0.0
    %3141 = vmatpush1.msra.mxu0 0.0
    %3142 = vmatprep.subr.mxu0 0.0
    %3143 = vmatpush1.msra.mxu0 0.0
    %3144 = vmatprep.subr.mxu0 0.0
    %3145 = vmatpush1.msra.mxu0 0.0
    %3146 = vmatprep.subr.mxu0 0.0
    %3147 = vmatpush1.msra.mxu0 0.0
    %3148 = vmatprep.subr.mxu0 0.0
    %3149 = vmatpush1.msra.mxu0 0.0
    %3150 = vmatprep.subr.mxu0 0.0
    %3151 = vmatpush1.msra.mxu0 0.0
    %3152 = vmatprep.subr.mxu0 0.0
    %3153 = vmatpush1.msra.mxu0 0.0
    %3154 = vmatprep.subr.mxu0 0.0
    %3155 = vmatpush1.msra.mxu0 0.0
    %3156 = vmatprep.subr.mxu0 0.0
    %3157 = vmatpush1.msra.mxu0 0.0
    %3158 = vmatprep.subr.mxu0 0.0
    %3159 = vmatpush1.msra.mxu0 0.0
    %3160 = vmatprep.subr.mxu0 0.0
    %3161 = vmatpush1.msra.mxu0 0.0
    %3162 = vmatprep.subr.mxu0 0.0
    %3163 = vmatpush1.msra.mxu0 0.0
    %3164 = vmatprep.subr.mxu0 0.0
    %3165 = vmatpush1.msra.mxu0 0.0
    %3166 = vmatprep.subr.mxu0 0.0
    %3167 = vmatpush1.msra.mxu0 0.0
    %3168 = vmatprep.subr.mxu0 0.0
    %3169 = vmatpush1.msra.mxu0 0.0
    %3170 = vmatprep.mubr.f32.mxu0 0.0
    %v3171 = vand.u32 %v2765, 4294901760
    %3172 = vmatmul.mubr.f32.gmra.mrb[0].mxu0 %v3171
    %v3173 = vpop.f32.mrb[0].mxu0
    %v3174 = vadd.f32 %v3091, %v3173
    %v3175 = vpop.f32.mrb[0].mxu0
    %3176 = vdwg.mxu0
    %3177 = vmatprep.subr.mxu0 0.0
    %v3178 = vand.u32 %v1237, 4294901760
    %3179 = vmatpush1.msra.mxu0 %v3178
    %3180 = vmatprep.subr.mxu0 0.0
    %v3181 = vand.u32 %v1238, 4294901760
    %3182 = vmatpush1.msra.mxu0 %v3181
    %3183 = vmatprep.subr.mxu0 0.0
    %v3184 = vand.u32 %v1239, 4294901760
    %3185 = vmatpush1.msra.mxu0 %v3184
    %3186 = vmatprep.subr.mxu0 0.0
    %v3187 = vand.u32 %v1240, 4294901760
    %3188 = vmatpush1.msra.mxu0 %v3187
    %3189 = vmatprep.subr.mxu0 0.0
    %3190 = vmatpush1.msra.mxu0 0.0
    %3191 = vmatprep.subr.mxu0 0.0
    %3192 = vmatpush1.msra.mxu0 0.0
    %3193 = vmatprep.subr.mxu0 0.0
    %3194 = vmatpush1.msra.mxu0 0.0
    %3195 = vmatprep.subr.mxu0 0.0
    %3196 = vmatpush1.msra.mxu0 0.0
    %3197 = vmatprep.subr.mxu0 0.0
    %3198 = vmatpush1.msra.mxu0 0.0
    %3199 = vmatprep.subr.mxu0 0.0
    %3200 = vmatpush1.msra.mxu0 0.0
    %3201 = vmatprep.subr.mxu0 0.0
    %3202 = vmatpush1.msra.mxu0 0.0
    %3203 = vmatprep.subr.mxu0 0.0
    %3204 = vmatpush1.msra.mxu0 0.0
    %3205 = vmatprep.subr.mxu0 0.0
    %3206 = vmatpush1.msra.mxu0 0.0
    %3207 = vmatprep.subr.mxu0 0.0
    %3208 = vmatpush1.msra.mxu0 0.0
    %3209 = vmatprep.subr.mxu0 0.0
    %3210 = vmatpush1.msra.mxu0 0.0
    %3211 = vmatprep.subr.mxu0 0.0
    %3212 = vmatpush1.msra.mxu0 0.0
    %3213 = vmatprep.subr.mxu0 0.0
    %3214 = vmatpush1.msra.mxu0 0.0
    %3215 = vmatprep.subr.mxu0 0.0
    %3216 = vmatpush1.msra.mxu0 0.0
    %3217 = vmatprep.subr.mxu0 0.0
    %3218 = vmatpush1.msra.mxu0 0.0
    %3219 = vmatprep.subr.mxu0 0.0
    %3220 = vmatpush1.msra.mxu0 0.0
    %3221 = vmatprep.subr.mxu0 0.0
    %3222 = vmatpush1.msra.mxu0 0.0
    %3223 = vmatprep.subr.mxu0 0.0
    %3224 = vmatpush1.msra.mxu0 0.0
    %3225 = vmatprep.subr.mxu0 0.0
    %3226 = vmatpush1.msra.mxu0 0.0
    %3227 = vmatprep.subr.mxu0 0.0
    %3228 = vmatpush1.msra.mxu0 0.0
    %3229 = vmatprep.subr.mxu0 0.0
    %3230 = vmatpush1.msra.mxu0 0.0
    %3231 = vmatprep.subr.mxu0 0.0
    %3232 = vmatpush1.msra.mxu0 0.0
    %3233 = vmatprep.subr.mxu0 0.0
    %3234 = vmatpush1.msra.mxu0 0.0
    %3235 = vmatprep.subr.mxu0 0.0
    %3236 = vmatpush1.msra.mxu0 0.0
    %3237 = vmatprep.subr.mxu0 0.0
    %3238 = vmatpush1.msra.mxu0 0.0
    %3239 = vmatprep.subr.mxu0 0.0
    %3240 = vmatpush1.msra.mxu0 0.0
    %3241 = vmatprep.subr.mxu0 0.0
    %3242 = vmatpush1.msra.mxu0 0.0
    %3243 = vmatprep.subr.mxu0 0.0
    %3244 = vmatpush1.msra.mxu0 0.0
    %3245 = vmatprep.mubr.f32.mxu0 0.0
    %v3246 = vand.u32 %v2765, 4294901760
    %3247 = vmatmul.mubr.f32.gmra.mrb[0].mxu0 %v3246
    %v3248 = vpop.f32.mrb[0].mxu0
    %v3249 = vadd.f32 %v3174, %v3248
    %v3250 = vpop.f32.mrb[0].mxu0
    %3251 = vdwg.mxu0
    %v3252 = vadd.f32 %v1231, %v3249
    %v3253 = vxor.u32 %v2760, 2147483648
    %v3254 = vmul.f32 %v3253, 1.442695
    %v3255 = vpow.pop %v3254
    %v3256 = vadd.f32 %v3255, 1.0
    %v3257 = vrcp.pop %v3256
    %v3258 = vmul.f32 1.0, %v3257
    %v3259 = vtanh.pop %v2760
    %v3261 = vrot.slane %v2236, 6
    %v3263 = vmul.f32 %v3258, %v3261
    %3265 = vrot.lane.b32.xlu0 %v3259, 64
    %v3266 = vpop.permute.xlu0 %3265
    %v3268 = vmul.f32 %v3258, %v3266
    %3270 = vrot.lane.b32.xlu0 %v3268, 32
    %v3271 = vpop.permute.xlu0 %3270
    %v3273 = vadd.f32 %v3263, %v3271
    %v3274 = vtanh.pop %v3273
    %3276 = vrot.lane.b32.xlu0 %v3274, 64
    %v3277 = vpop.permute.xlu0 %3276
    %v3279 = vmul.f32 %v3258, %v3277
    %v3280 = vxor.u32 %v3252, 2147483648
    %v3281 = vmul.f32 %v3280, 1.442695
    %v3282 = vpow.pop %v3281
    %v3283 = vadd.f32 %v3282, 1.0
    %v3284 = vrcp.pop %v3283
    %v3285 = vmul.f32 1.0, %v3284
    %v3286 = vtanh.pop %v3252
    %v3288 = vrot.slane %v2260, 2
    %v3290 = vmul.f32 %v3285, %v3288
    %3292 = vrot.lane.b32.xlu0 %v3286, 64
    %v3293 = vpop.permute.xlu0 %3292
    %v3295 = vmul.f32 %v3285, %v3293
    %3297 = vrot.lane.b32.xlu0 %v3295, 32
    %v3298 = vpop.permute.xlu0 %3297
    %v3300 = vadd.f32 %v3290, %v3298
    %v3301 = vtanh.pop %v3300
    %3303 = vrot.lane.b32.xlu0 %v3301, 64
    %v3304 = vpop.permute.xlu0 %3303
    %v3306 = vmul.f32 %v3285, %v3304
    %v3308 = vrot.slane %v3279, 2
    %3309 = vrot.lane.b32.xlu0 %v3308, 32
    %v3310 = vpop.permute.xlu0 %3309
    %v3311 = vsel %vm634, %v3310, 0
    %3313 = vmatprep.subr.mxu0 0.0
    %v3314 = vand.u32 %v1233, 4294901760
    %3315 = vmatpush1.msra.mxu0 %v3314
    %3316 = vmatprep.subr.mxu0 0.0
    %v3317 = vand.u32 %v1234, 4294901760
    %3318 = vmatpush1.msra.mxu0 %v3317
    %3319 = vmatprep.subr.mxu0 0.0
    %v3320 = vand.u32 %v1235, 4294901760
    %3321 = vmatpush1.msra.mxu0 %v3320
    %3322 = vmatprep.subr.mxu0 0.0
    %v3323 = vand.u32 %v1236, 4294901760
    %3324 = vmatpush1.msra.mxu0 %v3323
    %3325 = vmatprep.subr.mxu0 0.0
    %3326 = vmatpush1.msra.mxu0 0.0
    %3327 = vmatprep.subr.mxu0 0.0
    %3328 = vmatpush1.msra.mxu0 0.0
    %3329 = vmatprep.subr.mxu0 0.0
    %3330 = vmatpush1.msra.mxu0 0.0
    %3331 = vmatprep.subr.mxu0 0.0
    %3332 = vmatpush1.msra.mxu0 0.0
    %3333 = vmatprep.subr.mxu0 0.0
    %3334 = vmatpush1.msra.mxu0 0.0
    %3335 = vmatprep.subr.mxu0 0.0
    %3336 = vmatpush1.msra.mxu0 0.0
    %3337 = vmatprep.subr.mxu0 0.0
    %3338 = vmatpush1.msra.mxu0 0.0
    %3339 = vmatprep.subr.mxu0 0.0
    %3340 = vmatpush1.msra.mxu0 0.0
    %3341 = vmatprep.subr.mxu0 0.0
    %3342 = vmatpush1.msra.mxu0 0.0
    %3343 = vmatprep.subr.mxu0 0.0
    %3344 = vmatpush1.msra.mxu0 0.0
    %3345 = vmatprep.subr.mxu0 0.0
    %3346 = vmatpush1.msra.mxu0 0.0
    %3347 = vmatprep.subr.mxu0 0.0
    %3348 = vmatpush1.msra.mxu0 0.0
    %3349 = vmatprep.subr.mxu0 0.0
    %3350 = vmatpush1.msra.mxu0 0.0
    %3351 = vmatprep.subr.mxu0 0.0
    %3352 = vmatpush1.msra.mxu0 0.0
    %3353 = vmatprep.subr.mxu0 0.0
    %3354 = vmatpush1.msra.mxu0 0.0
    %3355 = vmatprep.subr.mxu0 0.0
    %3356 = vmatpush1.msra.mxu0 0.0
    %3357 = vmatprep.subr.mxu0 0.0
    %3358 = vmatpush1.msra.mxu0 0.0
    %3359 = vmatprep.subr.mxu0 0.0
    %3360 = vmatpush1.msra.mxu0 0.0
    %3361 = vmatprep.subr.mxu0 0.0
    %3362 = vmatpush1.msra.mxu0 0.0
    %3363 = vmatprep.subr.mxu0 0.0
    %3364 = vmatpush1.msra.mxu0 0.0
    %3365 = vmatprep.subr.mxu0 0.0
    %3366 = vmatpush1.msra.mxu0 0.0
    %3367 = vmatprep.subr.mxu0 0.0
    %3368 = vmatpush1.msra.mxu0 0.0
    %3369 = vmatprep.subr.mxu0 0.0
    %3370 = vmatpush1.msra.mxu0 0.0
    %3371 = vmatprep.subr.mxu0 0.0
    %3372 = vmatpush1.msra.mxu0 0.0
    %3373 = vmatprep.subr.mxu0 0.0
    %3374 = vmatpush1.msra.mxu0 0.0
    %3375 = vmatprep.subr.mxu0 0.0
    %3376 = vmatpush1.msra.mxu0 0.0
    %3377 = vmatprep.subr.mxu0 0.0
    %3378 = vmatpush1.msra.mxu0 0.0
    %3379 = vmatprep.subr.mxu0 0.0
    %3380 = vmatpush1.msra.mxu0 0.0
    %3381 = vmatprep.mubr.f32.mxu0 0.0
    %v3382 = vand.u32 %v3311, 4294901760
    %v3383 = vsub.f32 %v3311, %v3382
    %v3384 = vand.u32 %v3383, 4294901760
    %v3385 = vsub.f32 %v3383, %v3384
    %v3386 = vand.u32 %v3385, 4294901760
    %3387 = vmatmul.mubr.f32.gmra.mrb[0].mxu0 %v3386
    %v3388 = vpop.f32.mrb[0].mxu0
    %v3389 = vadd.f32 0.0, %v3388
    %v3390 = vpop.f32.mrb[0].mxu0
    %3391 = vdwg.mxu0
    %3392 = vmatprep.subr.mxu0 0.0
    %v3393 = vand.u32 %v1233, 4294901760
    %v3394 = vsub.f32 %v1233, %v3393
    %v3395 = vand.u32 %v3394, 4294901760
    %v3396 = vsub.f32 %v3394, %v3395
    %v3397 = vand.u32 %v3396, 4294901760
    %3398 = vmatpush1.msra.mxu0 %v3397
    %3399 = vmatprep.subr.mxu0 0.0
    %v3400 = vand.u32 %v1234, 4294901760
    %v3401 = vsub.f32 %v1234, %v3400
    %v3402 = vand.u32 %v3401, 4294901760
    %v3403 = vsub.f32 %v3401, %v3402
    %v3404 = vand.u32 %v3403, 4294901760
    %3405 = vmatpush1.msra.mxu0 %v3404
    %3406 = vmatprep.subr.mxu0 0.0
    %v3407 = vand.u32 %v1235, 4294901760
    %v3408 = vsub.f32 %v1235, %v3407
    %v3409 = vand.u32 %v3408, 4294901760
    %v3410 = vsub.f32 %v3408, %v3409
    %v3411 = vand.u32 %v3410, 4294901760
    %3412 = vmatpush1.msra.mxu0 %v3411
    %3413 = vmatprep.subr.mxu0 0.0
    %v3414 = vand.u32 %v1236, 4294901760
    %v3415 = vsub.f32 %v1236, %v3414
    %v3416 = vand.u32 %v3415, 4294901760
    %v3417 = vsub.f32 %v3415, %v3416
    %v3418 = vand.u32 %v3417, 4294901760
    %3419 = vmatpush1.msra.mxu0 %v3418
    %3420 = vmatprep.subr.mxu0 0.0
    %3421 = vmatpush1.msra.mxu0 0.0
    %3422 = vmatprep.subr.mxu0 0.0
    %3423 = vmatpush1.msra.mxu0 0.0
    %3424 = vmatprep.subr.mxu0 0.0
    %3425 = vmatpush1.msra.mxu0 0.0
    %3426 = vmatprep.subr.mxu0 0.0
    %3427 = vmatpush1.msra.mxu0 0.0
    %3428 = vmatprep.subr.mxu0 0.0
    %3429 = vmatpush1.msra.mxu0 0.0
    %3430 = vmatprep.subr.mxu0 0.0
    %3431 = vmatpush1.msra.mxu0 0.0
    %3432 = vmatprep.subr.mxu0 0.0
    %3433 = vmatpush1.msra.mxu0 0.0
    %3434 = vmatprep.subr.mxu0 0.0
    %3435 = vmatpush1.msra.mxu0 0.0
    %3436 = vmatprep.subr.mxu0 0.0
    %3437 = vmatpush1.msra.mxu0 0.0
    %3438 = vmatprep.subr.mxu0 0.0
    %3439 = vmatpush1.msra.mxu0 0.0
    %3440 = vmatprep.subr.mxu0 0.0
    %3441 = vmatpush1.msra.mxu0 0.0
    %3442 = vmatprep.subr.mxu0 0.0
    %3443 = vmatpush1.msra.mxu0 0.0
    %3444 = vmatprep.subr.mxu0 0.0
    %3445 = vmatpush1.msra.mxu0 0.0
    %3446 = vmatprep.subr.mxu0 0.0
    %3447 = vmatpush1.msra.mxu0 0.0
    %3448 = vmatprep.subr.mxu0 0.0
    %3449 = vmatpush1.msra.mxu0 0.0
    %3450 = vmatprep.subr.mxu0 0.0
    %3451 = vmatpush1.msra.mxu0 0.0
    %3452 = vmatprep.subr.mxu0 0.0
    %3453 = vmatpush1.msra.mxu0 0.0
    %3454 = vmatprep.subr.mxu0 0.0
    %3455 = vmatpush1.msra.mxu0 0.0
    %3456 = vmatprep.subr.mxu0 0.0
    %3457 = vmatpush1.msra.mxu0 0.0
    %3458 = vmatprep.subr.mxu0 0.0
    %3459 = vmatpush1.msra.mxu0 0.0
    %3460 = vmatprep.subr.mxu0 0.0
    %3461 = vmatpush1.msra.mxu0 0.0
    %3462 = vmatprep.subr.mxu0 0.0
    %3463 = vmatpush1.msra.mxu0 0.0
    %3464 = vmatprep.subr.mxu0 0.0
    %3465 = vmatpush1.msra.mxu0 0.0
    %3466 = vmatprep.subr.mxu0 0.0
    %3467 = vmatpush1.msra.mxu0 0.0
    %3468 = vmatprep.subr.mxu0 0.0
    %3469 = vmatpush1.msra.mxu0 0.0
    %3470 = vmatprep.subr.mxu0 0.0
    %3471 = vmatpush1.msra.mxu0 0.0
    %3472 = vmatprep.subr.mxu0 0.0
    %3473 = vmatpush1.msra.mxu0 0.0
    %3474 = vmatprep.subr.mxu0 0.0
    %3475 = vmatpush1.msra.mxu0 0.0
    %3476 = vmatprep.mubr.f32.mxu0 0.0
    %v3477 = vand.u32 %v3311, 4294901760
    %3478 = vmatmul.mubr.f32.gmra.mrb[0].mxu0 %v3477
    %v3479 = vpop.f32.mrb[0].mxu0
    %v3480 = vadd.f32 %v3389, %v3479
    %v3481 = vpop.f32.mrb[0].mxu0
    %3482 = vdwg.mxu0
    %3483 = vmatprep.subr.mxu0 0.0
    %v3484 = vand.u32 %v1233, 4294901760
    %v3485 = vsub.f32 %v1233, %v3484
    %3486 = vmatpush1.msra.mxu0 %v3485
    %3487 = vmatprep.subr.mxu0 0.0
    %v3488 = vand.u32 %v1234, 4294901760
    %v3489 = vsub.f32 %v1234, %v3488
    %3490 = vmatpush1.msra.mxu0 %v3489
    %3491 = vmatprep.subr.mxu0 0.0
    %v3492 = vand.u32 %v1235, 4294901760
    %v3493 = vsub.f32 %v1235, %v3492
    %3494 = vmatpush1.msra.mxu0 %v3493
    %3495 = vmatprep.subr.mxu0 0.0
    %v3496 = vand.u32 %v1236, 4294901760
    %v3497 = vsub.f32 %v1236, %v3496
    %3498 = vmatpush1.msra.mxu0 %v3497
    %3499 = vmatprep.subr.mxu0 0.0
    %3500 = vmatpush1.msra.mxu0 0.0
    %3501 = vmatprep.subr.mxu0 0.0
    %3502 = vmatpush1.msra.mxu0 0.0
    %3503 = vmatprep.subr.mxu0 0.0
    %3504 = vmatpush1.msra.mxu0 0.0
    %3505 = vmatprep.subr.mxu0 0.0
    %3506 = vmatpush1.msra.mxu0 0.0
    %3507 = vmatprep.subr.mxu0 0.0
    %3508 = vmatpush1.msra.mxu0 0.0
    %3509 = vmatprep.subr.mxu0 0.0
    %3510 = vmatpush1.msra.mxu0 0.0
    %3511 = vmatprep.subr.mxu0 0.0
    %3512 = vmatpush1.msra.mxu0 0.0
    %3513 = vmatprep.subr.mxu0 0.0
    %3514 = vmatpush1.msra.mxu0 0.0
    %3515 = vmatprep.subr.mxu0 0.0
    %3516 = vmatpush1.msra.mxu0 0.0
    %3517 = vmatprep.subr.mxu0 0.0
    %3518 = vmatpush1.msra.mxu0 0.0
    %3519 = vmatprep.subr.mxu0 0.0
    %3520 = vmatpush1.msra.mxu0 0.0
    %3521 = vmatprep.subr.mxu0 0.0
    %3522 = vmatpush1.msra.mxu0 0.0
    %3523 = vmatprep.subr.mxu0 0.0
    %3524 = vmatpush1.msra.mxu0 0.0
    %3525 = vmatprep.subr.mxu0 0.0
    %3526 = vmatpush1.msra.mxu0 0.0
    %3527 = vmatprep.subr.mxu0 0.0
    %3528 = vmatpush1.msra.mxu0 0.0
    %3529 = vmatprep.subr.mxu0 0.0
    %3530 = vmatpush1.msra.mxu0 0.0
    %3531 = vmatprep.subr.mxu0 0.0
    %3532 = vmatpush1.msra.mxu0 0.0
    %3533 = vmatprep.subr.mxu0 0.0
    %3534 = vmatpush1.msra.mxu0 0.0
    %3535 = vmatprep.subr.mxu0 0.0
    %3536 = vmatpush1.msra.mxu0 0.0
    %3537 = vmatprep.subr.mxu0 0.0
    %3538 = vmatpush1.msra.mxu0 0.0
    %3539 = vmatprep.subr.mxu0 0.0
    %3540 = vmatpush1.msra.mxu0 0.0
    %3541 = vmatprep.subr.mxu0 0.0
    %3542 = vmatpush1.msra.mxu0 0.0
    %3543 = vmatprep.subr.mxu0 0.0
    %3544 = vmatpush1.msra.mxu0 0.0
    %3545 = vmatprep.subr.mxu0 0.0
    %3546 = vmatpush1.msra.mxu0 0.0
    %3547 = vmatprep.subr.mxu0 0.0
    %3548 = vmatpush1.msra.mxu0 0.0
    %3549 = vmatprep.subr.mxu0 0.0
    %3550 = vmatpush1.msra.mxu0 0.0
    %3551 = vmatprep.subr.mxu0 0.0
    %3552 = vmatpush1.msra.mxu0 0.0
    %3553 = vmatprep.subr.mxu0 0.0
    %3554 = vmatpush1.msra.mxu0 0.0
    %3555 = vmatprep.mubr.f32.mxu0 0.0
    %v3556 = vand.u32 %v3311, 4294901760
    %v3557 = vsub.f32 %v3311, %v3556
    %3558 = vmatmul.mubr.f32.gmra.mrb[0].mxu0 %v3557
    %v3559 = vpop.f32.mrb[0].mxu0
    %v3560 = vadd.f32 %v3480, %v3559
    %v3561 = vpop.f32.mrb[0].mxu0
    %3562 = vdwg.mxu0
    %3563 = vmatprep.subr.mxu0 0.0
    %v3564 = vand.u32 %v1233, 4294901760
    %3565 = vmatpush1.msra.mxu0 %v3564
    %3566 = vmatprep.subr.mxu0 0.0
    %v3567 = vand.u32 %v1234, 4294901760
    %3568 = vmatpush1.msra.mxu0 %v3567
    %3569 = vmatprep.subr.mxu0 0.0
    %v3570 = vand.u32 %v1235, 4294901760
    %3571 = vmatpush1.msra.mxu0 %v3570
    %3572 = vmatprep.subr.mxu0 0.0
    %v3573 = vand.u32 %v1236, 4294901760
    %3574 = vmatpush1.msra.mxu0 %v3573
    %3575 = vmatprep.subr.mxu0 0.0
    %3576 = vmatpush1.msra.mxu0 0.0
    %3577 = vmatprep.subr.mxu0 0.0
    %3578 = vmatpush1.msra.mxu0 0.0
    %3579 = vmatprep.subr.mxu0 0.0
    %3580 = vmatpush1.msra.mxu0 0.0
    %3581 = vmatprep.subr.mxu0 0.0
    %3582 = vmatpush1.msra.mxu0 0.0
    %3583 = vmatprep.subr.mxu0 0.0
    %3584 = vmatpush1.msra.mxu0 0.0
    %3585 = vmatprep.subr.mxu0 0.0
    %3586 = vmatpush1.msra.mxu0 0.0
    %3587 = vmatprep.subr.mxu0 0.0
    %3588 = vmatpush1.msra.mxu0 0.0
    %3589 = vmatprep.subr.mxu0 0.0
    %3590 = vmatpush1.msra.mxu0 0.0
    %3591 = vmatprep.subr.mxu0 0.0
    %3592 = vmatpush1.msra.mxu0 0.0
    %3593 = vmatprep.subr.mxu0 0.0
    %3594 = vmatpush1.msra.mxu0 0.0
    %3595 = vmatprep.subr.mxu0 0.0
    %3596 = vmatpush1.msra.mxu0 0.0
    %3597 = vmatprep.subr.mxu0 0.0
    %3598 = vmatpush1.msra.mxu0 0.0
    %3599 = vmatprep.subr.mxu0 0.0
    %3600 = vmatpush1.msra.mxu0 0.0
    %3601 = vmatprep.subr.mxu0 0.0
    %3602 = vmatpush1.msra.mxu0 0.0
    %3603 = vmatprep.subr.mxu0 0.0
    %3604 = vmatpush1.msra.mxu0 0.0
    %3605 = vmatprep.subr.mxu0 0.0
    %3606 = vmatpush1.msra.mxu0 0.0
    %3607 = vmatprep.subr.mxu0 0.0
    %3608 = vmatpush1.msra.mxu0 0.0
    %3609 = vmatprep.subr.mxu0 0.0
    %3610 = vmatpush1.msra.mxu0 0.0
    %3611 = vmatprep.subr.mxu0 0.0
    %3612 = vmatpush1.msra.mxu0 0.0
    %3613 = vmatprep.subr.mxu0 0.0
    %3614 = vmatpush1.msra.mxu0 0.0
    %3615 = vmatprep.subr.mxu0 0.0
    %3616 = vmatpush1.msra.mxu0 0.0
    %3617 = vmatprep.subr.mxu0 0.0
    %3618 = vmatpush1.msra.mxu0 0.0
    %3619 = vmatprep.subr.mxu0 0.0
    %3620 = vmatpush1.msra.mxu0 0.0
    %3621 = vmatprep.subr.mxu0 0.0
    %3622 = vmatpush1.msra.mxu0 0.0
    %3623 = vmatprep.subr.mxu0 0.0
    %3624 = vmatpush1.msra.mxu0 0.0
    %3625 = vmatprep.subr.mxu0 0.0
    %3626 = vmatpush1.msra.mxu0 0.0
    %3627 = vmatprep.subr.mxu0 0.0
    %3628 = vmatpush1.msra.mxu0 0.0
    %3629 = vmatprep.subr.mxu0 0.0
    %3630 = vmatpush1.msra.mxu0 0.0
    %3631 = vmatprep.mubr.f32.mxu0 0.0
    %v3632 = vand.u32 %v3311, 4294901760
    %v3633 = vsub.f32 %v3311, %v3632
    %v3634 = vand.u32 %v3633, 4294901760
    %3635 = vmatmul.mubr.f32.gmra.mrb[0].mxu0 %v3634
    %v3636 = vpop.f32.mrb[0].mxu0
    %v3637 = vadd.f32 %v3560, %v3636
    %v3638 = vpop.f32.mrb[0].mxu0
    %3639 = vdwg.mxu0
    %3640 = vmatprep.subr.mxu0 0.0
    %v3641 = vand.u32 %v1233, 4294901760
    %v3642 = vsub.f32 %v1233, %v3641
    %v3643 = vand.u32 %v3642, 4294901760
    %3644 = vmatpush1.msra.mxu0 %v3643
    %3645 = vmatprep.subr.mxu0 0.0
    %v3646 = vand.u32 %v1234, 4294901760
    %v3647 = vsub.f32 %v1234, %v3646
    %v3648 = vand.u32 %v3647, 4294901760
    %3649 = vmatpush1.msra.mxu0 %v3648
    %3650 = vmatprep.subr.mxu0 0.0
    %v3651 = vand.u32 %v1235, 4294901760
    %v3652 = vsub.f32 %v1235, %v3651
    %v3653 = vand.u32 %v3652, 4294901760
    %3654 = vmatpush1.msra.mxu0 %v3653
    %3655 = vmatprep.subr.mxu0 0.0
    %v3656 = vand.u32 %v1236, 4294901760
    %v3657 = vsub.f32 %v1236, %v3656
    %v3658 = vand.u32 %v3657, 4294901760
    %3659 = vmatpush1.msra.mxu0 %v3658
    %3660 = vmatprep.subr.mxu0 0.0
    %3661 = vmatpush1.msra.mxu0 0.0
    %3662 = vmatprep.subr.mxu0 0.0
    %3663 = vmatpush1.msra.mxu0 0.0
    %3664 = vmatprep.subr.mxu0 0.0
    %3665 = vmatpush1.msra.mxu0 0.0
    %3666 = vmatprep.subr.mxu0 0.0
    %3667 = vmatpush1.msra.mxu0 0.0
    %3668 = vmatprep.subr.mxu0 0.0
    %3669 = vmatpush1.msra.mxu0 0.0
    %3670 = vmatprep.subr.mxu0 0.0
    %3671 = vmatpush1.msra.mxu0 0.0
    %3672 = vmatprep.subr.mxu0 0.0
    %3673 = vmatpush1.msra.mxu0 0.0
    %3674 = vmatprep.subr.mxu0 0.0
    %3675 = vmatpush1.msra.mxu0 0.0
    %3676 = vmatprep.subr.mxu0 0.0
    %3677 = vmatpush1.msra.mxu0 0.0
    %3678 = vmatprep.subr.mxu0 0.0
    %3679 = vmatpush1.msra.mxu0 0.0
    %3680 = vmatprep.subr.mxu0 0.0
    %3681 = vmatpush1.msra.mxu0 0.0
    %3682 = vmatprep.subr.mxu0 0.0
    %3683 = vmatpush1.msra.mxu0 0.0
    %3684 = vmatprep.subr.mxu0 0.0
    %3685 = vmatpush1.msra.mxu0 0.0
    %3686 = vmatprep.subr.mxu0 0.0
    %3687 = vmatpush1.msra.mxu0 0.0
    %3688 = vmatprep.subr.mxu0 0.0
    %3689 = vmatpush1.msra.mxu0 0.0
    %3690 = vmatprep.subr.mxu0 0.0
    %3691 = vmatpush1.msra.mxu0 0.0
    %3692 = vmatprep.subr.mxu0 0.0
    %3693 = vmatpush1.msra.mxu0 0.0
    %3694 = vmatprep.subr.mxu0 0.0
    %3695 = vmatpush1.msra.mxu0 0.0
    %3696 = vmatprep.subr.mxu0 0.0
    %3697 = vmatpush1.msra.mxu0 0.0
    %3698 = vmatprep.subr.mxu0 0.0
    %3699 = vmatpush1.msra.mxu0 0.0
    %3700 = vmatprep.subr.mxu0 0.0
    %3701 = vmatpush1.msra.mxu0 0.0
    %3702 = vmatprep.subr.mxu0 0.0
    %3703 = vmatpush1.msra.mxu0 0.0
    %3704 = vmatprep.subr.mxu0 0.0
    %3705 = vmatpush1.msra.mxu0 0.0
    %3706 = vmatprep.subr.mxu0 0.0
    %3707 = vmatpush1.msra.mxu0 0.0
    %3708 = vmatprep.subr.mxu0 0.0
    %3709 = vmatpush1.msra.mxu0 0.0
    %3710 = vmatprep.subr.mxu0 0.0
    %3711 = vmatpush1.msra.mxu0 0.0
    %3712 = vmatprep.subr.mxu0 0.0
    %3713 = vmatpush1.msra.mxu0 0.0
    %3714 = vmatprep.subr.mxu0 0.0
    %3715 = vmatpush1.msra.mxu0 0.0
    %3716 = vmatprep.mubr.f32.mxu0 0.0
    %v3717 = vand.u32 %v3311, 4294901760
    %3718 = vmatmul.mubr.f32.gmra.mrb[0].mxu0 %v3717
    %v3719 = vpop.f32.mrb[0].mxu0
    %v3720 = vadd.f32 %v3637, %v3719
    %v3721 = vpop.f32.mrb[0].mxu0
    %3722 = vdwg.mxu0
    %3723 = vmatprep.subr.mxu0 0.0
    %v3724 = vand.u32 %v1233, 4294901760
    %3725 = vmatpush1.msra.mxu0 %v3724
    %3726 = vmatprep.subr.mxu0 0.0
    %v3727 = vand.u32 %v1234, 4294901760
    %3728 = vmatpush1.msra.mxu0 %v3727
    %3729 = vmatprep.subr.mxu0 0.0
    %v3730 = vand.u32 %v1235, 4294901760
    %3731 = vmatpush1.msra.mxu0 %v3730
    %3732 = vmatprep.subr.mxu0 0.0
    %v3733 = vand.u32 %v1236, 4294901760
    %3734 = vmatpush1.msra.mxu0 %v3733
    %3735 = vmatprep.subr.mxu0 0.0
    %3736 = vmatpush1.msra.mxu0 0.0
    %3737 = vmatprep.subr.mxu0 0.0
    %3738 = vmatpush1.msra.mxu0 0.0
    %3739 = vmatprep.subr.mxu0 0.0
    %3740 = vmatpush1.msra.mxu0 0.0
    %3741 = vmatprep.subr.mxu0 0.0
    %3742 = vmatpush1.msra.mxu0 0.0
    %3743 = vmatprep.subr.mxu0 0.0
    %3744 = vmatpush1.msra.mxu0 0.0
    %3745 = vmatprep.subr.mxu0 0.0
    %3746 = vmatpush1.msra.mxu0 0.0
    %3747 = vmatprep.subr.mxu0 0.0
    %3748 = vmatpush1.msra.mxu0 0.0
    %3749 = vmatprep.subr.mxu0 0.0
    %3750 = vmatpush1.msra.mxu0 0.0
    %3751 = vmatprep.subr.mxu0 0.0
    %3752 = vmatpush1.msra.mxu0 0.0
    %3753 = vmatprep.subr.mxu0 0.0
    %3754 = vmatpush1.msra.mxu0 0.0
    %3755 = vmatprep.subr.mxu0 0.0
    %3756 = vmatpush1.msra.mxu0 0.0
    %3757 = vmatprep.subr.mxu0 0.0
    %3758 = vmatpush1.msra.mxu0 0.0
    %3759 = vmatprep.subr.mxu0 0.0
    %3760 = vmatpush1.msra.mxu0 0.0
    %3761 = vmatprep.subr.mxu0 0.0
    %3762 = vmatpush1.msra.mxu0 0.0
    %3763 = vmatprep.subr.mxu0 0.0
    %3764 = vmatpush1.msra.mxu0 0.0
    %3765 = vmatprep.subr.mxu0 0.0
    %3766 = vmatpush1.msra.mxu0 0.0
    %3767 = vmatprep.subr.mxu0 0.0
    %3768 = vmatpush1.msra.mxu0 0.0
    %3769 = vmatprep.subr.mxu0 0.0
    %3770 = vmatpush1.msra.mxu0 0.0
    %3771 = vmatprep.subr.mxu0 0.0
    %3772 = vmatpush1.msra.mxu0 0.0
    %3773 = vmatprep.subr.mxu0 0.0
    %3774 = vmatpush1.msra.mxu0 0.0
    %3775 = vmatprep.subr.mxu0 0.0
    %3776 = vmatpush1.msra.mxu0 0.0
    %3777 = vmatprep.subr.mxu0 0.0
    %3778 = vmatpush1.msra.mxu0 0.0
    %3779 = vmatprep.subr.mxu0 0.0
    %3780 = vmatpush1.msra.mxu0 0.0
    %3781 = vmatprep.subr.mxu0 0.0
    %3782 = vmatpush1.msra.mxu0 0.0
    %3783 = vmatprep.subr.mxu0 0.0
    %3784 = vmatpush1.msra.mxu0 0.0
    %3785 = vmatprep.subr.mxu0 0.0
    %3786 = vmatpush1.msra.mxu0 0.0
    %3787 = vmatprep.subr.mxu0 0.0
    %3788 = vmatpush1.msra.mxu0 0.0
    %3789 = vmatprep.subr.mxu0 0.0
    %3790 = vmatpush1.msra.mxu0 0.0
    %3791 = vmatprep.mubr.f32.mxu0 0.0
    %v3792 = vand.u32 %v3311, 4294901760
    %3793 = vmatmul.mubr.f32.gmra.mrb[0].mxu0 %v3792
    %v3794 = vpop.f32.mrb[0].mxu0
    %v3795 = vadd.f32 %v3720, %v3794
    %v3796 = vpop.f32.mrb[0].mxu0
    %3797 = vdwg.mxu0
    %v3799 = vrot.slane %v3795, 4
    %v3801 = vadd.f32 %v1222, %v3799
    %3803 = vrot.lane.b32.xlu0 %v3306, 32
    %v3804 = vpop.permute.xlu0 %3803
    %v3805 = vsel %vm634, %v3804, 0
    %3807 = vmatprep.subr.mxu0 0.0
    %v3808 = vand.u32 %v1237, 4294901760
    %3809 = vmatpush1.msra.mxu0 %v3808
    %3810 = vmatprep.subr.mxu0 0.0
    %v3811 = vand.u32 %v1238, 4294901760
    %3812 = vmatpush1.msra.mxu0 %v3811
    %3813 = vmatprep.subr.mxu0 0.0
    %v3814 = vand.u32 %v1239, 4294901760
    %3815 = vmatpush1.msra.mxu0 %v3814
    %3816 = vmatprep.subr.mxu0 0.0
    %v3817 = vand.u32 %v1240, 4294901760
    %3818 = vmatpush1.msra.mxu0 %v3817
    %3819 = vmatprep.subr.mxu0 0.0
    %3820 = vmatpush1.msra.mxu0 0.0
    %3821 = vmatprep.subr.mxu0 0.0
    %3822 = vmatpush1.msra.mxu0 0.0
    %3823 = vmatprep.subr.mxu0 0.0
    %3824 = vmatpush1.msra.mxu0 0.0
    %3825 = vmatprep.subr.mxu0 0.0
    %3826 = vmatpush1.msra.mxu0 0.0
    %3827 = vmatprep.subr.mxu0 0.0
    %3828 = vmatpush1.msra.mxu0 0.0
    %3829 = vmatprep.subr.mxu0 0.0
    %3830 = vmatpush1.msra.mxu0 0.0
    %3831 = vmatprep.subr.mxu0 0.0
    %3832 = vmatpush1.msra.mxu0 0.0
    %3833 = vmatprep.subr.mxu0 0.0
    %3834 = vmatpush1.msra.mxu0 0.0
    %3835 = vmatprep.subr.mxu0 0.0
    %3836 = vmatpush1.msra.mxu0 0.0
    %3837 = vmatprep.subr.mxu0 0.0
    %3838 = vmatpush1.msra.mxu0 0.0
    %3839 = vmatprep.subr.mxu0 0.0
    %3840 = vmatpush1.msra.mxu0 0.0
    %3841 = vmatprep.subr.mxu0 0.0
    %3842 = vmatpush1.msra.mxu0 0.0
    %3843 = vmatprep.subr.mxu0 0.0
    %3844 = vmatpush1.msra.mxu0 0.0
    %3845 = vmatprep.subr.mxu0 0.0
    %3846 = vmatpush1.msra.mxu0 0.0
    %3847 = vmatprep.subr.mxu0 0.0
    %3848 = vmatpush1.msra.mxu0 0.0
    %3849 = vmatprep.subr.mxu0 0.0
    %3850 = vmatpush1.msra.mxu0 0.0
    %3851 = vmatprep.subr.mxu0 0.0
    %3852 = vmatpush1.msra.mxu0 0.0
    %3853 = vmatprep.subr.mxu0 0.0
    %3854 = vmatpush1.msra.mxu0 0.0
    %3855 = vmatprep.subr.mxu0 0.0
    %3856 = vmatpush1.msra.mxu0 0.0
    %3857 = vmatprep.subr.mxu0 0.0
    %3858 = vmatpush1.msra.mxu0 0.0
    %3859 = vmatprep.subr.mxu0 0.0
    %3860 = vmatpush1.msra.mxu0 0.0
    %3861 = vmatprep.subr.mxu0 0.0
    %3862 = vmatpush1.msra.mxu0 0.0
    %3863 = vmatprep.subr.mxu0 0.0
    %3864 = vmatpush1.msra.mxu0 0.0
    %3865 = vmatprep.subr.mxu0 0.0
    %3866 = vmatpush1.msra.mxu0 0.0
    %3867 = vmatprep.subr.mxu0 0.0
    %3868 = vmatpush1.msra.mxu0 0.0
    %3869 = vmatprep.subr.mxu0 0.0
    %3870 = vmatpush1.msra.mxu0 0.0
    %3871 = vmatprep.subr.mxu0 0.0
    %3872 = vmatpush1.msra.mxu0 0.0
    %3873 = vmatprep.subr.mxu0 0.0
    %3874 = vmatpush1.msra.mxu0 0.0
    %3875 = vmatprep.mubr.f32.mxu0 0.0
    %v3876 = vand.u32 %v3805, 4294901760
    %v3877 = vsub.f32 %v3805, %v3876
    %v3878 = vand.u32 %v3877, 4294901760
    %v3879 = vsub.f32 %v3877, %v3878
    %v3880 = vand.u32 %v3879, 4294901760
    %3881 = vmatmul.mubr.f32.gmra.mrb[0].mxu0 %v3880
    %v3882 = vpop.f32.mrb[0].mxu0
    %v3883 = vadd.f32 0.0, %v3882
    %v3884 = vpop.f32.mrb[0].mxu0
    %3885 = vdwg.mxu0
    %3886 = vmatprep.subr.mxu0 0.0
    %v3887 = vand.u32 %v1237, 4294901760
    %v3888 = vsub.f32 %v1237, %v3887
    %v3889 = vand.u32 %v3888, 4294901760
    %v3890 = vsub.f32 %v3888, %v3889
    %v3891 = vand.u32 %v3890, 4294901760
    %3892 = vmatpush1.msra.mxu0 %v3891
    %3893 = vmatprep.subr.mxu0 0.0
    %v3894 = vand.u32 %v1238, 4294901760
    %v3895 = vsub.f32 %v1238, %v3894
    %v3896 = vand.u32 %v3895, 4294901760
    %v3897 = vsub.f32 %v3895, %v3896
    %v3898 = vand.u32 %v3897, 4294901760
    %3899 = vmatpush1.msra.mxu0 %v3898
    %3900 = vmatprep.subr.mxu0 0.0
    %v3901 = vand.u32 %v1239, 4294901760
    %v3902 = vsub.f32 %v1239, %v3901
    %v3903 = vand.u32 %v3902, 4294901760
    %v3904 = vsub.f32 %v3902, %v3903
    %v3905 = vand.u32 %v3904, 4294901760
    %3906 = vmatpush1.msra.mxu0 %v3905
    %3907 = vmatprep.subr.mxu0 0.0
    %v3908 = vand.u32 %v1240, 4294901760
    %v3909 = vsub.f32 %v1240, %v3908
    %v3910 = vand.u32 %v3909, 4294901760
    %v3911 = vsub.f32 %v3909, %v3910
    %v3912 = vand.u32 %v3911, 4294901760
    %3913 = vmatpush1.msra.mxu0 %v3912
    %3914 = vmatprep.subr.mxu0 0.0
    %3915 = vmatpush1.msra.mxu0 0.0
    %3916 = vmatprep.subr.mxu0 0.0
    %3917 = vmatpush1.msra.mxu0 0.0
    %3918 = vmatprep.subr.mxu0 0.0
    %3919 = vmatpush1.msra.mxu0 0.0
    %3920 = vmatprep.subr.mxu0 0.0
    %3921 = vmatpush1.msra.mxu0 0.0
    %3922 = vmatprep.subr.mxu0 0.0
    %3923 = vmatpush1.msra.mxu0 0.0
    %3924 = vmatprep.subr.mxu0 0.0
    %3925 = vmatpush1.msra.mxu0 0.0
    %3926 = vmatprep.subr.mxu0 0.0
    %3927 = vmatpush1.msra.mxu0 0.0
    %3928 = vmatprep.subr.mxu0 0.0
    %3929 = vmatpush1.msra.mxu0 0.0
    %3930 = vmatprep.subr.mxu0 0.0
    %3931 = vmatpush1.msra.mxu0 0.0
    %3932 = vmatprep.subr.mxu0 0.0
    %3933 = vmatpush1.msra.mxu0 0.0
    %3934 = vmatprep.subr.mxu0 0.0
    %3935 = vmatpush1.msra.mxu0 0.0
    %3936 = vmatprep.subr.mxu0 0.0
    %3937 = vmatpush1.msra.mxu0 0.0
    %3938 = vmatprep.subr.mxu0 0.0
    %3939 = vmatpush1.msra.mxu0 0.0
    %3940 = vmatprep.subr.mxu0 0.0
    %3941 = vmatpush1.msra.mxu0 0.0
    %3942 = vmatprep.subr.mxu0 0.0
    %3943 = vmatpush1.msra.mxu0 0.0
    %3944 = vmatprep.subr.mxu0 0.0
    %3945 = vmatpush1.msra.mxu0 0.0
    %3946 = vmatprep.subr.mxu0 0.0
    %3947 = vmatpush1.msra.mxu0 0.0
    %3948 = vmatprep.subr.mxu0 0.0
    %3949 = vmatpush1.msra.mxu0 0.0
    %3950 = vmatprep.subr.mxu0 0.0
    %3951 = vmatpush1.msra.mxu0 0.0
    %3952 = vmatprep.subr.mxu0 0.0
    %3953 = vmatpush1.msra.mxu0 0.0
    %3954 = vmatprep.subr.mxu0 0.0
    %3955 = vmatpush1.msra.mxu0 0.0
    %3956 = vmatprep.subr.mxu0 0.0
    %3957 = vmatpush1.msra.mxu0 0.0
    %3958 = vmatprep.subr.mxu0 0.0
    %3959 = vmatpush1.msra.mxu0 0.0
    %3960 = vmatprep.subr.mxu0 0.0
    %3961 = vmatpush1.msra.mxu0 0.0
    %3962 = vmatprep.subr.mxu0 0.0
    %3963 = vmatpush1.msra.mxu0 0.0
    %3964 = vmatprep.subr.mxu0 0.0
    %3965 = vmatpush1.msra.mxu0 0.0
    %3966 = vmatprep.subr.mxu0 0.0
    %3967 = vmatpush1.msra.mxu0 0.0
    %3968 = vmatprep.subr.mxu0 0.0
    %3969 = vmatpush1.msra.mxu0 0.0
    %3970 = vmatprep.mubr.f32.mxu0 0.0
    %v3971 = vand.u32 %v3805, 4294901760
    %3972 = vmatmul.mubr.f32.gmra.mrb[0].mxu0 %v3971
    %v3973 = vpop.f32.mrb[0].mxu0
    %v3974 = vadd.f32 %v3883, %v3973
    %v3975 = vpop.f32.mrb[0].mxu0
    %3976 = vdwg.mxu0
    %3977 = vmatprep.subr.mxu0 0.0
    %v3978 = vand.u32 %v1237, 4294901760
    %v3979 = vsub.f32 %v1237, %v3978
    %3980 = vmatpush1.msra.mxu0 %v3979
    %3981 = vmatprep.subr.mxu0 0.0
    %v3982 = vand.u32 %v1238, 4294901760
    %v3983 = vsub.f32 %v1238, %v3982
    %3984 = vmatpush1.msra.mxu0 %v3983
    %3985 = vmatprep.subr.mxu0 0.0
    %v3986 = vand.u32 %v1239, 4294901760
    %v3987 = vsub.f32 %v1239, %v3986
    %3988 = vmatpush1.msra.mxu0 %v3987
    %3989 = vmatprep.subr.mxu0 0.0
    %v3990 = vand.u32 %v1240, 4294901760
    %v3991 = vsub.f32 %v1240, %v3990
    %3992 = vmatpush1.msra.mxu0 %v3991
    %3993 = vmatprep.subr.mxu0 0.0
    %3994 = vmatpush1.msra.mxu0 0.0
    %3995 = vmatprep.subr.mxu0 0.0
    %3996 = vmatpush1.msra.mxu0 0.0
    %3997 = vmatprep.subr.mxu0 0.0
    %3998 = vmatpush1.msra.mxu0 0.0
    %3999 = vmatprep.subr.mxu0 0.0
    %4000 = vmatpush1.msra.mxu0 0.0
    %4001 = vmatprep.subr.mxu0 0.0
    %4002 = vmatpush1.msra.mxu0 0.0
    %4003 = vmatprep.subr.mxu0 0.0
    %4004 = vmatpush1.msra.mxu0 0.0
    %4005 = vmatprep.subr.mxu0 0.0
    %4006 = vmatpush1.msra.mxu0 0.0
    %4007 = vmatprep.subr.mxu0 0.0
    %4008 = vmatpush1.msra.mxu0 0.0
    %4009 = vmatprep.subr.mxu0 0.0
    %4010 = vmatpush1.msra.mxu0 0.0
    %4011 = vmatprep.subr.mxu0 0.0
    %4012 = vmatpush1.msra.mxu0 0.0
    %4013 = vmatprep.subr.mxu0 0.0
    %4014 = vmatpush1.msra.mxu0 0.0
    %4015 = vmatprep.subr.mxu0 0.0
    %4016 = vmatpush1.msra.mxu0 0.0
    %4017 = vmatprep.subr.mxu0 0.0
    %4018 = vmatpush1.msra.mxu0 0.0
    %4019 = vmatprep.subr.mxu0 0.0
    %4020 = vmatpush1.msra.mxu0 0.0
    %4021 = vmatprep.subr.mxu0 0.0
    %4022 = vmatpush1.msra.mxu0 0.0
    %4023 = vmatprep.subr.mxu0 0.0
    %4024 = vmatpush1.msra.mxu0 0.0
    %4025 = vmatprep.subr.mxu0 0.0
    %4026 = vmatpush1.msra.mxu0 0.0
    %4027 = vmatprep.subr.mxu0 0.0
    %4028 = vmatpush1.msra.mxu0 0.0
    %4029 = vmatprep.subr.mxu0 0.0
    %4030 = vmatpush1.msra.mxu0 0.0
    %4031 = vmatprep.subr.mxu0 0.0
    %4032 = vmatpush1.msra.mxu0 0.0
    %4033 = vmatprep.subr.mxu0 0.0
    %4034 = vmatpush1.msra.mxu0 0.0
    %4035 = vmatprep.subr.mxu0 0.0
    %4036 = vmatpush1.msra.mxu0 0.0
    %4037 = vmatprep.subr.mxu0 0.0
    %4038 = vmatpush1.msra.mxu0 0.0
    %4039 = vmatprep.subr.mxu0 0.0
    %4040 = vmatpush1.msra.mxu0 0.0
    %4041 = vmatprep.subr.mxu0 0.0
    %4042 = vmatpush1.msra.mxu0 0.0
    %4043 = vmatprep.subr.mxu0 0.0
    %4044 = vmatpush1.msra.mxu0 0.0
    %4045 = vmatprep.subr.mxu0 0.0
    %4046 = vmatpush1.msra.mxu0 0.0
    %4047 = vmatprep.subr.mxu0 0.0
    %4048 = vmatpush1.msra.mxu0 0.0
    %4049 = vmatprep.mubr.f32.mxu0 0.0
    %v4050 = vand.u32 %v3805, 4294901760
    %v4051 = vsub.f32 %v3805, %v4050
    %4052 = vmatmul.mubr.f32.gmra.mrb[0].mxu0 %v4051
    %v4053 = vpop.f32.mrb[0].mxu0
    %v4054 = vadd.f32 %v3974, %v4053
    %v4055 = vpop.f32.mrb[0].mxu0
    %4056 = vdwg.mxu0
    %4057 = vmatprep.subr.mxu0 0.0
    %v4058 = vand.u32 %v1237, 4294901760
    %4059 = vmatpush1.msra.mxu0 %v4058
    %4060 = vmatprep.subr.mxu0 0.0
    %v4061 = vand.u32 %v1238, 4294901760
    %4062 = vmatpush1.msra.mxu0 %v4061
    %4063 = vmatprep.subr.mxu0 0.0
    %v4064 = vand.u32 %v1239, 4294901760
    %4065 = vmatpush1.msra.mxu0 %v4064
    %4066 = vmatprep.subr.mxu0 0.0
    %v4067 = vand.u32 %v1240, 4294901760
    %4068 = vmatpush1.msra.mxu0 %v4067
    %4069 = vmatprep.subr.mxu0 0.0
    %4070 = vmatpush1.msra.mxu0 0.0
    %4071 = vmatprep.subr.mxu0 0.0
    %4072 = vmatpush1.msra.mxu0 0.0
    %4073 = vmatprep.subr.mxu0 0.0
    %4074 = vmatpush1.msra.mxu0 0.0
    %4075 = vmatprep.subr.mxu0 0.0
    %4076 = vmatpush1.msra.mxu0 0.0
    %4077 = vmatprep.subr.mxu0 0.0
    %4078 = vmatpush1.msra.mxu0 0.0
    %4079 = vmatprep.subr.mxu0 0.0
    %4080 = vmatpush1.msra.mxu0 0.0
    %4081 = vmatprep.subr.mxu0 0.0
    %4082 = vmatpush1.msra.mxu0 0.0
    %4083 = vmatprep.subr.mxu0 0.0
    %4084 = vmatpush1.msra.mxu0 0.0
    %4085 = vmatprep.subr.mxu0 0.0
    %4086 = vmatpush1.msra.mxu0 0.0
    %4087 = vmatprep.subr.mxu0 0.0
    %4088 = vmatpush1.msra.mxu0 0.0
    %4089 = vmatprep.subr.mxu0 0.0
    %4090 = vmatpush1.msra.mxu0 0.0
    %4091 = vmatprep.subr.mxu0 0.0
    %4092 = vmatpush1.msra.mxu0 0.0
    %4093 = vmatprep.subr.mxu0 0.0
    %4094 = vmatpush1.msra.mxu0 0.0
    %4095 = vmatprep.subr.mxu0 0.0
    %4096 = vmatpush1.msra.mxu0 0.0
    %4097 = vmatprep.subr.mxu0 0.0
    %4098 = vmatpush1.msra.mxu0 0.0
    %4099 = vmatprep.subr.mxu0 0.0
    %4100 = vmatpush1.msra.mxu0 0.0
    %4101 = vmatprep.subr.mxu0 0.0
    %4102 = vmatpush1.msra.mxu0 0.0
    %4103 = vmatprep.subr.mxu0 0.0
    %4104 = vmatpush1.msra.mxu0 0.0
    %4105 = vmatprep.subr.mxu0 0.0
    %4106 = vmatpush1.msra.mxu0 0.0
    %4107 = vmatprep.subr.mxu0 0.0
    %4108 = vmatpush1.msra.mxu0 0.0
    %4109 = vmatprep.subr.mxu0 0.0
    %4110 = vmatpush1.msra.mxu0 0.0
    %4111 = vmatprep.subr.mxu0 0.0
    %4112 = vmatpush1.msra.mxu0 0.0
    %4113 = vmatprep.subr.mxu0 0.0
    %4114 = vmatpush1.msra.mxu0 0.0
    %4115 = vmatprep.subr.mxu0 0.0
    %4116 = vmatpush1.msra.mxu0 0.0
    %4117 = vmatprep.subr.mxu0 0.0
    %4118 = vmatpush1.msra.mxu0 0.0
    %4119 = vmatprep.subr.mxu0 0.0
    %4120 = vmatpush1.msra.mxu0 0.0
    %4121 = vmatprep.subr.mxu0 0.0
    %4122 = vmatpush1.msra.mxu0 0.0
    %4123 = vmatprep.subr.mxu0 0.0
    %4124 = vmatpush1.msra.mxu0 0.0
    %4125 = vmatprep.mubr.f32.mxu0 0.0
    %v4126 = vand.u32 %v3805, 4294901760
    %v4127 = vsub.f32 %v3805, %v4126
    %v4128 = vand.u32 %v4127, 4294901760
    %4129 = vmatmul.mubr.f32.gmra.mrb[0].mxu0 %v4128
    %v4130 = vpop.f32.mrb[0].mxu0
    %v4131 = vadd.f32 %v4054, %v4130
    %v4132 = vpop.f32.mrb[0].mxu0
    %4133 = vdwg.mxu0
    %4134 = vmatprep.subr.mxu0 0.0
    %v4135 = vand.u32 %v1237, 4294901760
    %v4136 = vsub.f32 %v1237, %v4135
    %v4137 = vand.u32 %v4136, 4294901760
    %4138 = vmatpush1.msra.mxu0 %v4137
    %4139 = vmatprep.subr.mxu0 0.0
    %v4140 = vand.u32 %v1238, 4294901760
    %v4141 = vsub.f32 %v1238, %v4140
    %v4142 = vand.u32 %v4141, 4294901760
    %4143 = vmatpush1.msra.mxu0 %v4142
    %4144 = vmatprep.subr.mxu0 0.0
    %v4145 = vand.u32 %v1239, 4294901760
    %v4146 = vsub.f32 %v1239, %v4145
    %v4147 = vand.u32 %v4146, 4294901760
    %4148 = vmatpush1.msra.mxu0 %v4147
    %4149 = vmatprep.subr.mxu0 0.0
    %v4150 = vand.u32 %v1240, 4294901760
    %v4151 = vsub.f32 %v1240, %v4150
    %v4152 = vand.u32 %v4151, 4294901760
    %4153 = vmatpush1.msra.mxu0 %v4152
    %4154 = vmatprep.subr.mxu0 0.0
    %4155 = vmatpush1.msra.mxu0 0.0
    %4156 = vmatprep.subr.mxu0 0.0
    %4157 = vmatpush1.msra.mxu0 0.0
    %4158 = vmatprep.subr.mxu0 0.0
    %4159 = vmatpush1.msra.mxu0 0.0
    %4160 = vmatprep.subr.mxu0 0.0
    %4161 = vmatpush1.msra.mxu0 0.0
    %4162 = vmatprep.subr.mxu0 0.0
    %4163 = vmatpush1.msra.mxu0 0.0
    %4164 = vmatprep.subr.mxu0 0.0
    %4165 = vmatpush1.msra.mxu0 0.0
    %4166 = vmatprep.subr.mxu0 0.0
    %4167 = vmatpush1.msra.mxu0 0.0
    %4168 = vmatprep.subr.mxu0 0.0
    %4169 = vmatpush1.msra.mxu0 0.0
    %4170 = vmatprep.subr.mxu0 0.0
    %4171 = vmatpush1.msra.mxu0 0.0
    %4172 = vmatprep.subr.mxu0 0.0
    %4173 = vmatpush1.msra.mxu0 0.0
    %4174 = vmatprep.subr.mxu0 0.0
    %4175 = vmatpush1.msra.mxu0 0.0
    %4176 = vmatprep.subr.mxu0 0.0
    %4177 = vmatpush1.msra.mxu0 0.0
    %4178 = vmatprep.subr.mxu0 0.0
    %4179 = vmatpush1.msra.mxu0 0.0
    %4180 = vmatprep.subr.mxu0 0.0
    %4181 = vmatpush1.msra.mxu0 0.0
    %4182 = vmatprep.subr.mxu0 0.0
    %4183 = vmatpush1.msra.mxu0 0.0
    %4184 = vmatprep.subr.mxu0 0.0
    %4185 = vmatpush1.msra.mxu0 0.0
    %4186 = vmatprep.subr.mxu0 0.0
    %4187 = vmatpush1.msra.mxu0 0.0
    %4188 = vmatprep.subr.mxu0 0.0
    %4189 = vmatpush1.msra.mxu0 0.0
    %4190 = vmatprep.subr.mxu0 0.0
    %4191 = vmatpush1.msra.mxu0 0.0
    %4192 = vmatprep.subr.mxu0 0.0
    %4193 = vmatpush1.msra.mxu0 0.0
    %4194 = vmatprep.subr.mxu0 0.0
    %4195 = vmatpush1.msra.mxu0 0.0
    %4196 = vmatprep.subr.mxu0 0.0
    %4197 = vmatpush1.msra.mxu0 0.0
    %4198 = vmatprep.subr.mxu0 0.0
    %4199 = vmatpush1.msra.mxu0 0.0
    %4200 = vmatprep.subr.mxu0 0.0
    %4201 = vmatpush1.msra.mxu0 0.0
    %4202 = vmatprep.subr.mxu0 0.0
    %4203 = vmatpush1.msra.mxu0 0.0
    %4204 = vmatprep.subr.mxu0 0.0
    %4205 = vmatpush1.msra.mxu0 0.0
    %4206 = vmatprep.subr.mxu0 0.0
    %4207 = vmatpush1.msra.mxu0 0.0
    %4208 = vmatprep.subr.mxu0 0.0
    %4209 = vmatpush1.msra.mxu0 0.0
    %4210 = vmatprep.mubr.f32.mxu0 0.0
    %v4211 = vand.u32 %v3805, 4294901760
    %4212 = vmatmul.mubr.f32.gmra.mrb[0].mxu0 %v4211
    %v4213 = vpop.f32.mrb[0].mxu0
    %v4214 = vadd.f32 %v4131, %v4213
    %v4215 = vpop.f32.mrb[0].mxu0
    %4216 = vdwg.mxu0
    %4217 = vmatprep.subr.mxu0 0.0
    %v4218 = vand.u32 %v1237, 4294901760
    %4219 = vmatpush1.msra.mxu0 %v4218
    %4220 = vmatprep.subr.mxu0 0.0
    %v4221 = vand.u32 %v1238, 4294901760
    %4222 = vmatpush1.msra.mxu0 %v4221
    %4223 = vmatprep.subr.mxu0 0.0
    %v4224 = vand.u32 %v1239, 4294901760
    %4225 = vmatpush1.msra.mxu0 %v4224
    %4226 = vmatprep.subr.mxu0 0.0
    %v4227 = vand.u32 %v1240, 4294901760
    %4228 = vmatpush1.msra.mxu0 %v4227
    %4229 = vmatprep.subr.mxu0 0.0
    %4230 = vmatpush1.msra.mxu0 0.0
    %4231 = vmatprep.subr.mxu0 0.0
    %4232 = vmatpush1.msra.mxu0 0.0
    %4233 = vmatprep.subr.mxu0 0.0
    %4234 = vmatpush1.msra.mxu0 0.0
    %4235 = vmatprep.subr.mxu0 0.0
    %4236 = vmatpush1.msra.mxu0 0.0
    %4237 = vmatprep.subr.mxu0 0.0
    %4238 = vmatpush1.msra.mxu0 0.0
    %4239 = vmatprep.subr.mxu0 0.0
    %4240 = vmatpush1.msra.mxu0 0.0
    %4241 = vmatprep.subr.mxu0 0.0
    %4242 = vmatpush1.msra.mxu0 0.0
    %4243 = vmatprep.subr.mxu0 0.0
    %4244 = vmatpush1.msra.mxu0 0.0
    %4245 = vmatprep.subr.mxu0 0.0
    %4246 = vmatpush1.msra.mxu0 0.0
    %4247 = vmatprep.subr.mxu0 0.0
    %4248 = vmatpush1.msra.mxu0 0.0
    %4249 = vmatprep.subr.mxu0 0.0
    %4250 = vmatpush1.msra.mxu0 0.0
    %4251 = vmatprep.subr.mxu0 0.0
    %4252 = vmatpush1.msra.mxu0 0.0
    %4253 = vmatprep.subr.mxu0 0.0
    %4254 = vmatpush1.msra.mxu0 0.0
    %4255 = vmatprep.subr.mxu0 0.0
    %4256 = vmatpush1.msra.mxu0 0.0
    %4257 = vmatprep.subr.mxu0 0.0
    %4258 = vmatpush1.msra.mxu0 0.0
    %4259 = vmatprep.subr.mxu0 0.0
    %4260 = vmatpush1.msra.mxu0 0.0
    %4261 = vmatprep.subr.mxu0 0.0
    %4262 = vmatpush1.msra.mxu0 0.0
    %4263 = vmatprep.subr.mxu0 0.0
    %4264 = vmatpush1.msra.mxu0 0.0
    %4265 = vmatprep.subr.mxu0 0.0
    %4266 = vmatpush1.msra.mxu0 0.0
    %4267 = vmatprep.subr.mxu0 0.0
    %4268 = vmatpush1.msra.mxu0 0.0
    %4269 = vmatprep.subr.mxu0 0.0
    %4270 = vmatpush1.msra.mxu0 0.0
    %4271 = vmatprep.subr.mxu0 0.0
    %4272 = vmatpush1.msra.mxu0 0.0
    %4273 = vmatprep.subr.mxu0 0.0
    %4274 = vmatpush1.msra.mxu0 0.0
    %4275 = vmatprep.subr.mxu0 0.0
    %4276 = vmatpush1.msra.mxu0 0.0
    %4277 = vmatprep.subr.mxu0 0.0
    %4278 = vmatpush1.msra.mxu0 0.0
    %4279 = vmatprep.subr.mxu0 0.0
    %4280 = vmatpush1.msra.mxu0 0.0
    %4281 = vmatprep.subr.mxu0 0.0
    %4282 = vmatpush1.msra.mxu0 0.0
    %4283 = vmatprep.subr.mxu0 0.0
    %4284 = vmatpush1.msra.mxu0 0.0
    %4285 = vmatprep.mubr.f32.mxu0 0.0
    %v4286 = vand.u32 %v3805, 4294901760
    %4287 = vmatmul.mubr.f32.gmra.mrb[0].mxu0 %v4286
    %v4288 = vpop.f32.mrb[0].mxu0
    %v4289 = vadd.f32 %v4214, %v4288
    %v4290 = vpop.f32.mrb[0].mxu0
    %4291 = vdwg.mxu0
    %v4293 = vrot.slane %v4289, 2
    %v4295 = vadd.f32 %v1224, %v4293
    %v4296 = vxor.u32 %v3801, 2147483648
    %v4297 = vmul.f32 %v4296, 1.442695
    %v4298 = vpow.pop %v4297
    %v4299 = vadd.f32 %v4298, 1.0
    %v4300 = vrcp.pop %v4299
    %v4301 = vmul.f32 1.0, %v4300
    %v4302 = vtanh.pop %v3801
    %v4304 = vrot.slane %v3273, 6
    %v4306 = vmul.f32 %v4301, %v4304
    %4308 = vrot.lane.b32.xlu0 %v4302, 64
    %v4309 = vpop.permute.xlu0 %4308
    %v4311 = vmul.f32 %v4301, %v4309
    %4313 = vrot.lane.b32.xlu0 %v4311, 32
    %v4314 = vpop.permute.xlu0 %4313
    %v4316 = vadd.f32 %v4306, %v4314
    %v4317 = vtanh.pop %v4316
    %4319 = vrot.lane.b32.xlu0 %v4317, 64
    %v4320 = vpop.permute.xlu0 %4319
    %v4322 = vmul.f32 %v4301, %v4320
    %v4323 = vxor.u32 %v4295, 2147483648
    %v4324 = vmul.f32 %v4323, 1.442695
    %v4325 = vpow.pop %v4324
    %v4326 = vadd.f32 %v4325, 1.0
    %v4327 = vrcp.pop %v4326
    %v4328 = vmul.f32 1.0, %v4327
    %v4329 = vtanh.pop %v4295
    %v4331 = vrot.slane %v3300, 2
    %v4333 = vmul.f32 %v4328, %v4331
    %4335 = vrot.lane.b32.xlu0 %v4329, 64
    %v4336 = vpop.permute.xlu0 %4335
    %v4338 = vmul.f32 %v4328, %v4336
    %4340 = vrot.lane.b32.xlu0 %v4338, 32
    %v4341 = vpop.permute.xlu0 %4340
    %v4343 = vadd.f32 %v4333, %v4341
    %v4344 = vtanh.pop %v4343
    %4346 = vrot.lane.b32.xlu0 %v4344, 64
    %v4347 = vpop.permute.xlu0 %4346
    %v4349 = vmul.f32 %v4328, %v4347
    %v4351 = vrot.slane %v4322, 4
    %4352 = vrot.lane.b32.xlu0 %v4351, 32
    %v4353 = vpop.permute.xlu0 %4352
    %v4354 = vsel %vm634, %v4353, 0
    %4356 = vmatprep.subr.mxu0 0.0
    %v4357 = vand.u32 %v1233, 4294901760
    %4358 = vmatpush1.msra.mxu0 %v4357
    %4359 = vmatprep.subr.mxu0 0.0
    %v4360 = vand.u32 %v1234, 4294901760
    %4361 = vmatpush1.msra.mxu0 %v4360
    %4362 = vmatprep.subr.mxu0 0.0
    %v4363 = vand.u32 %v1235, 4294901760
    %4364 = vmatpush1.msra.mxu0 %v4363
    %4365 = vmatprep.subr.mxu0 0.0
    %v4366 = vand.u32 %v1236, 4294901760
    %4367 = vmatpush1.msra.mxu0 %v4366
    %4368 = vmatprep.subr.mxu0 0.0
    %4369 = vmatpush1.msra.mxu0 0.0
    %4370 = vmatprep.subr.mxu0 0.0
    %4371 = vmatpush1.msra.mxu0 0.0
    %4372 = vmatprep.subr.mxu0 0.0
    %4373 = vmatpush1.msra.mxu0 0.0
    %4374 = vmatprep.subr.mxu0 0.0
    %4375 = vmatpush1.msra.mxu0 0.0
    %4376 = vmatprep.subr.mxu0 0.0
    %4377 = vmatpush1.msra.mxu0 0.0
    %4378 = vmatprep.subr.mxu0 0.0
    %4379 = vmatpush1.msra.mxu0 0.0
    %4380 = vmatprep.subr.mxu0 0.0
    %4381 = vmatpush1.msra.mxu0 0.0
    %4382 = vmatprep.subr.mxu0 0.0
    %4383 = vmatpush1.msra.mxu0 0.0
    %4384 = vmatprep.subr.mxu0 0.0
    %4385 = vmatpush1.msra.mxu0 0.0
    %4386 = vmatprep.subr.mxu0 0.0
    %4387 = vmatpush1.msra.mxu0 0.0
    %4388 = vmatprep.subr.mxu0 0.0
    %4389 = vmatpush1.msra.mxu0 0.0
    %4390 = vmatprep.subr.mxu0 0.0
    %4391 = vmatpush1.msra.mxu0 0.0
    %4392 = vmatprep.subr.mxu0 0.0
    %4393 = vmatpush1.msra.mxu0 0.0
    %4394 = vmatprep.subr.mxu0 0.0
    %4395 = vmatpush1.msra.mxu0 0.0
    %4396 = vmatprep.subr.mxu0 0.0
    %4397 = vmatpush1.msra.mxu0 0.0
    %4398 = vmatprep.subr.mxu0 0.0
    %4399 = vmatpush1.msra.mxu0 0.0
    %4400 = vmatprep.subr.mxu0 0.0
    %4401 = vmatpush1.msra.mxu0 0.0
    %4402 = vmatprep.subr.mxu0 0.0
    %4403 = vmatpush1.msra.mxu0 0.0
    %4404 = vmatprep.subr.mxu0 0.0
    %4405 = vmatpush1.msra.mxu0 0.0
    %4406 = vmatprep.subr.mxu0 0.0
    %4407 = vmatpush1.msra.mxu0 0.0
    %4408 = vmatprep.subr.mxu0 0.0
    %4409 = vmatpush1.msra.mxu0 0.0
    %4410 = vmatprep.subr.mxu0 0.0
    %4411 = vmatpush1.msra.mxu0 0.0
    %4412 = vmatprep.subr.mxu0 0.0
    %4413 = vmatpush1.msra.mxu0 0.0
    %4414 = vmatprep.subr.mxu0 0.0
    %4415 = vmatpush1.msra.mxu0 0.0
    %4416 = vmatprep.subr.mxu0 0.0
    %4417 = vmatpush1.msra.mxu0 0.0
    %4418 = vmatprep.subr.mxu0 0.0
    %4419 = vmatpush1.msra.mxu0 0.0
    %4420 = vmatprep.subr.mxu0 0.0
    %4421 = vmatpush1.msra.mxu0 0.0
    %4422 = vmatprep.subr.mxu0 0.0
    %4423 = vmatpush1.msra.mxu0 0.0
    %4424 = vmatprep.mubr.f32.mxu0 0.0
    %v4425 = vand.u32 %v4354, 4294901760
    %v4426 = vsub.f32 %v4354, %v4425
    %v4427 = vand.u32 %v4426, 4294901760
    %v4428 = vsub.f32 %v4426, %v4427
    %v4429 = vand.u32 %v4428, 4294901760
    %4430 = vmatmul.mubr.f32.gmra.mrb[0].mxu0 %v4429
    %v4431 = vpop.f32.mrb[0].mxu0
    %v4432 = vadd.f32 0.0, %v4431
    %v4433 = vpop.f32.mrb[0].mxu0
    %4434 = vdwg.mxu0
    %4435 = vmatprep.subr.mxu0 0.0
    %v4436 = vand.u32 %v1233, 4294901760
    %v4437 = vsub.f32 %v1233, %v4436
    %v4438 = vand.u32 %v4437, 4294901760
    %v4439 = vsub.f32 %v4437, %v4438
    %v4440 = vand.u32 %v4439, 4294901760
    %4441 = vmatpush1.msra.mxu0 %v4440
    %4442 = vmatprep.subr.mxu0 0.0
    %v4443 = vand.u32 %v1234, 4294901760
    %v4444 = vsub.f32 %v1234, %v4443
    %v4445 = vand.u32 %v4444, 4294901760
    %v4446 = vsub.f32 %v4444, %v4445
    %v4447 = vand.u32 %v4446, 4294901760
    %4448 = vmatpush1.msra.mxu0 %v4447
    %4449 = vmatprep.subr.mxu0 0.0
    %v4450 = vand.u32 %v1235, 4294901760
    %v4451 = vsub.f32 %v1235, %v4450
    %v4452 = vand.u32 %v4451, 4294901760
    %v4453 = vsub.f32 %v4451, %v4452
    %v4454 = vand.u32 %v4453, 4294901760
    %4455 = vmatpush1.msra.mxu0 %v4454
    %4456 = vmatprep.subr.mxu0 0.0
    %v4457 = vand.u32 %v1236, 4294901760
    %v4458 = vsub.f32 %v1236, %v4457
    %v4459 = vand.u32 %v4458, 4294901760
    %v4460 = vsub.f32 %v4458, %v4459
    %v4461 = vand.u32 %v4460, 4294901760
    %4462 = vmatpush1.msra.mxu0 %v4461
    %4463 = vmatprep.subr.mxu0 0.0
    %4464 = vmatpush1.msra.mxu0 0.0
    %4465 = vmatprep.subr.mxu0 0.0
    %4466 = vmatpush1.msra.mxu0 0.0
    %4467 = vmatprep.subr.mxu0 0.0
    %4468 = vmatpush1.msra.mxu0 0.0
    %4469 = vmatprep.subr.mxu0 0.0
    %4470 = vmatpush1.msra.mxu0 0.0
    %4471 = vmatprep.subr.mxu0 0.0
    %4472 = vmatpush1.msra.mxu0 0.0
    %4473 = vmatprep.subr.mxu0 0.0
    %4474 = vmatpush1.msra.mxu0 0.0
    %4475 = vmatprep.subr.mxu0 0.0
    %4476 = vmatpush1.msra.mxu0 0.0
    %4477 = vmatprep.subr.mxu0 0.0
    %4478 = vmatpush1.msra.mxu0 0.0
    %4479 = vmatprep.subr.mxu0 0.0
    %4480 = vmatpush1.msra.mxu0 0.0
    %4481 = vmatprep.subr.mxu0 0.0
    %4482 = vmatpush1.msra.mxu0 0.0
    %4483 = vmatprep.subr.mxu0 0.0
    %4484 = vmatpush1.msra.mxu0 0.0
    %4485 = vmatprep.subr.mxu0 0.0
    %4486 = vmatpush1.msra.mxu0 0.0
    %4487 = vmatprep.subr.mxu0 0.0
    %4488 = vmatpush1.msra.mxu0 0.0
    %4489 = vmatprep.subr.mxu0 0.0
    %4490 = vmatpush1.msra.mxu0 0.0
    %4491 = vmatprep.subr.mxu0 0.0
    %4492 = vmatpush1.msra.mxu0 0.0
    %4493 = vmatprep.subr.mxu0 0.0
    %4494 = vmatpush1.msra.mxu0 0.0
    %4495 = vmatprep.subr.mxu0 0.0
    %4496 = vmatpush1.msra.mxu0 0.0
    %4497 = vmatprep.subr.mxu0 0.0
    %4498 = vmatpush1.msra.mxu0 0.0
    %4499 = vmatprep.subr.mxu0 0.0
    %4500 = vmatpush1.msra.mxu0 0.0
    %4501 = vmatprep.subr.mxu0 0.0
    %4502 = vmatpush1.msra.mxu0 0.0
    %4503 = vmatprep.subr.mxu0 0.0
    %4504 = vmatpush1.msra.mxu0 0.0
    %4505 = vmatprep.subr.mxu0 0.0
    %4506 = vmatpush1.msra.mxu0 0.0
    %4507 = vmatprep.subr.mxu0 0.0
    %4508 = vmatpush1.msra.mxu0 0.0
    %4509 = vmatprep.subr.mxu0 0.0
    %4510 = vmatpush1.msra.mxu0 0.0
    %4511 = vmatprep.subr.mxu0 0.0
    %4512 = vmatpush1.msra.mxu0 0.0
    %4513 = vmatprep.subr.mxu0 0.0
    %4514 = vmatpush1.msra.mxu0 0.0
    %4515 = vmatprep.subr.mxu0 0.0
    %4516 = vmatpush1.msra.mxu0 0.0
    %4517 = vmatprep.subr.mxu0 0.0
    %4518 = vmatpush1.msra.mxu0 0.0
    %4519 = vmatprep.mubr.f32.mxu0 0.0
    %v4520 = vand.u32 %v4354, 4294901760
    %4521 = vmatmul.mubr.f32.gmra.mrb[0].mxu0 %v4520
    %v4522 = vpop.f32.mrb[0].mxu0
    %v4523 = vadd.f32 %v4432, %v4522
    %v4524 = vpop.f32.mrb[0].mxu0
    %4525 = vdwg.mxu0
    %4526 = vmatprep.subr.mxu0 0.0
    %v4527 = vand.u32 %v1233, 4294901760
    %v4528 = vsub.f32 %v1233, %v4527
    %4529 = vmatpush1.msra.mxu0 %v4528
    %4530 = vmatprep.subr.mxu0 0.0
    %v4531 = vand.u32 %v1234, 4294901760
    %v4532 = vsub.f32 %v1234, %v4531
    %4533 = vmatpush1.msra.mxu0 %v4532
    %4534 = vmatprep.subr.mxu0 0.0
    %v4535 = vand.u32 %v1235, 4294901760
    %v4536 = vsub.f32 %v1235, %v4535
    %4537 = vmatpush1.msra.mxu0 %v4536
    %4538 = vmatprep.subr.mxu0 0.0
    %v4539 = vand.u32 %v1236, 4294901760
    %v4540 = vsub.f32 %v1236, %v4539
    %4541 = vmatpush1.msra.mxu0 %v4540
    %4542 = vmatprep.subr.mxu0 0.0
    %4543 = vmatpush1.msra.mxu0 0.0
    %4544 = vmatprep.subr.mxu0 0.0
    %4545 = vmatpush1.msra.mxu0 0.0
    %4546 = vmatprep.subr.mxu0 0.0
    %4547 = vmatpush1.msra.mxu0 0.0
    %4548 = vmatprep.subr.mxu0 0.0
    %4549 = vmatpush1.msra.mxu0 0.0
    %4550 = vmatprep.subr.mxu0 0.0
    %4551 = vmatpush1.msra.mxu0 0.0
    %4552 = vmatprep.subr.mxu0 0.0
    %4553 = vmatpush1.msra.mxu0 0.0
    %4554 = vmatprep.subr.mxu0 0.0
    %4555 = vmatpush1.msra.mxu0 0.0
    %4556 = vmatprep.subr.mxu0 0.0
    %4557 = vmatpush1.msra.mxu0 0.0
    %4558 = vmatprep.subr.mxu0 0.0
    %4559 = vmatpush1.msra.mxu0 0.0
    %4560 = vmatprep.subr.mxu0 0.0
    %4561 = vmatpush1.msra.mxu0 0.0
    %4562 = vmatprep.subr.mxu0 0.0
    %4563 = vmatpush1.msra.mxu0 0.0
    %4564 = vmatprep.subr.mxu0 0.0
    %4565 = vmatpush1.msra.mxu0 0.0
    %4566 = vmatprep.subr.mxu0 0.0
    %4567 = vmatpush1.msra.mxu0 0.0
    %4568 = vmatprep.subr.mxu0 0.0
    %4569 = vmatpush1.msra.mxu0 0.0
    %4570 = vmatprep.subr.mxu0 0.0
    %4571 = vmatpush1.msra.mxu0 0.0
    %4572 = vmatprep.subr.mxu0 0.0
    %4573 = vmatpush1.msra.mxu0 0.0
    %4574 = vmatprep.subr.mxu0 0.0
    %4575 = vmatpush1.msra.mxu0 0.0
    %4576 = vmatprep.subr.mxu0 0.0
    %4577 = vmatpush1.msra.mxu0 0.0
    %4578 = vmatprep.subr.mxu0 0.0
    %4579 = vmatpush1.msra.mxu0 0.0
    %4580 = vmatprep.subr.mxu0 0.0
    %4581 = vmatpush1.msra.mxu0 0.0
    %4582 = vmatprep.subr.mxu0 0.0
    %4583 = vmatpush1.msra.mxu0 0.0
    %4584 = vmatprep.subr.mxu0 0.0
    %4585 = vmatpush1.msra.mxu0 0.0
    %4586 = vmatprep.subr.mxu0 0.0
    %4587 = vmatpush1.msra.mxu0 0.0
    %4588 = vmatprep.subr.mxu0 0.0
    %4589 = vmatpush1.msra.mxu0 0.0
    %4590 = vmatprep.subr.mxu0 0.0
    %4591 = vmatpush1.msra.mxu0 0.0
    %4592 = vmatprep.subr.mxu0 0.0
    %4593 = vmatpush1.msra.mxu0 0.0
    %4594 = vmatprep.subr.mxu0 0.0
    %4595 = vmatpush1.msra.mxu0 0.0
    %4596 = vmatprep.subr.mxu0 0.0
    %4597 = vmatpush1.msra.mxu0 0.0
    %4598 = vmatprep.mubr.f32.mxu0 0.0
    %v4599 = vand.u32 %v4354, 4294901760
    %v4600 = vsub.f32 %v4354, %v4599
    %4601 = vmatmul.mubr.f32.gmra.mrb[0].mxu0 %v4600
    %v4602 = vpop.f32.mrb[0].mxu0
    %v4603 = vadd.f32 %v4523, %v4602
    %v4604 = vpop.f32.mrb[0].mxu0
    %4605 = vdwg.mxu0
    %4606 = vmatprep.subr.mxu0 0.0
    %v4607 = vand.u32 %v1233, 4294901760
    %4608 = vmatpush1.msra.mxu0 %v4607
    %4609 = vmatprep.subr.mxu0 0.0
    %v4610 = vand.u32 %v1234, 4294901760
    %4611 = vmatpush1.msra.mxu0 %v4610
    %4612 = vmatprep.subr.mxu0 0.0
    %v4613 = vand.u32 %v1235, 4294901760
    %4614 = vmatpush1.msra.mxu0 %v4613
    %4615 = vmatprep.subr.mxu0 0.0
    %v4616 = vand.u32 %v1236, 4294901760
    %4617 = vmatpush1.msra.mxu0 %v4616
    %4618 = vmatprep.subr.mxu0 0.0
    %4619 = vmatpush1.msra.mxu0 0.0
    %4620 = vmatprep.subr.mxu0 0.0
    %4621 = vmatpush1.msra.mxu0 0.0
    %4622 = vmatprep.subr.mxu0 0.0
    %4623 = vmatpush1.msra.mxu0 0.0
    %4624 = vmatprep.subr.mxu0 0.0
    %4625 = vmatpush1.msra.mxu0 0.0
    %4626 = vmatprep.subr.mxu0 0.0
    %4627 = vmatpush1.msra.mxu0 0.0
    %4628 = vmatprep.subr.mxu0 0.0
    %4629 = vmatpush1.msra.mxu0 0.0
    %4630 = vmatprep.subr.mxu0 0.0
    %4631 = vmatpush1.msra.mxu0 0.0
    %4632 = vmatprep.subr.mxu0 0.0
    %4633 = vmatpush1.msra.mxu0 0.0
    %4634 = vmatprep.subr.mxu0 0.0
    %4635 = vmatpush1.msra.mxu0 0.0
    %4636 = vmatprep.subr.mxu0 0.0
    %4637 = vmatpush1.msra.mxu0 0.0
    %4638 = vmatprep.subr.mxu0 0.0
    %4639 = vmatpush1.msra.mxu0 0.0
    %4640 = vmatprep.subr.mxu0 0.0
    %4641 = vmatpush1.msra.mxu0 0.0
    %4642 = vmatprep.subr.mxu0 0.0
    %4643 = vmatpush1.msra.mxu0 0.0
    %4644 = vmatprep.subr.mxu0 0.0
    %4645 = vmatpush1.msra.mxu0 0.0
    %4646 = vmatprep.subr.mxu0 0.0
    %4647 = vmatpush1.msra.mxu0 0.0
    %4648 = vmatprep.subr.mxu0 0.0
    %4649 = vmatpush1.msra.mxu0 0.0
    %4650 = vmatprep.subr.mxu0 0.0
    %4651 = vmatpush1.msra.mxu0 0.0
    %4652 = vmatprep.subr.mxu0 0.0
    %4653 = vmatpush1.msra.mxu0 0.0
    %4654 = vmatprep.subr.mxu0 0.0
    %4655 = vmatpush1.msra.mxu0 0.0
    %4656 = vmatprep.subr.mxu0 0.0
    %4657 = vmatpush1.msra.mxu0 0.0
    %4658 = vmatprep.subr.mxu0 0.0
    %4659 = vmatpush1.msra.mxu0 0.0
    %4660 = vmatprep.subr.mxu0 0.0
    %4661 = vmatpush1.msra.mxu0 0.0
    %4662 = vmatprep.subr.mxu0 0.0
    %4663 = vmatpush1.msra.mxu0 0.0
    %4664 = vmatprep.subr.mxu0 0.0
    %4665 = vmatpush1.msra.mxu0 0.0
    %4666 = vmatprep.subr.mxu0 0.0
    %4667 = vmatpush1.msra.mxu0 0.0
    %4668 = vmatprep.subr.mxu0 0.0
    %4669 = vmatpush1.msra.mxu0 0.0
    %4670 = vmatprep.subr.mxu0 0.0
    %4671 = vmatpush1.msra.mxu0 0.0
    %4672 = vmatprep.subr.mxu0 0.0
    %4673 = vmatpush1.msra.mxu0 0.0
    %4674 = vmatprep.mubr.f32.mxu0 0.0
    %v4675 = vand.u32 %v4354, 4294901760
    %v4676 = vsub.f32 %v4354, %v4675
    %v4677 = vand.u32 %v4676, 4294901760
    %4678 = vmatmul.mubr.f32.gmra.mrb[0].mxu0 %v4677
    %v4679 = vpop.f32.mrb[0].mxu0
    %v4680 = vadd.f32 %v4603, %v4679
    %v4681 = vpop.f32.mrb[0].mxu0
    %4682 = vdwg.mxu0
    %4683 = vmatprep.subr.mxu0 0.0
    %v4684 = vand.u32 %v1233, 4294901760
    %v4685 = vsub.f32 %v1233, %v4684
    %v4686 = vand.u32 %v4685, 4294901760
    %4687 = vmatpush1.msra.mxu0 %v4686
    %4688 = vmatprep.subr.mxu0 0.0
    %v4689 = vand.u32 %v1234, 4294901760
    %v4690 = vsub.f32 %v1234, %v4689
    %v4691 = vand.u32 %v4690, 4294901760
    %4692 = vmatpush1.msra.mxu0 %v4691
    %4693 = vmatprep.subr.mxu0 0.0
    %v4694 = vand.u32 %v1235, 4294901760
    %v4695 = vsub.f32 %v1235, %v4694
    %v4696 = vand.u32 %v4695, 4294901760
    %4697 = vmatpush1.msra.mxu0 %v4696
    %4698 = vmatprep.subr.mxu0 0.0
    %v4699 = vand.u32 %v1236, 4294901760
    %v4700 = vsub.f32 %v1236, %v4699
    %v4701 = vand.u32 %v4700, 4294901760
    %4702 = vmatpush1.msra.mxu0 %v4701
    %4703 = vmatprep.subr.mxu0 0.0
    %4704 = vmatpush1.msra.mxu0 0.0
    %4705 = vmatprep.subr.mxu0 0.0
    %4706 = vmatpush1.msra.mxu0 0.0
    %4707 = vmatprep.subr.mxu0 0.0
    %4708 = vmatpush1.msra.mxu0 0.0
    %4709 = vmatprep.subr.mxu0 0.0
    %4710 = vmatpush1.msra.mxu0 0.0
    %4711 = vmatprep.subr.mxu0 0.0
    %4712 = vmatpush1.msra.mxu0 0.0
    %4713 = vmatprep.subr.mxu0 0.0
    %4714 = vmatpush1.msra.mxu0 0.0
    %4715 = vmatprep.subr.mxu0 0.0
    %4716 = vmatpush1.msra.mxu0 0.0
    %4717 = vmatprep.subr.mxu0 0.0
    %4718 = vmatpush1.msra.mxu0 0.0
    %4719 = vmatprep.subr.mxu0 0.0
    %4720 = vmatpush1.msra.mxu0 0.0
    %4721 = vmatprep.subr.mxu0 0.0
    %4722 = vmatpush1.msra.mxu0 0.0
    %4723 = vmatprep.subr.mxu0 0.0
    %4724 = vmatpush1.msra.mxu0 0.0
    %4725 = vmatprep.subr.mxu0 0.0
    %4726 = vmatpush1.msra.mxu0 0.0
    %4727 = vmatprep.subr.mxu0 0.0
    %4728 = vmatpush1.msra.mxu0 0.0
    %4729 = vmatprep.subr.mxu0 0.0
    %4730 = vmatpush1.msra.mxu0 0.0
    %4731 = vmatprep.subr.mxu0 0.0
    %4732 = vmatpush1.msra.mxu0 0.0
    %4733 = vmatprep.subr.mxu0 0.0
    %4734 = vmatpush1.msra.mxu0 0.0
    %4735 = vmatprep.subr.mxu0 0.0
    %4736 = vmatpush1.msra.mxu0 0.0
    %4737 = vmatprep.subr.mxu0 0.0
    %4738 = vmatpush1.msra.mxu0 0.0
    %4739 = vmatprep.subr.mxu0 0.0
    %4740 = vmatpush1.msra.mxu0 0.0
    %4741 = vmatprep.subr.mxu0 0.0
    %4742 = vmatpush1.msra.mxu0 0.0
    %4743 = vmatprep.subr.mxu0 0.0
    %4744 = vmatpush1.msra.mxu0 0.0
    %4745 = vmatprep.subr.mxu0 0.0
    %4746 = vmatpush1.msra.mxu0 0.0
    %4747 = vmatprep.subr.mxu0 0.0
    %4748 = vmatpush1.msra.mxu0 0.0
    %4749 = vmatprep.subr.mxu0 0.0
    %4750 = vmatpush1.msra.mxu0 0.0
    %4751 = vmatprep.subr.mxu0 0.0
    %4752 = vmatpush1.msra.mxu0 0.0
    %4753 = vmatprep.subr.mxu0 0.0
    %4754 = vmatpush1.msra.mxu0 0.0
    %4755 = vmatprep.subr.mxu0 0.0
    %4756 = vmatpush1.msra.mxu0 0.0
    %4757 = vmatprep.subr.mxu0 0.0
    %4758 = vmatpush1.msra.mxu0 0.0
    %4759 = vmatprep.mubr.f32.mxu0 0.0
    %v4760 = vand.u32 %v4354, 4294901760
    %4761 = vmatmul.mubr.f32.gmra.mrb[0].mxu0 %v4760
    %v4762 = vpop.f32.mrb[0].mxu0
    %v4763 = vadd.f32 %v4680, %v4762
    %v4764 = vpop.f32.mrb[0].mxu0
    %4765 = vdwg.mxu0
    %4766 = vmatprep.subr.mxu0 0.0
    %v4767 = vand.u32 %v1233, 4294901760
    %4768 = vmatpush1.msra.mxu0 %v4767
    %4769 = vmatprep.subr.mxu0 0.0
    %v4770 = vand.u32 %v1234, 4294901760
    %4771 = vmatpush1.msra.mxu0 %v4770
    %4772 = vmatprep.subr.mxu0 0.0
    %v4773 = vand.u32 %v1235, 4294901760
    %4774 = vmatpush1.msra.mxu0 %v4773
    %4775 = vmatprep.subr.mxu0 0.0
    %v4776 = vand.u32 %v1236, 4294901760
    %4777 = vmatpush1.msra.mxu0 %v4776
    %4778 = vmatprep.subr.mxu0 0.0
    %4779 = vmatpush1.msra.mxu0 0.0
    %4780 = vmatprep.subr.mxu0 0.0
    %4781 = vmatpush1.msra.mxu0 0.0
    %4782 = vmatprep.subr.mxu0 0.0
    %4783 = vmatpush1.msra.mxu0 0.0
    %4784 = vmatprep.subr.mxu0 0.0
    %4785 = vmatpush1.msra.mxu0 0.0
    %4786 = vmatprep.subr.mxu0 0.0
    %4787 = vmatpush1.msra.mxu0 0.0
    %4788 = vmatprep.subr.mxu0 0.0
    %4789 = vmatpush1.msra.mxu0 0.0
    %4790 = vmatprep.subr.mxu0 0.0
    %4791 = vmatpush1.msra.mxu0 0.0
    %4792 = vmatprep.subr.mxu0 0.0
    %4793 = vmatpush1.msra.mxu0 0.0
    %4794 = vmatprep.subr.mxu0 0.0
    %4795 = vmatpush1.msra.mxu0 0.0
    %4796 = vmatprep.subr.mxu0 0.0
    %4797 = vmatpush1.msra.mxu0 0.0
    %4798 = vmatprep.subr.mxu0 0.0
    %4799 = vmatpush1.msra.mxu0 0.0
    %4800 = vmatprep.subr.mxu0 0.0
    %4801 = vmatpush1.msra.mxu0 0.0
    %4802 = vmatprep.subr.mxu0 0.0
    %4803 = vmatpush1.msra.mxu0 0.0
    %4804 = vmatprep.subr.mxu0 0.0
    %4805 = vmatpush1.msra.mxu0 0.0
    %4806 = vmatprep.subr.mxu0 0.0
    %4807 = vmatpush1.msra.mxu0 0.0
    %4808 = vmatprep.subr.mxu0 0.0
    %4809 = vmatpush1.msra.mxu0 0.0
    %4810 = vmatprep.subr.mxu0 0.0
    %4811 = vmatpush1.msra.mxu0 0.0
    %4812 = vmatprep.subr.mxu0 0.0
    %4813 = vmatpush1.msra.mxu0 0.0
    %4814 = vmatprep.subr.mxu0 0.0
    %4815 = vmatpush1.msra.mxu0 0.0
    %4816 = vmatprep.subr.mxu0 0.0
    %4817 = vmatpush1.msra.mxu0 0.0
    %4818 = vmatprep.subr.mxu0 0.0
    %4819 = vmatpush1.msra.mxu0 0.0
    %4820 = vmatprep.subr.mxu0 0.0
    %4821 = vmatpush1.msra.mxu0 0.0
    %4822 = vmatprep.subr.mxu0 0.0
    %4823 = vmatpush1.msra.mxu0 0.0
    %4824 = vmatprep.subr.mxu0 0.0
    %4825 = vmatpush1.msra.mxu0 0.0
    %4826 = vmatprep.subr.mxu0 0.0
    %4827 = vmatpush1.msra.mxu0 0.0
    %4828 = vmatprep.subr.mxu0 0.0
    %4829 = vmatpush1.msra.mxu0 0.0
    %4830 = vmatprep.subr.mxu0 0.0
    %4831 = vmatpush1.msra.mxu0 0.0
    %4832 = vmatprep.subr.mxu0 0.0
    %4833 = vmatpush1.msra.mxu0 0.0
    %4834 = vmatprep.mubr.f32.mxu0 0.0
    %v4835 = vand.u32 %v4354, 4294901760
    %4836 = vmatmul.mubr.f32.gmra.mrb[0].mxu0 %v4835
    %v4837 = vpop.f32.mrb[0].mxu0
    %v4838 = vadd.f32 %v4763, %v4837
    %v4839 = vpop.f32.mrb[0].mxu0
    %4840 = vdwg.mxu0
    %v4842 = vrot.slane %v4838, 2
    %v4844 = vadd.f32 %v1222, %v4842
    %v4846 = vrot.slane %v4349, 6
    %4847 = vrot.lane.b32.xlu0 %v4846, 32
    %v4848 = vpop.permute.xlu0 %4847
    %v4849 = vsel %vm634, %v4848, 0
    %4851 = vmatprep.subr.mxu0 0.0
    %v4852 = vand.u32 %v1237, 4294901760
    %4853 = vmatpush1.msra.mxu0 %v4852
    %4854 = vmatprep.subr.mxu0 0.0
    %v4855 = vand.u32 %v1238, 4294901760
    %4856 = vmatpush1.msra.mxu0 %v4855
    %4857 = vmatprep.subr.mxu0 0.0
    %v4858 = vand.u32 %v1239, 4294901760
    %4859 = vmatpush1.msra.mxu0 %v4858
    %4860 = vmatprep.subr.mxu0 0.0
    %v4861 = vand.u32 %v1240, 4294901760
    %4862 = vmatpush1.msra.mxu0 %v4861
    %4863 = vmatprep.subr.mxu0 0.0
    %4864 = vmatpush1.msra.mxu0 0.0
    %4865 = vmatprep.subr.mxu0 0.0
    %4866 = vmatpush1.msra.mxu0 0.0
    %4867 = vmatprep.subr.mxu0 0.0
    %4868 = vmatpush1.msra.mxu0 0.0
    %4869 = vmatprep.subr.mxu0 0.0
    %4870 = vmatpush1.msra.mxu0 0.0
    %4871 = vmatprep.subr.mxu0 0.0
    %4872 = vmatpush1.msra.mxu0 0.0
    %4873 = vmatprep.subr.mxu0 0.0
    %4874 = vmatpush1.msra.mxu0 0.0
    %4875 = vmatprep.subr.mxu0 0.0
    %4876 = vmatpush1.msra.mxu0 0.0
    %4877 = vmatprep.subr.mxu0 0.0
    %4878 = vmatpush1.msra.mxu0 0.0
    %4879 = vmatprep.subr.mxu0 0.0
    %4880 = vmatpush1.msra.mxu0 0.0
    %4881 = vmatprep.subr.mxu0 0.0
    %4882 = vmatpush1.msra.mxu0 0.0
    %4883 = vmatprep.subr.mxu0 0.0
    %4884 = vmatpush1.msra.mxu0 0.0
    %4885 = vmatprep.subr.mxu0 0.0
    %4886 = vmatpush1.msra.mxu0 0.0
    %4887 = vmatprep.subr.mxu0 0.0
    %4888 = vmatpush1.msra.mxu0 0.0
    %4889 = vmatprep.subr.mxu0 0.0
    %4890 = vmatpush1.msra.mxu0 0.0
    %4891 = vmatprep.subr.mxu0 0.0
    %4892 = vmatpush1.msra.mxu0 0.0
    %4893 = vmatprep.subr.mxu0 0.0
    %4894 = vmatpush1.msra.mxu0 0.0
    %4895 = vmatprep.subr.mxu0 0.0
    %4896 = vmatpush1.msra.mxu0 0.0
    %4897 = vmatprep.subr.mxu0 0.0
    %4898 = vmatpush1.msra.mxu0 0.0
    %4899 = vmatprep.subr.mxu0 0.0
    %4900 = vmatpush1.msra.mxu0 0.0
    %4901 = vmatprep.subr.mxu0 0.0
    %4902 = vmatpush1.msra.mxu0 0.0
    %4903 = vmatprep.subr.mxu0 0.0
    %4904 = vmatpush1.msra.mxu0 0.0
    %4905 = vmatprep.subr.mxu0 0.0
    %4906 = vmatpush1.msra.mxu0 0.0
    %4907 = vmatprep.subr.mxu0 0.0
    %4908 = vmatpush1.msra.mxu0 0.0
    %4909 = vmatprep.subr.mxu0 0.0
    %4910 = vmatpush1.msra.mxu0 0.0
    %4911 = vmatprep.subr.mxu0 0.0
    %4912 = vmatpush1.msra.mxu0 0.0
    %4913 = vmatprep.subr.mxu0 0.0
    %4914 = vmatpush1.msra.mxu0 0.0
    %4915 = vmatprep.subr.mxu0 0.0
    %4916 = vmatpush1.msra.mxu0 0.0
    %4917 = vmatprep.subr.mxu0 0.0
    %4918 = vmatpush1.msra.mxu0 0.0
    %4919 = vmatprep.mubr.f32.mxu0 0.0
    %v4920 = vand.u32 %v4849, 4294901760
    %v4921 = vsub.f32 %v4849, %v4920
    %v4922 = vand.u32 %v4921, 4294901760
    %v4923 = vsub.f32 %v4921, %v4922
    %v4924 = vand.u32 %v4923, 4294901760
    %4925 = vmatmul.mubr.f32.gmra.mrb[0].mxu0 %v4924
    %v4926 = vpop.f32.mrb[0].mxu0
    %v4927 = vadd.f32 0.0, %v4926
    %v4928 = vpop.f32.mrb[0].mxu0
    %4929 = vdwg.mxu0
    %4930 = vmatprep.subr.mxu0 0.0
    %v4931 = vand.u32 %v1237, 4294901760
    %v4932 = vsub.f32 %v1237, %v4931
    %v4933 = vand.u32 %v4932, 4294901760
    %v4934 = vsub.f32 %v4932, %v4933
    %v4935 = vand.u32 %v4934, 4294901760
    %4936 = vmatpush1.msra.mxu0 %v4935
    %4937 = vmatprep.subr.mxu0 0.0
    %v4938 = vand.u32 %v1238, 4294901760
    %v4939 = vsub.f32 %v1238, %v4938
    %v4940 = vand.u32 %v4939, 4294901760
    %v4941 = vsub.f32 %v4939, %v4940
    %v4942 = vand.u32 %v4941, 4294901760
    %4943 = vmatpush1.msra.mxu0 %v4942
    %4944 = vmatprep.subr.mxu0 0.0
    %v4945 = vand.u32 %v1239, 4294901760
    %v4946 = vsub.f32 %v1239, %v4945
    %v4947 = vand.u32 %v4946, 4294901760
    %v4948 = vsub.f32 %v4946, %v4947
    %v4949 = vand.u32 %v4948, 4294901760
    %4950 = vmatpush1.msra.mxu0 %v4949
    %4951 = vmatprep.subr.mxu0 0.0
    %v4952 = vand.u32 %v1240, 4294901760
    %v4953 = vsub.f32 %v1240, %v4952
    %v4954 = vand.u32 %v4953, 4294901760
    %v4955 = vsub.f32 %v4953, %v4954
    %v4956 = vand.u32 %v4955, 4294901760
    %4957 = vmatpush1.msra.mxu0 %v4956
    %4958 = vmatprep.subr.mxu0 0.0
    %4959 = vmatpush1.msra.mxu0 0.0
    %4960 = vmatprep.subr.mxu0 0.0
    %4961 = vmatpush1.msra.mxu0 0.0
    %4962 = vmatprep.subr.mxu0 0.0
    %4963 = vmatpush1.msra.mxu0 0.0
    %4964 = vmatprep.subr.mxu0 0.0
    %4965 = vmatpush1.msra.mxu0 0.0
    %4966 = vmatprep.subr.mxu0 0.0
    %4967 = vmatpush1.msra.mxu0 0.0
    %4968 = vmatprep.subr.mxu0 0.0
    %4969 = vmatpush1.msra.mxu0 0.0
    %4970 = vmatprep.subr.mxu0 0.0
    %4971 = vmatpush1.msra.mxu0 0.0
    %4972 = vmatprep.subr.mxu0 0.0
    %4973 = vmatpush1.msra.mxu0 0.0
    %4974 = vmatprep.subr.mxu0 0.0
    %4975 = vmatpush1.msra.mxu0 0.0
    %4976 = vmatprep.subr.mxu0 0.0
    %4977 = vmatpush1.msra.mxu0 0.0
    %4978 = vmatprep.subr.mxu0 0.0
    %4979 = vmatpush1.msra.mxu0 0.0
    %4980 = vmatprep.subr.mxu0 0.0
    %4981 = vmatpush1.msra.mxu0 0.0
    %4982 = vmatprep.subr.mxu0 0.0
    %4983 = vmatpush1.msra.mxu0 0.0
    %4984 = vmatprep.subr.mxu0 0.0
    %4985 = vmatpush1.msra.mxu0 0.0
    %4986 = vmatprep.subr.mxu0 0.0
    %4987 = vmatpush1.msra.mxu0 0.0
    %4988 = vmatprep.subr.mxu0 0.0
    %4989 = vmatpush1.msra.mxu0 0.0
    %4990 = vmatprep.subr.mxu0 0.0
    %4991 = vmatpush1.msra.mxu0 0.0
    %4992 = vmatprep.subr.mxu0 0.0
    %4993 = vmatpush1.msra.mxu0 0.0
    %4994 = vmatprep.subr.mxu0 0.0
    %4995 = vmatpush1.msra.mxu0 0.0
    %4996 = vmatprep.subr.mxu0 0.0
    %4997 = vmatpush1.msra.mxu0 0.0
    %4998 = vmatprep.subr.mxu0 0.0
    %4999 = vmatpush1.msra.mxu0 0.0
    %5000 = vmatprep.subr.mxu0 0.0
    %5001 = vmatpush1.msra.mxu0 0.0
    %5002 = vmatprep.subr.mxu0 0.0
    %5003 = vmatpush1.msra.mxu0 0.0
    %5004 = vmatprep.subr.mxu0 0.0
    %5005 = vmatpush1.msra.mxu0 0.0
    %5006 = vmatprep.subr.mxu0 0.0
    %5007 = vmatpush1.msra.mxu0 0.0
    %5008 = vmatprep.subr.mxu0 0.0
    %5009 = vmatpush1.msra.mxu0 0.0
    %5010 = vmatprep.subr.mxu0 0.0
    %5011 = vmatpush1.msra.mxu0 0.0
    %5012 = vmatprep.subr.mxu0 0.0
    %5013 = vmatpush1.msra.mxu0 0.0
    %5014 = vmatprep.mubr.f32.mxu0 0.0
    %v5015 = vand.u32 %v4849, 4294901760
    %5016 = vmatmul.mubr.f32.gmra.mrb[0].mxu0 %v5015
    %v5017 = vpop.f32.mrb[0].mxu0
    %v5018 = vadd.f32 %v4927, %v5017
    %v5019 = vpop.f32.mrb[0].mxu0
    %5020 = vdwg.mxu0
    %5021 = vmatprep.subr.mxu0 0.0
    %v5022 = vand.u32 %v1237, 4294901760
    %v5023 = vsub.f32 %v1237, %v5022
    %5024 = vmatpush1.msra.mxu0 %v5023
    %5025 = vmatprep.subr.mxu0 0.0
    %v5026 = vand.u32 %v1238, 4294901760
    %v5027 = vsub.f32 %v1238, %v5026
    %5028 = vmatpush1.msra.mxu0 %v5027
    %5029 = vmatprep.subr.mxu0 0.0
    %v5030 = vand.u32 %v1239, 4294901760
    %v5031 = vsub.f32 %v1239, %v5030
    %5032 = vmatpush1.msra.mxu0 %v5031
    %5033 = vmatprep.subr.mxu0 0.0
    %v5034 = vand.u32 %v1240, 4294901760
    %v5035 = vsub.f32 %v1240, %v5034
    %5036 = vmatpush1.msra.mxu0 %v5035
    %5037 = vmatprep.subr.mxu0 0.0
    %5038 = vmatpush1.msra.mxu0 0.0
    %5039 = vmatprep.subr.mxu0 0.0
    %5040 = vmatpush1.msra.mxu0 0.0
    %5041 = vmatprep.subr.mxu0 0.0
    %5042 = vmatpush1.msra.mxu0 0.0
    %5043 = vmatprep.subr.mxu0 0.0
    %5044 = vmatpush1.msra.mxu0 0.0
    %5045 = vmatprep.subr.mxu0 0.0
    %5046 = vmatpush1.msra.mxu0 0.0
    %5047 = vmatprep.subr.mxu0 0.0
    %5048 = vmatpush1.msra.mxu0 0.0
    %5049 = vmatprep.subr.mxu0 0.0
    %5050 = vmatpush1.msra.mxu0 0.0
    %5051 = vmatprep.subr.mxu0 0.0
    %5052 = vmatpush1.msra.mxu0 0.0
    %5053 = vmatprep.subr.mxu0 0.0
    %5054 = vmatpush1.msra.mxu0 0.0
    %5055 = vmatprep.subr.mxu0 0.0
    %5056 = vmatpush1.msra.mxu0 0.0
    %5057 = vmatprep.subr.mxu0 0.0
    %5058 = vmatpush1.msra.mxu0 0.0
    %5059 = vmatprep.subr.mxu0 0.0
    %5060 = vmatpush1.msra.mxu0 0.0
    %5061 = vmatprep.subr.mxu0 0.0
    %5062 = vmatpush1.msra.mxu0 0.0
    %5063 = vmatprep.subr.mxu0 0.0
    %5064 = vmatpush1.msra.mxu0 0.0
    %5065 = vmatprep.subr.mxu0 0.0
    %5066 = vmatpush1.msra.mxu0 0.0
    %5067 = vmatprep.subr.mxu0 0.0
    %5068 = vmatpush1.msra.mxu0 0.0
    %5069 = vmatprep.subr.mxu0 0.0
    %5070 = vmatpush1.msra.mxu0 0.0
    %5071 = vmatprep.subr.mxu0 0.0
    %5072 = vmatpush1.msra.mxu0 0.0
    %5073 = vmatprep.subr.mxu0 0.0
    %5074 = vmatpush1.msra.mxu0 0.0
    %5075 = vmatprep.subr.mxu0 0.0
    %5076 = vmatpush1.msra.mxu0 0.0
    %5077 = vmatprep.subr.mxu0 0.0
    %5078 = vmatpush1.msra.mxu0 0.0
    %5079 = vmatprep.subr.mxu0 0.0
    %5080 = vmatpush1.msra.mxu0 0.0
    %5081 = vmatprep.subr.mxu0 0.0
    %5082 = vmatpush1.msra.mxu0 0.0
    %5083 = vmatprep.subr.mxu0 0.0
    %5084 = vmatpush1.msra.mxu0 0.0
    %5085 = vmatprep.subr.mxu0 0.0
    %5086 = vmatpush1.msra.mxu0 0.0
    %5087 = vmatprep.subr.mxu0 0.0
    %5088 = vmatpush1.msra.mxu0 0.0
    %5089 = vmatprep.subr.mxu0 0.0
    %5090 = vmatpush1.msra.mxu0 0.0
    %5091 = vmatprep.subr.mxu0 0.0
    %5092 = vmatpush1.msra.mxu0 0.0
    %5093 = vmatprep.mubr.f32.mxu0 0.0
    %v5094 = vand.u32 %v4849, 4294901760
    %v5095 = vsub.f32 %v4849, %v5094
    %5096 = vmatmul.mubr.f32.gmra.mrb[0].mxu0 %v5095
    %v5097 = vpop.f32.mrb[0].mxu0
    %v5098 = vadd.f32 %v5018, %v5097
    %v5099 = vpop.f32.mrb[0].mxu0
    %5100 = vdwg.mxu0
    %5101 = vmatprep.subr.mxu0 0.0
    %v5102 = vand.u32 %v1237, 4294901760
    %5103 = vmatpush1.msra.mxu0 %v5102
    %5104 = vmatprep.subr.mxu0 0.0
    %v5105 = vand.u32 %v1238, 4294901760
    %5106 = vmatpush1.msra.mxu0 %v5105
    %5107 = vmatprep.subr.mxu0 0.0
    %v5108 = vand.u32 %v1239, 4294901760
    %5109 = vmatpush1.msra.mxu0 %v5108
    %5110 = vmatprep.subr.mxu0 0.0
    %v5111 = vand.u32 %v1240, 4294901760
    %5112 = vmatpush1.msra.mxu0 %v5111
    %5113 = vmatprep.subr.mxu0 0.0
    %5114 = vmatpush1.msra.mxu0 0.0
    %5115 = vmatprep.subr.mxu0 0.0
    %5116 = vmatpush1.msra.mxu0 0.0
    %5117 = vmatprep.subr.mxu0 0.0
    %5118 = vmatpush1.msra.mxu0 0.0
    %5119 = vmatprep.subr.mxu0 0.0
    %5120 = vmatpush1.msra.mxu0 0.0
    %5121 = vmatprep.subr.mxu0 0.0
    %5122 = vmatpush1.msra.mxu0 0.0
    %5123 = vmatprep.subr.mxu0 0.0
    %5124 = vmatpush1.msra.mxu0 0.0
    %5125 = vmatprep.subr.mxu0 0.0
    %5126 = vmatpush1.msra.mxu0 0.0
    %5127 = vmatprep.subr.mxu0 0.0
    %5128 = vmatpush1.msra.mxu0 0.0
    %5129 = vmatprep.subr.mxu0 0.0
    %5130 = vmatpush1.msra.mxu0 0.0
    %5131 = vmatprep.subr.mxu0 0.0
    %5132 = vmatpush1.msra.mxu0 0.0
    %5133 = vmatprep.subr.mxu0 0.0
    %5134 = vmatpush1.msra.mxu0 0.0
    %5135 = vmatprep.subr.mxu0 0.0
    %5136 = vmatpush1.msra.mxu0 0.0
    %5137 = vmatprep.subr.mxu0 0.0
    %5138 = vmatpush1.msra.mxu0 0.0
    %5139 = vmatprep.subr.mxu0 0.0
    %5140 = vmatpush1.msra.mxu0 0.0
    %5141 = vmatprep.subr.mxu0 0.0
    %5142 = vmatpush1.msra.mxu0 0.0
    %5143 = vmatprep.subr.mxu0 0.0
    %5144 = vmatpush1.msra.mxu0 0.0
    %5145 = vmatprep.subr.mxu0 0.0
    %5146 = vmatpush1.msra.mxu0 0.0
    %5147 = vmatprep.subr.mxu0 0.0
    %5148 = vmatpush1.msra.mxu0 0.0
    %5149 = vmatprep.subr.mxu0 0.0
    %5150 = vmatpush1.msra.mxu0 0.0
    %5151 = vmatprep.subr.mxu0 0.0
    %5152 = vmatpush1.msra.mxu0 0.0
    %5153 = vmatprep.subr.mxu0 0.0
    %5154 = vmatpush1.msra.mxu0 0.0
    %5155 = vmatprep.subr.mxu0 0.0
    %5156 = vmatpush1.msra.mxu0 0.0
    %5157 = vmatprep.subr.mxu0 0.0
    %5158 = vmatpush1.msra.mxu0 0.0
    %5159 = vmatprep.subr.mxu0 0.0
    %5160 = vmatpush1.msra.mxu0 0.0
    %5161 = vmatprep.subr.mxu0 0.0
    %5162 = vmatpush1.msra.mxu0 0.0
    %5163 = vmatprep.subr.mxu0 0.0
    %5164 = vmatpush1.msra.mxu0 0.0
    %5165 = vmatprep.subr.mxu0 0.0
    %5166 = vmatpush1.msra.mxu0 0.0
    %5167 = vmatprep.subr.mxu0 0.0
    %5168 = vmatpush1.msra.mxu0 0.0
    %5169 = vmatprep.mubr.f32.mxu0 0.0
    %v5170 = vand.u32 %v4849, 4294901760
    %v5171 = vsub.f32 %v4849, %v5170
    %v5172 = vand.u32 %v5171, 4294901760
    %5173 = vmatmul.mubr.f32.gmra.mrb[0].mxu0 %v5172
    %v5174 = vpop.f32.mrb[0].mxu0
    %v5175 = vadd.f32 %v5098, %v5174
    %v5176 = vpop.f32.mrb[0].mxu0
    %5177 = vdwg.mxu0
    %5178 = vmatprep.subr.mxu0 0.0
    %v5179 = vand.u32 %v1237, 4294901760
    %v5180 = vsub.f32 %v1237, %v5179
    %v5181 = vand.u32 %v5180, 4294901760
    %5182 = vmatpush1.msra.mxu0 %v5181
    %5183 = vmatprep.subr.mxu0 0.0
    %v5184 = vand.u32 %v1238, 4294901760
    %v5185 = vsub.f32 %v1238, %v5184
    %v5186 = vand.u32 %v5185, 4294901760
    %5187 = vmatpush1.msra.mxu0 %v5186
    %5188 = vmatprep.subr.mxu0 0.0
    %v5189 = vand.u32 %v1239, 4294901760
    %v5190 = vsub.f32 %v1239, %v5189
    %v5191 = vand.u32 %v5190, 4294901760
    %5192 = vmatpush1.msra.mxu0 %v5191
    %5193 = vmatprep.subr.mxu0 0.0
    %v5194 = vand.u32 %v1240, 4294901760
    %v5195 = vsub.f32 %v1240, %v5194
    %v5196 = vand.u32 %v5195, 4294901760
    %5197 = vmatpush1.msra.mxu0 %v5196
    %5198 = vmatprep.subr.mxu0 0.0
    %5199 = vmatpush1.msra.mxu0 0.0
    %5200 = vmatprep.subr.mxu0 0.0
    %5201 = vmatpush1.msra.mxu0 0.0
    %5202 = vmatprep.subr.mxu0 0.0
    %5203 = vmatpush1.msra.mxu0 0.0
    %5204 = vmatprep.subr.mxu0 0.0
    %5205 = vmatpush1.msra.mxu0 0.0
    %5206 = vmatprep.subr.mxu0 0.0
    %5207 = vmatpush1.msra.mxu0 0.0
    %5208 = vmatprep.subr.mxu0 0.0
    %5209 = vmatpush1.msra.mxu0 0.0
    %5210 = vmatprep.subr.mxu0 0.0
    %5211 = vmatpush1.msra.mxu0 0.0
    %5212 = vmatprep.subr.mxu0 0.0
    %5213 = vmatpush1.msra.mxu0 0.0
    %5214 = vmatprep.subr.mxu0 0.0
    %5215 = vmatpush1.msra.mxu0 0.0
    %5216 = vmatprep.subr.mxu0 0.0
    %5217 = vmatpush1.msra.mxu0 0.0
    %5218 = vmatprep.subr.mxu0 0.0
    %5219 = vmatpush1.msra.mxu0 0.0
    %5220 = vmatprep.subr.mxu0 0.0
    %5221 = vmatpush1.msra.mxu0 0.0
    %5222 = vmatprep.subr.mxu0 0.0
    %5223 = vmatpush1.msra.mxu0 0.0
    %5224 = vmatprep.subr.mxu0 0.0
    %5225 = vmatpush1.msra.mxu0 0.0
    %5226 = vmatprep.subr.mxu0 0.0
    %5227 = vmatpush1.msra.mxu0 0.0
    %5228 = vmatprep.subr.mxu0 0.0
    %5229 = vmatpush1.msra.mxu0 0.0
    %5230 = vmatprep.subr.mxu0 0.0
    %5231 = vmatpush1.msra.mxu0 0.0
    %5232 = vmatprep.subr.mxu0 0.0
    %5233 = vmatpush1.msra.mxu0 0.0
    %5234 = vmatprep.subr.mxu0 0.0
    %5235 = vmatpush1.msra.mxu0 0.0
    %5236 = vmatprep.subr.mxu0 0.0
    %5237 = vmatpush1.msra.mxu0 0.0
    %5238 = vmatprep.subr.mxu0 0.0
    %5239 = vmatpush1.msra.mxu0 0.0
    %5240 = vmatprep.subr.mxu0 0.0
    %5241 = vmatpush1.msra.mxu0 0.0
    %5242 = vmatprep.subr.mxu0 0.0
    %5243 = vmatpush1.msra.mxu0 0.0
    %5244 = vmatprep.subr.mxu0 0.0
    %5245 = vmatpush1.msra.mxu0 0.0
    %5246 = vmatprep.subr.mxu0 0.0
    %5247 = vmatpush1.msra.mxu0 0.0
    %5248 = vmatprep.subr.mxu0 0.0
    %5249 = vmatpush1.msra.mxu0 0.0
    %5250 = vmatprep.subr.mxu0 0.0
    %5251 = vmatpush1.msra.mxu0 0.0
    %5252 = vmatprep.subr.mxu0 0.0
    %5253 = vmatpush1.msra.mxu0 0.0
    %5254 = vmatprep.mubr.f32.mxu0 0.0
    %v5255 = vand.u32 %v4849, 4294901760
    %5256 = vmatmul.mubr.f32.gmra.mrb[0].mxu0 %v5255
    %v5257 = vpop.f32.mrb[0].mxu0
    %v5258 = vadd.f32 %v5175, %v5257
    %v5259 = vpop.f32.mrb[0].mxu0
    %5260 = vdwg.mxu0
    %5261 = vmatprep.subr.mxu0 0.0
    %v5262 = vand.u32 %v1237, 4294901760
    %5263 = vmatpush1.msra.mxu0 %v5262
    %5264 = vmatprep.subr.mxu0 0.0
    %v5265 = vand.u32 %v1238, 4294901760
    %5266 = vmatpush1.msra.mxu0 %v5265
    %5267 = vmatprep.subr.mxu0 0.0
    %v5268 = vand.u32 %v1239, 4294901760
    %5269 = vmatpush1.msra.mxu0 %v5268
    %5270 = vmatprep.subr.mxu0 0.0
    %v5271 = vand.u32 %v1240, 4294901760
    %5272 = vmatpush1.msra.mxu0 %v5271
    %5273 = vmatprep.subr.mxu0 0.0
    %5274 = vmatpush1.msra.mxu0 0.0
    %5275 = vmatprep.subr.mxu0 0.0
    %5276 = vmatpush1.msra.mxu0 0.0
    %5277 = vmatprep.subr.mxu0 0.0
    %5278 = vmatpush1.msra.mxu0 0.0
    %5279 = vmatprep.subr.mxu0 0.0
    %5280 = vmatpush1.msra.mxu0 0.0
    %5281 = vmatprep.subr.mxu0 0.0
    %5282 = vmatpush1.msra.mxu0 0.0
    %5283 = vmatprep.subr.mxu0 0.0
    %5284 = vmatpush1.msra.mxu0 0.0
    %5285 = vmatprep.subr.mxu0 0.0
    %5286 = vmatpush1.msra.mxu0 0.0
    %5287 = vmatprep.subr.mxu0 0.0
    %5288 = vmatpush1.msra.mxu0 0.0
    %5289 = vmatprep.subr.mxu0 0.0
    %5290 = vmatpush1.msra.mxu0 0.0
    %5291 = vmatprep.subr.mxu0 0.0
    %5292 = vmatpush1.msra.mxu0 0.0
    %5293 = vmatprep.subr.mxu0 0.0
    %5294 = vmatpush1.msra.mxu0 0.0
    %5295 = vmatprep.subr.mxu0 0.0
    %5296 = vmatpush1.msra.mxu0 0.0
    %5297 = vmatprep.subr.mxu0 0.0
    %5298 = vmatpush1.msra.mxu0 0.0
    %5299 = vmatprep.subr.mxu0 0.0
    %5300 = vmatpush1.msra.mxu0 0.0
    %5301 = vmatprep.subr.mxu0 0.0
    %5302 = vmatpush1.msra.mxu0 0.0
    %5303 = vmatprep.subr.mxu0 0.0
    %5304 = vmatpush1.msra.mxu0 0.0
    %5305 = vmatprep.subr.mxu0 0.0
    %5306 = vmatpush1.msra.mxu0 0.0
    %5307 = vmatprep.subr.mxu0 0.0
    %5308 = vmatpush1.msra.mxu0 0.0
    %5309 = vmatprep.subr.mxu0 0.0
    %5310 = vmatpush1.msra.mxu0 0.0
    %5311 = vmatprep.subr.mxu0 0.0
    %5312 = vmatpush1.msra.mxu0 0.0
    %5313 = vmatprep.subr.mxu0 0.0
    %5314 = vmatpush1.msra.mxu0 0.0
    %5315 = vmatprep.subr.mxu0 0.0
    %5316 = vmatpush1.msra.mxu0 0.0
    %5317 = vmatprep.subr.mxu0 0.0
    %5318 = vmatpush1.msra.mxu0 0.0
    %5319 = vmatprep.subr.mxu0 0.0
    %5320 = vmatpush1.msra.mxu0 0.0
    %5321 = vmatprep.subr.mxu0 0.0
    %5322 = vmatpush1.msra.mxu0 0.0
    %5323 = vmatprep.subr.mxu0 0.0
    %5324 = vmatpush1.msra.mxu0 0.0
    %5325 = vmatprep.subr.mxu0 0.0
    %5326 = vmatpush1.msra.mxu0 0.0
    %5327 = vmatprep.subr.mxu0 0.0
    %5328 = vmatpush1.msra.mxu0 0.0
    %5329 = vmatprep.mubr.f32.mxu0 0.0
    %v5330 = vand.u32 %v4849, 4294901760
    %5331 = vmatmul.mubr.f32.gmra.mrb[0].mxu0 %v5330
    %v5332 = vpop.f32.mrb[0].mxu0
    %v5333 = vadd.f32 %v5258, %v5332
    %v5334 = vpop.f32.mrb[0].mxu0
    %5335 = vdwg.mxu0
    %v5337 = vrot.slane %v5333, 4
    %v5339 = vadd.f32 %v1224, %v5337
    %v5340 = vxor.u32 %v4844, 2147483648
    %v5341 = vmul.f32 %v5340, 1.442695
    %v5342 = vpow.pop %v5341
    %v5343 = vadd.f32 %v5342, 1.0
    %v5344 = vrcp.pop %v5343
    %v5345 = vmul.f32 1.0, %v5344
    %v5346 = vtanh.pop %v4844
    %v5348 = vrot.slane %v4316, 6
    %v5350 = vmul.f32 %v5345, %v5348
    %5352 = vrot.lane.b32.xlu0 %v5346, 64
    %v5353 = vpop.permute.xlu0 %5352
    %v5355 = vmul.f32 %v5345, %v5353
    %5357 = vrot.lane.b32.xlu0 %v5355, 32
    %v5358 = vpop.permute.xlu0 %5357
    %v5360 = vadd.f32 %v5350, %v5358
    %v5361 = vtanh.pop %v5360
    %5363 = vrot.lane.b32.xlu0 %v5361, 64
    %v5364 = vpop.permute.xlu0 %5363
    %v5366 = vmul.f32 %v5345, %v5364
    %v5367 = vxor.u32 %v5339, 2147483648
    %v5368 = vmul.f32 %v5367, 1.442695
    %v5369 = vpow.pop %v5368
    %v5370 = vadd.f32 %v5369, 1.0
    %v5371 = vrcp.pop %v5370
    %v5372 = vmul.f32 1.0, %v5371
    %v5373 = vtanh.pop %v5339
    %v5375 = vrot.slane %v4343, 2
    %v5377 = vmul.f32 %v5372, %v5375
    %5379 = vrot.lane.b32.xlu0 %v5373, 64
    %v5380 = vpop.permute.xlu0 %5379
    %v5382 = vmul.f32 %v5372, %v5380
    %5384 = vrot.lane.b32.xlu0 %v5382, 32
    %v5385 = vpop.permute.xlu0 %5384
    %v5387 = vadd.f32 %v5377, %v5385
    %v5388 = vtanh.pop %v5387
    %5390 = vrot.lane.b32.xlu0 %v5388, 64
    %v5391 = vpop.permute.xlu0 %5390
    %v5393 = vmul.f32 %v5372, %v5391
    %v5395 = vrot.slane %v5366, 6
    %5396 = vrot.lane.b32.xlu0 %v5395, 32
    %v5397 = vpop.permute.xlu0 %5396
    %v5398 = vsel %vm634, %v5397, 0
    %5400 = vmatprep.subr.mxu0 0.0
    %v5401 = vand.u32 %v1233, 4294901760
    %5402 = vmatpush1.msra.mxu0 %v5401
    %5403 = vmatprep.subr.mxu0 0.0
    %v5404 = vand.u32 %v1234, 4294901760
    %5405 = vmatpush1.msra.mxu0 %v5404
    %5406 = vmatprep.subr.mxu0 0.0
    %v5407 = vand.u32 %v1235, 4294901760
    %5408 = vmatpush1.msra.mxu0 %v5407
    %5409 = vmatprep.subr.mxu0 0.0
    %v5410 = vand.u32 %v1236, 4294901760
    %5411 = vmatpush1.msra.mxu0 %v5410
    %5412 = vmatprep.subr.mxu0 0.0
    %5413 = vmatpush1.msra.mxu0 0.0
    %5414 = vmatprep.subr.mxu0 0.0
    %5415 = vmatpush1.msra.mxu0 0.0
    %5416 = vmatprep.subr.mxu0 0.0
    %5417 = vmatpush1.msra.mxu0 0.0
    %5418 = vmatprep.subr.mxu0 0.0
    %5419 = vmatpush1.msra.mxu0 0.0
    %5420 = vmatprep.subr.mxu0 0.0
    %5421 = vmatpush1.msra.mxu0 0.0
    %5422 = vmatprep.subr.mxu0 0.0
    %5423 = vmatpush1.msra.mxu0 0.0
    %5424 = vmatprep.subr.mxu0 0.0
    %5425 = vmatpush1.msra.mxu0 0.0
    %5426 = vmatprep.subr.mxu0 0.0
    %5427 = vmatpush1.msra.mxu0 0.0
    %5428 = vmatprep.subr.mxu0 0.0
    %5429 = vmatpush1.msra.mxu0 0.0
    %5430 = vmatprep.subr.mxu0 0.0
    %5431 = vmatpush1.msra.mxu0 0.0
    %5432 = vmatprep.subr.mxu0 0.0
    %5433 = vmatpush1.msra.mxu0 0.0
    %5434 = vmatprep.subr.mxu0 0.0
    %5435 = vmatpush1.msra.mxu0 0.0
    %5436 = vmatprep.subr.mxu0 0.0
    %5437 = vmatpush1.msra.mxu0 0.0
    %5438 = vmatprep.subr.mxu0 0.0
    %5439 = vmatpush1.msra.mxu0 0.0
    %5440 = vmatprep.subr.mxu0 0.0
    %5441 = vmatpush1.msra.mxu0 0.0
    %5442 = vmatprep.subr.mxu0 0.0
    %5443 = vmatpush1.msra.mxu0 0.0
    %5444 = vmatprep.subr.mxu0 0.0
    %5445 = vmatpush1.msra.mxu0 0.0
    %5446 = vmatprep.subr.mxu0 0.0
    %5447 = vmatpush1.msra.mxu0 0.0
    %5448 = vmatprep.subr.mxu0 0.0
    %5449 = vmatpush1.msra.mxu0 0.0
    %5450 = vmatprep.subr.mxu0 0.0
    %5451 = vmatpush1.msra.mxu0 0.0
    %5452 = vmatprep.subr.mxu0 0.0
    %5453 = vmatpush1.msra.mxu0 0.0
    %5454 = vmatprep.subr.mxu0 0.0
    %5455 = vmatpush1.msra.mxu0 0.0
    %5456 = vmatprep.subr.mxu0 0.0
    %5457 = vmatpush1.msra.mxu0 0.0
    %5458 = vmatprep.subr.mxu0 0.0
    %5459 = vmatpush1.msra.mxu0 0.0
    %5460 = vmatprep.subr.mxu0 0.0
    %5461 = vmatpush1.msra.mxu0 0.0
    %5462 = vmatprep.subr.mxu0 0.0
    %5463 = vmatpush1.msra.mxu0 0.0
    %5464 = vmatprep.subr.mxu0 0.0
    %5465 = vmatpush1.msra.mxu0 0.0
    %5466 = vmatprep.subr.mxu0 0.0
    %5467 = vmatpush1.msra.mxu0 0.0
    %5468 = vmatprep.mubr.f32.mxu0 0.0
    %v5469 = vand.u32 %v5398, 4294901760
    %v5470 = vsub.f32 %v5398, %v5469
    %v5471 = vand.u32 %v5470, 4294901760
    %v5472 = vsub.f32 %v5470, %v5471
    %v5473 = vand.u32 %v5472, 4294901760
    %5474 = vmatmul.mubr.f32.gmra.mrb[0].mxu0 %v5473
    %v5475 = vpop.f32.mrb[0].mxu0
    %v5476 = vadd.f32 0.0, %v5475
    %v5477 = vpop.f32.mrb[0].mxu0
    %5478 = vdwg.mxu0
    %5479 = vmatprep.subr.mxu0 0.0
    %v5480 = vand.u32 %v1233, 4294901760
    %v5481 = vsub.f32 %v1233, %v5480
    %v5482 = vand.u32 %v5481, 4294901760
    %v5483 = vsub.f32 %v5481, %v5482
    %v5484 = vand.u32 %v5483, 4294901760
    %5485 = vmatpush1.msra.mxu0 %v5484
    %5486 = vmatprep.subr.mxu0 0.0
    %v5487 = vand.u32 %v1234, 4294901760
    %v5488 = vsub.f32 %v1234, %v5487
    %v5489 = vand.u32 %v5488, 4294901760
    %v5490 = vsub.f32 %v5488, %v5489
    %v5491 = vand.u32 %v5490, 4294901760
    %5492 = vmatpush1.msra.mxu0 %v5491
    %5493 = vmatprep.subr.mxu0 0.0
    %v5494 = vand.u32 %v1235, 4294901760
    %v5495 = vsub.f32 %v1235, %v5494
    %v5496 = vand.u32 %v5495, 4294901760
    %v5497 = vsub.f32 %v5495, %v5496
    %v5498 = vand.u32 %v5497, 4294901760
    %5499 = vmatpush1.msra.mxu0 %v5498
    %5500 = vmatprep.subr.mxu0 0.0
    %v5501 = vand.u32 %v1236, 4294901760
    %v5502 = vsub.f32 %v1236, %v5501
    %v5503 = vand.u32 %v5502, 4294901760
    %v5504 = vsub.f32 %v5502, %v5503
    %v5505 = vand.u32 %v5504, 4294901760
    %5506 = vmatpush1.msra.mxu0 %v5505
    %5507 = vmatprep.subr.mxu0 0.0
    %5508 = vmatpush1.msra.mxu0 0.0
    %5509 = vmatprep.subr.mxu0 0.0
    %5510 = vmatpush1.msra.mxu0 0.0
    %5511 = vmatprep.subr.mxu0 0.0
    %5512 = vmatpush1.msra.mxu0 0.0
    %5513 = vmatprep.subr.mxu0 0.0
    %5514 = vmatpush1.msra.mxu0 0.0
    %5515 = vmatprep.subr.mxu0 0.0
    %5516 = vmatpush1.msra.mxu0 0.0
    %5517 = vmatprep.subr.mxu0 0.0
    %5518 = vmatpush1.msra.mxu0 0.0
    %5519 = vmatprep.subr.mxu0 0.0
    %5520 = vmatpush1.msra.mxu0 0.0
    %5521 = vmatprep.subr.mxu0 0.0
    %5522 = vmatpush1.msra.mxu0 0.0
    %5523 = vmatprep.subr.mxu0 0.0
    %5524 = vmatpush1.msra.mxu0 0.0
    %5525 = vmatprep.subr.mxu0 0.0
    %5526 = vmatpush1.msra.mxu0 0.0
    %5527 = vmatprep.subr.mxu0 0.0
    %5528 = vmatpush1.msra.mxu0 0.0
    %5529 = vmatprep.subr.mxu0 0.0
    %5530 = vmatpush1.msra.mxu0 0.0
    %5531 = vmatprep.subr.mxu0 0.0
    %5532 = vmatpush1.msra.mxu0 0.0
    %5533 = vmatprep.subr.mxu0 0.0
    %5534 = vmatpush1.msra.mxu0 0.0
    %5535 = vmatprep.subr.mxu0 0.0
    %5536 = vmatpush1.msra.mxu0 0.0
    %5537 = vmatprep.subr.mxu0 0.0
    %5538 = vmatpush1.msra.mxu0 0.0
    %5539 = vmatprep.subr.mxu0 0.0
    %5540 = vmatpush1.msra.mxu0 0.0
    %5541 = vmatprep.subr.mxu0 0.0
    %5542 = vmatpush1.msra.mxu0 0.0
    %5543 = vmatprep.subr.mxu0 0.0
    %5544 = vmatpush1.msra.mxu0 0.0
    %5545 = vmatprep.subr.mxu0 0.0
    %5546 = vmatpush1.msra.mxu0 0.0
    %5547 = vmatprep.subr.mxu0 0.0
    %5548 = vmatpush1.msra.mxu0 0.0
    %5549 = vmatprep.subr.mxu0 0.0
    %5550 = vmatpush1.msra.mxu0 0.0
    %5551 = vmatprep.subr.mxu0 0.0
    %5552 = vmatpush1.msra.mxu0 0.0
    %5553 = vmatprep.subr.mxu0 0.0
    %5554 = vmatpush1.msra.mxu0 0.0
    %5555 = vmatprep.subr.mxu0 0.0
    %5556 = vmatpush1.msra.mxu0 0.0
    %5557 = vmatprep.subr.mxu0 0.0
    %5558 = vmatpush1.msra.mxu0 0.0
    %5559 = vmatprep.subr.mxu0 0.0
    %5560 = vmatpush1.msra.mxu0 0.0
    %5561 = vmatprep.subr.mxu0 0.0
    %5562 = vmatpush1.msra.mxu0 0.0
    %5563 = vmatprep.mubr.f32.mxu0 0.0
    %v5564 = vand.u32 %v5398, 4294901760
    %5565 = vmatmul.mubr.f32.gmra.mrb[0].mxu0 %v5564
    %v5566 = vpop.f32.mrb[0].mxu0
    %v5567 = vadd.f32 %v5476, %v5566
    %v5568 = vpop.f32.mrb[0].mxu0
    %5569 = vdwg.mxu0
    %5570 = vmatprep.subr.mxu0 0.0
    %v5571 = vand.u32 %v1233, 4294901760
    %v5572 = vsub.f32 %v1233, %v5571
    %5573 = vmatpush1.msra.mxu0 %v5572
    %5574 = vmatprep.subr.mxu0 0.0
    %v5575 = vand.u32 %v1234, 4294901760
    %v5576 = vsub.f32 %v1234, %v5575
    %5577 = vmatpush1.msra.mxu0 %v5576
    %5578 = vmatprep.subr.mxu0 0.0
    %v5579 = vand.u32 %v1235, 4294901760
    %v5580 = vsub.f32 %v1235, %v5579
    %5581 = vmatpush1.msra.mxu0 %v5580
    %5582 = vmatprep.subr.mxu0 0.0
    %v5583 = vand.u32 %v1236, 4294901760
    %v5584 = vsub.f32 %v1236, %v5583
    %5585 = vmatpush1.msra.mxu0 %v5584
    %5586 = vmatprep.subr.mxu0 0.0
    %5587 = vmatpush1.msra.mxu0 0.0
    %5588 = vmatprep.subr.mxu0 0.0
    %5589 = vmatpush1.msra.mxu0 0.0
    %5590 = vmatprep.subr.mxu0 0.0
    %5591 = vmatpush1.msra.mxu0 0.0
    %5592 = vmatprep.subr.mxu0 0.0
    %5593 = vmatpush1.msra.mxu0 0.0
    %5594 = vmatprep.subr.mxu0 0.0
    %5595 = vmatpush1.msra.mxu0 0.0
    %5596 = vmatprep.subr.mxu0 0.0
    %5597 = vmatpush1.msra.mxu0 0.0
    %5598 = vmatprep.subr.mxu0 0.0
    %5599 = vmatpush1.msra.mxu0 0.0
    %5600 = vmatprep.subr.mxu0 0.0
    %5601 = vmatpush1.msra.mxu0 0.0
    %5602 = vmatprep.subr.mxu0 0.0
    %5603 = vmatpush1.msra.mxu0 0.0
    %5604 = vmatprep.subr.mxu0 0.0
    %5605 = vmatpush1.msra.mxu0 0.0
    %5606 = vmatprep.subr.mxu0 0.0
    %5607 = vmatpush1.msra.mxu0 0.0
    %5608 = vmatprep.subr.mxu0 0.0
    %5609 = vmatpush1.msra.mxu0 0.0
    %5610 = vmatprep.subr.mxu0 0.0
    %5611 = vmatpush1.msra.mxu0 0.0
    %5612 = vmatprep.subr.mxu0 0.0
    %5613 = vmatpush1.msra.mxu0 0.0
    %5614 = vmatprep.subr.mxu0 0.0
    %5615 = vmatpush1.msra.mxu0 0.0
    %5616 = vmatprep.subr.mxu0 0.0
    %5617 = vmatpush1.msra.mxu0 0.0
    %5618 = vmatprep.subr.mxu0 0.0
    %5619 = vmatpush1.msra.mxu0 0.0
    %5620 = vmatprep.subr.mxu0 0.0
    %5621 = vmatpush1.msra.mxu0 0.0
    %5622 = vmatprep.subr.mxu0 0.0
    %5623 = vmatpush1.msra.mxu0 0.0
    %5624 = vmatprep.subr.mxu0 0.0
    %5625 = vmatpush1.msra.mxu0 0.0
    %5626 = vmatprep.subr.mxu0 0.0
    %5627 = vmatpush1.msra.mxu0 0.0
    %5628 = vmatprep.subr.mxu0 0.0
    %5629 = vmatpush1.msra.mxu0 0.0
    %5630 = vmatprep.subr.mxu0 0.0
    %5631 = vmatpush1.msra.mxu0 0.0
    %5632 = vmatprep.subr.mxu0 0.0
    %5633 = vmatpush1.msra.mxu0 0.0
    %5634 = vmatprep.subr.mxu0 0.0
    %5635 = vmatpush1.msra.mxu0 0.0
    %5636 = vmatprep.subr.mxu0 0.0
    %5637 = vmatpush1.msra.mxu0 0.0
    %5638 = vmatprep.subr.mxu0 0.0
    %5639 = vmatpush1.msra.mxu0 0.0
    %5640 = vmatprep.subr.mxu0 0.0
    %5641 = vmatpush1.msra.mxu0 0.0
    %5642 = vmatprep.mubr.f32.mxu0 0.0
    %v5643 = vand.u32 %v5398, 4294901760
    %v5644 = vsub.f32 %v5398, %v5643
    %5645 = vmatmul.mubr.f32.gmra.mrb[0].mxu0 %v5644
    %v5646 = vpop.f32.mrb[0].mxu0
    %v5647 = vadd.f32 %v5567, %v5646
    %v5648 = vpop.f32.mrb[0].mxu0
    %5649 = vdwg.mxu0
    %5650 = vmatprep.subr.mxu0 0.0
    %v5651 = vand.u32 %v1233, 4294901760
    %5652 = vmatpush1.msra.mxu0 %v5651
    %5653 = vmatprep.subr.mxu0 0.0
    %v5654 = vand.u32 %v1234, 4294901760
    %5655 = vmatpush1.msra.mxu0 %v5654
    %5656 = vmatprep.subr.mxu0 0.0
    %v5657 = vand.u32 %v1235, 4294901760
    %5658 = vmatpush1.msra.mxu0 %v5657
    %5659 = vmatprep.subr.mxu0 0.0
    %v5660 = vand.u32 %v1236, 4294901760
    %5661 = vmatpush1.msra.mxu0 %v5660
    %5662 = vmatprep.subr.mxu0 0.0
    %5663 = vmatpush1.msra.mxu0 0.0
    %5664 = vmatprep.subr.mxu0 0.0
    %5665 = vmatpush1.msra.mxu0 0.0
    %5666 = vmatprep.subr.mxu0 0.0
    %5667 = vmatpush1.msra.mxu0 0.0
    %5668 = vmatprep.subr.mxu0 0.0
    %5669 = vmatpush1.msra.mxu0 0.0
    %5670 = vmatprep.subr.mxu0 0.0
    %5671 = vmatpush1.msra.mxu0 0.0
    %5672 = vmatprep.subr.mxu0 0.0
    %5673 = vmatpush1.msra.mxu0 0.0
    %5674 = vmatprep.subr.mxu0 0.0
    %5675 = vmatpush1.msra.mxu0 0.0
    %5676 = vmatprep.subr.mxu0 0.0
    %5677 = vmatpush1.msra.mxu0 0.0
    %5678 = vmatprep.subr.mxu0 0.0
    %5679 = vmatpush1.msra.mxu0 0.0
    %5680 = vmatprep.subr.mxu0 0.0
    %5681 = vmatpush1.msra.mxu0 0.0
    %5682 = vmatprep.subr.mxu0 0.0
    %5683 = vmatpush1.msra.mxu0 0.0
    %5684 = vmatprep.subr.mxu0 0.0
    %5685 = vmatpush1.msra.mxu0 0.0
    %5686 = vmatprep.subr.mxu0 0.0
    %5687 = vmatpush1.msra.mxu0 0.0
    %5688 = vmatprep.subr.mxu0 0.0
    %5689 = vmatpush1.msra.mxu0 0.0
    %5690 = vmatprep.subr.mxu0 0.0
    %5691 = vmatpush1.msra.mxu0 0.0
    %5692 = vmatprep.subr.mxu0 0.0
    %5693 = vmatpush1.msra.mxu0 0.0
    %5694 = vmatprep.subr.mxu0 0.0
    %5695 = vmatpush1.msra.mxu0 0.0
    %5696 = vmatprep.subr.mxu0 0.0
    %5697 = vmatpush1.msra.mxu0 0.0
    %5698 = vmatprep.subr.mxu0 0.0
    %5699 = vmatpush1.msra.mxu0 0.0
    %5700 = vmatprep.subr.mxu0 0.0
    %5701 = vmatpush1.msra.mxu0 0.0
    %5702 = vmatprep.subr.mxu0 0.0
    %5703 = vmatpush1.msra.mxu0 0.0
    %5704 = vmatprep.subr.mxu0 0.0
    %5705 = vmatpush1.msra.mxu0 0.0
    %5706 = vmatprep.subr.mxu0 0.0
    %5707 = vmatpush1.msra.mxu0 0.0
    %5708 = vmatprep.subr.mxu0 0.0
    %5709 = vmatpush1.msra.mxu0 0.0
    %5710 = vmatprep.subr.mxu0 0.0
    %5711 = vmatpush1.msra.mxu0 0.0
    %5712 = vmatprep.subr.mxu0 0.0
    %5713 = vmatpush1.msra.mxu0 0.0
    %5714 = vmatprep.subr.mxu0 0.0
    %5715 = vmatpush1.msra.mxu0 0.0
    %5716 = vmatprep.subr.mxu0 0.0
    %5717 = vmatpush1.msra.mxu0 0.0
    %5718 = vmatprep.mubr.f32.mxu0 0.0
    %v5719 = vand.u32 %v5398, 4294901760
    %v5720 = vsub.f32 %v5398, %v5719
    %v5721 = vand.u32 %v5720, 4294901760
    %5722 = vmatmul.mubr.f32.gmra.mrb[0].mxu0 %v5721
    %v5723 = vpop.f32.mrb[0].mxu0
    %v5724 = vadd.f32 %v5647, %v5723
    %v5725 = vpop.f32.mrb[0].mxu0
    %5726 = vdwg.mxu0
    %5727 = vmatprep.subr.mxu0 0.0
    %v5728 = vand.u32 %v1233, 4294901760
    %v5729 = vsub.f32 %v1233, %v5728
    %v5730 = vand.u32 %v5729, 4294901760
    %5731 = vmatpush1.msra.mxu0 %v5730
    %5732 = vmatprep.subr.mxu0 0.0
    %v5733 = vand.u32 %v1234, 4294901760
    %v5734 = vsub.f32 %v1234, %v5733
    %v5735 = vand.u32 %v5734, 4294901760
    %5736 = vmatpush1.msra.mxu0 %v5735
    %5737 = vmatprep.subr.mxu0 0.0
    %v5738 = vand.u32 %v1235, 4294901760
    %v5739 = vsub.f32 %v1235, %v5738
    %v5740 = vand.u32 %v5739, 4294901760
    %5741 = vmatpush1.msra.mxu0 %v5740
    %5742 = vmatprep.subr.mxu0 0.0
    %v5743 = vand.u32 %v1236, 4294901760
    %v5744 = vsub.f32 %v1236, %v5743
    %v5745 = vand.u32 %v5744, 4294901760
    %5746 = vmatpush1.msra.mxu0 %v5745
    %5747 = vmatprep.subr.mxu0 0.0
    %5748 = vmatpush1.msra.mxu0 0.0
    %5749 = vmatprep.subr.mxu0 0.0
    %5750 = vmatpush1.msra.mxu0 0.0
    %5751 = vmatprep.subr.mxu0 0.0
    %5752 = vmatpush1.msra.mxu0 0.0
    %5753 = vmatprep.subr.mxu0 0.0
    %5754 = vmatpush1.msra.mxu0 0.0
    %5755 = vmatprep.subr.mxu0 0.0
    %5756 = vmatpush1.msra.mxu0 0.0
    %5757 = vmatprep.subr.mxu0 0.0
    %5758 = vmatpush1.msra.mxu0 0.0
    %5759 = vmatprep.subr.mxu0 0.0
    %5760 = vmatpush1.msra.mxu0 0.0
    %5761 = vmatprep.subr.mxu0 0.0
    %5762 = vmatpush1.msra.mxu0 0.0
    %5763 = vmatprep.subr.mxu0 0.0
    %5764 = vmatpush1.msra.mxu0 0.0
    %5765 = vmatprep.subr.mxu0 0.0
    %5766 = vmatpush1.msra.mxu0 0.0
    %5767 = vmatprep.subr.mxu0 0.0
    %5768 = vmatpush1.msra.mxu0 0.0
    %5769 = vmatprep.subr.mxu0 0.0
    %5770 = vmatpush1.msra.mxu0 0.0
    %5771 = vmatprep.subr.mxu0 0.0
    %5772 = vmatpush1.msra.mxu0 0.0
    %5773 = vmatprep.subr.mxu0 0.0
    %5774 = vmatpush1.msra.mxu0 0.0
    %5775 = vmatprep.subr.mxu0 0.0
    %5776 = vmatpush1.msra.mxu0 0.0
    %5777 = vmatprep.subr.mxu0 0.0
    %5778 = vmatpush1.msra.mxu0 0.0
    %5779 = vmatprep.subr.mxu0 0.0
    %5780 = vmatpush1.msra.mxu0 0.0
    %5781 = vmatprep.subr.mxu0 0.0
    %5782 = vmatpush1.msra.mxu0 0.0
    %5783 = vmatprep.subr.mxu0 0.0
    %5784 = vmatpush1.msra.mxu0 0.0
    %5785 = vmatprep.subr.mxu0 0.0
    %5786 = vmatpush1.msra.mxu0 0.0
    %5787 = vmatprep.subr.mxu0 0.0
    %5788 = vmatpush1.msra.mxu0 0.0
    %5789 = vmatprep.subr.mxu0 0.0
    %5790 = vmatpush1.msra.mxu0 0.0
    %5791 = vmatprep.subr.mxu0 0.0
    %5792 = vmatpush1.msra.mxu0 0.0
    %5793 = vmatprep.subr.mxu0 0.0
    %5794 = vmatpush1.msra.mxu0 0.0
    %5795 = vmatprep.subr.mxu0 0.0
    %5796 = vmatpush1.msra.mxu0 0.0
    %5797 = vmatprep.subr.mxu0 0.0
    %5798 = vmatpush1.msra.mxu0 0.0
    %5799 = vmatprep.subr.mxu0 0.0
    %5800 = vmatpush1.msra.mxu0 0.0
    %5801 = vmatprep.subr.mxu0 0.0
    %5802 = vmatpush1.msra.mxu0 0.0
    %5803 = vmatprep.mubr.f32.mxu0 0.0
    %v5804 = vand.u32 %v5398, 4294901760
    %5805 = vmatmul.mubr.f32.gmra.mrb[0].mxu0 %v5804
    %v5806 = vpop.f32.mrb[0].mxu0
    %v5807 = vadd.f32 %v5724, %v5806
    %v5808 = vpop.f32.mrb[0].mxu0
    %5809 = vdwg.mxu0
    %5810 = vmatprep.subr.mxu0 0.0
    %v5811 = vand.u32 %v1233, 4294901760
    %5812 = vmatpush1.msra.mxu0 %v5811
    %5813 = vmatprep.subr.mxu0 0.0
    %v5814 = vand.u32 %v1234, 4294901760
    %5815 = vmatpush1.msra.mxu0 %v5814
    %5816 = vmatprep.subr.mxu0 0.0
    %v5817 = vand.u32 %v1235, 4294901760
    %5818 = vmatpush1.msra.mxu0 %v5817
    %5819 = vmatprep.subr.mxu0 0.0
    %v5820 = vand.u32 %v1236, 4294901760
    %5821 = vmatpush1.msra.mxu0 %v5820
    %5822 = vmatprep.subr.mxu0 0.0
    %5823 = vmatpush1.msra.mxu0 0.0
    %5824 = vmatprep.subr.mxu0 0.0
    %5825 = vmatpush1.msra.mxu0 0.0
    %5826 = vmatprep.subr.mxu0 0.0
    %5827 = vmatpush1.msra.mxu0 0.0
    %5828 = vmatprep.subr.mxu0 0.0
    %5829 = vmatpush1.msra.mxu0 0.0
    %5830 = vmatprep.subr.mxu0 0.0
    %5831 = vmatpush1.msra.mxu0 0.0
    %5832 = vmatprep.subr.mxu0 0.0
    %5833 = vmatpush1.msra.mxu0 0.0
    %5834 = vmatprep.subr.mxu0 0.0
    %5835 = vmatpush1.msra.mxu0 0.0
    %5836 = vmatprep.subr.mxu0 0.0
    %5837 = vmatpush1.msra.mxu0 0.0
    %5838 = vmatprep.subr.mxu0 0.0
    %5839 = vmatpush1.msra.mxu0 0.0
    %5840 = vmatprep.subr.mxu0 0.0
    %5841 = vmatpush1.msra.mxu0 0.0
    %5842 = vmatprep.subr.mxu0 0.0
    %5843 = vmatpush1.msra.mxu0 0.0
    %5844 = vmatprep.subr.mxu0 0.0
    %5845 = vmatpush1.msra.mxu0 0.0
    %5846 = vmatprep.subr.mxu0 0.0
    %5847 = vmatpush1.msra.mxu0 0.0
    %5848 = vmatprep.subr.mxu0 0.0
    %5849 = vmatpush1.msra.mxu0 0.0
    %5850 = vmatprep.subr.mxu0 0.0
    %5851 = vmatpush1.msra.mxu0 0.0
    %5852 = vmatprep.subr.mxu0 0.0
    %5853 = vmatpush1.msra.mxu0 0.0
    %5854 = vmatprep.subr.mxu0 0.0
    %5855 = vmatpush1.msra.mxu0 0.0
    %5856 = vmatprep.subr.mxu0 0.0
    %5857 = vmatpush1.msra.mxu0 0.0
    %5858 = vmatprep.subr.mxu0 0.0
    %5859 = vmatpush1.msra.mxu0 0.0
    %5860 = vmatprep.subr.mxu0 0.0
    %5861 = vmatpush1.msra.mxu0 0.0
    %5862 = vmatprep.subr.mxu0 0.0
    %5863 = vmatpush1.msra.mxu0 0.0
    %5864 = vmatprep.subr.mxu0 0.0
    %5865 = vmatpush1.msra.mxu0 0.0
    %5866 = vmatprep.subr.mxu0 0.0
    %5867 = vmatpush1.msra.mxu0 0.0
    %5868 = vmatprep.subr.mxu0 0.0
    %5869 = vmatpush1.msra.mxu0 0.0
    %5870 = vmatprep.subr.mxu0 0.0
    %5871 = vmatpush1.msra.mxu0 0.0
    %5872 = vmatprep.subr.mxu0 0.0
    %5873 = vmatpush1.msra.mxu0 0.0
    %5874 = vmatprep.subr.mxu0 0.0
    %5875 = vmatpush1.msra.mxu0 0.0
    %5876 = vmatprep.subr.mxu0 0.0
    %5877 = vmatpush1.msra.mxu0 0.0
    %5878 = vmatprep.mubr.f32.mxu0 0.0
    %v5879 = vand.u32 %v5398, 4294901760
    %5880 = vmatmul.mubr.f32.gmra.mrb[0].mxu0 %v5879
    %v5881 = vpop.f32.mrb[0].mxu0
    %v5882 = vadd.f32 %v5807, %v5881
    %v5883 = vpop.f32.mrb[0].mxu0
    %5884 = vdwg.mxu0
    %v5885 = vadd.f32 %v1229, %v5882
    %v5887 = vrot.slane %v5393, 4
    %5888 = vrot.lane.b32.xlu0 %v5887, 32
    %v5889 = vpop.permute.xlu0 %5888
    %v5890 = vsel %vm634, %v5889, 0
    %5892 = vmatprep.subr.mxu0 0.0
    %v5893 = vand.u32 %v1237, 4294901760
    %5894 = vmatpush1.msra.mxu0 %v5893
    %5895 = vmatprep.subr.mxu0 0.0
    %v5896 = vand.u32 %v1238, 4294901760
    %5897 = vmatpush1.msra.mxu0 %v5896
    %5898 = vmatprep.subr.mxu0 0.0
    %v5899 = vand.u32 %v1239, 4294901760
    %5900 = vmatpush1.msra.mxu0 %v5899
    %5901 = vmatprep.subr.mxu0 0.0
    %v5902 = vand.u32 %v1240, 4294901760
    %5903 = vmatpush1.msra.mxu0 %v5902
    %5904 = vmatprep.subr.mxu0 0.0
    %5905 = vmatpush1.msra.mxu0 0.0
    %5906 = vmatprep.subr.mxu0 0.0
    %5907 = vmatpush1.msra.mxu0 0.0
    %5908 = vmatprep.subr.mxu0 0.0
    %5909 = vmatpush1.msra.mxu0 0.0
    %5910 = vmatprep.subr.mxu0 0.0
    %5911 = vmatpush1.msra.mxu0 0.0
    %5912 = vmatprep.subr.mxu0 0.0
    %5913 = vmatpush1.msra.mxu0 0.0
    %5914 = vmatprep.subr.mxu0 0.0
    %5915 = vmatpush1.msra.mxu0 0.0
    %5916 = vmatprep.subr.mxu0 0.0
    %5917 = vmatpush1.msra.mxu0 0.0
    %5918 = vmatprep.subr.mxu0 0.0
    %5919 = vmatpush1.msra.mxu0 0.0
    %5920 = vmatprep.subr.mxu0 0.0
    %5921 = vmatpush1.msra.mxu0 0.0
    %5922 = vmatprep.subr.mxu0 0.0
    %5923 = vmatpush1.msra.mxu0 0.0
    %5924 = vmatprep.subr.mxu0 0.0
    %5925 = vmatpush1.msra.mxu0 0.0
    %5926 = vmatprep.subr.mxu0 0.0
    %5927 = vmatpush1.msra.mxu0 0.0
    %5928 = vmatprep.subr.mxu0 0.0
    %5929 = vmatpush1.msra.mxu0 0.0
    %5930 = vmatprep.subr.mxu0 0.0
    %5931 = vmatpush1.msra.mxu0 0.0
    %5932 = vmatprep.subr.mxu0 0.0
    %5933 = vmatpush1.msra.mxu0 0.0
    %5934 = vmatprep.subr.mxu0 0.0
    %5935 = vmatpush1.msra.mxu0 0.0
    %5936 = vmatprep.subr.mxu0 0.0
    %5937 = vmatpush1.msra.mxu0 0.0
    %5938 = vmatprep.subr.mxu0 0.0
    %5939 = vmatpush1.msra.mxu0 0.0
    %5940 = vmatprep.subr.mxu0 0.0
    %5941 = vmatpush1.msra.mxu0 0.0
    %5942 = vmatprep.subr.mxu0 0.0
    %5943 = vmatpush1.msra.mxu0 0.0
    %5944 = vmatprep.subr.mxu0 0.0
    %5945 = vmatpush1.msra.mxu0 0.0
    %5946 = vmatprep.subr.mxu0 0.0
    %5947 = vmatpush1.msra.mxu0 0.0
    %5948 = vmatprep.subr.mxu0 0.0
    %5949 = vmatpush1.msra.mxu0 0.0
    %5950 = vmatprep.subr.mxu0 0.0
    %5951 = vmatpush1.msra.mxu0 0.0
    %5952 = vmatprep.subr.mxu0 0.0
    %5953 = vmatpush1.msra.mxu0 0.0
    %5954 = vmatprep.subr.mxu0 0.0
    %5955 = vmatpush1.msra.mxu0 0.0
    %5956 = vmatprep.subr.mxu0 0.0
    %5957 = vmatpush1.msra.mxu0 0.0
    %5958 = vmatprep.subr.mxu0 0.0
    %5959 = vmatpush1.msra.mxu0 0.0
    %5960 = vmatprep.mubr.f32.mxu0 0.0
    %v5961 = vand.u32 %v5890, 4294901760
    %v5962 = vsub.f32 %v5890, %v5961
    %v5963 = vand.u32 %v5962, 4294901760
    %v5964 = vsub.f32 %v5962, %v5963
    %v5965 = vand.u32 %v5964, 4294901760
    %5966 = vmatmul.mubr.f32.gmra.mrb[0].mxu0 %v5965
    %v5967 = vpop.f32.mrb[0].mxu0
    %v5968 = vadd.f32 0.0, %v5967
    %v5969 = vpop.f32.mrb[0].mxu0
    %5970 = vdwg.mxu0
    %5971 = vmatprep.subr.mxu0 0.0
    %v5972 = vand.u32 %v1237, 4294901760
    %v5973 = vsub.f32 %v1237, %v5972
    %v5974 = vand.u32 %v5973, 4294901760
    %v5975 = vsub.f32 %v5973, %v5974
    %v5976 = vand.u32 %v5975, 4294901760
    %5977 = vmatpush1.msra.mxu0 %v5976
    %5978 = vmatprep.subr.mxu0 0.0
    %v5979 = vand.u32 %v1238, 4294901760
    %v5980 = vsub.f32 %v1238, %v5979
    %v5981 = vand.u32 %v5980, 4294901760
    %v5982 = vsub.f32 %v5980, %v5981
    %v5983 = vand.u32 %v5982, 4294901760
    %5984 = vmatpush1.msra.mxu0 %v5983
    %5985 = vmatprep.subr.mxu0 0.0
    %v5986 = vand.u32 %v1239, 4294901760
    %v5987 = vsub.f32 %v1239, %v5986
    %v5988 = vand.u32 %v5987, 4294901760
    %v5989 = vsub.f32 %v5987, %v5988
    %v5990 = vand.u32 %v5989, 4294901760
    %5991 = vmatpush1.msra.mxu0 %v5990
    %5992 = vmatprep.subr.mxu0 0.0
    %v5993 = vand.u32 %v1240, 4294901760
    %v5994 = vsub.f32 %v1240, %v5993
    %v5995 = vand.u32 %v5994, 4294901760
    %v5996 = vsub.f32 %v5994, %v5995
    %v5997 = vand.u32 %v5996, 4294901760
    %5998 = vmatpush1.msra.mxu0 %v5997
    %5999 = vmatprep.subr.mxu0 0.0
    %6000 = vmatpush1.msra.mxu0 0.0
    %6001 = vmatprep.subr.mxu0 0.0
    %6002 = vmatpush1.msra.mxu0 0.0
    %6003 = vmatprep.subr.mxu0 0.0
    %6004 = vmatpush1.msra.mxu0 0.0
    %6005 = vmatprep.subr.mxu0 0.0
    %6006 = vmatpush1.msra.mxu0 0.0
    %6007 = vmatprep.subr.mxu0 0.0
    %6008 = vmatpush1.msra.mxu0 0.0
    %6009 = vmatprep.subr.mxu0 0.0
    %6010 = vmatpush1.msra.mxu0 0.0
    %6011 = vmatprep.subr.mxu0 0.0
    %6012 = vmatpush1.msra.mxu0 0.0
    %6013 = vmatprep.subr.mxu0 0.0
    %6014 = vmatpush1.msra.mxu0 0.0
    %6015 = vmatprep.subr.mxu0 0.0
    %6016 = vmatpush1.msra.mxu0 0.0
    %6017 = vmatprep.subr.mxu0 0.0
    %6018 = vmatpush1.msra.mxu0 0.0
    %6019 = vmatprep.subr.mxu0 0.0
    %6020 = vmatpush1.msra.mxu0 0.0
    %6021 = vmatprep.subr.mxu0 0.0
    %6022 = vmatpush1.msra.mxu0 0.0
    %6023 = vmatprep.subr.mxu0 0.0
    %6024 = vmatpush1.msra.mxu0 0.0
    %6025 = vmatprep.subr.mxu0 0.0
    %6026 = vmatpush1.msra.mxu0 0.0
    %6027 = vmatprep.subr.mxu0 0.0
    %6028 = vmatpush1.msra.mxu0 0.0
    %6029 = vmatprep.subr.mxu0 0.0
    %6030 = vmatpush1.msra.mxu0 0.0
    %6031 = vmatprep.subr.mxu0 0.0
    %6032 = vmatpush1.msra.mxu0 0.0
    %6033 = vmatprep.subr.mxu0 0.0
    %6034 = vmatpush1.msra.mxu0 0.0
    %6035 = vmatprep.subr.mxu0 0.0
    %6036 = vmatpush1.msra.mxu0 0.0
    %6037 = vmatprep.subr.mxu0 0.0
    %6038 = vmatpush1.msra.mxu0 0.0
    %6039 = vmatprep.subr.mxu0 0.0
    %6040 = vmatpush1.msra.mxu0 0.0
    %6041 = vmatprep.subr.mxu0 0.0
    %6042 = vmatpush1.msra.mxu0 0.0
    %6043 = vmatprep.subr.mxu0 0.0
    %6044 = vmatpush1.msra.mxu0 0.0
    %6045 = vmatprep.subr.mxu0 0.0
    %6046 = vmatpush1.msra.mxu0 0.0
    %6047 = vmatprep.subr.mxu0 0.0
    %6048 = vmatpush1.msra.mxu0 0.0
    %6049 = vmatprep.subr.mxu0 0.0
    %6050 = vmatpush1.msra.mxu0 0.0
    %6051 = vmatprep.subr.mxu0 0.0
    %6052 = vmatpush1.msra.mxu0 0.0
    %6053 = vmatprep.subr.mxu0 0.0
    %6054 = vmatpush1.msra.mxu0 0.0
    %6055 = vmatprep.mubr.f32.mxu0 0.0
    %v6056 = vand.u32 %v5890, 4294901760
    %6057 = vmatmul.mubr.f32.gmra.mrb[0].mxu0 %v6056
    %v6058 = vpop.f32.mrb[0].mxu0
    %v6059 = vadd.f32 %v5968, %v6058
    %v6060 = vpop.f32.mrb[0].mxu0
    %6061 = vdwg.mxu0
    %6062 = vmatprep.subr.mxu0 0.0
    %v6063 = vand.u32 %v1237, 4294901760
    %v6064 = vsub.f32 %v1237, %v6063
    %6065 = vmatpush1.msra.mxu0 %v6064
    %6066 = vmatprep.subr.mxu0 0.0
    %v6067 = vand.u32 %v1238, 4294901760
    %v6068 = vsub.f32 %v1238, %v6067
    %6069 = vmatpush1.msra.mxu0 %v6068
    %6070 = vmatprep.subr.mxu0 0.0
    %v6071 = vand.u32 %v1239, 4294901760
    %v6072 = vsub.f32 %v1239, %v6071
    %6073 = vmatpush1.msra.mxu0 %v6072
    %6074 = vmatprep.subr.mxu0 0.0
    %v6075 = vand.u32 %v1240, 4294901760
    %v6076 = vsub.f32 %v1240, %v6075
    %6077 = vmatpush1.msra.mxu0 %v6076
    %6078 = vmatprep.subr.mxu0 0.0
    %6079 = vmatpush1.msra.mxu0 0.0
    %6080 = vmatprep.subr.mxu0 0.0
    %6081 = vmatpush1.msra.mxu0 0.0
    %6082 = vmatprep.subr.mxu0 0.0
    %6083 = vmatpush1.msra.mxu0 0.0
    %6084 = vmatprep.subr.mxu0 0.0
    %6085 = vmatpush1.msra.mxu0 0.0
    %6086 = vmatprep.subr.mxu0 0.0
    %6087 = vmatpush1.msra.mxu0 0.0
    %6088 = vmatprep.subr.mxu0 0.0
    %6089 = vmatpush1.msra.mxu0 0.0
    %6090 = vmatprep.subr.mxu0 0.0
    %6091 = vmatpush1.msra.mxu0 0.0
    %6092 = vmatprep.subr.mxu0 0.0
    %6093 = vmatpush1.msra.mxu0 0.0
    %6094 = vmatprep.subr.mxu0 0.0
    %6095 = vmatpush1.msra.mxu0 0.0
    %6096 = vmatprep.subr.mxu0 0.0
    %6097 = vmatpush1.msra.mxu0 0.0
    %6098 = vmatprep.subr.mxu0 0.0
    %6099 = vmatpush1.msra.mxu0 0.0
    %6100 = vmatprep.subr.mxu0 0.0
    %6101 = vmatpush1.msra.mxu0 0.0
    %6102 = vmatprep.subr.mxu0 0.0
    %6103 = vmatpush1.msra.mxu0 0.0
    %6104 = vmatprep.subr.mxu0 0.0
    %6105 = vmatpush1.msra.mxu0 0.0
    %6106 = vmatprep.subr.mxu0 0.0
    %6107 = vmatpush1.msra.mxu0 0.0
    %6108 = vmatprep.subr.mxu0 0.0
    %6109 = vmatpush1.msra.mxu0 0.0
    %6110 = vmatprep.subr.mxu0 0.0
    %6111 = vmatpush1.msra.mxu0 0.0
    %6112 = vmatprep.subr.mxu0 0.0
    %6113 = vmatpush1.msra.mxu0 0.0
    %6114 = vmatprep.subr.mxu0 0.0
    %6115 = vmatpush1.msra.mxu0 0.0
    %6116 = vmatprep.subr.mxu0 0.0
    %6117 = vmatpush1.msra.mxu0 0.0
    %6118 = vmatprep.subr.mxu0 0.0
    %6119 = vmatpush1.msra.mxu0 0.0
    %6120 = vmatprep.subr.mxu0 0.0
    %6121 = vmatpush1.msra.mxu0 0.0
    %6122 = vmatprep.subr.mxu0 0.0
    %6123 = vmatpush1.msra.mxu0 0.0
    %6124 = vmatprep.subr.mxu0 0.0
    %6125 = vmatpush1.msra.mxu0 0.0
    %6126 = vmatprep.subr.mxu0 0.0
    %6127 = vmatpush1.msra.mxu0 0.0
    %6128 = vmatprep.subr.mxu0 0.0
    %6129 = vmatpush1.msra.mxu0 0.0
    %6130 = vmatprep.subr.mxu0 0.0
    %6131 = vmatpush1.msra.mxu0 0.0
    %6132 = vmatprep.subr.mxu0 0.0
    %6133 = vmatpush1.msra.mxu0 0.0
    %6134 = vmatprep.mubr.f32.mxu0 0.0
    %v6135 = vand.u32 %v5890, 4294901760
    %v6136 = vsub.f32 %v5890, %v6135
    %6137 = vmatmul.mubr.f32.gmra.mrb[0].mxu0 %v6136
    %v6138 = vpop.f32.mrb[0].mxu0
    %v6139 = vadd.f32 %v6059, %v6138
    %v6140 = vpop.f32.mrb[0].mxu0
    %6141 = vdwg.mxu0
    %6142 = vmatprep.subr.mxu0 0.0
    %v6143 = vand.u32 %v1237, 4294901760
    %6144 = vmatpush1.msra.mxu0 %v6143
    %6145 = vmatprep.subr.mxu0 0.0
    %v6146 = vand.u32 %v1238, 4294901760
    %6147 = vmatpush1.msra.mxu0 %v6146
    %6148 = vmatprep.subr.mxu0 0.0
    %v6149 = vand.u32 %v1239, 4294901760
    %6150 = vmatpush1.msra.mxu0 %v6149
    %6151 = vmatprep.subr.mxu0 0.0
    %v6152 = vand.u32 %v1240, 4294901760
    %6153 = vmatpush1.msra.mxu0 %v6152
    %6154 = vmatprep.subr.mxu0 0.0
    %6155 = vmatpush1.msra.mxu0 0.0
    %6156 = vmatprep.subr.mxu0 0.0
    %6157 = vmatpush1.msra.mxu0 0.0
    %6158 = vmatprep.subr.mxu0 0.0
    %6159 = vmatpush1.msra.mxu0 0.0
    %6160 = vmatprep.subr.mxu0 0.0
    %6161 = vmatpush1.msra.mxu0 0.0
    %6162 = vmatprep.subr.mxu0 0.0
    %6163 = vmatpush1.msra.mxu0 0.0
    %6164 = vmatprep.subr.mxu0 0.0
    %6165 = vmatpush1.msra.mxu0 0.0
    %6166 = vmatprep.subr.mxu0 0.0
    %6167 = vmatpush1.msra.mxu0 0.0
    %6168 = vmatprep.subr.mxu0 0.0
    %6169 = vmatpush1.msra.mxu0 0.0
    %6170 = vmatprep.subr.mxu0 0.0
    %6171 = vmatpush1.msra.mxu0 0.0
    %6172 = vmatprep.subr.mxu0 0.0
    %6173 = vmatpush1.msra.mxu0 0.0
    %6174 = vmatprep.subr.mxu0 0.0
    %6175 = vmatpush1.msra.mxu0 0.0
    %6176 = vmatprep.subr.mxu0 0.0
    %6177 = vmatpush1.msra.mxu0 0.0
    %6178 = vmatprep.subr.mxu0 0.0
    %6179 = vmatpush1.msra.mxu0 0.0
    %6180 = vmatprep.subr.mxu0 0.0
    %6181 = vmatpush1.msra.mxu0 0.0
    %6182 = vmatprep.subr.mxu0 0.0
    %6183 = vmatpush1.msra.mxu0 0.0
    %6184 = vmatprep.subr.mxu0 0.0
    %6185 = vmatpush1.msra.mxu0 0.0
    %6186 = vmatprep.subr.mxu0 0.0
    %6187 = vmatpush1.msra.mxu0 0.0
    %6188 = vmatprep.subr.mxu0 0.0
    %6189 = vmatpush1.msra.mxu0 0.0
    %6190 = vmatprep.subr.mxu0 0.0
    %6191 = vmatpush1.msra.mxu0 0.0
    %6192 = vmatprep.subr.mxu0 0.0
    %6193 = vmatpush1.msra.mxu0 0.0
    %6194 = vmatprep.subr.mxu0 0.0
    %6195 = vmatpush1.msra.mxu0 0.0
    %6196 = vmatprep.subr.mxu0 0.0
    %6197 = vmatpush1.msra.mxu0 0.0
    %6198 = vmatprep.subr.mxu0 0.0
    %6199 = vmatpush1.msra.mxu0 0.0
    %6200 = vmatprep.subr.mxu0 0.0
    %6201 = vmatpush1.msra.mxu0 0.0
    %6202 = vmatprep.subr.mxu0 0.0
    %6203 = vmatpush1.msra.mxu0 0.0
    %6204 = vmatprep.subr.mxu0 0.0
    %6205 = vmatpush1.msra.mxu0 0.0
    %6206 = vmatprep.subr.mxu0 0.0
    %6207 = vmatpush1.msra.mxu0 0.0
    %6208 = vmatprep.subr.mxu0 0.0
    %6209 = vmatpush1.msra.mxu0 0.0
    %6210 = vmatprep.mubr.f32.mxu0 0.0
    %v6211 = vand.u32 %v5890, 4294901760
    %v6212 = vsub.f32 %v5890, %v6211
    %v6213 = vand.u32 %v6212, 4294901760
    %6214 = vmatmul.mubr.f32.gmra.mrb[0].mxu0 %v6213
    %v6215 = vpop.f32.mrb[0].mxu0
    %v6216 = vadd.f32 %v6139, %v6215
    %v6217 = vpop.f32.mrb[0].mxu0
    %6218 = vdwg.mxu0
    %6219 = vmatprep.subr.mxu0 0.0
    %v6220 = vand.u32 %v1237, 4294901760
    %v6221 = vsub.f32 %v1237, %v6220
    %v6222 = vand.u32 %v6221, 4294901760
    %6223 = vmatpush1.msra.mxu0 %v6222
    %6224 = vmatprep.subr.mxu0 0.0
    %v6225 = vand.u32 %v1238, 4294901760
    %v6226 = vsub.f32 %v1238, %v6225
    %v6227 = vand.u32 %v6226, 4294901760
    %6228 = vmatpush1.msra.mxu0 %v6227
    %6229 = vmatprep.subr.mxu0 0.0
    %v6230 = vand.u32 %v1239, 4294901760
    %v6231 = vsub.f32 %v1239, %v6230
    %v6232 = vand.u32 %v6231, 4294901760
    %6233 = vmatpush1.msra.mxu0 %v6232
    %6234 = vmatprep.subr.mxu0 0.0
    %v6235 = vand.u32 %v1240, 4294901760
    %v6236 = vsub.f32 %v1240, %v6235
    %v6237 = vand.u32 %v6236, 4294901760
    %6238 = vmatpush1.msra.mxu0 %v6237
    %6239 = vmatprep.subr.mxu0 0.0
    %6240 = vmatpush1.msra.mxu0 0.0
    %6241 = vmatprep.subr.mxu0 0.0
    %6242 = vmatpush1.msra.mxu0 0.0
    %6243 = vmatprep.subr.mxu0 0.0
    %6244 = vmatpush1.msra.mxu0 0.0
    %6245 = vmatprep.subr.mxu0 0.0
    %6246 = vmatpush1.msra.mxu0 0.0
    %6247 = vmatprep.subr.mxu0 0.0
    %6248 = vmatpush1.msra.mxu0 0.0
    %6249 = vmatprep.subr.mxu0 0.0
    %6250 = vmatpush1.msra.mxu0 0.0
    %6251 = vmatprep.subr.mxu0 0.0
    %6252 = vmatpush1.msra.mxu0 0.0
    %6253 = vmatprep.subr.mxu0 0.0
    %6254 = vmatpush1.msra.mxu0 0.0
    %6255 = vmatprep.subr.mxu0 0.0
    %6256 = vmatpush1.msra.mxu0 0.0
    %6257 = vmatprep.subr.mxu0 0.0
    %6258 = vmatpush1.msra.mxu0 0.0
    %6259 = vmatprep.subr.mxu0 0.0
    %6260 = vmatpush1.msra.mxu0 0.0
    %6261 = vmatprep.subr.mxu0 0.0
    %6262 = vmatpush1.msra.mxu0 0.0
    %6263 = vmatprep.subr.mxu0 0.0
    %6264 = vmatpush1.msra.mxu0 0.0
    %6265 = vmatprep.subr.mxu0 0.0
    %6266 = vmatpush1.msra.mxu0 0.0
    %6267 = vmatprep.subr.mxu0 0.0
    %6268 = vmatpush1.msra.mxu0 0.0
    %6269 = vmatprep.subr.mxu0 0.0
    %6270 = vmatpush1.msra.mxu0 0.0
    %6271 = vmatprep.subr.mxu0 0.0
    %6272 = vmatpush1.msra.mxu0 0.0
    %6273 = vmatprep.subr.mxu0 0.0
    %6274 = vmatpush1.msra.mxu0 0.0
    %6275 = vmatprep.subr.mxu0 0.0
    %6276 = vmatpush1.msra.mxu0 0.0
    %6277 = vmatprep.subr.mxu0 0.0
    %6278 = vmatpush1.msra.mxu0 0.0
    %6279 = vmatprep.subr.mxu0 0.0
    %6280 = vmatpush1.msra.mxu0 0.0
    %6281 = vmatprep.subr.mxu0 0.0
    %6282 = vmatpush1.msra.mxu0 0.0
    %6283 = vmatprep.subr.mxu0 0.0
    %6284 = vmatpush1.msra.mxu0 0.0
    %6285 = vmatprep.subr.mxu0 0.0
    %6286 = vmatpush1.msra.mxu0 0.0
    %6287 = vmatprep.subr.mxu0 0.0
    %6288 = vmatpush1.msra.mxu0 0.0
    %6289 = vmatprep.subr.mxu0 0.0
    %6290 = vmatpush1.msra.mxu0 0.0
    %6291 = vmatprep.subr.mxu0 0.0
    %6292 = vmatpush1.msra.mxu0 0.0
    %6293 = vmatprep.subr.mxu0 0.0
    %6294 = vmatpush1.msra.mxu0 0.0
    %6295 = vmatprep.mubr.f32.mxu0 0.0
    %v6296 = vand.u32 %v5890, 4294901760
    %6297 = vmatmul.mubr.f32.gmra.mrb[0].mxu0 %v6296
    %v6298 = vpop.f32.mrb[0].mxu0
    %v6299 = vadd.f32 %v6216, %v6298
    %v6300 = vpop.f32.mrb[0].mxu0
    %6301 = vdwg.mxu0
    %6302 = vmatprep.subr.mxu0 0.0
    %v6303 = vand.u32 %v1237, 4294901760
    %6304 = vmatpush1.msra.mxu0 %v6303
    %6305 = vmatprep.subr.mxu0 0.0
    %v6306 = vand.u32 %v1238, 4294901760
    %6307 = vmatpush1.msra.mxu0 %v6306
    %6308 = vmatprep.subr.mxu0 0.0
    %v6309 = vand.u32 %v1239, 4294901760
    %6310 = vmatpush1.msra.mxu0 %v6309
    %6311 = vmatprep.subr.mxu0 0.0
    %v6312 = vand.u32 %v1240, 4294901760
    %6313 = vmatpush1.msra.mxu0 %v6312
    %6314 = vmatprep.subr.mxu0 0.0
    %6315 = vmatpush1.msra.mxu0 0.0
    %6316 = vmatprep.subr.mxu0 0.0
    %6317 = vmatpush1.msra.mxu0 0.0
    %6318 = vmatprep.subr.mxu0 0.0
    %6319 = vmatpush1.msra.mxu0 0.0
    %6320 = vmatprep.subr.mxu0 0.0
    %6321 = vmatpush1.msra.mxu0 0.0
    %6322 = vmatprep.subr.mxu0 0.0
    %6323 = vmatpush1.msra.mxu0 0.0
    %6324 = vmatprep.subr.mxu0 0.0
    %6325 = vmatpush1.msra.mxu0 0.0
    %6326 = vmatprep.subr.mxu0 0.0
    %6327 = vmatpush1.msra.mxu0 0.0
    %6328 = vmatprep.subr.mxu0 0.0
    %6329 = vmatpush1.msra.mxu0 0.0
    %6330 = vmatprep.subr.mxu0 0.0
    %6331 = vmatpush1.msra.mxu0 0.0
    %6332 = vmatprep.subr.mxu0 0.0
    %6333 = vmatpush1.msra.mxu0 0.0
    %6334 = vmatprep.subr.mxu0 0.0
    %6335 = vmatpush1.msra.mxu0 0.0
    %6336 = vmatprep.subr.mxu0 0.0
    %6337 = vmatpush1.msra.mxu0 0.0
    %6338 = vmatprep.subr.mxu0 0.0
    %6339 = vmatpush1.msra.mxu0 0.0
    %6340 = vmatprep.subr.mxu0 0.0
    %6341 = vmatpush1.msra.mxu0 0.0
    %6342 = vmatprep.subr.mxu0 0.0
    %6343 = vmatpush1.msra.mxu0 0.0
    %6344 = vmatprep.subr.mxu0 0.0
    %6345 = vmatpush1.msra.mxu0 0.0
    %6346 = vmatprep.subr.mxu0 0.0
    %6347 = vmatpush1.msra.mxu0 0.0
    %6348 = vmatprep.subr.mxu0 0.0
    %6349 = vmatpush1.msra.mxu0 0.0
    %6350 = vmatprep.subr.mxu0 0.0
    %6351 = vmatpush1.msra.mxu0 0.0
    %6352 = vmatprep.subr.mxu0 0.0
    %6353 = vmatpush1.msra.mxu0 0.0
    %6354 = vmatprep.subr.mxu0 0.0
    %6355 = vmatpush1.msra.mxu0 0.0
    %6356 = vmatprep.subr.mxu0 0.0
    %6357 = vmatpush1.msra.mxu0 0.0
    %6358 = vmatprep.subr.mxu0 0.0
    %6359 = vmatpush1.msra.mxu0 0.0
    %6360 = vmatprep.subr.mxu0 0.0
    %6361 = vmatpush1.msra.mxu0 0.0
    %6362 = vmatprep.subr.mxu0 0.0
    %6363 = vmatpush1.msra.mxu0 0.0
    %6364 = vmatprep.subr.mxu0 0.0
    %6365 = vmatpush1.msra.mxu0 0.0
    %6366 = vmatprep.subr.mxu0 0.0
    %6367 = vmatpush1.msra.mxu0 0.0
    %6368 = vmatprep.subr.mxu0 0.0
    %6369 = vmatpush1.msra.mxu0 0.0
    %6370 = vmatprep.mubr.f32.mxu0 0.0
    %v6371 = vand.u32 %v5890, 4294901760
    %6372 = vmatmul.mubr.f32.gmra.mrb[0].mxu0 %v6371
    %v6373 = vpop.f32.mrb[0].mxu0
    %v6374 = vadd.f32 %v6299, %v6373
    %v6375 = vpop.f32.mrb[0].mxu0
    %6376 = vdwg.mxu0
    %v6378 = vrot.slane %v6374, 6
    %v6380 = vadd.f32 %v1224, %v6378
    %v6381 = vxor.u32 %v5885, 2147483648
    %v6382 = vmul.f32 %v6381, 1.442695
    %v6383 = vpow.pop %v6382
    %v6384 = vadd.f32 %v6383, 1.0
    %v6385 = vrcp.pop %v6384
    %v6386 = vmul.f32 1.0, %v6385
    %v6387 = vtanh.pop %v5885
    %v6389 = vrot.slane %v5360, 6
    %v6391 = vmul.f32 %v6386, %v6389
    %6393 = vrot.lane.b32.xlu0 %v6387, 64
    %v6394 = vpop.permute.xlu0 %6393
    %v6396 = vmul.f32 %v6386, %v6394
    %6398 = vrot.lane.b32.xlu0 %v6396, 32
    %v6399 = vpop.permute.xlu0 %6398
    %v6401 = vadd.f32 %v6391, %v6399
    %v6402 = vtanh.pop %v6401
    %6404 = vrot.lane.b32.xlu0 %v6402, 64
    %v6405 = vpop.permute.xlu0 %6404
    %v6407 = vmul.f32 %v6386, %v6405
    %v6408 = vxor.u32 %v6380, 2147483648
    %v6409 = vmul.f32 %v6408, 1.442695
    %v6410 = vpow.pop %v6409
    %v6411 = vadd.f32 %v6410, 1.0
    %v6412 = vrcp.pop %v6411
    %v6413 = vmul.f32 1.0, %v6412
    %v6414 = vtanh.pop %v6380
    %v6416 = vrot.slane %v5387, 2
    %v6418 = vmul.f32 %v6413, %v6416
    %6420 = vrot.lane.b32.xlu0 %v6414, 64
    %v6421 = vpop.permute.xlu0 %6420
    %v6423 = vmul.f32 %v6413, %v6421
    %6425 = vrot.lane.b32.xlu0 %v6423, 32
    %v6426 = vpop.permute.xlu0 %6425
    %v6428 = vadd.f32 %v6418, %v6426
    %v6429 = vtanh.pop %v6428
    %6431 = vrot.lane.b32.xlu0 %v6429, 64
    %v6432 = vpop.permute.xlu0 %6431
    %v6434 = vmul.f32 %v6413, %v6432
    %6436 = vrot.lane.b32.xlu0 %v6407, 32
    %v6437 = vpop.permute.xlu0 %6436
    %v6438 = vsel %vm634, %v6437, 0
    %6440 = vmatprep.subr.mxu0 0.0
    %v6441 = vand.u32 %v1233, 4294901760
    %6442 = vmatpush1.msra.mxu0 %v6441
    %6443 = vmatprep.subr.mxu0 0.0
    %v6444 = vand.u32 %v1234, 4294901760
    %6445 = vmatpush1.msra.mxu0 %v6444
    %6446 = vmatprep.subr.mxu0 0.0
    %v6447 = vand.u32 %v1235, 4294901760
    %6448 = vmatpush1.msra.mxu0 %v6447
    %6449 = vmatprep.subr.mxu0 0.0
    %v6450 = vand.u32 %v1236, 4294901760
    %6451 = vmatpush1.msra.mxu0 %v6450
    %6452 = vmatprep.subr.mxu0 0.0
    %6453 = vmatpush1.msra.mxu0 0.0
    %6454 = vmatprep.subr.mxu0 0.0
    %6455 = vmatpush1.msra.mxu0 0.0
    %6456 = vmatprep.subr.mxu0 0.0
    %6457 = vmatpush1.msra.mxu0 0.0
    %6458 = vmatprep.subr.mxu0 0.0
    %6459 = vmatpush1.msra.mxu0 0.0
    %6460 = vmatprep.subr.mxu0 0.0
    %6461 = vmatpush1.msra.mxu0 0.0
    %6462 = vmatprep.subr.mxu0 0.0
    %6463 = vmatpush1.msra.mxu0 0.0
    %6464 = vmatprep.subr.mxu0 0.0
    %6465 = vmatpush1.msra.mxu0 0.0
    %6466 = vmatprep.subr.mxu0 0.0
    %6467 = vmatpush1.msra.mxu0 0.0
    %6468 = vmatprep.subr.mxu0 0.0
    %6469 = vmatpush1.msra.mxu0 0.0
    %6470 = vmatprep.subr.mxu0 0.0
    %6471 = vmatpush1.msra.mxu0 0.0
    %6472 = vmatprep.subr.mxu0 0.0
    %6473 = vmatpush1.msra.mxu0 0.0
    %6474 = vmatprep.subr.mxu0 0.0
    %6475 = vmatpush1.msra.mxu0 0.0
    %6476 = vmatprep.subr.mxu0 0.0
    %6477 = vmatpush1.msra.mxu0 0.0
    %6478 = vmatprep.subr.mxu0 0.0
    %6479 = vmatpush1.msra.mxu0 0.0
    %6480 = vmatprep.subr.mxu0 0.0
    %6481 = vmatpush1.msra.mxu0 0.0
    %6482 = vmatprep.subr.mxu0 0.0
    %6483 = vmatpush1.msra.mxu0 0.0
    %6484 = vmatprep.subr.mxu0 0.0
    %6485 = vmatpush1.msra.mxu0 0.0
    %6486 = vmatprep.subr.mxu0 0.0
    %6487 = vmatpush1.msra.mxu0 0.0
    %6488 = vmatprep.subr.mxu0 0.0
    %6489 = vmatpush1.msra.mxu0 0.0
    %6490 = vmatprep.subr.mxu0 0.0
    %6491 = vmatpush1.msra.mxu0 0.0
    %6492 = vmatprep.subr.mxu0 0.0
    %6493 = vmatpush1.msra.mxu0 0.0
    %6494 = vmatprep.subr.mxu0 0.0
    %6495 = vmatpush1.msra.mxu0 0.0
    %6496 = vmatprep.subr.mxu0 0.0
    %6497 = vmatpush1.msra.mxu0 0.0
    %6498 = vmatprep.subr.mxu0 0.0
    %6499 = vmatpush1.msra.mxu0 0.0
    %6500 = vmatprep.subr.mxu0 0.0
    %6501 = vmatpush1.msra.mxu0 0.0
    %6502 = vmatprep.subr.mxu0 0.0
    %6503 = vmatpush1.msra.mxu0 0.0
    %6504 = vmatprep.subr.mxu0 0.0
    %6505 = vmatpush1.msra.mxu0 0.0
    %6506 = vmatprep.subr.mxu0 0.0
    %6507 = vmatpush1.msra.mxu0 0.0
    %6508 = vmatprep.mubr.f32.mxu0 0.0
    %v6509 = vand.u32 %v6438, 4294901760
    %v6510 = vsub.f32 %v6438, %v6509
    %v6511 = vand.u32 %v6510, 4294901760
    %v6512 = vsub.f32 %v6510, %v6511
    %v6513 = vand.u32 %v6512, 4294901760
    %6514 = vmatmul.mubr.f32.gmra.mrb[0].mxu0 %v6513
    %v6515 = vpop.f32.mrb[0].mxu0
    %v6516 = vadd.f32 0.0, %v6515
    %v6517 = vpop.f32.mrb[0].mxu0
    %6518 = vdwg.mxu0
    %6519 = vmatprep.subr.mxu0 0.0
    %v6520 = vand.u32 %v1233, 4294901760
    %v6521 = vsub.f32 %v1233, %v6520
    %v6522 = vand.u32 %v6521, 4294901760
    %v6523 = vsub.f32 %v6521, %v6522
    %v6524 = vand.u32 %v6523, 4294901760
    %6525 = vmatpush1.msra.mxu0 %v6524
    %6526 = vmatprep.subr.mxu0 0.0
    %v6527 = vand.u32 %v1234, 4294901760
    %v6528 = vsub.f32 %v1234, %v6527
    %v6529 = vand.u32 %v6528, 4294901760
    %v6530 = vsub.f32 %v6528, %v6529
    %v6531 = vand.u32 %v6530, 4294901760
    %6532 = vmatpush1.msra.mxu0 %v6531
    %6533 = vmatprep.subr.mxu0 0.0
    %v6534 = vand.u32 %v1235, 4294901760
    %v6535 = vsub.f32 %v1235, %v6534
    %v6536 = vand.u32 %v6535, 4294901760
    %v6537 = vsub.f32 %v6535, %v6536
    %v6538 = vand.u32 %v6537, 4294901760
    %6539 = vmatpush1.msra.mxu0 %v6538
    %6540 = vmatprep.subr.mxu0 0.0
    %v6541 = vand.u32 %v1236, 4294901760
    %v6542 = vsub.f32 %v1236, %v6541
    %v6543 = vand.u32 %v6542, 4294901760
    %v6544 = vsub.f32 %v6542, %v6543
    %v6545 = vand.u32 %v6544, 4294901760
    %6546 = vmatpush1.msra.mxu0 %v6545
    %6547 = vmatprep.subr.mxu0 0.0
    %6548 = vmatpush1.msra.mxu0 0.0
    %6549 = vmatprep.subr.mxu0 0.0
    %6550 = vmatpush1.msra.mxu0 0.0
    %6551 = vmatprep.subr.mxu0 0.0
    %6552 = vmatpush1.msra.mxu0 0.0
    %6553 = vmatprep.subr.mxu0 0.0
    %6554 = vmatpush1.msra.mxu0 0.0
    %6555 = vmatprep.subr.mxu0 0.0
    %6556 = vmatpush1.msra.mxu0 0.0
    %6557 = vmatprep.subr.mxu0 0.0
    %6558 = vmatpush1.msra.mxu0 0.0
    %6559 = vmatprep.subr.mxu0 0.0
    %6560 = vmatpush1.msra.mxu0 0.0
    %6561 = vmatprep.subr.mxu0 0.0
    %6562 = vmatpush1.msra.mxu0 0.0
    %6563 = vmatprep.subr.mxu0 0.0
    %6564 = vmatpush1.msra.mxu0 0.0
    %6565 = vmatprep.subr.mxu0 0.0
    %6566 = vmatpush1.msra.mxu0 0.0
    %6567 = vmatprep.subr.mxu0 0.0
    %6568 = vmatpush1.msra.mxu0 0.0
    %6569 = vmatprep.subr.mxu0 0.0
    %6570 = vmatpush1.msra.mxu0 0.0
    %6571 = vmatprep.subr.mxu0 0.0
    %6572 = vmatpush1.msra.mxu0 0.0
    %6573 = vmatprep.subr.mxu0 0.0
    %6574 = vmatpush1.msra.mxu0 0.0
    %6575 = vmatprep.subr.mxu0 0.0
    %6576 = vmatpush1.msra.mxu0 0.0
    %6577 = vmatprep.subr.mxu0 0.0
    %6578 = vmatpush1.msra.mxu0 0.0
    %6579 = vmatprep.subr.mxu0 0.0
    %6580 = vmatpush1.msra.mxu0 0.0
    %6581 = vmatprep.subr.mxu0 0.0
    %6582 = vmatpush1.msra.mxu0 0.0
    %6583 = vmatprep.subr.mxu0 0.0
    %6584 = vmatpush1.msra.mxu0 0.0
    %6585 = vmatprep.subr.mxu0 0.0
    %6586 = vmatpush1.msra.mxu0 0.0
    %6587 = vmatprep.subr.mxu0 0.0
    %6588 = vmatpush1.msra.mxu0 0.0
    %6589 = vmatprep.subr.mxu0 0.0
    %6590 = vmatpush1.msra.mxu0 0.0
    %6591 = vmatprep.subr.mxu0 0.0
    %6592 = vmatpush1.msra.mxu0 0.0
    %6593 = vmatprep.subr.mxu0 0.0
    %6594 = vmatpush1.msra.mxu0 0.0
    %6595 = vmatprep.subr.mxu0 0.0
    %6596 = vmatpush1.msra.mxu0 0.0
    %6597 = vmatprep.subr.mxu0 0.0
    %6598 = vmatpush1.msra.mxu0 0.0
    %6599 = vmatprep.subr.mxu0 0.0
    %6600 = vmatpush1.msra.mxu0 0.0
    %6601 = vmatprep.subr.mxu0 0.0
    %6602 = vmatpush1.msra.mxu0 0.0
    %6603 = vmatprep.mubr.f32.mxu0 0.0
    %v6604 = vand.u32 %v6438, 4294901760
    %6605 = vmatmul.mubr.f32.gmra.mrb[0].mxu0 %v6604
    %v6606 = vpop.f32.mrb[0].mxu0
    %v6607 = vadd.f32 %v6516, %v6606
    %v6608 = vpop.f32.mrb[0].mxu0
    %6609 = vdwg.mxu0
    %6610 = vmatprep.subr.mxu0 0.0
    %v6611 = vand.u32 %v1233, 4294901760
    %v6612 = vsub.f32 %v1233, %v6611
    %6613 = vmatpush1.msra.mxu0 %v6612
    %6614 = vmatprep.subr.mxu0 0.0
    %v6615 = vand.u32 %v1234, 4294901760
    %v6616 = vsub.f32 %v1234, %v6615
    %6617 = vmatpush1.msra.mxu0 %v6616
    %6618 = vmatprep.subr.mxu0 0.0
    %v6619 = vand.u32 %v1235, 4294901760
    %v6620 = vsub.f32 %v1235, %v6619
    %6621 = vmatpush1.msra.mxu0 %v6620
    %6622 = vmatprep.subr.mxu0 0.0
    %v6623 = vand.u32 %v1236, 4294901760
    %v6624 = vsub.f32 %v1236, %v6623
    %6625 = vmatpush1.msra.mxu0 %v6624
    %6626 = vmatprep.subr.mxu0 0.0
    %6627 = vmatpush1.msra.mxu0 0.0
    %6628 = vmatprep.subr.mxu0 0.0
    %6629 = vmatpush1.msra.mxu0 0.0
    %6630 = vmatprep.subr.mxu0 0.0
    %6631 = vmatpush1.msra.mxu0 0.0
    %6632 = vmatprep.subr.mxu0 0.0
    %6633 = vmatpush1.msra.mxu0 0.0
    %6634 = vmatprep.subr.mxu0 0.0
    %6635 = vmatpush1.msra.mxu0 0.0
    %6636 = vmatprep.subr.mxu0 0.0
    %6637 = vmatpush1.msra.mxu0 0.0
    %6638 = vmatprep.subr.mxu0 0.0
    %6639 = vmatpush1.msra.mxu0 0.0
    %6640 = vmatprep.subr.mxu0 0.0
    %6641 = vmatpush1.msra.mxu0 0.0
    %6642 = vmatprep.subr.mxu0 0.0
    %6643 = vmatpush1.msra.mxu0 0.0
    %6644 = vmatprep.subr.mxu0 0.0
    %6645 = vmatpush1.msra.mxu0 0.0
    %6646 = vmatprep.subr.mxu0 0.0
    %6647 = vmatpush1.msra.mxu0 0.0
    %6648 = vmatprep.subr.mxu0 0.0
    %6649 = vmatpush1.msra.mxu0 0.0
    %6650 = vmatprep.subr.mxu0 0.0
    %6651 = vmatpush1.msra.mxu0 0.0
    %6652 = vmatprep.subr.mxu0 0.0
    %6653 = vmatpush1.msra.mxu0 0.0
    %6654 = vmatprep.subr.mxu0 0.0
    %6655 = vmatpush1.msra.mxu0 0.0
    %6656 = vmatprep.subr.mxu0 0.0
    %6657 = vmatpush1.msra.mxu0 0.0
    %6658 = vmatprep.subr.mxu0 0.0
    %6659 = vmatpush1.msra.mxu0 0.0
    %6660 = vmatprep.subr.mxu0 0.0
    %6661 = vmatpush1.msra.mxu0 0.0
    %6662 = vmatprep.subr.mxu0 0.0
    %6663 = vmatpush1.msra.mxu0 0.0
    %6664 = vmatprep.subr.mxu0 0.0
    %6665 = vmatpush1.msra.mxu0 0.0
    %6666 = vmatprep.subr.mxu0 0.0
    %6667 = vmatpush1.msra.mxu0 0.0
    %6668 = vmatprep.subr.mxu0 0.0
    %6669 = vmatpush1.msra.mxu0 0.0
    %6670 = vmatprep.subr.mxu0 0.0
    %6671 = vmatpush1.msra.mxu0 0.0
    %6672 = vmatprep.subr.mxu0 0.0
    %6673 = vmatpush1.msra.mxu0 0.0
    %6674 = vmatprep.subr.mxu0 0.0
    %6675 = vmatpush1.msra.mxu0 0.0
    %6676 = vmatprep.subr.mxu0 0.0
    %6677 = vmatpush1.msra.mxu0 0.0
    %6678 = vmatprep.subr.mxu0 0.0
    %6679 = vmatpush1.msra.mxu0 0.0
    %6680 = vmatprep.subr.mxu0 0.0
    %6681 = vmatpush1.msra.mxu0 0.0
    %6682 = vmatprep.mubr.f32.mxu0 0.0
    %v6683 = vand.u32 %v6438, 4294901760
    %v6684 = vsub.f32 %v6438, %v6683
    %6685 = vmatmul.mubr.f32.gmra.mrb[0].mxu0 %v6684
    %v6686 = vpop.f32.mrb[0].mxu0
    %v6687 = vadd.f32 %v6607, %v6686
    %v6688 = vpop.f32.mrb[0].mxu0
    %6689 = vdwg.mxu0
    %6690 = vmatprep.subr.mxu0 0.0
    %v6691 = vand.u32 %v1233, 4294901760
    %6692 = vmatpush1.msra.mxu0 %v6691
    %6693 = vmatprep.subr.mxu0 0.0
    %v6694 = vand.u32 %v1234, 4294901760
    %6695 = vmatpush1.msra.mxu0 %v6694
    %6696 = vmatprep.subr.mxu0 0.0
    %v6697 = vand.u32 %v1235, 4294901760
    %6698 = vmatpush1.msra.mxu0 %v6697
    %6699 = vmatprep.subr.mxu0 0.0
    %v6700 = vand.u32 %v1236, 4294901760
    %6701 = vmatpush1.msra.mxu0 %v6700
    %6702 = vmatprep.subr.mxu0 0.0
    %6703 = vmatpush1.msra.mxu0 0.0
    %6704 = vmatprep.subr.mxu0 0.0
    %6705 = vmatpush1.msra.mxu0 0.0
    %6706 = vmatprep.subr.mxu0 0.0
    %6707 = vmatpush1.msra.mxu0 0.0
    %6708 = vmatprep.subr.mxu0 0.0
    %6709 = vmatpush1.msra.mxu0 0.0
    %6710 = vmatprep.subr.mxu0 0.0
    %6711 = vmatpush1.msra.mxu0 0.0
    %6712 = vmatprep.subr.mxu0 0.0
    %6713 = vmatpush1.msra.mxu0 0.0
    %6714 = vmatprep.subr.mxu0 0.0
    %6715 = vmatpush1.msra.mxu0 0.0
    %6716 = vmatprep.subr.mxu0 0.0
    %6717 = vmatpush1.msra.mxu0 0.0
    %6718 = vmatprep.subr.mxu0 0.0
    %6719 = vmatpush1.msra.mxu0 0.0
    %6720 = vmatprep.subr.mxu0 0.0
    %6721 = vmatpush1.msra.mxu0 0.0
    %6722 = vmatprep.subr.mxu0 0.0
    %6723 = vmatpush1.msra.mxu0 0.0
    %6724 = vmatprep.subr.mxu0 0.0
    %6725 = vmatpush1.msra.mxu0 0.0
    %6726 = vmatprep.subr.mxu0 0.0
    %6727 = vmatpush1.msra.mxu0 0.0
    %6728 = vmatprep.subr.mxu0 0.0
    %6729 = vmatpush1.msra.mxu0 0.0
    %6730 = vmatprep.subr.mxu0 0.0
    %6731 = vmatpush1.msra.mxu0 0.0
    %6732 = vmatprep.subr.mxu0 0.0
    %6733 = vmatpush1.msra.mxu0 0.0
    %6734 = vmatprep.subr.mxu0 0.0
    %6735 = vmatpush1.msra.mxu0 0.0
    %6736 = vmatprep.subr.mxu0 0.0
    %6737 = vmatpush1.msra.mxu0 0.0
    %6738 = vmatprep.subr.mxu0 0.0
    %6739 = vmatpush1.msra.mxu0 0.0
    %6740 = vmatprep.subr.mxu0 0.0
    %6741 = vmatpush1.msra.mxu0 0.0
    %6742 = vmatprep.subr.mxu0 0.0
    %6743 = vmatpush1.msra.mxu0 0.0
    %6744 = vmatprep.subr.mxu0 0.0
    %6745 = vmatpush1.msra.mxu0 0.0
    %6746 = vmatprep.subr.mxu0 0.0
    %6747 = vmatpush1.msra.mxu0 0.0
    %6748 = vmatprep.subr.mxu0 0.0
    %6749 = vmatpush1.msra.mxu0 0.0
    %6750 = vmatprep.subr.mxu0 0.0
    %6751 = vmatpush1.msra.mxu0 0.0
    %6752 = vmatprep.subr.mxu0 0.0
    %6753 = vmatpush1.msra.mxu0 0.0
    %6754 = vmatprep.subr.mxu0 0.0
    %6755 = vmatpush1.msra.mxu0 0.0
    %6756 = vmatprep.subr.mxu0 0.0
    %6757 = vmatpush1.msra.mxu0 0.0
    %6758 = vmatprep.mubr.f32.mxu0 0.0
    %v6759 = vand.u32 %v6438, 4294901760
    %v6760 = vsub.f32 %v6438, %v6759
    %v6761 = vand.u32 %v6760, 4294901760
    %6762 = vmatmul.mubr.f32.gmra.mrb[0].mxu0 %v6761
    %v6763 = vpop.f32.mrb[0].mxu0
    %v6764 = vadd.f32 %v6687, %v6763
    %v6765 = vpop.f32.mrb[0].mxu0
    %6766 = vdwg.mxu0
    %6767 = vmatprep.subr.mxu0 0.0
    %v6768 = vand.u32 %v1233, 4294901760
    %v6769 = vsub.f32 %v1233, %v6768
    %v6770 = vand.u32 %v6769, 4294901760
    %6771 = vmatpush1.msra.mxu0 %v6770
    %6772 = vmatprep.subr.mxu0 0.0
    %v6773 = vand.u32 %v1234, 4294901760
    %v6774 = vsub.f32 %v1234, %v6773
    %v6775 = vand.u32 %v6774, 4294901760
    %6776 = vmatpush1.msra.mxu0 %v6775
    %6777 = vmatprep.subr.mxu0 0.0
    %v6778 = vand.u32 %v1235, 4294901760
    %v6779 = vsub.f32 %v1235, %v6778
    %v6780 = vand.u32 %v6779, 4294901760
    %6781 = vmatpush1.msra.mxu0 %v6780
    %6782 = vmatprep.subr.mxu0 0.0
    %v6783 = vand.u32 %v1236, 4294901760
    %v6784 = vsub.f32 %v1236, %v6783
    %v6785 = vand.u32 %v6784, 4294901760
    %6786 = vmatpush1.msra.mxu0 %v6785
    %6787 = vmatprep.subr.mxu0 0.0
    %6788 = vmatpush1.msra.mxu0 0.0
    %6789 = vmatprep.subr.mxu0 0.0
    %6790 = vmatpush1.msra.mxu0 0.0
    %6791 = vmatprep.subr.mxu0 0.0
    %6792 = vmatpush1.msra.mxu0 0.0
    %6793 = vmatprep.subr.mxu0 0.0
    %6794 = vmatpush1.msra.mxu0 0.0
    %6795 = vmatprep.subr.mxu0 0.0
    %6796 = vmatpush1.msra.mxu0 0.0
    %6797 = vmatprep.subr.mxu0 0.0
    %6798 = vmatpush1.msra.mxu0 0.0
    %6799 = vmatprep.subr.mxu0 0.0
    %6800 = vmatpush1.msra.mxu0 0.0
    %6801 = vmatprep.subr.mxu0 0.0
    %6802 = vmatpush1.msra.mxu0 0.0
    %6803 = vmatprep.subr.mxu0 0.0
    %6804 = vmatpush1.msra.mxu0 0.0
    %6805 = vmatprep.subr.mxu0 0.0
    %6806 = vmatpush1.msra.mxu0 0.0
    %6807 = vmatprep.subr.mxu0 0.0
    %6808 = vmatpush1.msra.mxu0 0.0
    %6809 = vmatprep.subr.mxu0 0.0
    %6810 = vmatpush1.msra.mxu0 0.0
    %6811 = vmatprep.subr.mxu0 0.0
    %6812 = vmatpush1.msra.mxu0 0.0
    %6813 = vmatprep.subr.mxu0 0.0
    %6814 = vmatpush1.msra.mxu0 0.0
    %6815 = vmatprep.subr.mxu0 0.0
    %6816 = vmatpush1.msra.mxu0 0.0
    %6817 = vmatprep.subr.mxu0 0.0
    %6818 = vmatpush1.msra.mxu0 0.0
    %6819 = vmatprep.subr.mxu0 0.0
    %6820 = vmatpush1.msra.mxu0 0.0
    %6821 = vmatprep.subr.mxu0 0.0
    %6822 = vmatpush1.msra.mxu0 0.0
    %6823 = vmatprep.subr.mxu0 0.0
    %6824 = vmatpush1.msra.mxu0 0.0
    %6825 = vmatprep.subr.mxu0 0.0
    %6826 = vmatpush1.msra.mxu0 0.0
    %6827 = vmatprep.subr.mxu0 0.0
    %6828 = vmatpush1.msra.mxu0 0.0
    %6829 = vmatprep.subr.mxu0 0.0
    %6830 = vmatpush1.msra.mxu0 0.0
    %6831 = vmatprep.subr.mxu0 0.0
    %6832 = vmatpush1.msra.mxu0 0.0
    %6833 = vmatprep.subr.mxu0 0.0
    %6834 = vmatpush1.msra.mxu0 0.0
    %6835 = vmatprep.subr.mxu0 0.0
    %6836 = vmatpush1.msra.mxu0 0.0
    %6837 = vmatprep.subr.mxu0 0.0
    %6838 = vmatpush1.msra.mxu0 0.0
    %6839 = vmatprep.subr.mxu0 0.0
    %6840 = vmatpush1.msra.mxu0 0.0
    %6841 = vmatprep.subr.mxu0 0.0
    %6842 = vmatpush1.msra.mxu0 0.0
    %6843 = vmatprep.mubr.f32.mxu0 0.0
    %v6844 = vand.u32 %v6438, 4294901760
    %6845 = vmatmul.mubr.f32.gmra.mrb[0].mxu0 %v6844
    %v6846 = vpop.f32.mrb[0].mxu0
    %v6847 = vadd.f32 %v6764, %v6846
    %v6848 = vpop.f32.mrb[0].mxu0
    %6849 = vdwg.mxu0
    %6850 = vmatprep.subr.mxu0 0.0
    %v6851 = vand.u32 %v1233, 4294901760
    %6852 = vmatpush1.msra.mxu0 %v6851
    %6853 = vmatprep.subr.mxu0 0.0
    %v6854 = vand.u32 %v1234, 4294901760
    %6855 = vmatpush1.msra.mxu0 %v6854
    %6856 = vmatprep.subr.mxu0 0.0
    %v6857 = vand.u32 %v1235, 4294901760
    %6858 = vmatpush1.msra.mxu0 %v6857
    %6859 = vmatprep.subr.mxu0 0.0
    %v6860 = vand.u32 %v1236, 4294901760
    %6861 = vmatpush1.msra.mxu0 %v6860
    %6862 = vmatprep.subr.mxu0 0.0
    %6863 = vmatpush1.msra.mxu0 0.0
    %6864 = vmatprep.subr.mxu0 0.0
    %6865 = vmatpush1.msra.mxu0 0.0
    %6866 = vmatprep.subr.mxu0 0.0
    %6867 = vmatpush1.msra.mxu0 0.0
    %6868 = vmatprep.subr.mxu0 0.0
    %6869 = vmatpush1.msra.mxu0 0.0
    %6870 = vmatprep.subr.mxu0 0.0
    %6871 = vmatpush1.msra.mxu0 0.0
    %6872 = vmatprep.subr.mxu0 0.0
    %6873 = vmatpush1.msra.mxu0 0.0
    %6874 = vmatprep.subr.mxu0 0.0
    %6875 = vmatpush1.msra.mxu0 0.0
    %6876 = vmatprep.subr.mxu0 0.0
    %6877 = vmatpush1.msra.mxu0 0.0
    %6878 = vmatprep.subr.mxu0 0.0
    %6879 = vmatpush1.msra.mxu0 0.0
    %6880 = vmatprep.subr.mxu0 0.0
    %6881 = vmatpush1.msra.mxu0 0.0
    %6882 = vmatprep.subr.mxu0 0.0
    %6883 = vmatpush1.msra.mxu0 0.0
    %6884 = vmatprep.subr.mxu0 0.0
    %6885 = vmatpush1.msra.mxu0 0.0
    %6886 = vmatprep.subr.mxu0 0.0
    %6887 = vmatpush1.msra.mxu0 0.0
    %6888 = vmatprep.subr.mxu0 0.0
    %6889 = vmatpush1.msra.mxu0 0.0
    %6890 = vmatprep.subr.mxu0 0.0
    %6891 = vmatpush1.msra.mxu0 0.0
    %6892 = vmatprep.subr.mxu0 0.0
    %6893 = vmatpush1.msra.mxu0 0.0
    %6894 = vmatprep.subr.mxu0 0.0
    %6895 = vmatpush1.msra.mxu0 0.0
    %6896 = vmatprep.subr.mxu0 0.0
    %6897 = vmatpush1.msra.mxu0 0.0
    %6898 = vmatprep.subr.mxu0 0.0
    %6899 = vmatpush1.msra.mxu0 0.0
    %6900 = vmatprep.subr.mxu0 0.0
    %6901 = vmatpush1.msra.mxu0 0.0
    %6902 = vmatprep.subr.mxu0 0.0
    %6903 = vmatpush1.msra.mxu0 0.0
    %6904 = vmatprep.subr.mxu0 0.0
    %6905 = vmatpush1.msra.mxu0 0.0
    %6906 = vmatprep.subr.mxu0 0.0
    %6907 = vmatpush1.msra.mxu0 0.0
    %6908 = vmatprep.subr.mxu0 0.0
    %6909 = vmatpush1.msra.mxu0 0.0
    %6910 = vmatprep.subr.mxu0 0.0
    %6911 = vmatpush1.msra.mxu0 0.0
    %6912 = vmatprep.subr.mxu0 0.0
    %6913 = vmatpush1.msra.mxu0 0.0
    %6914 = vmatprep.subr.mxu0 0.0
    %6915 = vmatpush1.msra.mxu0 0.0
    %6916 = vmatprep.subr.mxu0 0.0
    %6917 = vmatpush1.msra.mxu0 0.0
    %6918 = vmatprep.mubr.f32.mxu0 0.0
    %v6919 = vand.u32 %v6438, 4294901760
    %6920 = vmatmul.mubr.f32.gmra.mrb[0].mxu0 %v6919
    %v6921 = vpop.f32.mrb[0].mxu0
    %v6922 = vadd.f32 %v6847, %v6921
    %v6923 = vpop.f32.mrb[0].mxu0
    %6924 = vdwg.mxu0
    %v6926 = vrot.slane %v6922, 6
    %v6928 = vadd.f32 %v1229, %v6926
    %v6930 = vrot.slane %v6434, 2
    %6931 = vrot.lane.b32.xlu0 %v6930, 32
    %v6932 = vpop.permute.xlu0 %6931
    %v6933 = vsel %vm634, %v6932, 0
    %6935 = vmatprep.subr.mxu0 0.0
    %v6936 = vand.u32 %v1237, 4294901760
    %6937 = vmatpush1.msra.mxu0 %v6936
    %6938 = vmatprep.subr.mxu0 0.0
    %v6939 = vand.u32 %v1238, 4294901760
    %6940 = vmatpush1.msra.mxu0 %v6939
    %6941 = vmatprep.subr.mxu0 0.0
    %v6942 = vand.u32 %v1239, 4294901760
    %6943 = vmatpush1.msra.mxu0 %v6942
    %6944 = vmatprep.subr.mxu0 0.0
    %v6945 = vand.u32 %v1240, 4294901760
    %6946 = vmatpush1.msra.mxu0 %v6945
    %6947 = vmatprep.subr.mxu0 0.0
    %6948 = vmatpush1.msra.mxu0 0.0
    %6949 = vmatprep.subr.mxu0 0.0
    %6950 = vmatpush1.msra.mxu0 0.0
    %6951 = vmatprep.subr.mxu0 0.0
    %6952 = vmatpush1.msra.mxu0 0.0
    %6953 = vmatprep.subr.mxu0 0.0
    %6954 = vmatpush1.msra.mxu0 0.0
    %6955 = vmatprep.subr.mxu0 0.0
    %6956 = vmatpush1.msra.mxu0 0.0
    %6957 = vmatprep.subr.mxu0 0.0
    %6958 = vmatpush1.msra.mxu0 0.0
    %6959 = vmatprep.subr.mxu0 0.0
    %6960 = vmatpush1.msra.mxu0 0.0
    %6961 = vmatprep.subr.mxu0 0.0
    %6962 = vmatpush1.msra.mxu0 0.0
    %6963 = vmatprep.subr.mxu0 0.0
    %6964 = vmatpush1.msra.mxu0 0.0
    %6965 = vmatprep.subr.mxu0 0.0
    %6966 = vmatpush1.msra.mxu0 0.0
    %6967 = vmatprep.subr.mxu0 0.0
    %6968 = vmatpush1.msra.mxu0 0.0
    %6969 = vmatprep.subr.mxu0 0.0
    %6970 = vmatpush1.msra.mxu0 0.0
    %6971 = vmatprep.subr.mxu0 0.0
    %6972 = vmatpush1.msra.mxu0 0.0
    %6973 = vmatprep.subr.mxu0 0.0
    %6974 = vmatpush1.msra.mxu0 0.0
    %6975 = vmatprep.subr.mxu0 0.0
    %6976 = vmatpush1.msra.mxu0 0.0
    %6977 = vmatprep.subr.mxu0 0.0
    %6978 = vmatpush1.msra.mxu0 0.0
    %6979 = vmatprep.subr.mxu0 0.0
    %6980 = vmatpush1.msra.mxu0 0.0
    %6981 = vmatprep.subr.mxu0 0.0
    %6982 = vmatpush1.msra.mxu0 0.0
    %6983 = vmatprep.subr.mxu0 0.0
    %6984 = vmatpush1.msra.mxu0 0.0
    %6985 = vmatprep.subr.mxu0 0.0
    %6986 = vmatpush1.msra.mxu0 0.0
    %6987 = vmatprep.subr.mxu0 0.0
    %6988 = vmatpush1.msra.mxu0 0.0
    %6989 = vmatprep.subr.mxu0 0.0
    %6990 = vmatpush1.msra.mxu0 0.0
    %6991 = vmatprep.subr.mxu0 0.0
    %6992 = vmatpush1.msra.mxu0 0.0
    %6993 = vmatprep.subr.mxu0 0.0
    %6994 = vmatpush1.msra.mxu0 0.0
    %6995 = vmatprep.subr.mxu0 0.0
    %6996 = vmatpush1.msra.mxu0 0.0
    %6997 = vmatprep.subr.mxu0 0.0
    %6998 = vmatpush1.msra.mxu0 0.0
    %6999 = vmatprep.subr.mxu0 0.0
    %7000 = vmatpush1.msra.mxu0 0.0
    %7001 = vmatprep.subr.mxu0 0.0
    %7002 = vmatpush1.msra.mxu0 0.0
    %7003 = vmatprep.mubr.f32.mxu0 0.0
    %v7004 = vand.u32 %v6933, 4294901760
    %v7005 = vsub.f32 %v6933, %v7004
    %v7006 = vand.u32 %v7005, 4294901760
    %v7007 = vsub.f32 %v7005, %v7006
    %v7008 = vand.u32 %v7007, 4294901760
    %7009 = vmatmul.mubr.f32.gmra.mrb[0].mxu0 %v7008
    %v7010 = vpop.f32.mrb[0].mxu0
    %v7011 = vadd.f32 0.0, %v7010
    %v7012 = vpop.f32.mrb[0].mxu0
    %7013 = vdwg.mxu0
    %7014 = vmatprep.subr.mxu0 0.0
    %v7015 = vand.u32 %v1237, 4294901760
    %v7016 = vsub.f32 %v1237, %v7015
    %v7017 = vand.u32 %v7016, 4294901760
    %v7018 = vsub.f32 %v7016, %v7017
    %v7019 = vand.u32 %v7018, 4294901760
    %7020 = vmatpush1.msra.mxu0 %v7019
    %7021 = vmatprep.subr.mxu0 0.0
    %v7022 = vand.u32 %v1238, 4294901760
    %v7023 = vsub.f32 %v1238, %v7022
    %v7024 = vand.u32 %v7023, 4294901760
    %v7025 = vsub.f32 %v7023, %v7024
    %v7026 = vand.u32 %v7025, 4294901760
    %7027 = vmatpush1.msra.mxu0 %v7026
    %7028 = vmatprep.subr.mxu0 0.0
    %v7029 = vand.u32 %v1239, 4294901760
    %v7030 = vsub.f32 %v1239, %v7029
    %v7031 = vand.u32 %v7030, 4294901760
    %v7032 = vsub.f32 %v7030, %v7031
    %v7033 = vand.u32 %v7032, 4294901760
    %7034 = vmatpush1.msra.mxu0 %v7033
    %7035 = vmatprep.subr.mxu0 0.0
    %v7036 = vand.u32 %v1240, 4294901760
    %v7037 = vsub.f32 %v1240, %v7036
    %v7038 = vand.u32 %v7037, 4294901760
    %v7039 = vsub.f32 %v7037, %v7038
    %v7040 = vand.u32 %v7039, 4294901760
    %7041 = vmatpush1.msra.mxu0 %v7040
    %7042 = vmatprep.subr.mxu0 0.0
    %7043 = vmatpush1.msra.mxu0 0.0
    %7044 = vmatprep.subr.mxu0 0.0
    %7045 = vmatpush1.msra.mxu0 0.0
    %7046 = vmatprep.subr.mxu0 0.0
    %7047 = vmatpush1.msra.mxu0 0.0
    %7048 = vmatprep.subr.mxu0 0.0
    %7049 = vmatpush1.msra.mxu0 0.0
    %7050 = vmatprep.subr.mxu0 0.0
    %7051 = vmatpush1.msra.mxu0 0.0
    %7052 = vmatprep.subr.mxu0 0.0
    %7053 = vmatpush1.msra.mxu0 0.0
    %7054 = vmatprep.subr.mxu0 0.0
    %7055 = vmatpush1.msra.mxu0 0.0
    %7056 = vmatprep.subr.mxu0 0.0
    %7057 = vmatpush1.msra.mxu0 0.0
    %7058 = vmatprep.subr.mxu0 0.0
    %7059 = vmatpush1.msra.mxu0 0.0
    %7060 = vmatprep.subr.mxu0 0.0
    %7061 = vmatpush1.msra.mxu0 0.0
    %7062 = vmatprep.subr.mxu0 0.0
    %7063 = vmatpush1.msra.mxu0 0.0
    %7064 = vmatprep.subr.mxu0 0.0
    %7065 = vmatpush1.msra.mxu0 0.0
    %7066 = vmatprep.subr.mxu0 0.0
    %7067 = vmatpush1.msra.mxu0 0.0
    %7068 = vmatprep.subr.mxu0 0.0
    %7069 = vmatpush1.msra.mxu0 0.0
    %7070 = vmatprep.subr.mxu0 0.0
    %7071 = vmatpush1.msra.mxu0 0.0
    %7072 = vmatprep.subr.mxu0 0.0
    %7073 = vmatpush1.msra.mxu0 0.0
    %7074 = vmatprep.subr.mxu0 0.0
    %7075 = vmatpush1.msra.mxu0 0.0
    %7076 = vmatprep.subr.mxu0 0.0
    %7077 = vmatpush1.msra.mxu0 0.0
    %7078 = vmatprep.subr.mxu0 0.0
    %7079 = vmatpush1.msra.mxu0 0.0
    %7080 = vmatprep.subr.mxu0 0.0
    %7081 = vmatpush1.msra.mxu0 0.0
    %7082 = vmatprep.subr.mxu0 0.0
    %7083 = vmatpush1.msra.mxu0 0.0
    %7084 = vmatprep.subr.mxu0 0.0
    %7085 = vmatpush1.msra.mxu0 0.0
    %7086 = vmatprep.subr.mxu0 0.0
    %7087 = vmatpush1.msra.mxu0 0.0
    %7088 = vmatprep.subr.mxu0 0.0
    %7089 = vmatpush1.msra.mxu0 0.0
    %7090 = vmatprep.subr.mxu0 0.0
    %7091 = vmatpush1.msra.mxu0 0.0
    %7092 = vmatprep.subr.mxu0 0.0
    %7093 = vmatpush1.msra.mxu0 0.0
    %7094 = vmatprep.subr.mxu0 0.0
    %7095 = vmatpush1.msra.mxu0 0.0
    %7096 = vmatprep.subr.mxu0 0.0
    %7097 = vmatpush1.msra.mxu0 0.0
    %7098 = vmatprep.mubr.f32.mxu0 0.0
    %v7099 = vand.u32 %v6933, 4294901760
    %7100 = vmatmul.mubr.f32.gmra.mrb[0].mxu0 %v7099
    %v7101 = vpop.f32.mrb[0].mxu0
    %v7102 = vadd.f32 %v7011, %v7101
    %v7103 = vpop.f32.mrb[0].mxu0
    %7104 = vdwg.mxu0
    %7105 = vmatprep.subr.mxu0 0.0
    %v7106 = vand.u32 %v1237, 4294901760
    %v7107 = vsub.f32 %v1237, %v7106
    %7108 = vmatpush1.msra.mxu0 %v7107
    %7109 = vmatprep.subr.mxu0 0.0
    %v7110 = vand.u32 %v1238, 4294901760
    %v7111 = vsub.f32 %v1238, %v7110
    %7112 = vmatpush1.msra.mxu0 %v7111
    %7113 = vmatprep.subr.mxu0 0.0
    %v7114 = vand.u32 %v1239, 4294901760
    %v7115 = vsub.f32 %v1239, %v7114
    %7116 = vmatpush1.msra.mxu0 %v7115
    %7117 = vmatprep.subr.mxu0 0.0
    %v7118 = vand.u32 %v1240, 4294901760
    %v7119 = vsub.f32 %v1240, %v7118
    %7120 = vmatpush1.msra.mxu0 %v7119
    %7121 = vmatprep.subr.mxu0 0.0
    %7122 = vmatpush1.msra.mxu0 0.0
    %7123 = vmatprep.subr.mxu0 0.0
    %7124 = vmatpush1.msra.mxu0 0.0
    %7125 = vmatprep.subr.mxu0 0.0
    %7126 = vmatpush1.msra.mxu0 0.0
    %7127 = vmatprep.subr.mxu0 0.0
    %7128 = vmatpush1.msra.mxu0 0.0
    %7129 = vmatprep.subr.mxu0 0.0
    %7130 = vmatpush1.msra.mxu0 0.0
    %7131 = vmatprep.subr.mxu0 0.0
    %7132 = vmatpush1.msra.mxu0 0.0
    %7133 = vmatprep.subr.mxu0 0.0
    %7134 = vmatpush1.msra.mxu0 0.0
    %7135 = vmatprep.subr.mxu0 0.0
    %7136 = vmatpush1.msra.mxu0 0.0
    %7137 = vmatprep.subr.mxu0 0.0
    %7138 = vmatpush1.msra.mxu0 0.0
    %7139 = vmatprep.subr.mxu0 0.0
    %7140 = vmatpush1.msra.mxu0 0.0
    %7141 = vmatprep.subr.mxu0 0.0
    %7142 = vmatpush1.msra.mxu0 0.0
    %7143 = vmatprep.subr.mxu0 0.0
    %7144 = vmatpush1.msra.mxu0 0.0
    %7145 = vmatprep.subr.mxu0 0.0
    %7146 = vmatpush1.msra.mxu0 0.0
    %7147 = vmatprep.subr.mxu0 0.0
    %7148 = vmatpush1.msra.mxu0 0.0
    %7149 = vmatprep.subr.mxu0 0.0
    %7150 = vmatpush1.msra.mxu0 0.0
    %7151 = vmatprep.subr.mxu0 0.0
    %7152 = vmatpush1.msra.mxu0 0.0
    %7153 = vmatprep.subr.mxu0 0.0
    %7154 = vmatpush1.msra.mxu0 0.0
    %7155 = vmatprep.subr.mxu0 0.0
    %7156 = vmatpush1.msra.mxu0 0.0
    %7157 = vmatprep.subr.mxu0 0.0
    %7158 = vmatpush1.msra.mxu0 0.0
    %7159 = vmatprep.subr.mxu0 0.0
    %7160 = vmatpush1.msra.mxu0 0.0
    %7161 = vmatprep.subr.mxu0 0.0
    %7162 = vmatpush1.msra.mxu0 0.0
    %7163 = vmatprep.subr.mxu0 0.0
    %7164 = vmatpush1.msra.mxu0 0.0
    %7165 = vmatprep.subr.mxu0 0.0
    %7166 = vmatpush1.msra.mxu0 0.0
    %7167 = vmatprep.subr.mxu0 0.0
    %7168 = vmatpush1.msra.mxu0 0.0
    %7169 = vmatprep.subr.mxu0 0.0
    %7170 = vmatpush1.msra.mxu0 0.0
    %7171 = vmatprep.subr.mxu0 0.0
    %7172 = vmatpush1.msra.mxu0 0.0
    %7173 = vmatprep.subr.mxu0 0.0
    %7174 = vmatpush1.msra.mxu0 0.0
    %7175 = vmatprep.subr.mxu0 0.0
    %7176 = vmatpush1.msra.mxu0 0.0
    %7177 = vmatprep.mubr.f32.mxu0 0.0
    %v7178 = vand.u32 %v6933, 4294901760
    %v7179 = vsub.f32 %v6933, %v7178
    %7180 = vmatmul.mubr.f32.gmra.mrb[0].mxu0 %v7179
    %v7181 = vpop.f32.mrb[0].mxu0
    %v7182 = vadd.f32 %v7102, %v7181
    %v7183 = vpop.f32.mrb[0].mxu0
    %7184 = vdwg.mxu0
    %7185 = vmatprep.subr.mxu0 0.0
    %v7186 = vand.u32 %v1237, 4294901760
    %7187 = vmatpush1.msra.mxu0 %v7186
    %7188 = vmatprep.subr.mxu0 0.0
    %v7189 = vand.u32 %v1238, 4294901760
    %7190 = vmatpush1.msra.mxu0 %v7189
    %7191 = vmatprep.subr.mxu0 0.0
    %v7192 = vand.u32 %v1239, 4294901760
    %7193 = vmatpush1.msra.mxu0 %v7192
    %7194 = vmatprep.subr.mxu0 0.0
    %v7195 = vand.u32 %v1240, 4294901760
    %7196 = vmatpush1.msra.mxu0 %v7195
    %7197 = vmatprep.subr.mxu0 0.0
    %7198 = vmatpush1.msra.mxu0 0.0
    %7199 = vmatprep.subr.mxu0 0.0
    %7200 = vmatpush1.msra.mxu0 0.0
    %7201 = vmatprep.subr.mxu0 0.0
    %7202 = vmatpush1.msra.mxu0 0.0
    %7203 = vmatprep.subr.mxu0 0.0
    %7204 = vmatpush1.msra.mxu0 0.0
    %7205 = vmatprep.subr.mxu0 0.0
    %7206 = vmatpush1.msra.mxu0 0.0
    %7207 = vmatprep.subr.mxu0 0.0
    %7208 = vmatpush1.msra.mxu0 0.0
    %7209 = vmatprep.subr.mxu0 0.0
    %7210 = vmatpush1.msra.mxu0 0.0
    %7211 = vmatprep.subr.mxu0 0.0
    %7212 = vmatpush1.msra.mxu0 0.0
    %7213 = vmatprep.subr.mxu0 0.0
    %7214 = vmatpush1.msra.mxu0 0.0
    %7215 = vmatprep.subr.mxu0 0.0
    %7216 = vmatpush1.msra.mxu0 0.0
    %7217 = vmatprep.subr.mxu0 0.0
    %7218 = vmatpush1.msra.mxu0 0.0
    %7219 = vmatprep.subr.mxu0 0.0
    %7220 = vmatpush1.msra.mxu0 0.0
    %7221 = vmatprep.subr.mxu0 0.0
    %7222 = vmatpush1.msra.mxu0 0.0
    %7223 = vmatprep.subr.mxu0 0.0
    %7224 = vmatpush1.msra.mxu0 0.0
    %7225 = vmatprep.subr.mxu0 0.0
    %7226 = vmatpush1.msra.mxu0 0.0
    %7227 = vmatprep.subr.mxu0 0.0
    %7228 = vmatpush1.msra.mxu0 0.0
    %7229 = vmatprep.subr.mxu0 0.0
    %7230 = vmatpush1.msra.mxu0 0.0
    %7231 = vmatprep.subr.mxu0 0.0
    %7232 = vmatpush1.msra.mxu0 0.0
    %7233 = vmatprep.subr.mxu0 0.0
    %7234 = vmatpush1.msra.mxu0 0.0
    %7235 = vmatprep.subr.mxu0 0.0
    %7236 = vmatpush1.msra.mxu0 0.0
    %7237 = vmatprep.subr.mxu0 0.0
    %7238 = vmatpush1.msra.mxu0 0.0
    %7239 = vmatprep.subr.mxu0 0.0
    %7240 = vmatpush1.msra.mxu0 0.0
    %7241 = vmatprep.subr.mxu0 0.0
    %7242 = vmatpush1.msra.mxu0 0.0
    %7243 = vmatprep.subr.mxu0 0.0
    %7244 = vmatpush1.msra.mxu0 0.0
    %7245 = vmatprep.subr.mxu0 0.0
    %7246 = vmatpush1.msra.mxu0 0.0
    %7247 = vmatprep.subr.mxu0 0.0
    %7248 = vmatpush1.msra.mxu0 0.0
    %7249 = vmatprep.subr.mxu0 0.0
    %7250 = vmatpush1.msra.mxu0 0.0
    %7251 = vmatprep.subr.mxu0 0.0
    %7252 = vmatpush1.msra.mxu0 0.0
    %7253 = vmatprep.mubr.f32.mxu0 0.0
    %v7254 = vand.u32 %v6933, 4294901760
    %v7255 = vsub.f32 %v6933, %v7254
    %v7256 = vand.u32 %v7255, 4294901760
    %7257 = vmatmul.mubr.f32.gmra.mrb[0].mxu0 %v7256
    %v7258 = vpop.f32.mrb[0].mxu0
    %v7259 = vadd.f32 %v7182, %v7258
    %v7260 = vpop.f32.mrb[0].mxu0
    %7261 = vdwg.mxu0
    %7262 = vmatprep.subr.mxu0 0.0
    %v7263 = vand.u32 %v1237, 4294901760
    %v7264 = vsub.f32 %v1237, %v7263
    %v7265 = vand.u32 %v7264, 4294901760
    %7266 = vmatpush1.msra.mxu0 %v7265
    %7267 = vmatprep.subr.mxu0 0.0
    %v7268 = vand.u32 %v1238, 4294901760
    %v7269 = vsub.f32 %v1238, %v7268
    %v7270 = vand.u32 %v7269, 4294901760
    %7271 = vmatpush1.msra.mxu0 %v7270
    %7272 = vmatprep.subr.mxu0 0.0
    %v7273 = vand.u32 %v1239, 4294901760
    %v7274 = vsub.f32 %v1239, %v7273
    %v7275 = vand.u32 %v7274, 4294901760
    %7276 = vmatpush1.msra.mxu0 %v7275
    %7277 = vmatprep.subr.mxu0 0.0
    %v7278 = vand.u32 %v1240, 4294901760
    %v7279 = vsub.f32 %v1240, %v7278
    %v7280 = vand.u32 %v7279, 4294901760
    %7281 = vmatpush1.msra.mxu0 %v7280
    %7282 = vmatprep.subr.mxu0 0.0
    %7283 = vmatpush1.msra.mxu0 0.0
    %7284 = vmatprep.subr.mxu0 0.0
    %7285 = vmatpush1.msra.mxu0 0.0
    %7286 = vmatprep.subr.mxu0 0.0
    %7287 = vmatpush1.msra.mxu0 0.0
    %7288 = vmatprep.subr.mxu0 0.0
    %7289 = vmatpush1.msra.mxu0 0.0
    %7290 = vmatprep.subr.mxu0 0.0
    %7291 = vmatpush1.msra.mxu0 0.0
    %7292 = vmatprep.subr.mxu0 0.0
    %7293 = vmatpush1.msra.mxu0 0.0
    %7294 = vmatprep.subr.mxu0 0.0
    %7295 = vmatpush1.msra.mxu0 0.0
    %7296 = vmatprep.subr.mxu0 0.0
    %7297 = vmatpush1.msra.mxu0 0.0
    %7298 = vmatprep.subr.mxu0 0.0
    %7299 = vmatpush1.msra.mxu0 0.0
    %7300 = vmatprep.subr.mxu0 0.0
    %7301 = vmatpush1.msra.mxu0 0.0
    %7302 = vmatprep.subr.mxu0 0.0
    %7303 = vmatpush1.msra.mxu0 0.0
    %7304 = vmatprep.subr.mxu0 0.0
    %7305 = vmatpush1.msra.mxu0 0.0
    %7306 = vmatprep.subr.mxu0 0.0
    %7307 = vmatpush1.msra.mxu0 0.0
    %7308 = vmatprep.subr.mxu0 0.0
    %7309 = vmatpush1.msra.mxu0 0.0
    %7310 = vmatprep.subr.mxu0 0.0
    %7311 = vmatpush1.msra.mxu0 0.0
    %7312 = vmatprep.subr.mxu0 0.0
    %7313 = vmatpush1.msra.mxu0 0.0
    %7314 = vmatprep.subr.mxu0 0.0
    %7315 = vmatpush1.msra.mxu0 0.0
    %7316 = vmatprep.subr.mxu0 0.0
    %7317 = vmatpush1.msra.mxu0 0.0
    %7318 = vmatprep.subr.mxu0 0.0
    %7319 = vmatpush1.msra.mxu0 0.0
    %7320 = vmatprep.subr.mxu0 0.0
    %7321 = vmatpush1.msra.mxu0 0.0
    %7322 = vmatprep.subr.mxu0 0.0
    %7323 = vmatpush1.msra.mxu0 0.0
    %7324 = vmatprep.subr.mxu0 0.0
    %7325 = vmatpush1.msra.mxu0 0.0
    %7326 = vmatprep.subr.mxu0 0.0
    %7327 = vmatpush1.msra.mxu0 0.0
    %7328 = vmatprep.subr.mxu0 0.0
    %7329 = vmatpush1.msra.mxu0 0.0
    %7330 = vmatprep.subr.mxu0 0.0
    %7331 = vmatpush1.msra.mxu0 0.0
    %7332 = vmatprep.subr.mxu0 0.0
    %7333 = vmatpush1.msra.mxu0 0.0
    %7334 = vmatprep.subr.mxu0 0.0
    %7335 = vmatpush1.msra.mxu0 0.0
    %7336 = vmatprep.subr.mxu0 0.0
    %7337 = vmatpush1.msra.mxu0 0.0
    %7338 = vmatprep.mubr.f32.mxu0 0.0
    %v7339 = vand.u32 %v6933, 4294901760
    %7340 = vmatmul.mubr.f32.gmra.mrb[0].mxu0 %v7339
    %v7341 = vpop.f32.mrb[0].mxu0
    %v7342 = vadd.f32 %v7259, %v7341
    %v7343 = vpop.f32.mrb[0].mxu0
    %7344 = vdwg.mxu0
    %7345 = vmatprep.subr.mxu0 0.0
    %v7346 = vand.u32 %v1237, 4294901760
    %7347 = vmatpush1.msra.mxu0 %v7346
    %7348 = vmatprep.subr.mxu0 0.0
    %v7349 = vand.u32 %v1238, 4294901760
    %7350 = vmatpush1.msra.mxu0 %v7349
    %7351 = vmatprep.subr.mxu0 0.0
    %v7352 = vand.u32 %v1239, 4294901760
    %7353 = vmatpush1.msra.mxu0 %v7352
    %7354 = vmatprep.subr.mxu0 0.0
    %v7355 = vand.u32 %v1240, 4294901760
    %7356 = vmatpush1.msra.mxu0 %v7355
    %7357 = vmatprep.subr.mxu0 0.0
    %7358 = vmatpush1.msra.mxu0 0.0
    %7359 = vmatprep.subr.mxu0 0.0
    %7360 = vmatpush1.msra.mxu0 0.0
    %7361 = vmatprep.subr.mxu0 0.0
    %7362 = vmatpush1.msra.mxu0 0.0
    %7363 = vmatprep.subr.mxu0 0.0
    %7364 = vmatpush1.msra.mxu0 0.0
    %7365 = vmatprep.subr.mxu0 0.0
    %7366 = vmatpush1.msra.mxu0 0.0
    %7367 = vmatprep.subr.mxu0 0.0
    %7368 = vmatpush1.msra.mxu0 0.0
    %7369 = vmatprep.subr.mxu0 0.0
    %7370 = vmatpush1.msra.mxu0 0.0
    %7371 = vmatprep.subr.mxu0 0.0
    %7372 = vmatpush1.msra.mxu0 0.0
    %7373 = vmatprep.subr.mxu0 0.0
    %7374 = vmatpush1.msra.mxu0 0.0
    %7375 = vmatprep.subr.mxu0 0.0
    %7376 = vmatpush1.msra.mxu0 0.0
    %7377 = vmatprep.subr.mxu0 0.0
    %7378 = vmatpush1.msra.mxu0 0.0
    %7379 = vmatprep.subr.mxu0 0.0
    %7380 = vmatpush1.msra.mxu0 0.0
    %7381 = vmatprep.subr.mxu0 0.0
    %7382 = vmatpush1.msra.mxu0 0.0
    %7383 = vmatprep.subr.mxu0 0.0
    %7384 = vmatpush1.msra.mxu0 0.0
    %7385 = vmatprep.subr.mxu0 0.0
    %7386 = vmatpush1.msra.mxu0 0.0
    %7387 = vmatprep.subr.mxu0 0.0
    %7388 = vmatpush1.msra.mxu0 0.0
    %7389 = vmatprep.subr.mxu0 0.0
    %7390 = vmatpush1.msra.mxu0 0.0
    %7391 = vmatprep.subr.mxu0 0.0
    %7392 = vmatpush1.msra.mxu0 0.0
    %7393 = vmatprep.subr.mxu0 0.0
    %7394 = vmatpush1.msra.mxu0 0.0
    %7395 = vmatprep.subr.mxu0 0.0
    %7396 = vmatpush1.msra.mxu0 0.0
    %7397 = vmatprep.subr.mxu0 0.0
    %7398 = vmatpush1.msra.mxu0 0.0
    %7399 = vmatprep.subr.mxu0 0.0
    %7400 = vmatpush1.msra.mxu0 0.0
    %7401 = vmatprep.subr.mxu0 0.0
    %7402 = vmatpush1.msra.mxu0 0.0
    %7403 = vmatprep.subr.mxu0 0.0
    %7404 = vmatpush1.msra.mxu0 0.0
    %7405 = vmatprep.subr.mxu0 0.0
    %7406 = vmatpush1.msra.mxu0 0.0
    %7407 = vmatprep.subr.mxu0 0.0
    %7408 = vmatpush1.msra.mxu0 0.0
    %7409 = vmatprep.subr.mxu0 0.0
    %7410 = vmatpush1.msra.mxu0 0.0
    %7411 = vmatprep.subr.mxu0 0.0
    %7412 = vmatpush1.msra.mxu0 0.0
    %7413 = vmatprep.mubr.f32.mxu0 0.0
    %v7414 = vand.u32 %v6933, 4294901760
    %7415 = vmatmul.mubr.f32.gmra.mrb[0].mxu0 %v7414
    %v7416 = vpop.f32.mrb[0].mxu0
    %v7417 = vadd.f32 %v7342, %v7416
    %v7418 = vpop.f32.mrb[0].mxu0
    %7419 = vdwg.mxu0
    %v7420 = vadd.f32 %v1224, %v7417
    %v7421 = vxor.u32 %v6928, 2147483648
    %v7422 = vmul.f32 %v7421, 1.442695
    %v7423 = vpow.pop %v7422
    %v7424 = vadd.f32 %v7423, 1.0
    %v7425 = vrcp.pop %v7424
    %v7426 = vmul.f32 1.0, %v7425
    %v7427 = vtanh.pop %v6928
    %v7429 = vrot.slane %v6401, 6
    %v7431 = vmul.f32 %v7426, %v7429
    %7433 = vrot.lane.b32.xlu0 %v7427, 64
    %v7434 = vpop.permute.xlu0 %7433
    %v7436 = vmul.f32 %v7426, %v7434
    %7438 = vrot.lane.b32.xlu0 %v7436, 32
    %v7439 = vpop.permute.xlu0 %7438
    %v7441 = vadd.f32 %v7431, %v7439
    %v7442 = vtanh.pop %v7441
    %7444 = vrot.lane.b32.xlu0 %v7442, 64
    %v7445 = vpop.permute.xlu0 %7444
    %v7447 = vmul.f32 %v7426, %v7445
    %v7448 = vxor.u32 %v7420, 2147483648
    %v7449 = vmul.f32 %v7448, 1.442695
    %v7450 = vpow.pop %v7449
    %v7451 = vadd.f32 %v7450, 1.0
    %v7452 = vrcp.pop %v7451
    %v7453 = vmul.f32 1.0, %v7452
    %v7454 = vtanh.pop %v7420
    %v7456 = vrot.slane %v6428, 2
    %v7458 = vmul.f32 %v7453, %v7456
    %7460 = vrot.lane.b32.xlu0 %v7454, 64
    %v7461 = vpop.permute.xlu0 %7460
    %v7463 = vmul.f32 %v7453, %v7461
    %7465 = vrot.lane.b32.xlu0 %v7463, 32
    %v7466 = vpop.permute.xlu0 %7465
    %v7468 = vadd.f32 %v7458, %v7466
    %v7469 = vtanh.pop %v7468
    %7471 = vrot.lane.b32.xlu0 %v7469, 64
    %v7472 = vpop.permute.xlu0 %7471
    %v7474 = vmul.f32 %v7453, %v7472
    %v7475 = vlaneseq
    %v7476 = vshrl.u32 %v7475, 7
    %vm7477 = vcmp.eq.s32.totalorder %v7476, 0
    %v7478 = vsel %vm7477, 1, 0
    %vm7479 = vcmp.eq.s32.totalorder %v7478, 1
    %v7480 = vlaneseq
    %v7481 = vshrl.u32 %v7480, 7
    %v7482 = vsub.s32 2, %v7481
    %v7483 = vrot.slane %v7447, %v7482
    %v7484 = vsel %vm7479, %v7483, 0.0
    %v7485 = vadd.f32 %v7484, 0.0
    %v7486 = vlaneseq
    %v7487 = vshrl.u32 %v7486, 7
    %v7488 = vsub.s32 3, %v7487
    %v7489 = vrot.slane %v7447, %v7488
    %v7490 = vsel %vm7479, %v7489, 0.0
    %v7491 = vadd.f32 %v7490, 0.0
    %vm7492 = vcmp.eq.s32.totalorder %v7476, 1
    %v7493 = vsel %vm7492, 1, 0
    %vm7494 = vcmp.eq.s32.totalorder %v7493, 1
    %v7495 = vlaneseq
    %v7496 = vshrl.u32 %v7495, 7
    %v7497 = vsub.s32 0, %v7496
    %v7498 = vrot.slane %v7474, %v7497
    %v7499 = vsel %vm7494, %v7498, 0.0
    %v7500 = vadd.f32 %v7485, %v7499
    %v7501 = vlaneseq
    %v7502 = vshrl.u32 %v7501, 7
    %v7503 = vsub.s32 1, %v7502
    %v7504 = vrot.slane %v7474, %v7503
    %v7505 = vsel %vm7494, %v7504, 0.0
    %v7506 = vadd.f32 %v7491, %v7505
    %v7507 = vmul.f32 %v2242, %v7500
    %7509 = vrot.lane.b32.xlu0 %v7507, 32
    %v7510 = vpop.permute.xlu0 %7509
    %vm7512 = vcmask 254976
    %v7513 = vsel %vm7512, %v7510, 0.0
    %7514 = vadd.xlane.f32.xlu0 %v7513
    %v7515 = vpop.xlane.xlu0 %7514
    %v7516 = vmul.f32 %v7474, %v7506
    %7518 = vrot.lane.b32.xlu0 %v7516, 32
    %v7519 = vpop.permute.xlu0 %7518
    %v7521 = vsel %vm7512, %v7519, 0.0
    %7522 = vadd.xlane.f32.xlu0 %v7521
    %v7523 = vpop.xlane.xlu0 %7522
    %v7524 = vadd.f32 %v7515, %v7523
    %v7526 = vrot.slane %v7500, 6
    %v7528 = vmul.f32 %v3279, %v7526
    %7530 = vrot.lane.b32.xlu0 %v7528, 32
    %v7531 = vpop.permute.xlu0 %7530
    %vm7533 = vcmask 257026
    %v7534 = vsel %vm7533, %v7531, 0.0
    %7535 = vadd.xlane.f32.xlu0 %v7534
    %v7536 = vpop.xlane.xlu0 %7535
    %v7538 = vrot.slane %v7506, 6
    %v7540 = vmul.f32 %v6434, %v7538
    %7542 = vrot.lane.b32.xlu0 %v7540, 32
    %v7543 = vpop.permute.xlu0 %7542
    %v7545 = vsel %vm7533, %v7543, 0.0
    %7546 = vadd.xlane.f32.xlu0 %v7545
    %v7547 = vpop.xlane.xlu0 %7546
    %v7548 = vadd.f32 %v7536, %v7547
    %v7549 = vrot.slane %v7500, 4
    %v7551 = vmul.f32 %v4322, %v7549
    %7553 = vrot.lane.b32.xlu0 %v7551, 32
    %v7554 = vpop.permute.xlu0 %7553
    %vm7556 = vcmask 259076
    %v7557 = vsel %vm7556, %v7554, 0.0
    %7558 = vadd.xlane.f32.xlu0 %v7557
    %v7559 = vpop.xlane.xlu0 %7558
    %v7560 = vrot.slane %v7506, 4
    %v7562 = vmul.f32 %v5393, %v7560
    %7564 = vrot.lane.b32.xlu0 %v7562, 32
    %v7565 = vpop.permute.xlu0 %7564
    %v7567 = vsel %vm7556, %v7565, 0.0
    %7568 = vadd.xlane.f32.xlu0 %v7567
    %v7569 = vpop.xlane.xlu0 %7568
    %v7570 = vadd.f32 %v7559, %v7569
    %v7571 = vrot.slane %v7500, 2
    %v7573 = vmul.f32 %v5366, %v7571
    %7575 = vrot.lane.b32.xlu0 %v7573, 32
    %v7576 = vpop.permute.xlu0 %7575
    %vm7578 = vcmask 261126
    %v7579 = vsel %vm7578, %v7576, 0.0
    %7580 = vadd.xlane.f32.xlu0 %v7579
    %v7581 = vpop.xlane.xlu0 %7580
    %v7582 = vrot.slane %v7506, 2
    %v7584 = vmul.f32 %v4349, %v7582
    %7586 = vrot.lane.b32.xlu0 %v7584, 32
    %v7587 = vpop.permute.xlu0 %7586
    %v7589 = vsel %vm7578, %v7587, 0.0
    %7590 = vadd.xlane.f32.xlu0 %v7589
    %v7591 = vpop.xlane.xlu0 %7590
    %v7592 = vadd.f32 %v7581, %v7591
    %v7593 = vmul.f32 %v6407, %v7500
    %7595 = vrot.lane.b32.xlu0 %v7593, 32
    %v7596 = vpop.permute.xlu0 %7595
    %v7598 = vsel %vm7512, %v7596, 0.0
    %7599 = vadd.xlane.f32.xlu0 %v7598
    %v7600 = vpop.xlane.xlu0 %7599
    %v7601 = vmul.f32 %v3306, %v7506
    %7603 = vrot.lane.b32.xlu0 %v7601, 32
    %v7604 = vpop.permute.xlu0 %7603
    %v7606 = vsel %vm7512, %v7604, 0.0
    %7607 = vadd.xlane.f32.xlu0 %v7606
    %v7608 = vpop.xlane.xlu0 %7607
    %v7609 = vadd.f32 %v7600, %v7608
    %v7610 = vmul.f32 %v7447, %v7526
    %7612 = vrot.lane.b32.xlu0 %v7610, 32
    %v7613 = vpop.permute.xlu0 %7612
    %v7615 = vsel %vm7533, %v7613, 0.0
    %7616 = vadd.xlane.f32.xlu0 %v7615
    %v7617 = vpop.xlane.xlu0 %7616
    %v7618 = vmul.f32 %v2266, %v7538
    %7620 = vrot.lane.b32.xlu0 %v7618, 32
    %v7621 = vpop.permute.xlu0 %7620
    %v7623 = vsel %vm7533, %v7621, 0.0
    %7624 = vadd.xlane.f32.xlu0 %v7623
    %v7625 = vpop.xlane.xlu0 %7624
    %v7626 = vadd.f32 %v7617, %v7625
    %v7628 = vrot.slane %v7548, 2
    %v7630 = vmax.f32 %v7524, %v7628
    %v7632 = vrot.slane %v7570, 4
    %v7634 = vmax.f32 %v7630, %v7632
    %v7636 = vrot.slane %v7592, 6
    %v7638 = vmax.f32 %v7634, %v7636
    %v7639 = vmax.f32 %v7638, %v7609
    %v7641 = vrot.slane %v7626, 2
    %v7643 = vmax.f32 %v7639, %v7641
    %v7644 = vsub.f32 %v7524, %v7643
    %v7645 = vmul.f32 %v7644, 1.442695
    %v7646 = vpow.pop %v7645
    %v7648 = vrot.slane %v7643, 6
    %v7650 = vsub.f32 %v7548, %v7648
    %v7651 = vmul.f32 %v7650, 1.442695
    %v7652 = vpow.pop %v7651
    %v7653 = vrot.slane %v7643, 4
    %v7655 = vsub.f32 %v7570, %v7653
    %v7656 = vmul.f32 %v7655, 1.442695
    %v7657 = vpow.pop %v7656
    %v7658 = vrot.slane %v7643, 2
    %v7660 = vsub.f32 %v7592, %v7658
    %v7661 = vmul.f32 %v7660, 1.442695
    %v7662 = vpow.pop %v7661
    %v7663 = vsub.f32 %v7609, %v7643
    %v7664 = vmul.f32 %v7663, 1.442695
    %v7665 = vpow.pop %v7664
    %v7666 = vsub.f32 %v7626, %v7648
    %v7667 = vmul.f32 %v7666, 1.442695
    %v7668 = vpow.pop %v7667
    %v7670 = vrot.slane %v7652, 2
    %v7672 = vadd.f32 %v7646, %v7670
    %v7674 = vrot.slane %v7657, 4
    %v7676 = vadd.f32 %v7672, %v7674
    %v7678 = vrot.slane %v7662, 6
    %v7680 = vadd.f32 %v7676, %v7678
    %v7681 = vadd.f32 %v7680, %v7665
    %v7683 = vrot.slane %v7668, 2
    %v7685 = vadd.f32 %v7681, %v7683
    %v7686 = vrcp.pop %v7685
    %v7687 = vmul.f32 1.0, %v7686
    %v7688 = vmul.f32 %v7646, %v7687
    %v7690 = vrot.slane %v7687, 6
    %v7692 = vmul.f32 %v7652, %v7690
    %v7693 = vrot.slane %v7687, 4
    %v7695 = vmul.f32 %v7657, %v7693
    %v7696 = vrot.slane %v7687, 2
    %v7698 = vmul.f32 %v7662, %v7696
    %v7699 = vmul.f32 %v7665, %v7687
    %v7700 = vmul.f32 %v7668, %v7690
    %7702 = vset.pattern.permute.xlu0 0
    %7703 = vperm.xlu0 %7702, %v7688
    %v7704 = vpop.permute.xlu0 %7703
    %v7706 = vmul.f32 %v7704, %v2242
    %v7707 = vmul.f32 %v7704, %v7474
    %7709 = vset.pattern.permute.xlu0 0
    %7710 = vperm.xlu0 %7709, %v7692
    %v7711 = vpop.permute.xlu0 %7710
    %v7713 = vmul.f32 %v7711, %v3279
    %v7715 = vrot.slane %v7713, 2
    %v7717 = vadd.f32 %v7706, %v7715
    %v7718 = vmul.f32 %v7711, %v6434
    %v7720 = vrot.slane %v7718, 2
    %v7722 = vadd.f32 %v7707, %v7720
    %7724 = vset.pattern.permute.xlu0 0
    %7725 = vperm.xlu0 %7724, %v7695
    %v7726 = vpop.permute.xlu0 %7725
    %v7728 = vmul.f32 %v7726, %v4322
    %v7730 = vrot.slane %v7728, 4
    %v7732 = vadd.f32 %v7717, %v7730
    %v7733 = vmul.f32 %v7726, %v5393
    %v7735 = vrot.slane %v7733, 4
    %v7737 = vadd.f32 %v7722, %v7735
    %7739 = vset.pattern.permute.xlu0 0
    %7740 = vperm.xlu0 %7739, %v7698
    %v7741 = vpop.permute.xlu0 %7740
    %v7743 = vmul.f32 %v7741, %v5366
    %v7745 = vrot.slane %v7743, 6
    %v7747 = vadd.f32 %v7732, %v7745
    %v7748 = vmul.f32 %v7741, %v4349
    %v7750 = vrot.slane %v7748, 6
    %v7752 = vadd.f32 %v7737, %v7750
    %7754 = vset.pattern.permute.xlu0 0
    %7755 = vperm.xlu0 %7754, %v7699
    %v7756 = vpop.permute.xlu0 %7755
    %v7758 = vmul.f32 %v7756, %v6407
    %v7759 = vadd.f32 %v7747, %v7758
    %v7760 = vmul.f32 %v7756, %v3306
    %v7761 = vadd.f32 %v7752, %v7760
    %7763 = vset.pattern.permute.xlu0 0
    %7764 = vperm.xlu0 %7763, %v7700
    %v7765 = vpop.permute.xlu0 %7764
    %v7767 = vmul.f32 %v7765, %v7447
    %v7769 = vrot.slane %v7767, 2
    %v7771 = vadd.f32 %v7759, %v7769
    %v7772 = vmul.f32 %v7765, %v2266
    %v7774 = vrot.slane %v7772, 2
    %v7776 = vadd.f32 %v7761, %v7774
    %v7777 = vld [vmem:[%s7] sm:$0xff]
    %v7778 = vld [vmem:[%s7 + $0x8] sm:$0xff]
    %v7779 = vld [vmem:[%s7 + $0x10] sm:$0xff]
    %v7780 = vld [vmem:[%s7 + $0x18] sm:$0xff]
    %v7781 = vld [vmem:[%s7 + $0x20] sm:$0xff]
    %v7782 = vld [vmem:[%s7 + $0x28] sm:$0xff]
    %v7783 = vld [vmem:[%s7 + $0x30] sm:$0xff]
    %v7784 = vld [vmem:[%s7 + $0x38] sm:$0xff]
    %7786 = vrot.lane.b32.xlu0 %v7776, 32
    %v7787 = vpop.permute.xlu0 %7786
    %v7788 = vsel %vm634, %v7787, 0
    %7790 = vmatprep.subr.mxu0 0.0
    %v7791 = vand.u32 %v7781, 4294901760
    %7792 = vmatpush1.msra.mxu0 %v7791
    %7793 = vmatprep.subr.mxu0 0.0
    %v7794 = vand.u32 %v7782, 4294901760
    %7795 = vmatpush1.msra.mxu0 %v7794
    %7796 = vmatprep.subr.mxu0 0.0
    %v7797 = vand.u32 %v7783, 4294901760
    %7798 = vmatpush1.msra.mxu0 %v7797
    %7799 = vmatprep.subr.mxu0 0.0
    %v7800 = vand.u32 %v7784, 4294901760
    %7801 = vmatpush1.msra.mxu0 %v7800
    %7802 = vmatprep.subr.mxu0 0.0
    %7803 = vmatpush1.msra.mxu0 0.0
    %7804 = vmatprep.subr.mxu0 0.0
    %7805 = vmatpush1.msra.mxu0 0.0
    %7806 = vmatprep.subr.mxu0 0.0
    %7807 = vmatpush1.msra.mxu0 0.0
    %7808 = vmatprep.subr.mxu0 0.0
    %7809 = vmatpush1.msra.mxu0 0.0
    %7810 = vmatprep.subr.mxu0 0.0
    %7811 = vmatpush1.msra.mxu0 0.0
    %7812 = vmatprep.subr.mxu0 0.0
    %7813 = vmatpush1.msra.mxu0 0.0
    %7814 = vmatprep.subr.mxu0 0.0
    %7815 = vmatpush1.msra.mxu0 0.0
    %7816 = vmatprep.subr.mxu0 0.0
    %7817 = vmatpush1.msra.mxu0 0.0
    %7818 = vmatprep.subr.mxu0 0.0
    %7819 = vmatpush1.msra.mxu0 0.0
    %7820 = vmatprep.subr.mxu0 0.0
    %7821 = vmatpush1.msra.mxu0 0.0
    %7822 = vmatprep.subr.mxu0 0.0
    %7823 = vmatpush1.msra.mxu0 0.0
    %7824 = vmatprep.subr.mxu0 0.0
    %7825 = vmatpush1.msra.mxu0 0.0
    %7826 = vmatprep.subr.mxu0 0.0
    %7827 = vmatpush1.msra.mxu0 0.0
    %7828 = vmatprep.subr.mxu0 0.0
    %7829 = vmatpush1.msra.mxu0 0.0
    %7830 = vmatprep.subr.mxu0 0.0
    %7831 = vmatpush1.msra.mxu0 0.0
    %7832 = vmatprep.subr.mxu0 0.0
    %7833 = vmatpush1.msra.mxu0 0.0
    %7834 = vmatprep.subr.mxu0 0.0
    %7835 = vmatpush1.msra.mxu0 0.0
    %7836 = vmatprep.subr.mxu0 0.0
    %7837 = vmatpush1.msra.mxu0 0.0
    %7838 = vmatprep.subr.mxu0 0.0
    %7839 = vmatpush1.msra.mxu0 0.0
    %7840 = vmatprep.subr.mxu0 0.0
    %7841 = vmatpush1.msra.mxu0 0.0
    %7842 = vmatprep.subr.mxu0 0.0
    %7843 = vmatpush1.msra.mxu0 0.0
    %7844 = vmatprep.subr.mxu0 0.0
    %7845 = vmatpush1.msra.mxu0 0.0
    %7846 = vmatprep.subr.mxu0 0.0
    %7847 = vmatpush1.msra.mxu0 0.0
    %7848 = vmatprep.subr.mxu0 0.0
    %7849 = vmatpush1.msra.mxu0 0.0
    %7850 = vmatprep.subr.mxu0 0.0
    %7851 = vmatpush1.msra.mxu0 0.0
    %7852 = vmatprep.subr.mxu0 0.0
    %7853 = vmatpush1.msra.mxu0 0.0
    %7854 = vmatprep.subr.mxu0 0.0
    %7855 = vmatpush1.msra.mxu0 0.0
    %7856 = vmatprep.subr.mxu0 0.0
    %7857 = vmatpush1.msra.mxu0 0.0
    %7858 = vmatprep.mubr.f32.mxu0 0.0
    %v7859 = vand.u32 %v7788, 4294901760
    %v7860 = vsub.f32 %v7788, %v7859
    %v7861 = vand.u32 %v7860, 4294901760
    %v7862 = vsub.f32 %v7860, %v7861
    %v7863 = vand.u32 %v7862, 4294901760
    %7864 = vmatmul.mubr.f32.gmra.mrb[0].mxu0 %v7863
    %v7865 = vpop.f32.mrb[0].mxu0
    %v7866 = vadd.f32 0.0, %v7865
    %v7867 = vpop.f32.mrb[0].mxu0
    %7868 = vdwg.mxu0
    %7869 = vmatprep.subr.mxu0 0.0
    %v7870 = vand.u32 %v7781, 4294901760
    %v7871 = vsub.f32 %v7781, %v7870
    %v7872 = vand.u32 %v7871, 4294901760
    %v7873 = vsub.f32 %v7871, %v7872
    %v7874 = vand.u32 %v7873, 4294901760
    %7875 = vmatpush1.msra.mxu0 %v7874
    %7876 = vmatprep.subr.mxu0 0.0
    %v7877 = vand.u32 %v7782, 4294901760
    %v7878 = vsub.f32 %v7782, %v7877
    %v7879 = vand.u32 %v7878, 4294901760
    %v7880 = vsub.f32 %v7878, %v7879
    %v7881 = vand.u32 %v7880, 4294901760
    %7882 = vmatpush1.msra.mxu0 %v7881
    %7883 = vmatprep.subr.mxu0 0.0
    %v7884 = vand.u32 %v7783, 4294901760
    %v7885 = vsub.f32 %v7783, %v7884
    %v7886 = vand.u32 %v7885, 4294901760
    %v7887 = vsub.f32 %v7885, %v7886
    %v7888 = vand.u32 %v7887, 4294901760
    %7889 = vmatpush1.msra.mxu0 %v7888
    %7890 = vmatprep.subr.mxu0 0.0
    %v7891 = vand.u32 %v7784, 4294901760
    %v7892 = vsub.f32 %v7784, %v7891
    %v7893 = vand.u32 %v7892, 4294901760
    %v7894 = vsub.f32 %v7892, %v7893
    %v7895 = vand.u32 %v7894, 4294901760
    %7896 = vmatpush1.msra.mxu0 %v7895
    %7897 = vmatprep.subr.mxu0 0.0
    %7898 = vmatpush1.msra.mxu0 0.0
    %7899 = vmatprep.subr.mxu0 0.0
    %7900 = vmatpush1.msra.mxu0 0.0
    %7901 = vmatprep.subr.mxu0 0.0
    %7902 = vmatpush1.msra.mxu0 0.0
    %7903 = vmatprep.subr.mxu0 0.0
    %7904 = vmatpush1.msra.mxu0 0.0
    %7905 = vmatprep.subr.mxu0 0.0
    %7906 = vmatpush1.msra.mxu0 0.0
    %7907 = vmatprep.subr.mxu0 0.0
    %7908 = vmatpush1.msra.mxu0 0.0
    %7909 = vmatprep.subr.mxu0 0.0
    %7910 = vmatpush1.msra.mxu0 0.0
    %7911 = vmatprep.subr.mxu0 0.0
    %7912 = vmatpush1.msra.mxu0 0.0
    %7913 = vmatprep.subr.mxu0 0.0
    %7914 = vmatpush1.msra.mxu0 0.0
    %7915 = vmatprep.subr.mxu0 0.0
    %7916 = vmatpush1.msra.mxu0 0.0
    %7917 = vmatprep.subr.mxu0 0.0
    %7918 = vmatpush1.msra.mxu0 0.0
    %7919 = vmatprep.subr.mxu0 0.0
    %7920 = vmatpush1.msra.mxu0 0.0
    %7921 = vmatprep.subr.mxu0 0.0
    %7922 = vmatpush1.msra.mxu0 0.0
    %7923 = vmatprep.subr.mxu0 0.0
    %7924 = vmatpush1.msra.mxu0 0.0
    %7925 = vmatprep.subr.mxu0 0.0
    %7926 = vmatpush1.msra.mxu0 0.0
    %7927 = vmatprep.subr.mxu0 0.0
    %7928 = vmatpush1.msra.mxu0 0.0
    %7929 = vmatprep.subr.mxu0 0.0
    %7930 = vmatpush1.msra.mxu0 0.0
    %7931 = vmatprep.subr.mxu0 0.0
    %7932 = vmatpush1.msra.mxu0 0.0
    %7933 = vmatprep.subr.mxu0 0.0
    %7934 = vmatpush1.msra.mxu0 0.0
    %7935 = vmatprep.subr.mxu0 0.0
    %7936 = vmatpush1.msra.mxu0 0.0
    %7937 = vmatprep.subr.mxu0 0.0
    %7938 = vmatpush1.msra.mxu0 0.0
    %7939 = vmatprep.subr.mxu0 0.0
    %7940 = vmatpush1.msra.mxu0 0.0
    %7941 = vmatprep.subr.mxu0 0.0
    %7942 = vmatpush1.msra.mxu0 0.0
    %7943 = vmatprep.subr.mxu0 0.0
    %7944 = vmatpush1.msra.mxu0 0.0
    %7945 = vmatprep.subr.mxu0 0.0
    %7946 = vmatpush1.msra.mxu0 0.0
    %7947 = vmatprep.subr.mxu0 0.0
    %7948 = vmatpush1.msra.mxu0 0.0
    %7949 = vmatprep.subr.mxu0 0.0
    %7950 = vmatpush1.msra.mxu0 0.0
    %7951 = vmatprep.subr.mxu0 0.0
    %7952 = vmatpush1.msra.mxu0 0.0
    %7953 = vmatprep.mubr.f32.mxu0 0.0
    %v7954 = vand.u32 %v7788, 4294901760
    %7955 = vmatmul.mubr.f32.gmra.mrb[0].mxu0 %v7954
    %v7956 = vpop.f32.mrb[0].mxu0
    %v7957 = vadd.f32 %v7866, %v7956
    %v7958 = vpop.f32.mrb[0].mxu0
    %7959 = vdwg.mxu0
    %7960 = vmatprep.subr.mxu0 0.0
    %v7961 = vand.u32 %v7781, 4294901760
    %v7962 = vsub.f32 %v7781, %v7961
    %7963 = vmatpush1.msra.mxu0 %v7962
    %7964 = vmatprep.subr.mxu0 0.0
    %v7965 = vand.u32 %v7782, 4294901760
    %v7966 = vsub.f32 %v7782, %v7965
    %7967 = vmatpush1.msra.mxu0 %v7966
    %7968 = vmatprep.subr.mxu0 0.0
    %v7969 = vand.u32 %v7783, 4294901760
    %v7970 = vsub.f32 %v7783, %v7969
    %7971 = vmatpush1.msra.mxu0 %v7970
    %7972 = vmatprep.subr.mxu0 0.0
    %v7973 = vand.u32 %v7784, 4294901760
    %v7974 = vsub.f32 %v7784, %v7973
    %7975 = vmatpush1.msra.mxu0 %v7974
    %7976 = vmatprep.subr.mxu0 0.0
    %7977 = vmatpush1.msra.mxu0 0.0
    %7978 = vmatprep.subr.mxu0 0.0
    %7979 = vmatpush1.msra.mxu0 0.0
    %7980 = vmatprep.subr.mxu0 0.0
    %7981 = vmatpush1.msra.mxu0 0.0
    %7982 = vmatprep.subr.mxu0 0.0
    %7983 = vmatpush1.msra.mxu0 0.0
    %7984 = vmatprep.subr.mxu0 0.0
    %7985 = vmatpush1.msra.mxu0 0.0
    %7986 = vmatprep.subr.mxu0 0.0
    %7987 = vmatpush1.msra.mxu0 0.0
    %7988 = vmatprep.subr.mxu0 0.0
    %7989 = vmatpush1.msra.mxu0 0.0
    %7990 = vmatprep.subr.mxu0 0.0
    %7991 = vmatpush1.msra.mxu0 0.0
    %7992 = vmatprep.subr.mxu0 0.0
    %7993 = vmatpush1.msra.mxu0 0.0
    %7994 = vmatprep.subr.mxu0 0.0
    %7995 = vmatpush1.msra.mxu0 0.0
    %7996 = vmatprep.subr.mxu0 0.0
    %7997 = vmatpush1.msra.mxu0 0.0
    %7998 = vmatprep.subr.mxu0 0.0
    %7999 = vmatpush1.msra.mxu0 0.0
    %8000 = vmatprep.subr.mxu0 0.0
    %8001 = vmatpush1.msra.mxu0 0.0
    %8002 = vmatprep.subr.mxu0 0.0
    %8003 = vmatpush1.msra.mxu0 0.0
    %8004 = vmatprep.subr.mxu0 0.0
    %8005 = vmatpush1.msra.mxu0 0.0
    %8006 = vmatprep.subr.mxu0 0.0
    %8007 = vmatpush1.msra.mxu0 0.0
    %8008 = vmatprep.subr.mxu0 0.0
    %8009 = vmatpush1.msra.mxu0 0.0
    %8010 = vmatprep.subr.mxu0 0.0
    %8011 = vmatpush1.msra.mxu0 0.0
    %8012 = vmatprep.subr.mxu0 0.0
    %8013 = vmatpush1.msra.mxu0 0.0
    %8014 = vmatprep.subr.mxu0 0.0
    %8015 = vmatpush1.msra.mxu0 0.0
    %8016 = vmatprep.subr.mxu0 0.0
    %8017 = vmatpush1.msra.mxu0 0.0
    %8018 = vmatprep.subr.mxu0 0.0
    %8019 = vmatpush1.msra.mxu0 0.0
    %8020 = vmatprep.subr.mxu0 0.0
    %8021 = vmatpush1.msra.mxu0 0.0
    %8022 = vmatprep.subr.mxu0 0.0
    %8023 = vmatpush1.msra.mxu0 0.0
    %8024 = vmatprep.subr.mxu0 0.0
    %8025 = vmatpush1.msra.mxu0 0.0
    %8026 = vmatprep.subr.mxu0 0.0
    %8027 = vmatpush1.msra.mxu0 0.0
    %8028 = vmatprep.subr.mxu0 0.0
    %8029 = vmatpush1.msra.mxu0 0.0
    %8030 = vmatprep.subr.mxu0 0.0
    %8031 = vmatpush1.msra.mxu0 0.0
    %8032 = vmatprep.mubr.f32.mxu0 0.0
    %v8033 = vand.u32 %v7788, 4294901760
    %v8034 = vsub.f32 %v7788, %v8033
    %8035 = vmatmul.mubr.f32.gmra.mrb[0].mxu0 %v8034
    %v8036 = vpop.f32.mrb[0].mxu0
    %v8037 = vadd.f32 %v7957, %v8036
    %v8038 = vpop.f32.mrb[0].mxu0
    %8039 = vdwg.mxu0
    %8040 = vmatprep.subr.mxu0 0.0
    %v8041 = vand.u32 %v7781, 4294901760
    %8042 = vmatpush1.msra.mxu0 %v8041
    %8043 = vmatprep.subr.mxu0 0.0
    %v8044 = vand.u32 %v7782, 4294901760
    %8045 = vmatpush1.msra.mxu0 %v8044
    %8046 = vmatprep.subr.mxu0 0.0
    %v8047 = vand.u32 %v7783, 4294901760
    %8048 = vmatpush1.msra.mxu0 %v8047
    %8049 = vmatprep.subr.mxu0 0.0
    %v8050 = vand.u32 %v7784, 4294901760
    %8051 = vmatpush1.msra.mxu0 %v8050
    %8052 = vmatprep.subr.mxu0 0.0
    %8053 = vmatpush1.msra.mxu0 0.0
    %8054 = vmatprep.subr.mxu0 0.0
    %8055 = vmatpush1.msra.mxu0 0.0
    %8056 = vmatprep.subr.mxu0 0.0
    %8057 = vmatpush1.msra.mxu0 0.0
    %8058 = vmatprep.subr.mxu0 0.0
    %8059 = vmatpush1.msra.mxu0 0.0
    %8060 = vmatprep.subr.mxu0 0.0
    %8061 = vmatpush1.msra.mxu0 0.0
    %8062 = vmatprep.subr.mxu0 0.0
    %8063 = vmatpush1.msra.mxu0 0.0
    %8064 = vmatprep.subr.mxu0 0.0
    %8065 = vmatpush1.msra.mxu0 0.0
    %8066 = vmatprep.subr.mxu0 0.0
    %8067 = vmatpush1.msra.mxu0 0.0
    %8068 = vmatprep.subr.mxu0 0.0
    %8069 = vmatpush1.msra.mxu0 0.0
    %8070 = vmatprep.subr.mxu0 0.0
    %8071 = vmatpush1.msra.mxu0 0.0
    %8072 = vmatprep.subr.mxu0 0.0
    %8073 = vmatpush1.msra.mxu0 0.0
    %8074 = vmatprep.subr.mxu0 0.0
    %8075 = vmatpush1.msra.mxu0 0.0
    %8076 = vmatprep.subr.mxu0 0.0
    %8077 = vmatpush1.msra.mxu0 0.0
    %8078 = vmatprep.subr.mxu0 0.0
    %8079 = vmatpush1.msra.mxu0 0.0
    %8080 = vmatprep.subr.mxu0 0.0
    %8081 = vmatpush1.msra.mxu0 0.0
    %8082 = vmatprep.subr.mxu0 0.0
    %8083 = vmatpush1.msra.mxu0 0.0
    %8084 = vmatprep.subr.mxu0 0.0
    %8085 = vmatpush1.msra.mxu0 0.0
    %8086 = vmatprep.subr.mxu0 0.0
    %8087 = vmatpush1.msra.mxu0 0.0
    %8088 = vmatprep.subr.mxu0 0.0
    %8089 = vmatpush1.msra.mxu0 0.0
    %8090 = vmatprep.subr.mxu0 0.0
    %8091 = vmatpush1.msra.mxu0 0.0
    %8092 = vmatprep.subr.mxu0 0.0
    %8093 = vmatpush1.msra.mxu0 0.0
    %8094 = vmatprep.subr.mxu0 0.0
    %8095 = vmatpush1.msra.mxu0 0.0
    %8096 = vmatprep.subr.mxu0 0.0
    %8097 = vmatpush1.msra.mxu0 0.0
    %8098 = vmatprep.subr.mxu0 0.0
    %8099 = vmatpush1.msra.mxu0 0.0
    %8100 = vmatprep.subr.mxu0 0.0
    %8101 = vmatpush1.msra.mxu0 0.0
    %8102 = vmatprep.subr.mxu0 0.0
    %8103 = vmatpush1.msra.mxu0 0.0
    %8104 = vmatprep.subr.mxu0 0.0
    %8105 = vmatpush1.msra.mxu0 0.0
    %8106 = vmatprep.subr.mxu0 0.0
    %8107 = vmatpush1.msra.mxu0 0.0
    %8108 = vmatprep.mubr.f32.mxu0 0.0
    %v8109 = vand.u32 %v7788, 4294901760
    %v8110 = vsub.f32 %v7788, %v8109
    %v8111 = vand.u32 %v8110, 4294901760
    %8112 = vmatmul.mubr.f32.gmra.mrb[0].mxu0 %v8111
    %v8113 = vpop.f32.mrb[0].mxu0
    %v8114 = vadd.f32 %v8037, %v8113
    %v8115 = vpop.f32.mrb[0].mxu0
    %8116 = vdwg.mxu0
    %8117 = vmatprep.subr.mxu0 0.0
    %v8118 = vand.u32 %v7781, 4294901760
    %v8119 = vsub.f32 %v7781, %v8118
    %v8120 = vand.u32 %v8119, 4294901760
    %8121 = vmatpush1.msra.mxu0 %v8120
    %8122 = vmatprep.subr.mxu0 0.0
    %v8123 = vand.u32 %v7782, 4294901760
    %v8124 = vsub.f32 %v7782, %v8123
    %v8125 = vand.u32 %v8124, 4294901760
    %8126 = vmatpush1.msra.mxu0 %v8125
    %8127 = vmatprep.subr.mxu0 0.0
    %v8128 = vand.u32 %v7783, 4294901760
    %v8129 = vsub.f32 %v7783, %v8128
    %v8130 = vand.u32 %v8129, 4294901760
    %8131 = vmatpush1.msra.mxu0 %v8130
    %8132 = vmatprep.subr.mxu0 0.0
    %v8133 = vand.u32 %v7784, 4294901760
    %v8134 = vsub.f32 %v7784, %v8133
    %v8135 = vand.u32 %v8134, 4294901760
    %8136 = vmatpush1.msra.mxu0 %v8135
    %8137 = vmatprep.subr.mxu0 0.0
    %8138 = vmatpush1.msra.mxu0 0.0
    %8139 = vmatprep.subr.mxu0 0.0
    %8140 = vmatpush1.msra.mxu0 0.0
    %8141 = vmatprep.subr.mxu0 0.0
    %8142 = vmatpush1.msra.mxu0 0.0
    %8143 = vmatprep.subr.mxu0 0.0
    %8144 = vmatpush1.msra.mxu0 0.0
    %8145 = vmatprep.subr.mxu0 0.0
    %8146 = vmatpush1.msra.mxu0 0.0
    %8147 = vmatprep.subr.mxu0 0.0
    %8148 = vmatpush1.msra.mxu0 0.0
    %8149 = vmatprep.subr.mxu0 0.0
    %8150 = vmatpush1.msra.mxu0 0.0
    %8151 = vmatprep.subr.mxu0 0.0
    %8152 = vmatpush1.msra.mxu0 0.0
    %8153 = vmatprep.subr.mxu0 0.0
    %8154 = vmatpush1.msra.mxu0 0.0
    %8155 = vmatprep.subr.mxu0 0.0
    %8156 = vmatpush1.msra.mxu0 0.0
    %8157 = vmatprep.subr.mxu0 0.0
    %8158 = vmatpush1.msra.mxu0 0.0
    %8159 = vmatprep.subr.mxu0 0.0
    %8160 = vmatpush1.msra.mxu0 0.0
    %8161 = vmatprep.subr.mxu0 0.0
    %8162 = vmatpush1.msra.mxu0 0.0
    %8163 = vmatprep.subr.mxu0 0.0
    %8164 = vmatpush1.msra.mxu0 0.0
    %8165 = vmatprep.subr.mxu0 0.0
    %8166 = vmatpush1.msra.mxu0 0.0
    %8167 = vmatprep.subr.mxu0 0.0
    %8168 = vmatpush1.msra.mxu0 0.0
    %8169 = vmatprep.subr.mxu0 0.0
    %8170 = vmatpush1.msra.mxu0 0.0
    %8171 = vmatprep.subr.mxu0 0.0
    %8172 = vmatpush1.msra.mxu0 0.0
    %8173 = vmatprep.subr.mxu0 0.0
    %8174 = vmatpush1.msra.mxu0 0.0
    %8175 = vmatprep.subr.mxu0 0.0
    %8176 = vmatpush1.msra.mxu0 0.0
    %8177 = vmatprep.subr.mxu0 0.0
    %8178 = vmatpush1.msra.mxu0 0.0
    %8179 = vmatprep.subr.mxu0 0.0
    %8180 = vmatpush1.msra.mxu0 0.0
    %8181 = vmatprep.subr.mxu0 0.0
    %8182 = vmatpush1.msra.mxu0 0.0
    %8183 = vmatprep.subr.mxu0 0.0
    %8184 = vmatpush1.msra.mxu0 0.0
    %8185 = vmatprep.subr.mxu0 0.0
    %8186 = vmatpush1.msra.mxu0 0.0
    %8187 = vmatprep.subr.mxu0 0.0
    %8188 = vmatpush1.msra.mxu0 0.0
    %8189 = vmatprep.subr.mxu0 0.0
    %8190 = vmatpush1.msra.mxu0 0.0
    %8191 = vmatprep.subr.mxu0 0.0
    %8192 = vmatpush1.msra.mxu0 0.0
    %8193 = vmatprep.mubr.f32.mxu0 0.0
    %v8194 = vand.u32 %v7788, 4294901760
    %8195 = vmatmul.mubr.f32.gmra.mrb[0].mxu0 %v8194
    %v8196 = vpop.f32.mrb[0].mxu0
    %v8197 = vadd.f32 %v8114, %v8196
    %v8198 = vpop.f32.mrb[0].mxu0
    %8199 = vdwg.mxu0
    %8200 = vmatprep.subr.mxu0 0.0
    %v8201 = vand.u32 %v7781, 4294901760
    %8202 = vmatpush1.msra.mxu0 %v8201
    %8203 = vmatprep.subr.mxu0 0.0
    %v8204 = vand.u32 %v7782, 4294901760
    %8205 = vmatpush1.msra.mxu0 %v8204
    %8206 = vmatprep.subr.mxu0 0.0
    %v8207 = vand.u32 %v7783, 4294901760
    %8208 = vmatpush1.msra.mxu0 %v8207
    %8209 = vmatprep.subr.mxu0 0.0
    %v8210 = vand.u32 %v7784, 4294901760
    %8211 = vmatpush1.msra.mxu0 %v8210
    %8212 = vmatprep.subr.mxu0 0.0
    %8213 = vmatpush1.msra.mxu0 0.0
    %8214 = vmatprep.subr.mxu0 0.0
    %8215 = vmatpush1.msra.mxu0 0.0
    %8216 = vmatprep.subr.mxu0 0.0
    %8217 = vmatpush1.msra.mxu0 0.0
    %8218 = vmatprep.subr.mxu0 0.0
    %8219 = vmatpush1.msra.mxu0 0.0
    %8220 = vmatprep.subr.mxu0 0.0
    %8221 = vmatpush1.msra.mxu0 0.0
    %8222 = vmatprep.subr.mxu0 0.0
    %8223 = vmatpush1.msra.mxu0 0.0
    %8224 = vmatprep.subr.mxu0 0.0
    %8225 = vmatpush1.msra.mxu0 0.0
    %8226 = vmatprep.subr.mxu0 0.0
    %8227 = vmatpush1.msra.mxu0 0.0
    %8228 = vmatprep.subr.mxu0 0.0
    %8229 = vmatpush1.msra.mxu0 0.0
    %8230 = vmatprep.subr.mxu0 0.0
    %8231 = vmatpush1.msra.mxu0 0.0
    %8232 = vmatprep.subr.mxu0 0.0
    %8233 = vmatpush1.msra.mxu0 0.0
    %8234 = vmatprep.subr.mxu0 0.0
    %8235 = vmatpush1.msra.mxu0 0.0
    %8236 = vmatprep.subr.mxu0 0.0
    %8237 = vmatpush1.msra.mxu0 0.0
    %8238 = vmatprep.subr.mxu0 0.0
    %8239 = vmatpush1.msra.mxu0 0.0
    %8240 = vmatprep.subr.mxu0 0.0
    %8241 = vmatpush1.msra.mxu0 0.0
    %8242 = vmatprep.subr.mxu0 0.0
    %8243 = vmatpush1.msra.mxu0 0.0
    %8244 = vmatprep.subr.mxu0 0.0
    %8245 = vmatpush1.msra.mxu0 0.0
    %8246 = vmatprep.subr.mxu0 0.0
    %8247 = vmatpush1.msra.mxu0 0.0
    %8248 = vmatprep.subr.mxu0 0.0
    %8249 = vmatpush1.msra.mxu0 0.0
    %8250 = vmatprep.subr.mxu0 0.0
    %8251 = vmatpush1.msra.mxu0 0.0
    %8252 = vmatprep.subr.mxu0 0.0
    %8253 = vmatpush1.msra.mxu0 0.0
    %8254 = vmatprep.subr.mxu0 0.0
    %8255 = vmatpush1.msra.mxu0 0.0
    %8256 = vmatprep.subr.mxu0 0.0
    %8257 = vmatpush1.msra.mxu0 0.0
    %8258 = vmatprep.subr.mxu0 0.0
    %8259 = vmatpush1.msra.mxu0 0.0
    %8260 = vmatprep.subr.mxu0 0.0
    %8261 = vmatpush1.msra.mxu0 0.0
    %8262 = vmatprep.subr.mxu0 0.0
    %8263 = vmatpush1.msra.mxu0 0.0
    %8264 = vmatprep.subr.mxu0 0.0
    %8265 = vmatpush1.msra.mxu0 0.0
    %8266 = vmatprep.subr.mxu0 0.0
    %8267 = vmatpush1.msra.mxu0 0.0
    %8268 = vmatprep.mubr.f32.mxu0 0.0
    %v8269 = vand.u32 %v7788, 4294901760
    %8270 = vmatmul.mubr.f32.gmra.mrb[0].mxu0 %v8269
    %v8271 = vpop.f32.mrb[0].mxu0
    %v8272 = vadd.f32 %v8197, %v8271
    %v8273 = vpop.f32.mrb[0].mxu0
    %8274 = vdwg.mxu0
    %8276 = vrot.lane.b32.xlu0 %v7771, 32
    %v8277 = vpop.permute.xlu0 %8276
    %v8278 = vsel %vm634, %v8277, 0
    %8280 = vmatprep.subr.mxu0 0.0
    %v8281 = vand.u32 %v7777, 4294901760
    %8282 = vmatpush1.msra.mxu0 %v8281
    %8283 = vmatprep.subr.mxu0 0.0
    %v8284 = vand.u32 %v7778, 4294901760
    %8285 = vmatpush1.msra.mxu0 %v8284
    %8286 = vmatprep.subr.mxu0 0.0
    %v8287 = vand.u32 %v7779, 4294901760
    %8288 = vmatpush1.msra.mxu0 %v8287
    %8289 = vmatprep.subr.mxu0 0.0
    %v8290 = vand.u32 %v7780, 4294901760
    %8291 = vmatpush1.msra.mxu0 %v8290
    %8292 = vmatprep.subr.mxu0 0.0
    %8293 = vmatpush1.msra.mxu0 0.0
    %8294 = vmatprep.subr.mxu0 0.0
    %8295 = vmatpush1.msra.mxu0 0.0
    %8296 = vmatprep.subr.mxu0 0.0
    %8297 = vmatpush1.msra.mxu0 0.0
    %8298 = vmatprep.subr.mxu0 0.0
    %8299 = vmatpush1.msra.mxu0 0.0
    %8300 = vmatprep.subr.mxu0 0.0
    %8301 = vmatpush1.msra.mxu0 0.0
    %8302 = vmatprep.subr.mxu0 0.0
    %8303 = vmatpush1.msra.mxu0 0.0
    %8304 = vmatprep.subr.mxu0 0.0
    %8305 = vmatpush1.msra.mxu0 0.0
    %8306 = vmatprep.subr.mxu0 0.0
    %8307 = vmatpush1.msra.mxu0 0.0
    %8308 = vmatprep.subr.mxu0 0.0
    %8309 = vmatpush1.msra.mxu0 0.0
    %8310 = vmatprep.subr.mxu0 0.0
    %8311 = vmatpush1.msra.mxu0 0.0
    %8312 = vmatprep.subr.mxu0 0.0
    %8313 = vmatpush1.msra.mxu0 0.0
    %8314 = vmatprep.subr.mxu0 0.0
    %8315 = vmatpush1.msra.mxu0 0.0
    %8316 = vmatprep.subr.mxu0 0.0
    %8317 = vmatpush1.msra.mxu0 0.0
    %8318 = vmatprep.subr.mxu0 0.0
    %8319 = vmatpush1.msra.mxu0 0.0
    %8320 = vmatprep.subr.mxu0 0.0
    %8321 = vmatpush1.msra.mxu0 0.0
    %8322 = vmatprep.subr.mxu0 0.0
    %8323 = vmatpush1.msra.mxu0 0.0
    %8324 = vmatprep.subr.mxu0 0.0
    %8325 = vmatpush1.msra.mxu0 0.0
    %8326 = vmatprep.subr.mxu0 0.0
    %8327 = vmatpush1.msra.mxu0 0.0
    %8328 = vmatprep.subr.mxu0 0.0
    %8329 = vmatpush1.msra.mxu0 0.0
    %8330 = vmatprep.subr.mxu0 0.0
    %8331 = vmatpush1.msra.mxu0 0.0
    %8332 = vmatprep.subr.mxu0 0.0
    %8333 = vmatpush1.msra.mxu0 0.0
    %8334 = vmatprep.subr.mxu0 0.0
    %8335 = vmatpush1.msra.mxu0 0.0
    %8336 = vmatprep.subr.mxu0 0.0
    %8337 = vmatpush1.msra.mxu0 0.0
    %8338 = vmatprep.subr.mxu0 0.0
    %8339 = vmatpush1.msra.mxu0 0.0
    %8340 = vmatprep.subr.mxu0 0.0
    %8341 = vmatpush1.msra.mxu0 0.0
    %8342 = vmatprep.subr.mxu0 0.0
    %8343 = vmatpush1.msra.mxu0 0.0
    %8344 = vmatprep.subr.mxu0 0.0
    %8345 = vmatpush1.msra.mxu0 0.0
    %8346 = vmatprep.subr.mxu0 0.0
    %8347 = vmatpush1.msra.mxu0 0.0
    %8348 = vmatprep.mubr.f32.mxu0 0.0
    %v8349 = vand.u32 %v8278, 4294901760
    %v8350 = vsub.f32 %v8278, %v8349
    %v8351 = vand.u32 %v8350, 4294901760
    %v8352 = vsub.f32 %v8350, %v8351
    %v8353 = vand.u32 %v8352, 4294901760
    %8354 = vmatmul.mubr.f32.gmra.mrb[0].mxu0 %v8353
    %v8355 = vpop.f32.mrb[0].mxu0
    %v8356 = vadd.f32 %v8272, %v8355
    %v8357 = vpop.f32.mrb[0].mxu0
    %8358 = vdwg.mxu0
    %8359 = vmatprep.subr.mxu0 0.0
    %v8360 = vand.u32 %v7777, 4294901760
    %v8361 = vsub.f32 %v7777, %v8360
    %v8362 = vand.u32 %v8361, 4294901760
    %v8363 = vsub.f32 %v8361, %v8362
    %v8364 = vand.u32 %v8363, 4294901760
    %8365 = vmatpush1.msra.mxu0 %v8364
    %8366 = vmatprep.subr.mxu0 0.0
    %v8367 = vand.u32 %v7778, 4294901760
    %v8368 = vsub.f32 %v7778, %v8367
    %v8369 = vand.u32 %v8368, 4294901760
    %v8370 = vsub.f32 %v8368, %v8369
    %v8371 = vand.u32 %v8370, 4294901760
    %8372 = vmatpush1.msra.mxu0 %v8371
    %8373 = vmatprep.subr.mxu0 0.0
    %v8374 = vand.u32 %v7779, 4294901760
    %v8375 = vsub.f32 %v7779, %v8374
    %v8376 = vand.u32 %v8375, 4294901760
    %v8377 = vsub.f32 %v8375, %v8376
    %v8378 = vand.u32 %v8377, 4294901760
    %8379 = vmatpush1.msra.mxu0 %v8378
    %8380 = vmatprep.subr.mxu0 0.0
    %v8381 = vand.u32 %v7780, 4294901760
    %v8382 = vsub.f32 %v7780, %v8381
    %v8383 = vand.u32 %v8382, 4294901760
    %v8384 = vsub.f32 %v8382, %v8383
    %v8385 = vand.u32 %v8384, 4294901760
    %8386 = vmatpush1.msra.mxu0 %v8385
    %8387 = vmatprep.subr.mxu0 0.0
    %8388 = vmatpush1.msra.mxu0 0.0
    %8389 = vmatprep.subr.mxu0 0.0
    %8390 = vmatpush1.msra.mxu0 0.0
    %8391 = vmatprep.subr.mxu0 0.0
    %8392 = vmatpush1.msra.mxu0 0.0
    %8393 = vmatprep.subr.mxu0 0.0
    %8394 = vmatpush1.msra.mxu0 0.0
    %8395 = vmatprep.subr.mxu0 0.0
    %8396 = vmatpush1.msra.mxu0 0.0
    %8397 = vmatprep.subr.mxu0 0.0
    %8398 = vmatpush1.msra.mxu0 0.0
    %8399 = vmatprep.subr.mxu0 0.0
    %8400 = vmatpush1.msra.mxu0 0.0
    %8401 = vmatprep.subr.mxu0 0.0
    %8402 = vmatpush1.msra.mxu0 0.0
    %8403 = vmatprep.subr.mxu0 0.0
    %8404 = vmatpush1.msra.mxu0 0.0
    %8405 = vmatprep.subr.mxu0 0.0
    %8406 = vmatpush1.msra.mxu0 0.0
    %8407 = vmatprep.subr.mxu0 0.0
    %8408 = vmatpush1.msra.mxu0 0.0
    %8409 = vmatprep.subr.mxu0 0.0
    %8410 = vmatpush1.msra.mxu0 0.0
    %8411 = vmatprep.subr.mxu0 0.0
    %8412 = vmatpush1.msra.mxu0 0.0
    %8413 = vmatprep.subr.mxu0 0.0
    %8414 = vmatpush1.msra.mxu0 0.0
    %8415 = vmatprep.subr.mxu0 0.0
    %8416 = vmatpush1.msra.mxu0 0.0
    %8417 = vmatprep.subr.mxu0 0.0
    %8418 = vmatpush1.msra.mxu0 0.0
    %8419 = vmatprep.subr.mxu0 0.0
    %8420 = vmatpush1.msra.mxu0 0.0
    %8421 = vmatprep.subr.mxu0 0.0
    %8422 = vmatpush1.msra.mxu0 0.0
    %8423 = vmatprep.subr.mxu0 0.0
    %8424 = vmatpush1.msra.mxu0 0.0
    %8425 = vmatprep.subr.mxu0 0.0
    %8426 = vmatpush1.msra.mxu0 0.0
    %8427 = vmatprep.subr.mxu0 0.0
    %8428 = vmatpush1.msra.mxu0 0.0
    %8429 = vmatprep.subr.mxu0 0.0
    %8430 = vmatpush1.msra.mxu0 0.0
    %8431 = vmatprep.subr.mxu0 0.0
    %8432 = vmatpush1.msra.mxu0 0.0
    %8433 = vmatprep.subr.mxu0 0.0
    %8434 = vmatpush1.msra.mxu0 0.0
    %8435 = vmatprep.subr.mxu0 0.0
    %8436 = vmatpush1.msra.mxu0 0.0
    %8437 = vmatprep.subr.mxu0 0.0
    %8438 = vmatpush1.msra.mxu0 0.0
    %8439 = vmatprep.subr.mxu0 0.0
    %8440 = vmatpush1.msra.mxu0 0.0
    %8441 = vmatprep.subr.mxu0 0.0
    %8442 = vmatpush1.msra.mxu0 0.0
    %8443 = vmatprep.mubr.f32.mxu0 0.0
    %v8444 = vand.u32 %v8278, 4294901760
    %8445 = vmatmul.mubr.f32.gmra.mrb[0].mxu0 %v8444
    %v8446 = vpop.f32.mrb[0].mxu0
    %v8447 = vadd.f32 %v8356, %v8446
    %v8448 = vpop.f32.mrb[0].mxu0
    %8449 = vdwg.mxu0
    %8450 = vmatprep.subr.mxu0 0.0
    %v8451 = vand.u32 %v7777, 4294901760
    %v8452 = vsub.f32 %v7777, %v8451
    %8453 = vmatpush1.msra.mxu0 %v8452
    %8454 = vmatprep.subr.mxu0 0.0
    %v8455 = vand.u32 %v7778, 4294901760
    %v8456 = vsub.f32 %v7778, %v8455
    %8457 = vmatpush1.msra.mxu0 %v8456
    %8458 = vmatprep.subr.mxu0 0.0
    %v8459 = vand.u32 %v7779, 4294901760
    %v8460 = vsub.f32 %v7779, %v8459
    %8461 = vmatpush1.msra.mxu0 %v8460
    %8462 = vmatprep.subr.mxu0 0.0
    %v8463 = vand.u32 %v7780, 4294901760
    %v8464 = vsub.f32 %v7780, %v8463
    %8465 = vmatpush1.msra.mxu0 %v8464
    %8466 = vmatprep.subr.mxu0 0.0
    %8467 = vmatpush1.msra.mxu0 0.0
    %8468 = vmatprep.subr.mxu0 0.0
    %8469 = vmatpush1.msra.mxu0 0.0
    %8470 = vmatprep.subr.mxu0 0.0
    %8471 = vmatpush1.msra.mxu0 0.0
    %8472 = vmatprep.subr.mxu0 0.0
    %8473 = vmatpush1.msra.mxu0 0.0
    %8474 = vmatprep.subr.mxu0 0.0
    %8475 = vmatpush1.msra.mxu0 0.0
    %8476 = vmatprep.subr.mxu0 0.0
    %8477 = vmatpush1.msra.mxu0 0.0
    %8478 = vmatprep.subr.mxu0 0.0
    %8479 = vmatpush1.msra.mxu0 0.0
    %8480 = vmatprep.subr.mxu0 0.0
    %8481 = vmatpush1.msra.mxu0 0.0
    %8482 = vmatprep.subr.mxu0 0.0
    %8483 = vmatpush1.msra.mxu0 0.0
    %8484 = vmatprep.subr.mxu0 0.0
    %8485 = vmatpush1.msra.mxu0 0.0
    %8486 = vmatprep.subr.mxu0 0.0
    %8487 = vmatpush1.msra.mxu0 0.0
    %8488 = vmatprep.subr.mxu0 0.0
    %8489 = vmatpush1.msra.mxu0 0.0
    %8490 = vmatprep.subr.mxu0 0.0
    %8491 = vmatpush1.msra.mxu0 0.0
    %8492 = vmatprep.subr.mxu0 0.0
    %8493 = vmatpush1.msra.mxu0 0.0
    %8494 = vmatprep.subr.mxu0 0.0
    %8495 = vmatpush1.msra.mxu0 0.0
    %8496 = vmatprep.subr.mxu0 0.0
    %8497 = vmatpush1.msra.mxu0 0.0
    %8498 = vmatprep.subr.mxu0 0.0
    %8499 = vmatpush1.msra.mxu0 0.0
    %8500 = vmatprep.subr.mxu0 0.0
    %8501 = vmatpush1.msra.mxu0 0.0
    %8502 = vmatprep.subr.mxu0 0.0
    %8503 = vmatpush1.msra.mxu0 0.0
    %8504 = vmatprep.subr.mxu0 0.0
    %8505 = vmatpush1.msra.mxu0 0.0
    %8506 = vmatprep.subr.mxu0 0.0
    %8507 = vmatpush1.msra.mxu0 0.0
    %8508 = vmatprep.subr.mxu0 0.0
    %8509 = vmatpush1.msra.mxu0 0.0
    %8510 = vmatprep.subr.mxu0 0.0
    %8511 = vmatpush1.msra.mxu0 0.0
    %8512 = vmatprep.subr.mxu0 0.0
    %8513 = vmatpush1.msra.mxu0 0.0
    %8514 = vmatprep.subr.mxu0 0.0
    %8515 = vmatpush1.msra.mxu0 0.0
    %8516 = vmatprep.subr.mxu0 0.0
    %8517 = vmatpush1.msra.mxu0 0.0
    %8518 = vmatprep.subr.mxu0 0.0
    %8519 = vmatpush1.msra.mxu0 0.0
    %8520 = vmatprep.subr.mxu0 0.0
    %8521 = vmatpush1.msra.mxu0 0.0
    %8522 = vmatprep.mubr.f32.mxu0 0.0
    %v8523 = vand.u32 %v8278, 4294901760
    %v8524 = vsub.f32 %v8278, %v8523
    %8525 = vmatmul.mubr.f32.gmra.mrb[0].mxu0 %v8524
    %v8526 = vpop.f32.mrb[0].mxu0
    %v8527 = vadd.f32 %v8447, %v8526
    %v8528 = vpop.f32.mrb[0].mxu0
    %8529 = vdwg.mxu0
    %8530 = vmatprep.subr.mxu0 0.0
    %v8531 = vand.u32 %v7777, 4294901760
    %8532 = vmatpush1.msra.mxu0 %v8531
    %8533 = vmatprep.subr.mxu0 0.0
    %v8534 = vand.u32 %v7778, 4294901760
    %8535 = vmatpush1.msra.mxu0 %v8534
    %8536 = vmatprep.subr.mxu0 0.0
    %v8537 = vand.u32 %v7779, 4294901760
    %8538 = vmatpush1.msra.mxu0 %v8537
    %8539 = vmatprep.subr.mxu0 0.0
    %v8540 = vand.u32 %v7780, 4294901760
    %8541 = vmatpush1.msra.mxu0 %v8540
    %8542 = vmatprep.subr.mxu0 0.0
    %8543 = vmatpush1.msra.mxu0 0.0
    %8544 = vmatprep.subr.mxu0 0.0
    %8545 = vmatpush1.msra.mxu0 0.0
    %8546 = vmatprep.subr.mxu0 0.0
    %8547 = vmatpush1.msra.mxu0 0.0
    %8548 = vmatprep.subr.mxu0 0.0
    %8549 = vmatpush1.msra.mxu0 0.0
    %8550 = vmatprep.subr.mxu0 0.0
    %8551 = vmatpush1.msra.mxu0 0.0
    %8552 = vmatprep.subr.mxu0 0.0
    %8553 = vmatpush1.msra.mxu0 0.0
    %8554 = vmatprep.subr.mxu0 0.0
    %8555 = vmatpush1.msra.mxu0 0.0
    %8556 = vmatprep.subr.mxu0 0.0
    %8557 = vmatpush1.msra.mxu0 0.0
    %8558 = vmatprep.subr.mxu0 0.0
    %8559 = vmatpush1.msra.mxu0 0.0
    %8560 = vmatprep.subr.mxu0 0.0
    %8561 = vmatpush1.msra.mxu0 0.0
    %8562 = vmatprep.subr.mxu0 0.0
    %8563 = vmatpush1.msra.mxu0 0.0
    %8564 = vmatprep.subr.mxu0 0.0
    %8565 = vmatpush1.msra.mxu0 0.0
    %8566 = vmatprep.subr.mxu0 0.0
    %8567 = vmatpush1.msra.mxu0 0.0
    %8568 = vmatprep.subr.mxu0 0.0
    %8569 = vmatpush1.msra.mxu0 0.0
    %8570 = vmatprep.subr.mxu0 0.0
    %8571 = vmatpush1.msra.mxu0 0.0
    %8572 = vmatprep.subr.mxu0 0.0
    %8573 = vmatpush1.msra.mxu0 0.0
    %8574 = vmatprep.subr.mxu0 0.0
    %8575 = vmatpush1.msra.mxu0 0.0
    %8576 = vmatprep.subr.mxu0 0.0
    %8577 = vmatpush1.msra.mxu0 0.0
    %8578 = vmatprep.subr.mxu0 0.0
    %8579 = vmatpush1.msra.mxu0 0.0
    %8580 = vmatprep.subr.mxu0 0.0
    %8581 = vmatpush1.msra.mxu0 0.0
    %8582 = vmatprep.subr.mxu0 0.0
    %8583 = vmatpush1.msra.mxu0 0.0
    %8584 = vmatprep.subr.mxu0 0.0
    %8585 = vmatpush1.msra.mxu0 0.0
    %8586 = vmatprep.subr.mxu0 0.0
    %8587 = vmatpush1.msra.mxu0 0.0
    %8588 = vmatprep.subr.mxu0 0.0
    %8589 = vmatpush1.msra.mxu0 0.0
    %8590 = vmatprep.subr.mxu0 0.0
    %8591 = vmatpush1.msra.mxu0 0.0
    %8592 = vmatprep.subr.mxu0 0.0
    %8593 = vmatpush1.msra.mxu0 0.0
    %8594 = vmatprep.subr.mxu0 0.0
    %8595 = vmatpush1.msra.mxu0 0.0
    %8596 = vmatprep.subr.mxu0 0.0
    %8597 = vmatpush1.msra.mxu0 0.0
    %8598 = vmatprep.mubr.f32.mxu0 0.0
    %v8599 = vand.u32 %v8278, 4294901760
    %v8600 = vsub.f32 %v8278, %v8599
    %v8601 = vand.u32 %v8600, 4294901760
    %8602 = vmatmul.mubr.f32.gmra.mrb[0].mxu0 %v8601
    %v8603 = vpop.f32.mrb[0].mxu0
    %v8604 = vadd.f32 %v8527, %v8603
    %v8605 = vpop.f32.mrb[0].mxu0
    %8606 = vdwg.mxu0
    %8607 = vmatprep.subr.mxu0 0.0
    %v8608 = vand.u32 %v7777, 4294901760
    %v8609 = vsub.f32 %v7777, %v8608
    %v8610 = vand.u32 %v8609, 4294901760
    %8611 = vmatpush1.msra.mxu0 %v8610
    %8612 = vmatprep.subr.mxu0 0.0
    %v8613 = vand.u32 %v7778, 4294901760
    %v8614 = vsub.f32 %v7778, %v8613
    %v8615 = vand.u32 %v8614, 4294901760
    %8616 = vmatpush1.msra.mxu0 %v8615
    %8617 = vmatprep.subr.mxu0 0.0
    %v8618 = vand.u32 %v7779, 4294901760
    %v8619 = vsub.f32 %v7779, %v8618
    %v8620 = vand.u32 %v8619, 4294901760
    %8621 = vmatpush1.msra.mxu0 %v8620
    %8622 = vmatprep.subr.mxu0 0.0
    %v8623 = vand.u32 %v7780, 4294901760
    %v8624 = vsub.f32 %v7780, %v8623
    %v8625 = vand.u32 %v8624, 4294901760
    %8626 = vmatpush1.msra.mxu0 %v8625
    %8627 = vmatprep.subr.mxu0 0.0
    %8628 = vmatpush1.msra.mxu0 0.0
    %8629 = vmatprep.subr.mxu0 0.0
    %8630 = vmatpush1.msra.mxu0 0.0
    %8631 = vmatprep.subr.mxu0 0.0
    %8632 = vmatpush1.msra.mxu0 0.0
    %8633 = vmatprep.subr.mxu0 0.0
    %8634 = vmatpush1.msra.mxu0 0.0
    %8635 = vmatprep.subr.mxu0 0.0
    %8636 = vmatpush1.msra.mxu0 0.0
    %8637 = vmatprep.subr.mxu0 0.0
    %8638 = vmatpush1.msra.mxu0 0.0
    %8639 = vmatprep.subr.mxu0 0.0
    %8640 = vmatpush1.msra.mxu0 0.0
    %8641 = vmatprep.subr.mxu0 0.0
    %8642 = vmatpush1.msra.mxu0 0.0
    %8643 = vmatprep.subr.mxu0 0.0
    %8644 = vmatpush1.msra.mxu0 0.0
    %8645 = vmatprep.subr.mxu0 0.0
    %8646 = vmatpush1.msra.mxu0 0.0
    %8647 = vmatprep.subr.mxu0 0.0
    %8648 = vmatpush1.msra.mxu0 0.0
    %8649 = vmatprep.subr.mxu0 0.0
    %8650 = vmatpush1.msra.mxu0 0.0
    %8651 = vmatprep.subr.mxu0 0.0
    %8652 = vmatpush1.msra.mxu0 0.0
    %8653 = vmatprep.subr.mxu0 0.0
    %8654 = vmatpush1.msra.mxu0 0.0
    %8655 = vmatprep.subr.mxu0 0.0
    %8656 = vmatpush1.msra.mxu0 0.0
    %8657 = vmatprep.subr.mxu0 0.0
    %8658 = vmatpush1.msra.mxu0 0.0
    %8659 = vmatprep.subr.mxu0 0.0
    %8660 = vmatpush1.msra.mxu0 0.0
    %8661 = vmatprep.subr.mxu0 0.0
    %8662 = vmatpush1.msra.mxu0 0.0
    %8663 = vmatprep.subr.mxu0 0.0
    %8664 = vmatpush1.msra.mxu0 0.0
    %8665 = vmatprep.subr.mxu0 0.0
    %8666 = vmatpush1.msra.mxu0 0.0
    %8667 = vmatprep.subr.mxu0 0.0
    %8668 = vmatpush1.msra.mxu0 0.0
    %8669 = vmatprep.subr.mxu0 0.0
    %8670 = vmatpush1.msra.mxu0 0.0
    %8671 = vmatprep.subr.mxu0 0.0
    %8672 = vmatpush1.msra.mxu0 0.0
    %8673 = vmatprep.subr.mxu0 0.0
    %8674 = vmatpush1.msra.mxu0 0.0
    %8675 = vmatprep.subr.mxu0 0.0
    %8676 = vmatpush1.msra.mxu0 0.0
    %8677 = vmatprep.subr.mxu0 0.0
    %8678 = vmatpush1.msra.mxu0 0.0
    %8679 = vmatprep.subr.mxu0 0.0
    %8680 = vmatpush1.msra.mxu0 0.0
    %8681 = vmatprep.subr.mxu0 0.0
    %8682 = vmatpush1.msra.mxu0 0.0
    %8683 = vmatprep.mubr.f32.mxu0 0.0
    %v8684 = vand.u32 %v8278, 4294901760
    %8685 = vmatmul.mubr.f32.gmra.mrb[0].mxu0 %v8684
    %v8686 = vpop.f32.mrb[0].mxu0
    %v8687 = vadd.f32 %v8604, %v8686
    %v8688 = vpop.f32.mrb[0].mxu0
    %8689 = vdwg.mxu0
    %8690 = vmatprep.subr.mxu0 0.0
    %v8691 = vand.u32 %v7777, 4294901760
    %8692 = vmatpush1.msra.mxu0 %v8691
    %8693 = vmatprep.subr.mxu0 0.0
    %v8694 = vand.u32 %v7778, 4294901760
    %8695 = vmatpush1.msra.mxu0 %v8694
    %8696 = vmatprep.subr.mxu0 0.0
    %v8697 = vand.u32 %v7779, 4294901760
    %8698 = vmatpush1.msra.mxu0 %v8697
    %8699 = vmatprep.subr.mxu0 0.0
    %v8700 = vand.u32 %v7780, 4294901760
    %8701 = vmatpush1.msra.mxu0 %v8700
    %8702 = vmatprep.subr.mxu0 0.0
    %8703 = vmatpush1.msra.mxu0 0.0
    %8704 = vmatprep.subr.mxu0 0.0
    %8705 = vmatpush1.msra.mxu0 0.0
    %8706 = vmatprep.subr.mxu0 0.0
    %8707 = vmatpush1.msra.mxu0 0.0
    %8708 = vmatprep.subr.mxu0 0.0
    %8709 = vmatpush1.msra.mxu0 0.0
    %8710 = vmatprep.subr.mxu0 0.0
    %8711 = vmatpush1.msra.mxu0 0.0
    %8712 = vmatprep.subr.mxu0 0.0
    %8713 = vmatpush1.msra.mxu0 0.0
    %8714 = vmatprep.subr.mxu0 0.0
    %8715 = vmatpush1.msra.mxu0 0.0
    %8716 = vmatprep.subr.mxu0 0.0
    %8717 = vmatpush1.msra.mxu0 0.0
    %8718 = vmatprep.subr.mxu0 0.0
    %8719 = vmatpush1.msra.mxu0 0.0
    %8720 = vmatprep.subr.mxu0 0.0
    %8721 = vmatpush1.msra.mxu0 0.0
    %8722 = vmatprep.subr.mxu0 0.0
    %8723 = vmatpush1.msra.mxu0 0.0
    %8724 = vmatprep.subr.mxu0 0.0
    %8725 = vmatpush1.msra.mxu0 0.0
    %8726 = vmatprep.subr.mxu0 0.0
    %8727 = vmatpush1.msra.mxu0 0.0
    %8728 = vmatprep.subr.mxu0 0.0
    %8729 = vmatpush1.msra.mxu0 0.0
    %8730 = vmatprep.subr.mxu0 0.0
    %8731 = vmatpush1.msra.mxu0 0.0
    %8732 = vmatprep.subr.mxu0 0.0
    %8733 = vmatpush1.msra.mxu0 0.0
    %8734 = vmatprep.subr.mxu0 0.0
    %8735 = vmatpush1.msra.mxu0 0.0
    %8736 = vmatprep.subr.mxu0 0.0
    %8737 = vmatpush1.msra.mxu0 0.0
    %8738 = vmatprep.subr.mxu0 0.0
    %8739 = vmatpush1.msra.mxu0 0.0
    %8740 = vmatprep.subr.mxu0 0.0
    %8741 = vmatpush1.msra.mxu0 0.0
    %8742 = vmatprep.subr.mxu0 0.0
    %8743 = vmatpush1.msra.mxu0 0.0
    %8744 = vmatprep.subr.mxu0 0.0
    %8745 = vmatpush1.msra.mxu0 0.0
    %8746 = vmatprep.subr.mxu0 0.0
    %8747 = vmatpush1.msra.mxu0 0.0
    %8748 = vmatprep.subr.mxu0 0.0
    %8749 = vmatpush1.msra.mxu0 0.0
    %8750 = vmatprep.subr.mxu0 0.0
    %8751 = vmatpush1.msra.mxu0 0.0
    %8752 = vmatprep.subr.mxu0 0.0
    %8753 = vmatpush1.msra.mxu0 0.0
    %8754 = vmatprep.subr.mxu0 0.0
    %8755 = vmatpush1.msra.mxu0 0.0
    %8756 = vmatprep.subr.mxu0 0.0
    %8757 = vmatpush1.msra.mxu0 0.0
    %8758 = vmatprep.mubr.f32.mxu0 0.0
    %v8759 = vand.u32 %v8278, 4294901760
    %8760 = vmatmul.mubr.f32.gmra.mrb[0].mxu0 %v8759
    %v8761 = vpop.f32.mrb[0].mxu0
    %v8762 = vadd.f32 %v8687, %v8761
    %v8763 = vpop.f32.mrb[0].mxu0
    %8764 = vdwg.mxu0
    %v8765 = vld [vmem:[%s8] sm:$0x1]
    %v8767 = vlaneseq
    %v8768 = vshrl.u32 %v8767, 7
    %v8769 = vsub.s32 0, %v8768
    %v8770 = vrot.slane %v8765, %v8769
    %v8772 = vadd.f32 %v8762, %v8770
    %vm8773 = vcmask 17408
    %8774 = vst.msk [vmem:[#allocation2] sm:$0x3] %vm8773, %v8772
    %v8775 = vlaneseq
    %v8776 = vand.u32 %v8775, 127
    %vm8777 = vcmp.eq.s32.totalorder %v8776, 0
    %v8778 = vsel %vm8777, 1, 0
    %vm8779 = vcmp.eq.s32.totalorder %v8778, 1
    %v8780 = vsel %vm8779, %v7704, 0.0
    %vm8781 = vcmp.eq.s32.totalorder %v8776, 1
    %v8782 = vsel %vm8781, 1, 0
    %vm8783 = vcmp.eq.s32.totalorder %v8782, 1
    %v8784 = vsel %vm8783, %v7711, 0.0
    %v8786 = vrot.slane %v8784, 2
    %v8788 = vadd.f32 %v8780, %v8786
    %vm8789 = vcmp.eq.s32.totalorder %v8776, 2
    %v8790 = vsel %vm8789, 1, 0
    %vm8791 = vcmp.eq.s32.totalorder %v8790, 1
    %v8792 = vsel %vm8791, %v7726, 0.0
    %v8794 = vrot.slane %v8792, 4
    %v8796 = vadd.f32 %v8788, %v8794
    %vm8797 = vcmp.eq.s32.totalorder %v8776, 3
    %v8798 = vsel %vm8797, 1, 0
    %vm8799 = vcmp.eq.s32.totalorder %v8798, 1
    %v8800 = vsel %vm8799, %v7741, 0.0
    %v8802 = vrot.slane %v8800, 6
    %v8804 = vadd.f32 %v8796, %v8802
    %vm8805 = vcmp.eq.s32.totalorder %v8776, 4
    %v8806 = vsel %vm8805, 1, 0
    %vm8807 = vcmp.eq.s32.totalorder %v8806, 1
    %v8808 = vsel %vm8807, %v7756, 0.0
    %v8809 = vadd.f32 %v8804, %v8808
    %vm8810 = vcmp.eq.s32.totalorder %v8776, 5
    %v8811 = vsel %vm8810, 1, 0
    %vm8812 = vcmp.eq.s32.totalorder %v8811, 1
    %v8813 = vsel %vm8812, %v7765, 0.0
    %v8815 = vrot.slane %v8813, 2
    %v8817 = vadd.f32 %v8809, %v8815
    %vm8818 = vcmask 41984
    %8819 = vst.msk [vmem:[#allocation4] sm:$0x3] %vm8818, %v8817
    // Predicated region
    $region38: #{cnn_bilstm_attention_forward.1} parent=1 // pred_check
      _
    $region39: #{cnn_bilstm_attention_forward.1} parent=1 // pred_check_branch
      %8821 = sbr.rel (0) target = $region41
    $region40: #{cnn_bilstm_attention_forward.1} parent=1 // pred_region
      %s8823 = ssub.s32 32, 32
      %8824 = vsyncadd [#allocation3], %s8823
      %s8826 = sshll.u32 [#allocation2], 4
      %s8827 = int_to_ptr.vmem [resolvable:$true] %s8826
      %8829 = dma.vmem_to_hbm [thread:$0]  %s8827, 32, %s9, [#allocation3]
    $region41: #{cnn_bilstm_attention_forward.1} parent=1 // pred_fallthru
      _
    // Predicated region
    $region42: #{cnn_bilstm_attention_forward.1} parent=1 // pred_check
      _
    $region43: #{cnn_bilstm_attention_forward.1} parent=1 // pred_check_branch
      %8831 = sbr.rel (0) target = $region45
    $region44: #{cnn_bilstm_attention_forward.1} parent=1 // pred_region
      %s8833 = ssub.s32 32, 32
      %8834 = vsyncadd [#allocation5], %s8833
      %s8836 = sshll.u32 [#allocation4], 4
      %s8837 = int_to_ptr.vmem [resolvable:$true] %s8836
      %8839 = dma.vmem_to_hbm [thread:$0]  %s8837, 32, %s10, [#allocation5]
    $region45: #{cnn_bilstm_attention_forward.1} parent=1 // pred_fallthru
      _
    // Predicated region
    $region46: #{cnn_bilstm_attention_forward.1} parent=1 // pred_check
      _
    $region47: #{cnn_bilstm_attention_forward.1} parent=1 // pred_check_branch
      %8841 = sbr.rel (0) target = $region49
    $region48: #{cnn_bilstm_attention_forward.1} parent=1 // pred_region
      %8842 = dma.done [#allocation3], 32
    $region49: #{cnn_bilstm_attention_forward.1} parent=1 // pred_fallthru
      _
    // Predicated region
    $region50: #{cnn_bilstm_attention_forward.1} parent=1 // pred_check
      _
    $region51: #{cnn_bilstm_attention_forward.1} parent=1 // pred_check_branch
      %8844 = sbr.rel (0) target = $region53
    $region52: #{cnn_bilstm_attention_forward.1} parent=1 // pred_region
      %8845 = dma.done [#allocation5], 32
    $region53: #{cnn_bilstm_attention_forward.1} parent=1 // pred_fallthru
      _
    %8846 = vsyncpa [#allocation3], 1
    %8847 = vsyncpa [#allocation5], 1

</llo_original>
